<compile_context>
chip_gen: v7x
topology: tpu7x:2x2x1
jax: 0.10.0
libtpu: 0.0.40
codegen_flags: <defaults>
</compile_context>

<pallas_src>
import functools

import jax
import jax.numpy as jnp
from jax.experimental import pallas as pl
from jax.experimental.pallas import tpu as pltpu

_BN_EPS = 1e-5
_VMEM_LIMIT = 32 * 1024 * 1024

# ConvTranspose2d(k=4, s=2, p=1): output phase p in {0,1} (even/odd output index)
# draws from 2 kernel taps per spatial dim. _PHASE_TAPS[p][d] is the kernel index
# used by window offset d (d in {0,1}, ordered by increasing input index).
_PHASE_TAPS = ((3, 1), (2, 0))


def _round_up(x, m):
    return (x + m - 1) // m * m


def _pick_tile(dim, candidates):
    """Largest candidate that divides dim, else None."""
    for c in candidates:
        if dim % c == 0:
            return c
    return None


# ----------------------------------------------------------------------------
# Pallas kernel 1: tiled matmul (bf16 in, f32 accumulate) with fused per-column
# shift epilogue and per-M-tile column sum / sum-of-squares (for BatchNorm).
# ----------------------------------------------------------------------------
def _matmul_fused_kernel(x_ref, w_ref, s_ref, y_ref, sum_ref, ssq_ref, acc_ref,
                         *, act, tm, m_valid):
    @pl.when(pl.program_id(2) == 0)
    def _init():
        acc_ref[...] = jnp.zeros_like(acc_ref)

    acc_ref[...] += jnp.dot(x_ref[...], w_ref[...],
                            preferred_element_type=jnp.float32)

    @pl.when(pl.program_id(2) == pl.num_programs(2) - 1)
    def _store():
        y = acc_ref[...] + s_ref[...]            # fused per-column shift (e.g. bias)
        if act == "relu":
            y = jnp.maximum(y, 0.0)
        y_ref[...] = y.astype(y_ref.dtype)
        ys = y
        if m_valid is not None:
            # Mask rows beyond the true M so padded rows never pollute BN stats.
            row = (pl.program_id(0) * tm
                   + jax.lax.broadcasted_iota(jnp.int32, y.shape, 0))
            ys = jnp.where(row < m_valid, y, 0.0)
        # Per-(M-tile, column) partial sums so BN stats don't re-read y from HBM.
        # Broadcast over 8 sublanes to keep the (8,128) block tiling legal.
        sum_ref[...] = jnp.broadcast_to(jnp.sum(ys, axis=0, keepdims=True),
                                        sum_ref.shape)
        ssq_ref[...] = jnp.broadcast_to(jnp.sum(ys * ys, axis=0, keepdims=True),
                                        ssq_ref.shape)


def matmul_fused(x, w_p, shift_p, *, act="none", out_dtype=jnp.bfloat16):
    """y = act(x @ w + shift) plus per-M-tile column sum / sum-of-squares.

    x:       (M, K)  — cast to bf16; K is NOT lane-padded (full-dim K block).
    w_p:     (K, Np) bf16, prepared once (Np a multiple of 128).
    shift_p: (1, Np) f32 per-output-column shift.
    Returns (y (Mp, Np) out_dtype, psum (gm*8, Np) f32, pssq (gm*8, Np) f32).
    """
    x = x.astype(jnp.bfloat16)
    M, K = x.shape
    Kw, Np = w_p.shape
    assert Kw == K and Np % 128 == 0
    tm = _pick_tile(M, (512, 256, 128, 64, 32, 16))
    if tm is None:                          # rare fallback: pad M to a sublane multiple
        Mp = _round_up(M, 16)
        x = jnp.zeros((Mp, K), x.dtype).at[:M].set(x)
        tm = _pick_tile(Mp, (512, 256, 128, 64, 32, 16))
    else:
        Mp = M
    tn = _pick_tile(Np, (256, 128))
    tk = _pick_tile(K, (512, 256, 128)) or K    # small K: single full-width block
    gm, gn, gk = Mp // tm, Np // tn, K // tk

    kernel = functools.partial(_matmul_fused_kernel, act=act, tm=tm,
                               m_valid=None if Mp == M else M)
    y, psum, pssq = pl.pallas_call(
        kernel,
        out_shape=(
            jax.ShapeDtypeStruct((Mp, Np), out_dtype),
            jax.ShapeDtypeStruct((gm * 8, Np), jnp.float32),
            jax.ShapeDtypeStruct((gm * 8, Np), jnp.float32),
        ),
        grid_spec=pltpu.PrefetchScalarGridSpec(
            num_scalar_prefetch=0,
            grid=(gm, gn, gk),                        # K-reduction innermost
            in_specs=[
                pl.BlockSpec((tm, tk), lambda i, j, k: (i, k)),
                pl.BlockSpec((tk, tn), lambda i, j, k: (k, j)),
                pl.BlockSpec((1, tn), lambda i, j, k: (0, j)),
            ],
            out_specs=[
                pl.BlockSpec((tm, tn), lambda i, j, k: (i, j)),
                pl.BlockSpec((8, tn), lambda i, j, k: (i, j)),
                pl.BlockSpec((8, tn), lambda i, j, k: (i, j)),
            ],
            scratch_shapes=[pltpu.VMEM((tm, tn), jnp.float32)],
        ),
        compiler_params=pltpu.CompilerParams(
            dimension_semantics=("parallel", "parallel", "arbitrary"),
            vmem_limit_bytes=_VMEM_LIMIT),
    )(x, w_p, shift_p)
    return y, psum, pssq


# ----------------------------------------------------------------------------
# Pallas kernel 2: tiled BatchNorm affine + ReLU (scale * y + shift, then ReLU).
# ----------------------------------------------------------------------------
def _bn_relu_kernel(y_ref, s_ref, t_ref, o_ref):
    y = y_ref[...].astype(jnp.float32)
    o_ref[...] = jnp.maximum(y * s_ref[...] + t_ref[...], 0.0)


def pallas_bn_relu(y_p, scale, shift):
    Mp, Np = y_p.shape
    # HBM-bound pass: use large M blocks (~1-4 MiB) independent of the matmul tile.
    tm = _pick_tile(Mp, (8192, 4096, 2048, 1024, 512, 256, 128, 64, 32, 16))
    return pl.pallas_call(
        _bn_relu_kernel,
        out_shape=jax.ShapeDtypeStruct((Mp, Np), jnp.float32),
        grid_spec=pltpu.PrefetchScalarGridSpec(
            num_scalar_prefetch=0,
            grid=(Mp // tm,),
            in_specs=[
                pl.BlockSpec((tm, Np), lambda i: (i, 0)),
                pl.BlockSpec((1, Np), lambda i: (0, 0)),
                pl.BlockSpec((1, Np), lambda i: (0, 0)),
            ],
            out_specs=pl.BlockSpec((tm, Np), lambda i: (i, 0)),
        ),
        compiler_params=pltpu.CompilerParams(
            dimension_semantics=("parallel",),
            vmem_limit_bytes=_VMEM_LIMIT),
    )(y_p, scale.reshape(1, Np), shift.reshape(1, Np))


# ----------------------------------------------------------------------------
# Conv layers built from the kernels above (patch extraction is XLA glue).
# ----------------------------------------------------------------------------
def _im2col(x, k, pad):
    """x: (N, H, W, C) -> (N*Ho*Wo, k*k*C) patches, (ky, kx, cin) K ordering."""
    nb, h, w, c = x.shape
    xp = jnp.pad(x, ((0, 0), (pad, pad), (pad, pad), (0, 0)))
    ho = h + 2 * pad - (k - 1)
    wo = w + 2 * pad - (k - 1)
    cols = []
    for ky in range(k):
        for kx in range(k):
            cols.append(xp[:, ky:ky + ho, kx:kx + wo, :])
    return jnp.concatenate(cols, axis=-1).reshape(nb * ho * wo, k * k * c)


def conv_transpose4x4_s2(x, up_params):
    """ConvTranspose2d(C, C, k=4, s=2, p=1): 4 sub-pixel phases folded into the
    matmul N axis; all phases share one 3x3-window patch matrix."""
    nb, h, w, cin = x.shape
    m = nb * h * w
    patches = _im2col(x, 3, 1)                           # (m, 9*cin) bf16
    y_p, _, _ = matmul_fused(patches, up_params["w"], up_params["shift"],
                             act="none", out_dtype=jnp.bfloat16)
    nt = up_params["w"].shape[1] // 4                    # lane-padded per-phase width
    y = y_p[:m].reshape(nb, h, w, 2, 2, nt)[..., :cin]   # (..., py, px, cin)
    # Interleave: out[:, 2i+py, 2j+px, :] = phase(py, px)[:, i, j, :]
    y = jnp.transpose(y, (0, 1, 3, 2, 4, 5)).reshape(nb, 2 * h, 2 * w, cin)
    return y


def conv3x3_bn_relu(x, conv_params, out_channels):
    """Conv2d(k=3, s=1, p=1) -> BatchNorm2d (training-mode batch stats) -> ReLU."""
    nb, h, w, _ = x.shape
    m = nb * h * w
    patches = _im2col(x, 3, 1)                           # (m, 9*cin) bf16
    y_p, psum, pssq = matmul_fused(patches, conv_params["w"],
                                   conv_params["shift0"], act="none",
                                   out_dtype=jnp.bfloat16)
    gm = psum.shape[0] // 8
    np_ = y_p.shape[1]
    # Finalize BN batch statistics from the kernel-emitted per-tile partial sums
    # (tiny per-channel reduce; no re-read of y from HBM).
    col_sum = psum.reshape(gm, 8, np_)[:, 0, :].sum(axis=0)
    col_ssq = pssq.reshape(gm, 8, np_)[:, 0, :].sum(axis=0)
    mean = col_sum / m
    var = jnp.maximum(col_ssq / m - mean * mean, 0.0)    # biased var (PyTorch BN train)
    scale = conv_params["gamma"] * jax.lax.rsqrt(var + _BN_EPS)
    shift = conv_params["beta"] - mean * scale
    out_p = pallas_bn_relu(y_p, scale, shift)
    return out_p[:m, :out_channels].reshape(nb, h, w, out_channels)


# ----------------------------------------------------------------------------
# Parameter construction (deterministic) and one-time matmul-layout preparation.
# ----------------------------------------------------------------------------
def init_raw_params(key, in_channels, out_channels):
    k1, k2, k3, k4 = jax.random.split(key, 4)

    def uni(k, shape, fan_in):
        b = 1.0 / (fan_in ** 0.5)
        return jax.random.uniform(k, shape, jnp.float32, -b, b)

    return {
        "up_w": uni(k1, (in_channels, in_channels, 4, 4), in_channels * 16),
        "up_b": uni(k2, (in_channels,), in_channels * 16),
        "conv_w": uni(k3, (out_channels, in_channels, 3, 3), in_channels * 9),
        # Conv bias exists in the PyTorch module but cancels exactly inside
        # training-mode BatchNorm; kept for the reference, unused in the kernels.
        "conv_b": uni(k4, (out_channels,), in_channels * 9),
        "gamma": jnp.ones((out_channels,), jnp.float32),   # PyTorch BN defaults
        "beta": jnp.zeros((out_channels,), jnp.float32),
    }


def prepare_params(raw, in_channels, out_channels):
    """Hoisted, one-time weight prep: bf16, matmul-layout, lane-padded N only."""
    cin, cout = in_channels, out_channels

    # --- ConvTranspose2d(cin, cin, 4, s=2, p=1): phases packed along N.
    # Patch K ordering is (ky, kx, cin) with ky,kx in {0,1,2} (3x3 window); phase
    # (py, px) only reads window positions (ky=py+dy, kx=px+dx), dy,dx in {0,1}.
    w_t = raw["up_w"]                                      # (cin, cout_t, 4, 4)
    cout_t = w_t.shape[1]
    k_up = 9 * cin
    nt = _round_up(cout_t, 128)
    w_up = jnp.zeros((k_up, 4 * nt), jnp.float32)
    up_shift = jnp.zeros((1, 4 * nt), jnp.float32)
    for py in (0, 1):
        for px in (0, 1):
            p = 2 * py + px
            for dy in (0, 1):
                for dx in (0, 1):
                    ky, kx = py + dy, px + dx
                    tap = w_t[:, :, _PHASE_TAPS[py][dy], _PHASE_TAPS[px][dx]]
                    r0 = (ky * 3 + kx) * cin
                    w_up = w_up.at[r0:r0 + cin, p * nt:p * nt + cout_t].set(tap)
            up_shift = up_shift.at[0, p * nt:p * nt + cout_t].set(raw["up_b"])

    # --- Conv2d(cin, cout, 3, s=1, p=1) feeding BatchNorm + ReLU.
    k_c = 9 * cin
    np_c = _round_up(cout, 128)
    wm_c = jnp.transpose(raw["conv_w"], (2, 3, 1, 0)).reshape(k_c, cout)
    w_c = jnp.zeros((k_c, np_c), jnp.float32).at[:, :cout].set(wm_c)
    gamma_p = jnp.zeros((np_c,), jnp.float32).at[:cout].set(raw["gamma"])
    beta_p = jnp.zeros((np_c,), jnp.float32).at[:cout].set(raw["beta"])

    return {
        "up": {"w": w_up.astype(jnp.bfloat16), "shift": up_shift},
        "conv": {"w": w_c.astype(jnp.bfloat16), "gamma": gamma_p, "beta": beta_p,
                 "shift0": jnp.zeros((1, np_c), jnp.float32)},
    }


# ----------------------------------------------------------------------------
# Forward pass (matches UpConv.forward) and a pure-XLA f32 reference.
# ----------------------------------------------------------------------------
def upconv_forward(params, x, *, out_channels):
    """x: NCHW float32. Returns NCHW (N, out_channels, 2H, 2W) float32."""
    x = jnp.transpose(x, (0, 2, 3, 1)).astype(jnp.bfloat16)   # NCHW -> NHWC, bf16
    x = conv_transpose4x4_s2(x, params["up"])                  # self.up
    x = conv3x3_bn_relu(x, params["conv"], out_channels)       # self.conv
    return jnp.transpose(x, (0, 3, 1, 2))                      # NHWC -> NCHW


def reference_forward(raw, x):
    """f32 XLA reference: ConvTranspose2d -> Conv2d(+bias) -> BN(train) -> ReLU."""
    # ConvTranspose2d(k=4,s=2,p=1) == conv(lhs_dilation=2, pad=k-1-p=2, flipped kernel).
    w_eq = jnp.transpose(raw["up_w"][:, :, ::-1, ::-1], (1, 0, 2, 3))
    y = jax.lax.conv_general_dilated(
        x, w_eq, window_strides=(1, 1), padding=((2, 2), (2, 2)),
        lhs_dilation=(2, 2), dimension_numbers=("NCHW", "OIHW", "NCHW"))
    y = y + raw["up_b"].reshape(1, -1, 1, 1)
    z = jax.lax.conv_general_dilated(
        y, raw["conv_w"], window_strides=(1, 1), padding=((1, 1), (1, 1)),
        dimension_numbers=("NCHW", "OIHW", "NCHW"))
    z = z + raw["conv_b"].reshape(1, -1, 1, 1)
    mean = z.mean(axis=(0, 2, 3), keepdims=True)
    var = jnp.mean((z - mean) ** 2, axis=(0, 2, 3), keepdims=True)
    zn = (z - mean) * jax.lax.rsqrt(var + _BN_EPS)
    zn = zn * raw["gamma"].reshape(1, -1, 1, 1) + raw["beta"].reshape(1, -1, 1, 1)
    return jnp.maximum(zn, 0.0)


if __name__ == "__main__":
    key = jax.random.PRNGKey(0)
    pkey, xkey = jax.random.split(key)

    B, Cin, Cout, H, W = 2, 4, 8, 16, 16

    raw = init_raw_params(pkey, Cin, Cout)
    params = prepare_params(raw, Cin, Cout)   # bf16 matmul-layout weights (hoisted)

    x = jax.random.normal(xkey, (B, Cin, H, W), jnp.float32)

    fwd = jax.jit(upconv_forward, static_argnames=("out_channels",))
    out = jax.block_until_ready(fwd(params, x, out_channels=Cout))

    assert out.shape == (B, Cout, 2 * H, 2 * W), out.shape
    assert bool(jnp.all(jnp.isfinite(out)))
    assert bool(jnp.all(out >= 0.0))          # ReLU output

    ref = jax.block_until_ready(jax.jit(reference_forward)(raw, x))
    max_err = float(jnp.max(jnp.abs(out - ref)))
    assert max_err < 0.2, f"max abs err vs f32 reference = {max_err}"  # bf16 tolerance

    print("KERNEL_OK")
</pallas_src>

<mosaic_0001>
module attributes {stable_mosaic.version = 11 : i64} {
  func.func @_matmul_fused_kernel(%arg0: i32, %arg1: i32, %arg2: i32, %arg3: memref<512x36xbf16, #tpu.memory_space<vmem>>, %arg4: memref<36x256xbf16, #tpu.memory_space<vmem>>, %arg5: memref<1x256xf32, #tpu.memory_space<vmem>>, %arg6: memref<512x256xbf16, #tpu.memory_space<vmem>>, %arg7: memref<8x256xf32, #tpu.memory_space<vmem>>, %arg8: memref<8x256xf32, #tpu.memory_space<vmem>>, %arg9: memref<512x256xf32, #tpu.memory_space<vmem>>) attributes {dimension_semantics = [#tpu.dimension_semantics<parallel>, #tpu.dimension_semantics<parallel>, #tpu.dimension_semantics<arbitrary>], iteration_bounds = array<i64: 1, 2, 1>, scalar_prefetch = 0 : i64, scratch_operands = 1 : i64, tpu.core_type = #tpu.core_type<tc>, window_params = [{transform_indices = @transform_0, window_bounds = array<i64: 512, 36>}, {transform_indices = @transform_1, window_bounds = array<i64: 36, 256>}, {transform_indices = @transform_2, window_bounds = array<i64: 1, 256>}, {transform_indices = @transform_3, window_bounds = array<i64: 512, 256>}, {transform_indices = @transform_4, window_bounds = array<i64: 8, 256>}, {transform_indices = @transform_5, window_bounds = array<i64: 8, 256>}]} {
    %c0_i32 = arith.constant 0 : i32
    %0 = arith.cmpi eq, %arg2, %c0_i32 : i32
    %1 = arith.extui %0 : i1 to i32
    %c0_i32_0 = arith.constant 0 : i32
    %2 = arith.cmpi ne, %1, %c0_i32_0 : i32
    scf.if %2 {
      %cst_10 = arith.constant 0.000000e+00 : f32
      %12 = vector.broadcast %cst_10 : f32 to vector<512x256xf32>
      %c0_11 = arith.constant 0 : index
      %c0_12 = arith.constant 0 : index
      %13 = vector.load %arg9[%c0_11, %c0_12] : memref<512x256xf32, #tpu.memory_space<vmem>>, vector<512x256xf32>
      tpu.vector_store %arg9[%c0_11, %c0_12], %12 {strides = array<i32>} : memref<512x256xf32, #tpu.memory_space<vmem>>, vector<512x256xf32>,
    } else {
    }
    %c0 = arith.constant 0 : index
    %c0_1 = arith.constant 0 : index
    %3 = vector.load %arg9[%c0, %c0_1] : memref<512x256xf32, #tpu.memory_space<vmem>>, vector<512x256xf32>
    %c0_2 = arith.constant 0 : index
    %c0_3 = arith.constant 0 : index
    %4 = vector.load %arg3[%c0_2, %c0_3] : memref<512x36xbf16, #tpu.memory_space<vmem>>, vector<512x36xbf16>
    %c0_4 = arith.constant 0 : index
    %c0_5 = arith.constant 0 : index
    %5 = vector.load %arg4[%c0_4, %c0_5] : memref<36x256xbf16, #tpu.memory_space<vmem>>, vector<36x256xbf16>
    %cst = arith.constant dense<0.000000e+00> : vector<512x256xf32>
    %6 = tpu.matmul %4, %5, %cst {dimension_numbers = #tpu.dot_dimension_numbers<[1], [0], [0], [1], [0, 0, 1, 1], [], []>} : vector<512x36xbf16>, vector<36x256xbf16>, vector<512x256xf32> -> vector<512x256xf32>
    %7 = arith.addf %3, %6 : vector<512x256xf32>
    %c0_6 = arith.constant 0 : index
    %c0_7 = arith.constant 0 : index
    %8 = vector.load %arg9[%c0_6, %c0_7] : memref<512x256xf32, #tpu.memory_space<vmem>>, vector<512x256xf32>
    tpu.vector_store %arg9[%c0_6, %c0_7], %7 {strides = array<i32>} : memref<512x256xf32, #tpu.memory_space<vmem>>, vector<512x256xf32>,
    %c0_i32_8 = arith.constant 0 : i32
    %9 = arith.cmpi eq, %arg2, %c0_i32_8 : i32
    %10 = arith.extui %9 : i1 to i32
    %c0_i32_9 = arith.constant 0 : i32
    %11 = arith.cmpi ne, %10, %c0_i32_9 : i32
    scf.if %11 {
      %c0_10 = arith.constant 0 : index
      %c0_11 = arith.constant 0 : index
      %12 = vector.load %arg9[%c0_10, %c0_11] : memref<512x256xf32, #tpu.memory_space<vmem>>, vector<512x256xf32>
      %c0_12 = arith.constant 0 : index
      %c0_13 = arith.constant 0 : index
      %13 = vector.load %arg5[%c0_12, %c0_13] : memref<1x256xf32, #tpu.memory_space<vmem>>, vector<1x256xf32>
      %14 = vector.broadcast %13 : vector<1x256xf32> to vector<512x256xf32>
      %15 = arith.addf %12, %14 : vector<512x256xf32>
      %16 = arith.truncf %15 : vector<512x256xf32> to vector<512x256xbf16>
      %c0_14 = arith.constant 0 : index
      %c0_15 = arith.constant 0 : index
      %17 = vector.load %arg6[%c0_14, %c0_15] : memref<512x256xbf16, #tpu.memory_space<vmem>>, vector<512x256xbf16>
      tpu.vector_store %arg6[%c0_14, %c0_15], %16 {strides = array<i32>} : memref<512x256xbf16, #tpu.memory_space<vmem>>, vector<512x256xbf16>,
      %cst_16 = arith.constant dense<0.000000e+00> : vector<256xf32>
      %18 = vector.multi_reduction <add>, %15, %cst_16 [0] : vector<512x256xf32> to vector<256xf32>
      %19 = vector.shape_cast %18 : vector<256xf32> to vector<1x256xf32>
      %20 = vector.shape_cast %19 : vector<1x256xf32> to vector<1x256xf32>
      %21 = vector.broadcast %20 : vector<1x256xf32> to vector<8x256xf32>
      %c0_17 = arith.constant 0 : index
      %c0_18 = arith.constant 0 : index
      %22 = vector.load %arg7[%c0_17, %c0_18] : memref<8x256xf32, #tpu.memory_space<vmem>>, vector<8x256xf32>
      tpu.vector_store %arg7[%c0_17, %c0_18], %21 {strides = array<i32>} : memref<8x256xf32, #tpu.memory_space<vmem>>, vector<8x256xf32>,
      %23 = arith.mulf %15, %15 : vector<512x256xf32>
      %cst_19 = arith.constant dense<0.000000e+00> : vector<256xf32>
      %24 = vector.multi_reduction <add>, %23, %cst_19 [0] : vector<512x256xf32> to vector<256xf32>
      %25 = vector.shape_cast %24 : vector<256xf32> to vector<1x256xf32>
      %26 = vector.shape_cast %25 : vector<1x256xf32> to vector<1x256xf32>
      %27 = vector.broadcast %26 : vector<1x256xf32> to vector<8x256xf32>
      %c0_20 = arith.constant 0 : index
      %c0_21 = arith.constant 0 : index
      %28 = vector.load %arg8[%c0_20, %c0_21] : memref<8x256xf32, #tpu.memory_space<vmem>>, vector<8x256xf32>
      tpu.vector_store %arg8[%c0_20, %c0_21], %27 {strides = array<i32>} : memref<8x256xf32, #tpu.memory_space<vmem>>, vector<8x256xf32>,
    } else {
    }
    return
  }
  func.func @transform_0(%arg0: i32, %arg1: i32, %arg2: i32) -> (i32, i32) {
    %c0_i32 = arith.constant 0 : i32
    return %arg0, %arg2 : i32, i32
  }
  func.func @transform_1(%arg0: i32, %arg1: i32, %arg2: i32) -> (i32, i32) {
    %c0_i32 = arith.constant 0 : i32
    return %arg2, %arg1 : i32, i32
  }
  func.func @transform_2(%arg0: i32, %arg1: i32, %arg2: i32) -> (i32, i32) {
    %c0_i32 = arith.constant 0 : i32
    %c0_i32_0 = arith.constant 0 : i32
    return %c0_i32, %arg1 : i32, i32
  }
  func.func @transform_3(%arg0: i32, %arg1: i32, %arg2: i32) -> (i32, i32) {
    %c0_i32 = arith.constant 0 : i32
    return %arg0, %arg1 : i32, i32
  }
  func.func @transform_4(%arg0: i32, %arg1: i32, %arg2: i32) -> (i32, i32) {
    %c0_i32 = arith.constant 0 : i32
    return %arg0, %arg1 : i32, i32
  }
  func.func @transform_5(%arg0: i32, %arg1: i32, %arg2: i32) -> (i32, i32) {
    %c0_i32 = arith.constant 0 : i32
    return %arg0, %arg1 : i32, i32
  }
}

module attributes {stable_mosaic.version = 11 : i64} {
  func.func @_matmul_fused_kernel(%arg0: i32, %arg1: i32, %arg2: i32, %arg3: memref<512x36xbf16, #tpu.memory_space<vmem>>, %arg4: memref<36x128xbf16, #tpu.memory_space<vmem>>, %arg5: memref<1x128xf32, #tpu.memory_space<vmem>>, %arg6: memref<512x128xbf16, #tpu.memory_space<vmem>>, %arg7: memref<8x128xf32, #tpu.memory_space<vmem>>, %arg8: memref<8x128xf32, #tpu.memory_space<vmem>>, %arg9: memref<512x128xf32, #tpu.memory_space<vmem>>) attributes {dimension_semantics = [#tpu.dimension_semantics<parallel>, #tpu.dimension_semantics<parallel>, #tpu.dimension_semantics<arbitrary>], iteration_bounds = array<i64: 4, 1, 1>, scalar_prefetch = 0 : i64, scratch_operands = 1 : i64, tpu.core_type = #tpu.core_type<tc>, window_params = [{transform_indices = @transform_0, window_bounds = array<i64: 512, 36>}, {transform_indices = @transform_1, window_bounds = array<i64: 36, 128>}, {transform_indices = @transform_2, window_bounds = array<i64: 1, 128>}, {transform_indices = @transform_3, window_bounds = array<i64: 512, 128>}, {transform_indices = @transform_4, window_bounds = array<i64: 8, 128>}, {transform_indices = @transform_5, window_bounds = array<i64: 8, 128>}]} {
    %c0_i32 = arith.constant 0 : i32
    %0 = arith.cmpi eq, %arg2, %c0_i32 : i32
    %1 = arith.extui %0 : i1 to i32
    %c0_i32_0 = arith.constant 0 : i32
    %2 = arith.cmpi ne, %1, %c0_i32_0 : i32
    scf.if %2 {
      %cst_10 = arith.constant 0.000000e+00 : f32
      %12 = vector.broadcast %cst_10 : f32 to vector<512x128xf32>
      %c0_11 = arith.constant 0 : index
      %c0_12 = arith.constant 0 : index
      %13 = vector.load %arg9[%c0_11, %c0_12] : memref<512x128xf32, #tpu.memory_space<vmem>>, vector<512x128xf32>
      tpu.vector_store %arg9[%c0_11, %c0_12], %12 {strides = array<i32>} : memref<512x128xf32, #tpu.memory_space<vmem>>, vector<512x128xf32>,
    } else {
    }
    %c0 = arith.constant 0 : index
    %c0_1 = arith.constant 0 : index
    %3 = vector.load %arg9[%c0, %c0_1] : memref<512x128xf32, #tpu.memory_space<vmem>>, vector<512x128xf32>
    %c0_2 = arith.constant 0 : index
    %c0_3 = arith.constant 0 : index
    %4 = vector.load %arg3[%c0_2, %c0_3] : memref<512x36xbf16, #tpu.memory_space<vmem>>, vector<512x36xbf16>
    %c0_4 = arith.constant 0 : index
    %c0_5 = arith.constant 0 : index
    %5 = vector.load %arg4[%c0_4, %c0_5] : memref<36x128xbf16, #tpu.memory_space<vmem>>, vector<36x128xbf16>
    %cst = arith.constant dense<0.000000e+00> : vector<512x128xf32>
    %6 = tpu.matmul %4, %5, %cst {dimension_numbers = #tpu.dot_dimension_numbers<[1], [0], [0], [1], [0, 0, 1, 1], [], []>} : vector<512x36xbf16>, vector<36x128xbf16>, vector<512x128xf32> -> vector<512x128xf32>
    %7 = arith.addf %3, %6 : vector<512x128xf32>
    %c0_6 = arith.constant 0 : index
    %c0_7 = arith.constant 0 : index
    %8 = vector.load %arg9[%c0_6, %c0_7] : memref<512x128xf32, #tpu.memory_space<vmem>>, vector<512x128xf32>
    tpu.vector_store %arg9[%c0_6, %c0_7], %7 {strides = array<i32>} : memref<512x128xf32, #tpu.memory_space<vmem>>, vector<512x128xf32>,
    %c0_i32_8 = arith.constant 0 : i32
    %9 = arith.cmpi eq, %arg2, %c0_i32_8 : i32
    %10 = arith.extui %9 : i1 to i32
    %c0_i32_9 = arith.constant 0 : i32
    %11 = arith.cmpi ne, %10, %c0_i32_9 : i32
    scf.if %11 {
      %c0_10 = arith.constant 0 : index
      %c0_11 = arith.constant 0 : index
      %12 = vector.load %arg9[%c0_10, %c0_11] : memref<512x128xf32, #tpu.memory_space<vmem>>, vector<512x128xf32>
      %c0_12 = arith.constant 0 : index
      %c0_13 = arith.constant 0 : index
      %13 = vector.load %arg5[%c0_12, %c0_13] : memref<1x128xf32, #tpu.memory_space<vmem>>, vector<1x128xf32>
      %14 = vector.broadcast %13 : vector<1x128xf32> to vector<512x128xf32>
      %15 = arith.addf %12, %14 : vector<512x128xf32>
      %16 = arith.truncf %15 : vector<512x128xf32> to vector<512x128xbf16>
      %c0_14 = arith.constant 0 : index
      %c0_15 = arith.constant 0 : index
      %17 = vector.load %arg6[%c0_14, %c0_15] : memref<512x128xbf16, #tpu.memory_space<vmem>>, vector<512x128xbf16>
      tpu.vector_store %arg6[%c0_14, %c0_15], %16 {strides = array<i32>} : memref<512x128xbf16, #tpu.memory_space<vmem>>, vector<512x128xbf16>,
      %cst_16 = arith.constant dense<0.000000e+00> : vector<128xf32>
      %18 = vector.multi_reduction <add>, %15, %cst_16 [0] : vector<512x128xf32> to vector<128xf32>
      %19 = vector.shape_cast %18 : vector<128xf32> to vector<1x128xf32>
      %20 = vector.shape_cast %19 : vector<1x128xf32> to vector<1x128xf32>
      %21 = vector.broadcast %20 : vector<1x128xf32> to vector<8x128xf32>
      %c0_17 = arith.constant 0 : index
      %c0_18 = arith.constant 0 : index
      %22 = vector.load %arg7[%c0_17, %c0_18] : memref<8x128xf32, #tpu.memory_space<vmem>>, vector<8x128xf32>
      tpu.vector_store %arg7[%c0_17, %c0_18], %21 {strides = array<i32>} : memref<8x128xf32, #tpu.memory_space<vmem>>, vector<8x128xf32>,
      %23 = arith.mulf %15, %15 : vector<512x128xf32>
      %cst_19 = arith.constant dense<0.000000e+00> : vector<128xf32>
      %24 = vector.multi_reduction <add>, %23, %cst_19 [0] : vector<512x128xf32> to vector<128xf32>
      %25 = vector.shape_cast %24 : vector<128xf32> to vector<1x128xf32>
      %26 = vector.shape_cast %25 : vector<1x128xf32> to vector<1x128xf32>
      %27 = vector.broadcast %26 : vector<1x128xf32> to vector<8x128xf32>
      %c0_20 = arith.constant 0 : index
      %c0_21 = arith.constant 0 : index
      %28 = vector.load %arg8[%c0_20, %c0_21] : memref<8x128xf32, #tpu.memory_space<vmem>>, vector<8x128xf32>
      tpu.vector_store %arg8[%c0_20, %c0_21], %27 {strides = array<i32>} : memref<8x128xf32, #tpu.memory_space<vmem>>, vector<8x128xf32>,
    } else {
    }
    return
  }
  func.func @transform_0(%arg0: i32, %arg1: i32, %arg2: i32) -> (i32, i32) {
    %c0_i32 = arith.constant 0 : i32
    return %arg0, %arg2 : i32, i32
  }
  func.func @transform_1(%arg0: i32, %arg1: i32, %arg2: i32) -> (i32, i32) {
    %c0_i32 = arith.constant 0 : i32
    return %arg2, %arg1 : i32, i32
  }
  func.func @transform_2(%arg0: i32, %arg1: i32, %arg2: i32) -> (i32, i32) {
    %c0_i32 = arith.constant 0 : i32
    %c0_i32_0 = arith.constant 0 : i32
    return %c0_i32, %arg1 : i32, i32
  }
  func.func @transform_3(%arg0: i32, %arg1: i32, %arg2: i32) -> (i32, i32) {
    %c0_i32 = arith.constant 0 : i32
    return %arg0, %arg1 : i32, i32
  }
  func.func @transform_4(%arg0: i32, %arg1: i32, %arg2: i32) -> (i32, i32) {
    %c0_i32 = arith.constant 0 : i32
    return %arg0, %arg1 : i32, i32
  }
  func.func @transform_5(%arg0: i32, %arg1: i32, %arg2: i32) -> (i32, i32) {
    %c0_i32 = arith.constant 0 : i32
    return %arg0, %arg1 : i32, i32
  }
}

module attributes {stable_mosaic.version = 11 : i64} {
  func.func @_bn_relu_kernel(%arg0: i32, %arg1: memref<2048x128xbf16, #tpu.memory_space<vmem>>, %arg2: memref<1x128xf32, #tpu.memory_space<vmem>>, %arg3: memref<1x128xf32, #tpu.memory_space<vmem>>, %arg4: memref<2048x128xf32, #tpu.memory_space<vmem>>) attributes {dimension_semantics = [#tpu.dimension_semantics<parallel>], iteration_bounds = array<i64: 1>, scalar_prefetch = 0 : i64, scratch_operands = 0 : i64, tpu.core_type = #tpu.core_type<tc>, window_params = [{transform_indices = @transform_0, window_bounds = array<i64: 2048, 128>}, {pipeline_mode = #tpu.pipeline_mode<synchronous>, transform_indices = @transform_1, window_bounds = array<i64: 1, 128>}, {pipeline_mode = #tpu.pipeline_mode<synchronous>, transform_indices = @transform_2, window_bounds = array<i64: 1, 128>}, {transform_indices = @transform_3, window_bounds = array<i64: 2048, 128>}]} {
    %c0 = arith.constant 0 : index
    %c0_0 = arith.constant 0 : index
    %0 = vector.load %arg1[%c0, %c0_0] : memref<2048x128xbf16, #tpu.memory_space<vmem>>, vector<2048x128xbf16>
    %1 = arith.extf %0 : vector<2048x128xbf16> to vector<2048x128xf32>
    %c0_1 = arith.constant 0 : index
    %c0_2 = arith.constant 0 : index
    %2 = vector.load %arg2[%c0_1, %c0_2] : memref<1x128xf32, #tpu.memory_space<vmem>>, vector<1x128xf32>
    %3 = vector.broadcast %2 : vector<1x128xf32> to vector<2048x128xf32>
    %4 = arith.mulf %1, %3 : vector<2048x128xf32>
    %c0_3 = arith.constant 0 : index
    %c0_4 = arith.constant 0 : index
    %5 = vector.load %arg3[%c0_3, %c0_4] : memref<1x128xf32, #tpu.memory_space<vmem>>, vector<1x128xf32>
    %6 = vector.broadcast %5 : vector<1x128xf32> to vector<2048x128xf32>
    %7 = arith.addf %4, %6 : vector<2048x128xf32>
    %cst = arith.constant 0.000000e+00 : f32
    %8 = vector.broadcast %cst : f32 to vector<2048x128xf32>
    %9 = arith.maximumf %7, %8 : vector<2048x128xf32>
    %c0_5 = arith.constant 0 : index
    %c0_6 = arith.constant 0 : index
    %10 = vector.load %arg4[%c0_5, %c0_6] : memref<2048x128xf32, #tpu.memory_space<vmem>>, vector<2048x128xf32>
    tpu.vector_store %arg4[%c0_5, %c0_6], %9 {strides = array<i32>} : memref<2048x128xf32, #tpu.memory_space<vmem>>, vector<2048x128xf32>,
    return
  }
  func.func @transform_0(%arg0: i32) -> (i32, i32) {
    %c0_i32 = arith.constant 0 : i32
    %c0_i32_0 = arith.constant 0 : i32
    return %arg0, %c0_i32 : i32, i32
  }
  func.func @transform_1(%arg0: i32) -> (i32, i32) {
    %c0_i32 = arith.constant 0 : i32
    %c0_i32_0 = arith.constant 0 : i32
    %c0_i32_1 = arith.constant 0 : i32
    return %c0_i32, %c0_i32_0 : i32, i32
  }
  func.func @transform_2(%arg0: i32) -> (i32, i32) {
    %c0_i32 = arith.constant 0 : i32
    %c0_i32_0 = arith.constant 0 : i32
    %c0_i32_1 = arith.constant 0 : i32
    return %c0_i32, %c0_i32_0 : i32, i32
  }
  func.func @transform_3(%arg0: i32) -> (i32, i32) {
    %c0_i32 = arith.constant 0 : i32
    %c0_i32_0 = arith.constant 0 : i32
    return %arg0, %c0_i32 : i32, i32
  }
}

</mosaic_0001>

<llo_original>
// kernel: upconv_forward.3
$region0: #{upconv_forward.3}
  #allocation0 [shape = 'u32[]', space=smem, size = 0x4, offset = 0x4, fixed_abs, tag = 'smem constant byte address 0x4 - core index']
  #allocation1 [shape = 'u32[144,128]{1,0:T(1,128)}', space=vmem, size = 0x12000, scoped, tag = 'internal scratch']
  #allocation2 [shape = 'f32[512,256]{1,0:T(8,128)}', space=vmem, size = 0x80000, scoped, tag = 'scratch operand']
  %s0 = inlined_call_operand.vmem [shape: bf16[512,36], index: 0, kind: input, shape index: {}]
  %s1 = inlined_call_operand.vmem [shape: bf16[36,512], index: 1, kind: input, shape index: {}]
  %s2 = inlined_call_operand.vmem [shape: f32[1,512], index: 2, kind: input, shape index: {}]
  %s3 = inlined_call_operand.vmem [shape: bf16[512,512], index: 3, kind: output, shape index: {0}]
  %s4 = inlined_call_operand.hbm [shape: f32[8,512], index: 4, kind: output, shape index: {1}]
  %s5 = inlined_call_operand.hbm [shape: f32[8,512], index: 5, kind: output, shape index: {2}]
  %6 = xla_tuple %s3, %s4, %s5
  %s7 = sld [smem:[#allocation0]]
  $region141: #{upconv_forward.3} parent=0
    _
  %s9 = ssub.s32 1, %s7
  %s10 = scalar_select 0, %s9, %s7
  $region1: #{upconv_forward.3} parent=0
    #allocation3 [shape = 'u8[40960]{0}', space=vmem, size = 0xa000, scoped, tag = 'input window, operand 1']
    #allocation4 [shape = 'u8[524288]{0}', space=vmem, size = 0x80000, scoped, tag = 'output window, operand 0']
    #allocation5 [shape = 'u8[16384]{0}', space=vmem, size = 0x4000, scoped, tag = 'output window, operand 1']
    #allocation6 [shape = 's32[2]{0}', space=sflag, size = 0x8, scoped, tag = 'scoped memory for upconv_forward.3']
    #allocation7 [shape = 'u8[16384]{0}', space=vmem, size = 0x4000, scoped, tag = 'output window, operand 2']
    #allocation8 [shape = 's32[2]{0}', space=sflag, size = 0x8, scoped, tag = 'scoped memory for upconv_forward.3']
    %11 = vsyncpa [#allocation6], 0
    %s12 = scalar_lea.sflag [#allocation6], 1
    %13 = vsyncpa %s12, 0
    %14 = vsyncpa [#allocation8], 0
    %s15 = scalar_lea.sflag [#allocation8], 1
    %16 = vsyncpa %s15, 0
    loop: start=0, step=1, limit=4
    $region2: #{upconv_forward.3} parent=1 // loop_pre_header
      _
    $region3: #{upconv_forward.3} parent=1 // loop_header
      %s18 = sphi 0, %s22
      %p19 = scmp.ge.s32.totalorder %s18, 4
      %s25 = sphi 0, %s44
      %s26 = sphi 0, %s40
      %s27 = sphi 0, %s36
      %s28 = sphi 0, %s25
      %s29 = sphi 0, %s26
      %s30 = sphi 0, %s27
      %s31 = sphi 0, %s28
      %s32 = sphi 0, %s29
      %s33 = sphi 0, %s30
      %s49 = sphi 0, %s51
      %s52 = sphi 0, %s49
      %s53 = sphi 0, %s52
      %s69 = sphi 0, %s53
      %s77 = sphi 0, %s79
      %s80 = sphi 0, %s77
      %s81 = sphi 0, %s80
      %s97 = sphi 0, %s81
      %s103 = sphi 0, %s105
      %s106 = sphi 0, %s103
      %s107 = sphi 0, %s106
      %s123 = sphi 0, %s107
      %s131 = sphi 0, %s133
      %s134 = sphi 0, %s131
      %s135 = sphi 0, %s134
      %s151 = sphi 0, %s135
      %s159 = sphi 0, %s161
      %s162 = sphi 0, %s159
      %s163 = sphi 0, %s162
      %s179 = sphi 0, %s163
      %s187 = sphi 0, %s189
      %s190 = sphi 0, %s187
      %s191 = sphi 0, %s190
      %s207 = sphi 0, %s191
    $region4: #{upconv_forward.3} parent=1 // loop_header_branch
      %21 = sbr.rel (%p19) target = $region8
    $region5: #{upconv_forward.3} parent=1 // loop_body
      %s23 = ssub.s32 %s18, 1
      %s24 = ssub.s32 %s18, 2
      %s34 = sadd.s32 1, %s27
      %p35 = scmp.ge.s32.totalorder %s34, 1
      %s36 = scalar_select %p35, 0, %s34
      %s37 = sadd.s32 1, %s26
      %s38 = scalar_select %p35, %s37, %s26
      %p39 = scmp.ge.s32.totalorder %s38, 2
      %s40 = scalar_select %p39, 0, %s38
      %s41 = sadd.s32 1, %s25
      %s42 = scalar_select %p39, %s41, %s25
      %p43 = scmp.ge.s32.totalorder %s42, 1
      %s44 = scalar_select %p43, 0, %s42
      %s45 = ssub.s32 %s25, %s44
      %s46 = ssub.s32 %s27, %s36
      %s47 = sor.u32 %s45, %s46
      %p48 = scmp.eq.s32.totalorder %s47, 0
      %s50 = sadd.s32 %s49, 1
      %s51 = scalar_select %p48, %s49, %s50
      %p54 = pneg %p48
      %p55 = scmp.eq.s32.totalorder %s18, 1
      %p56 = por %p54, %p55
      %p57 = scmp.ne.s32.totalorder %s49, %s52
      %p58 = scmp.eq.s32.totalorder %s18, 0
      %p59 = por %p57, %p58
      %p60 = scmp.ne.s32.totalorder %s49, %s52
      %p61 = scmp.eq.s32.totalorder %s23, 1
      %p62 = por %p60, %p61
      %p63 = scmp.ne.s32.totalorder %s52, %s53
      %p64 = scmp.eq.s32.totalorder %s23, 0
      %p65 = por %p63, %p64
      %p66 = scmp.ne.s32.totalorder %s52, %s53
      %p67 = scmp.eq.s32.totalorder %s24, 1
      %p68 = por %p66, %p67
      %p70 = scmp.ne.s32.totalorder %s53, %s69
      %p71 = scmp.eq.s32.totalorder %s24, 0
      %p72 = por %p70, %p71
      %s73 = ssub.s32 %s27, %s36
      %s74 = ssub.s32 %s26, %s40
      %s75 = sor.u32 %s73, %s74
      %p76 = scmp.eq.s32.totalorder %s75, 0
      %s78 = sadd.s32 %s77, 1
      %s79 = scalar_select %p76, %s77, %s78
      %p82 = pneg %p76
      %p83 = scmp.eq.s32.totalorder %s18, 1
      %p84 = por %p82, %p83
      %p85 = scmp.ne.s32.totalorder %s77, %s80
      %p86 = scmp.eq.s32.totalorder %s18, 0
      %p87 = por %p85, %p86
      %p88 = scmp.ne.s32.totalorder %s77, %s80
      %p89 = scmp.eq.s32.totalorder %s23, 1
      %p90 = por %p88, %p89
      %p91 = scmp.ne.s32.totalorder %s80, %s81
      %p92 = scmp.eq.s32.totalorder %s23, 0
      %p93 = por %p91, %p92
      %p94 = scmp.ne.s32.totalorder %s80, %s81
      %p95 = scmp.eq.s32.totalorder %s24, 1
      %p96 = por %p94, %p95
      %p98 = scmp.ne.s32.totalorder %s81, %s97
      %p99 = scmp.eq.s32.totalorder %s24, 0
      %p100 = por %p98, %p99
      %s101 = ssub.s32 %s26, %s40
      %p102 = scmp.eq.s32.totalorder %s101, 0
      %s104 = sadd.s32 %s103, 1
      %s105 = scalar_select %p102, %s103, %s104
      %p108 = pneg %p102
      %p109 = scmp.eq.s32.totalorder %s18, 1
      %p110 = por %p108, %p109
      %p111 = scmp.ne.s32.totalorder %s103, %s106
      %p112 = scmp.eq.s32.totalorder %s18, 0
      %p113 = por %p111, %p112
      %p114 = scmp.ne.s32.totalorder %s103, %s106
      %p115 = scmp.eq.s32.totalorder %s23, 1
      %p116 = por %p114, %p115
      %p117 = scmp.ne.s32.totalorder %s106, %s107
      %p118 = scmp.eq.s32.totalorder %s23, 0
      %p119 = por %p117, %p118
      %p120 = scmp.ne.s32.totalorder %s106, %s107
      %p121 = scmp.eq.s32.totalorder %s24, 1
      %p122 = por %p120, %p121
      %p124 = scmp.ne.s32.totalorder %s107, %s123
      %p125 = scmp.eq.s32.totalorder %s24, 0
      %p126 = por %p124, %p125
      %s127 = ssub.s32 %s25, %s44
      %s128 = ssub.s32 %s26, %s40
      %s129 = sor.u32 %s127, %s128
      %p130 = scmp.eq.s32.totalorder %s129, 0
      %s132 = sadd.s32 %s131, 1
      %s133 = scalar_select %p130, %s131, %s132
      %p136 = pneg %p130
      %p137 = scmp.eq.s32.totalorder %s18, 1
      %p138 = por %p136, %p137
      %p139 = scmp.ne.s32.totalorder %s131, %s134
      %p140 = scmp.eq.s32.totalorder %s18, 0
      %p141 = por %p139, %p140
      %p142 = scmp.ne.s32.totalorder %s131, %s134
      %p143 = scmp.eq.s32.totalorder %s23, 1
      %p144 = por %p142, %p143
      %p145 = scmp.ne.s32.totalorder %s134, %s135
      %p146 = scmp.eq.s32.totalorder %s23, 0
      %p147 = por %p145, %p146
      %p148 = scmp.ne.s32.totalorder %s134, %s135
      %p149 = scmp.eq.s32.totalorder %s24, 1
      %p150 = por %p148, %p149
      %p152 = scmp.ne.s32.totalorder %s135, %s151
      %p153 = scmp.eq.s32.totalorder %s24, 0
      %p154 = por %p152, %p153
      %s155 = ssub.s32 %s25, %s44
      %s156 = ssub.s32 %s26, %s40
      %s157 = sor.u32 %s155, %s156
      %p158 = scmp.eq.s32.totalorder %s157, 0
      %s160 = sadd.s32 %s159, 1
      %s161 = scalar_select %p158, %s159, %s160
      %p164 = pneg %p158
      %p165 = scmp.eq.s32.totalorder %s18, 1
      %p166 = por %p164, %p165
      %p167 = scmp.ne.s32.totalorder %s159, %s162
      %p168 = scmp.eq.s32.totalorder %s18, 0
      %p169 = por %p167, %p168
      %p170 = scmp.ne.s32.totalorder %s159, %s162
      %p171 = scmp.eq.s32.totalorder %s23, 1
      %p172 = por %p170, %p171
      %p173 = scmp.ne.s32.totalorder %s162, %s163
      %p174 = scmp.eq.s32.totalorder %s23, 0
      %p175 = por %p173, %p174
      %p176 = scmp.ne.s32.totalorder %s162, %s163
      %p177 = scmp.eq.s32.totalorder %s24, 1
      %p178 = por %p176, %p177
      %p180 = scmp.ne.s32.totalorder %s163, %s179
      %p181 = scmp.eq.s32.totalorder %s24, 0
      %p182 = por %p180, %p181
      %s183 = ssub.s32 %s25, %s44
      %s184 = ssub.s32 %s26, %s40
      %s185 = sor.u32 %s183, %s184
      %p186 = scmp.eq.s32.totalorder %s185, 0
      %s188 = sadd.s32 %s187, 1
      %s189 = scalar_select %p186, %s187, %s188
      %p192 = pneg %p186
      %p193 = scmp.eq.s32.totalorder %s18, 1
      %p194 = por %p192, %p193
      %p195 = scmp.ne.s32.totalorder %s187, %s190
      %p196 = scmp.eq.s32.totalorder %s18, 0
      %p197 = por %p195, %p196
      %p198 = scmp.ne.s32.totalorder %s187, %s190
      %p199 = scmp.eq.s32.totalorder %s23, 1
      %p200 = por %p198, %p199
      %p201 = scmp.ne.s32.totalorder %s190, %s191
      %p202 = scmp.eq.s32.totalorder %s23, 0
      %p203 = por %p201, %p202
      %p204 = scmp.ne.s32.totalorder %s190, %s191
      %p205 = scmp.eq.s32.totalorder %s24, 1
      %p206 = por %p204, %p205
      %p208 = scmp.ne.s32.totalorder %s191, %s207
      %p209 = scmp.eq.s32.totalorder %s24, 0
      %p210 = por %p208, %p209
      %p211 = scmp.le.s32.totalorder 1, %s18
      %p212 = scmp.lt.s32.totalorder %s18, 3
      %p213 = pnand %p211, %p212
      %p214 = pneg %p213
      // Predicated region
      $region9: #{upconv_forward.3} parent=5 // pred_check
        _
      $region10: #{upconv_forward.3} parent=5 // pred_check_branch
        %216 = sbr.rel (%p213) target = $region12
      $region11: #{upconv_forward.3} parent=5 // pred_region
        %s217 = ssub.s32 %s18, 1
        // Predicated region
        $region13: #{upconv_forward.3} parent=11 // pred_check
          %p218 = pneg %p65
        $region14: #{upconv_forward.3} parent=11 // pred_check_branch
          %220 = sbr.rel (%p218) target = $region16
        $region15: #{upconv_forward.3} parent=11 // pred_region
          %s221 = smul.u32 64, %s28
          %p222 = scmp.lt.s32.totalorder %s221, 63
          %s223 = scalar_select %p222, %s221, 63
          %p224 = scmp.lt.s32.totalorder %s30, 0
          %s225 = scalar_select %p224, %s30, 0
          %s226 = sadd.s32 %s225, %s223
          %s227 = smul.addr %s226, 4
          %s228 = scalar_lea.vmem %s0, %s227
          %s229 = smul.u32 64, %s28
        $region16: #{upconv_forward.3} parent=11 // pred_fallthru
          _
      $region12: #{upconv_forward.3} parent=5 // pred_fallthru
        _
      %p230 = scmp.lt.s32.totalorder %s18, 2
      // Predicated region
      $region17: #{upconv_forward.3} parent=5 // pred_check
        %p231 = pneg %p230
      $region18: #{upconv_forward.3} parent=5 // pred_check_branch
        %233 = sbr.rel (%p231) target = $region20
      $region19: #{upconv_forward.3} parent=5 // pred_region
        // Predicated region
        $region21: #{upconv_forward.3} parent=19 // pred_check
          %p234 = pneg %p87
        $region22: #{upconv_forward.3} parent=19 // pred_check_branch
          %236 = sbr.rel (%p234) target = $region24
        $region23: #{upconv_forward.3} parent=19 // pred_region
          %s237 = sand.u32 %s77, 1
          %s238 = sand.u32 %s77, 1
          %s239 = smul.addr %s238, 40
          %s240 = scalar_lea.vmem [#allocation3], %s239
          %s241 = smul.u32 5, %s27
          %s242 = smul.u32 2, %s26
          %s243 = smul.addr %s241, 4
          %s244 = sadd.s32 %s242, %s243
          %s245 = smul.addr %s244, 4
          %s246 = scalar_lea.vmem %s1, %s245
          // Predicated region
          $region25: #{upconv_forward.3} parent=23 // pred_check
            _
          $region26: #{upconv_forward.3} parent=23 // pred_check_branch
            %248 = sbr.rel (0) target = $region28
          $region27: #{upconv_forward.3} parent=23 // pred_region
            // Predicated region
            $region29: #{upconv_forward.3} parent=27 // pred_check
              _
            $region30: #{upconv_forward.3} parent=27 // pred_check_branch
              %250 = sbr.rel (0) target = $region32
            $region31: #{upconv_forward.3} parent=27 // pred_region
              // Predicated region
              $region44: #{upconv_forward.3} parent=31 // pred_check
                _
              $region45: #{upconv_forward.3} parent=31 // pred_check_branch
                %273 = sbr.rel (0) target = $region47
              $region46: #{upconv_forward.3} parent=31 // pred_region
                loop: start=0, step=1, limit=1
                $region48: #{upconv_forward.3} parent=46 // loop_pre_header
                  _
                $region49: #{upconv_forward.3} parent=46 // loop_header
                  %s275 = sphi 0, %s279
                  %p276 = scmp.ge.s32.totalorder %s275, 1
                  %s280 = sphi %s246, %s246
                  %s281 = sphi %s240, %s240
                $region50: #{upconv_forward.3} parent=46 // loop_header_branch
                  %278 = sbr.rel (%p276) target = $region54
                $region51: #{upconv_forward.3} parent=46 // loop_body
                  %v282 = vld [vmem:[%s280] sm:$0xff]
                  %283 = vst [vmem:[%s281] sm:$0xff] %v282
                  %v284 = vld [vmem:[%s280 + $0x10] sm:$0xff]
                  %285 = vst [vmem:[%s281 + $0x8] sm:$0xff] %v284
                  %v286 = vld [vmem:[%s280 + $0x20] sm:$0xff]
                  %287 = vst [vmem:[%s281 + $0x10] sm:$0xff] %v286
                  %v288 = vld [vmem:[%s280 + $0x30] sm:$0xff]
                  %289 = vst [vmem:[%s281 + $0x18] sm:$0xff] %v288
                  %v290 = vld [vmem:[%s280 + $0x40] sm:$0xff]
                  %291 = vst [vmem:[%s281 + $0x20] sm:$0xff] %v290
                $region52: #{upconv_forward.3} parent=46 // loop_footer
                  %s279 = sadd.s32 1, %s275
                $region53: #{upconv_forward.3} parent=46 // loop_footer_branch
                  %274 = sbr.rel target = $region49
                $region54: #{upconv_forward.3} parent=46 // loop_exit
                  _
              $region47: #{upconv_forward.3} parent=31 // pred_fallthru
                _
              // Predicated region
              $region55: #{upconv_forward.3} parent=31 // pred_check
                _
              $region56: #{upconv_forward.3} parent=31 // pred_check_branch
                %293 = sbr.rel target = $region58
              $region57: #{upconv_forward.3} parent=31 // pred_region
                _
              $region58: #{upconv_forward.3} parent=31 // pred_fallthru
                _
            $region32: #{upconv_forward.3} parent=27 // pred_fallthru
              _
            // Predicated region
            $region33: #{upconv_forward.3} parent=27 // pred_check
              _
            $region34: #{upconv_forward.3} parent=27 // pred_check_branch
              %252 = sbr.rel target = $region36
            $region35: #{upconv_forward.3} parent=27 // pred_region
              loop: start=0, step=1, limit=1
              $region37: #{upconv_forward.3} parent=35 // loop_pre_header
                _
              $region38: #{upconv_forward.3} parent=35 // loop_header
                %s255 = sphi 0, %s259
                %p256 = scmp.ge.s32.totalorder %s255, 1
                %s260 = sphi %s246, %s246
                %s261 = sphi %s240, %s240
              $region39: #{upconv_forward.3} parent=35 // loop_header_branch
                %258 = sbr.rel (%p256) target = $region43
              $region40: #{upconv_forward.3} parent=35 // loop_body
                %v262 = vld [vmem:[%s260] sm:$0xff]
                %263 = vst [vmem:[%s261] sm:$0xff] %v262
                %v264 = vld [vmem:[%s260 + $0x10] sm:$0xff]
                %265 = vst [vmem:[%s261 + $0x8] sm:$0xff] %v264
                %v266 = vld [vmem:[%s260 + $0x20] sm:$0xff]
                %267 = vst [vmem:[%s261 + $0x10] sm:$0xff] %v266
                %v268 = vld [vmem:[%s260 + $0x30] sm:$0xff]
                %269 = vst [vmem:[%s261 + $0x18] sm:$0xff] %v268
                %v270 = vld [vmem:[%s260 + $0x40] sm:$0xff]
                %271 = vst [vmem:[%s261 + $0x20] sm:$0xff] %v270
              $region41: #{upconv_forward.3} parent=35 // loop_footer
                %s259 = sadd.s32 1, %s255
              $region42: #{upconv_forward.3} parent=35 // loop_footer_branch
                %254 = sbr.rel target = $region38
              $region43: #{upconv_forward.3} parent=35 // loop_exit
                _
            $region36: #{upconv_forward.3} parent=27 // pred_fallthru
              _
          $region28: #{upconv_forward.3} parent=23 // pred_fallthru
            _
          %294 = vnop
        $region24: #{upconv_forward.3} parent=19 // pred_fallthru
          _
        // Predicated region
        $region59: #{upconv_forward.3} parent=19 // pred_check
          %p295 = pneg %p113
        $region60: #{upconv_forward.3} parent=19 // pred_check_branch
          %297 = sbr.rel (%p295) target = $region62
        $region61: #{upconv_forward.3} parent=19 // pred_region
          %s298 = smul.u32 2, %s26
          %p299 = scmp.lt.s32.totalorder %s298, 3
          %s300 = scalar_select %p299, %s298, 3
          %s301 = scalar_lea.vmem %s2, %s300
          %s302 = smul.u32 2, %s26
        $region62: #{upconv_forward.3} parent=19 // pred_fallthru
          _
      $region20: #{upconv_forward.3} parent=5 // pred_fallthru
        _
      %p303 = scmp.le.s32.totalorder 1, %s18
      %p304 = scmp.lt.s32.totalorder %s18, 3
      %p305 = pnand %p303, %p304
      %p306 = pneg %p305
      // Predicated region
      $region63: #{upconv_forward.3} parent=5 // pred_check
        _
      $region64: #{upconv_forward.3} parent=5 // pred_check_branch
        %308 = sbr.rel (%p305) target = $region66
      $region65: #{upconv_forward.3} parent=5 // pred_region
        %s309 = ssub.s32 %s18, 1
        %s310 = sand.u32 %s80, 1
        %s311 = sand.u32 %s80, 1
        %s312 = smul.addr %s311, 40
        %s313 = scalar_lea.vmem [#allocation3], %s312
        // Predicated region
        $region67: #{upconv_forward.3} parent=65 // pred_check
          %p314 = pneg %p93
        $region68: #{upconv_forward.3} parent=65 // pred_check_branch
          %316 = sbr.rel (%p314) target = $region70
        $region69: #{upconv_forward.3} parent=65 // pred_region
          _
        $region70: #{upconv_forward.3} parent=65 // pred_fallthru
          _
        %s317 = smul.u32 64, %s28
        %p318 = scmp.lt.s32.totalorder %s317, 63
        %s319 = scalar_select %p318, %s317, 63
        %p320 = scmp.lt.s32.totalorder %s30, 0
        %s321 = scalar_select %p320, %s30, 0
        %s322 = sadd.s32 %s321, %s319
        %s323 = smul.addr %s322, 4
        %s324 = scalar_lea.vmem %s0, %s323
        %p325 = pneg %p65
        %p326 = pneg %p62
        %s327 = sand.u32 %s80, 1
        %s328 = sand.u32 %s80, 1
        %s329 = smul.addr %s328, 40
        %s330 = scalar_lea.vmem [#allocation3], %s329
        %p331 = pneg %p93
        %p332 = pneg %p90
        %s333 = smul.u32 2, %s29
        %p334 = scmp.lt.s32.totalorder %s333, 3
        %s335 = scalar_select %p334, %s333, 3
        %s336 = scalar_lea.vmem %s2, %s335
        %p337 = pneg %p119
        %p338 = pneg %p116
        %p339 = pneg %p147
        %p340 = pneg %p144
        %s341 = sand.u32 %s134, 1
        %s342 = sand.u32 %s134, 1
        %s343 = smul.addr %s342, 512
        %s344 = scalar_lea.vmem [#allocation4], %s343
        %p345 = pneg %p175
        %p346 = pneg %p172
        %s347 = sand.u32 %s162, 1
        %s348 = scalar_lea.sflag [#allocation6], %s347
        %s349 = sand.u32 %s162, 1
        %s350 = smul.addr %s349, 16
        %s351 = scalar_lea.vmem [#allocation5], %s350
        %p352 = pneg %p203
        %p353 = pneg %p200
        %s354 = sand.u32 %s190, 1
        %s355 = scalar_lea.sflag [#allocation8], %s354
        %s356 = sand.u32 %s190, 1
        %s357 = smul.addr %s356, 16
        %s358 = scalar_lea.vmem [#allocation7], %s357
        %s359 = smul.u32 64, %s28
        %p360 = scmp.lt.s32.totalorder %s359, 63
        %s361 = scalar_select %p360, %s359, 63
        %p362 = scmp.lt.s32.totalorder %s30, 0
        %s363 = scalar_select %p362, %s30, 0
        %s364 = sadd.s32 %s363, %s361
        %s365 = smul.addr %s364, 4
        %s366 = scalar_lea.vmem %s0, %s365
        %s367 = smul.u32 64, %s28
        %s368 = smul.u32 5, %s30
        %s369 = smul.u32 2, %s29
        %s370 = smul.u32 2, %s29
        %p371 = scmp.lt.s32.totalorder %s370, 3
        %s372 = scalar_select %p371, %s370, 3
        %s373 = scalar_lea.vmem %s2, %s372
        %s374 = smul.u32 2, %s29
        %s375 = smul.u32 64, %s28
        %s376 = smul.u32 2, %s29
        %s377 = smul.u32 2, %s29
        %s378 = smul.u32 2, %s29
        %p380 = scmp.eq.s32.totalorder %s30, 0
        // Predicated region
        $region71: #{upconv_forward.3} parent=65 // pred_check
          %p381 = pneg %p380
        $region72: #{upconv_forward.3} parent=65 // pred_check_branch
          %383 = sbr.rel (%p381) target = $region74
        $region73: #{upconv_forward.3} parent=65 // pred_region
          %384 = vst [vmem:[#allocation2] sm:$0xff] 0.0
          %385 = vst [vmem:[#allocation2 + $0x8] sm:$0xff] 0.0
          %386 = vst [vmem:[#allocation2 + $0x10] sm:$0xff] 0.0
          %387 = vst [vmem:[#allocation2 + $0x18] sm:$0xff] 0.0
          %388 = vst [vmem:[#allocation2 + $0x20] sm:$0xff] 0.0
          %389 = vst [vmem:[#allocation2 + $0x28] sm:$0xff] 0.0
          %390 = vst [vmem:[#allocation2 + $0x30] sm:$0xff] 0.0
          %391 = vst [vmem:[#allocation2 + $0x38] sm:$0xff] 0.0
          %392 = vst [vmem:[#allocation2 + $0x40] sm:$0xff] 0.0
          %393 = vst [vmem:[#allocation2 + $0x48] sm:$0xff] 0.0
          %394 = vst [vmem:[#allocation2 + $0x50] sm:$0xff] 0.0
          %395 = vst [vmem:[#allocation2 + $0x58] sm:$0xff] 0.0
          %396 = vst [vmem:[#allocation2 + $0x60] sm:$0xff] 0.0
          %397 = vst [vmem:[#allocation2 + $0x68] sm:$0xff] 0.0
          %398 = vst [vmem:[#allocation2 + $0x70] sm:$0xff] 0.0
          %399 = vst [vmem:[#allocation2 + $0x78] sm:$0xff] 0.0
          %400 = vst [vmem:[#allocation2 + $0x80] sm:$0xff] 0.0
          %401 = vst [vmem:[#allocation2 + $0x88] sm:$0xff] 0.0
          %402 = vst [vmem:[#allocation2 + $0x90] sm:$0xff] 0.0
          %403 = vst [vmem:[#allocation2 + $0x98] sm:$0xff] 0.0
          %404 = vst [vmem:[#allocation2 + $0xa0] sm:$0xff] 0.0
          %405 = vst [vmem:[#allocation2 + $0xa8] sm:$0xff] 0.0
          %406 = vst [vmem:[#allocation2 + $0xb0] sm:$0xff] 0.0
          %407 = vst [vmem:[#allocation2 + $0xb8] sm:$0xff] 0.0
          %408 = vst [vmem:[#allocation2 + $0xc0] sm:$0xff] 0.0
          %409 = vst [vmem:[#allocation2 + $0xc8] sm:$0xff] 0.0
          %410 = vst [vmem:[#allocation2 + $0xd0] sm:$0xff] 0.0
          %411 = vst [vmem:[#allocation2 + $0xd8] sm:$0xff] 0.0
          %412 = vst [vmem:[#allocation2 + $0xe0] sm:$0xff] 0.0
          %413 = vst [vmem:[#allocation2 + $0xe8] sm:$0xff] 0.0
          %414 = vst [vmem:[#allocation2 + $0xf0] sm:$0xff] 0.0
          %415 = vst [vmem:[#allocation2 + $0xf8] sm:$0xff] 0.0
          %416 = vst [vmem:[#allocation2 + $0x100] sm:$0xff] 0.0
          %417 = vst [vmem:[#allocation2 + $0x108] sm:$0xff] 0.0
          %418 = vst [vmem:[#allocation2 + $0x110] sm:$0xff] 0.0
          %419 = vst [vmem:[#allocation2 + $0x118] sm:$0xff] 0.0
          %420 = vst [vmem:[#allocation2 + $0x120] sm:$0xff] 0.0
          %421 = vst [vmem:[#allocation2 + $0x128] sm:$0xff] 0.0
          %422 = vst [vmem:[#allocation2 + $0x130] sm:$0xff] 0.0
          %423 = vst [vmem:[#allocation2 + $0x138] sm:$0xff] 0.0
          %424 = vst [vmem:[#allocation2 + $0x140] sm:$0xff] 0.0
          %425 = vst [vmem:[#allocation2 + $0x148] sm:$0xff] 0.0
          %426 = vst [vmem:[#allocation2 + $0x150] sm:$0xff] 0.0
          %427 = vst [vmem:[#allocation2 + $0x158] sm:$0xff] 0.0
          %428 = vst [vmem:[#allocation2 + $0x160] sm:$0xff] 0.0
          %429 = vst [vmem:[#allocation2 + $0x168] sm:$0xff] 0.0
          %430 = vst [vmem:[#allocation2 + $0x170] sm:$0xff] 0.0
          %431 = vst [vmem:[#allocation2 + $0x178] sm:$0xff] 0.0
          %432 = vst [vmem:[#allocation2 + $0x180] sm:$0xff] 0.0
          %433 = vst [vmem:[#allocation2 + $0x188] sm:$0xff] 0.0
          %434 = vst [vmem:[#allocation2 + $0x190] sm:$0xff] 0.0
          %435 = vst [vmem:[#allocation2 + $0x198] sm:$0xff] 0.0
          %436 = vst [vmem:[#allocation2 + $0x1a0] sm:$0xff] 0.0
          %437 = vst [vmem:[#allocation2 + $0x1a8] sm:$0xff] 0.0
          %438 = vst [vmem:[#allocation2 + $0x1b0] sm:$0xff] 0.0
          %439 = vst [vmem:[#allocation2 + $0x1b8] sm:$0xff] 0.0
          %440 = vst [vmem:[#allocation2 + $0x1c0] sm:$0xff] 0.0
          %441 = vst [vmem:[#allocation2 + $0x1c8] sm:$0xff] 0.0
          %442 = vst [vmem:[#allocation2 + $0x1d0] sm:$0xff] 0.0
          %443 = vst [vmem:[#allocation2 + $0x1d8] sm:$0xff] 0.0
          %444 = vst [vmem:[#allocation2 + $0x1e0] sm:$0xff] 0.0
          %445 = vst [vmem:[#allocation2 + $0x1e8] sm:$0xff] 0.0
          %446 = vst [vmem:[#allocation2 + $0x1f0] sm:$0xff] 0.0
          %447 = vst [vmem:[#allocation2 + $0x1f8] sm:$0xff] 0.0
          %448 = vst [vmem:[#allocation2 + $0x200] sm:$0xff] 0.0
          %449 = vst [vmem:[#allocation2 + $0x208] sm:$0xff] 0.0
          %450 = vst [vmem:[#allocation2 + $0x210] sm:$0xff] 0.0
          %451 = vst [vmem:[#allocation2 + $0x218] sm:$0xff] 0.0
          %452 = vst [vmem:[#allocation2 + $0x220] sm:$0xff] 0.0
          %453 = vst [vmem:[#allocation2 + $0x228] sm:$0xff] 0.0
          %454 = vst [vmem:[#allocation2 + $0x230] sm:$0xff] 0.0
          %455 = vst [vmem:[#allocation2 + $0x238] sm:$0xff] 0.0
          %456 = vst [vmem:[#allocation2 + $0x240] sm:$0xff] 0.0
          %457 = vst [vmem:[#allocation2 + $0x248] sm:$0xff] 0.0
          %458 = vst [vmem:[#allocation2 + $0x250] sm:$0xff] 0.0
          %459 = vst [vmem:[#allocation2 + $0x258] sm:$0xff] 0.0
          %460 = vst [vmem:[#allocation2 + $0x260] sm:$0xff] 0.0
          %461 = vst [vmem:[#allocation2 + $0x268] sm:$0xff] 0.0
          %462 = vst [vmem:[#allocation2 + $0x270] sm:$0xff] 0.0
          %463 = vst [vmem:[#allocation2 + $0x278] sm:$0xff] 0.0
          %464 = vst [vmem:[#allocation2 + $0x280] sm:$0xff] 0.0
          %465 = vst [vmem:[#allocation2 + $0x288] sm:$0xff] 0.0
          %466 = vst [vmem:[#allocation2 + $0x290] sm:$0xff] 0.0
          %467 = vst [vmem:[#allocation2 + $0x298] sm:$0xff] 0.0
          %468 = vst [vmem:[#allocation2 + $0x2a0] sm:$0xff] 0.0
          %469 = vst [vmem:[#allocation2 + $0x2a8] sm:$0xff] 0.0
          %470 = vst [vmem:[#allocation2 + $0x2b0] sm:$0xff] 0.0
          %471 = vst [vmem:[#allocation2 + $0x2b8] sm:$0xff] 0.0
          %472 = vst [vmem:[#allocation2 + $0x2c0] sm:$0xff] 0.0
          %473 = vst [vmem:[#allocation2 + $0x2c8] sm:$0xff] 0.0
          %474 = vst [vmem:[#allocation2 + $0x2d0] sm:$0xff] 0.0
          %475 = vst [vmem:[#allocation2 + $0x2d8] sm:$0xff] 0.0
          %476 = vst [vmem:[#allocation2 + $0x2e0] sm:$0xff] 0.0
          %477 = vst [vmem:[#allocation2 + $0x2e8] sm:$0xff] 0.0
          %478 = vst [vmem:[#allocation2 + $0x2f0] sm:$0xff] 0.0
          %479 = vst [vmem:[#allocation2 + $0x2f8] sm:$0xff] 0.0
          %480 = vst [vmem:[#allocation2 + $0x300] sm:$0xff] 0.0
          %481 = vst [vmem:[#allocation2 + $0x308] sm:$0xff] 0.0
          %482 = vst [vmem:[#allocation2 + $0x310] sm:$0xff] 0.0
          %483 = vst [vmem:[#allocation2 + $0x318] sm:$0xff] 0.0
          %484 = vst [vmem:[#allocation2 + $0x320] sm:$0xff] 0.0
          %485 = vst [vmem:[#allocation2 + $0x328] sm:$0xff] 0.0
          %486 = vst [vmem:[#allocation2 + $0x330] sm:$0xff] 0.0
          %487 = vst [vmem:[#allocation2 + $0x338] sm:$0xff] 0.0
          %488 = vst [vmem:[#allocation2 + $0x340] sm:$0xff] 0.0
          %489 = vst [vmem:[#allocation2 + $0x348] sm:$0xff] 0.0
          %490 = vst [vmem:[#allocation2 + $0x350] sm:$0xff] 0.0
          %491 = vst [vmem:[#allocation2 + $0x358] sm:$0xff] 0.0
          %492 = vst [vmem:[#allocation2 + $0x360] sm:$0xff] 0.0
          %493 = vst [vmem:[#allocation2 + $0x368] sm:$0xff] 0.0
          %494 = vst [vmem:[#allocation2 + $0x370] sm:$0xff] 0.0
          %495 = vst [vmem:[#allocation2 + $0x378] sm:$0xff] 0.0
          %496 = vst [vmem:[#allocation2 + $0x380] sm:$0xff] 0.0
          %497 = vst [vmem:[#allocation2 + $0x388] sm:$0xff] 0.0
          %498 = vst [vmem:[#allocation2 + $0x390] sm:$0xff] 0.0
          %499 = vst [vmem:[#allocation2 + $0x398] sm:$0xff] 0.0
          %500 = vst [vmem:[#allocation2 + $0x3a0] sm:$0xff] 0.0
          %501 = vst [vmem:[#allocation2 + $0x3a8] sm:$0xff] 0.0
          %502 = vst [vmem:[#allocation2 + $0x3b0] sm:$0xff] 0.0
          %503 = vst [vmem:[#allocation2 + $0x3b8] sm:$0xff] 0.0
          %504 = vst [vmem:[#allocation2 + $0x3c0] sm:$0xff] 0.0
          %505 = vst [vmem:[#allocation2 + $0x3c8] sm:$0xff] 0.0
          %506 = vst [vmem:[#allocation2 + $0x3d0] sm:$0xff] 0.0
          %507 = vst [vmem:[#allocation2 + $0x3d8] sm:$0xff] 0.0
          %508 = vst [vmem:[#allocation2 + $0x3e0] sm:$0xff] 0.0
          %509 = vst [vmem:[#allocation2 + $0x3e8] sm:$0xff] 0.0
          %510 = vst [vmem:[#allocation2 + $0x3f0] sm:$0xff] 0.0
          %511 = vst [vmem:[#allocation2 + $0x3f8] sm:$0xff] 0.0
        $region74: #{upconv_forward.3} parent=65 // pred_fallthru
          _
        %v512 = vld [vmem:[#allocation2] sm:$0xff]
        %v513 = vld [vmem:[#allocation2 + $0x8] sm:$0xff]
        %v514 = vld [vmem:[#allocation2 + $0x10] sm:$0xff]
        %v515 = vld [vmem:[#allocation2 + $0x18] sm:$0xff]
        %v516 = vld [vmem:[#allocation2 + $0x20] sm:$0xff]
        %v517 = vld [vmem:[#allocation2 + $0x28] sm:$0xff]
        %v518 = vld [vmem:[#allocation2 + $0x30] sm:$0xff]
        %v519 = vld [vmem:[#allocation2 + $0x38] sm:$0xff]
        %v520 = vld [vmem:[#allocation2 + $0x40] sm:$0xff]
        %v521 = vld [vmem:[#allocation2 + $0x48] sm:$0xff]
        %v522 = vld [vmem:[#allocation2 + $0x50] sm:$0xff]
        %v523 = vld [vmem:[#allocation2 + $0x58] sm:$0xff]
        %v524 = vld [vmem:[#allocation2 + $0x60] sm:$0xff]
        %v525 = vld [vmem:[#allocation2 + $0x68] sm:$0xff]
        %v526 = vld [vmem:[#allocation2 + $0x70] sm:$0xff]
        %v527 = vld [vmem:[#allocation2 + $0x78] sm:$0xff]
        %v528 = vld [vmem:[#allocation2 + $0x80] sm:$0xff]
        %v529 = vld [vmem:[#allocation2 + $0x88] sm:$0xff]
        %v530 = vld [vmem:[#allocation2 + $0x90] sm:$0xff]
        %v531 = vld [vmem:[#allocation2 + $0x98] sm:$0xff]
        %v532 = vld [vmem:[#allocation2 + $0xa0] sm:$0xff]
        %v533 = vld [vmem:[#allocation2 + $0xa8] sm:$0xff]
        %v534 = vld [vmem:[#allocation2 + $0xb0] sm:$0xff]
        %v535 = vld [vmem:[#allocation2 + $0xb8] sm:$0xff]
        %v536 = vld [vmem:[#allocation2 + $0xc0] sm:$0xff]
        %v537 = vld [vmem:[#allocation2 + $0xc8] sm:$0xff]
        %v538 = vld [vmem:[#allocation2 + $0xd0] sm:$0xff]
        %v539 = vld [vmem:[#allocation2 + $0xd8] sm:$0xff]
        %v540 = vld [vmem:[#allocation2 + $0xe0] sm:$0xff]
        %v541 = vld [vmem:[#allocation2 + $0xe8] sm:$0xff]
        %v542 = vld [vmem:[#allocation2 + $0xf0] sm:$0xff]
        %v543 = vld [vmem:[#allocation2 + $0xf8] sm:$0xff]
        %v544 = vld [vmem:[#allocation2 + $0x100] sm:$0xff]
        %v545 = vld [vmem:[#allocation2 + $0x108] sm:$0xff]
        %v546 = vld [vmem:[#allocation2 + $0x110] sm:$0xff]
        %v547 = vld [vmem:[#allocation2 + $0x118] sm:$0xff]
        %v548 = vld [vmem:[#allocation2 + $0x120] sm:$0xff]
        %v549 = vld [vmem:[#allocation2 + $0x128] sm:$0xff]
        %v550 = vld [vmem:[#allocation2 + $0x130] sm:$0xff]
        %v551 = vld [vmem:[#allocation2 + $0x138] sm:$0xff]
        %v552 = vld [vmem:[#allocation2 + $0x140] sm:$0xff]
        %v553 = vld [vmem:[#allocation2 + $0x148] sm:$0xff]
        %v554 = vld [vmem:[#allocation2 + $0x150] sm:$0xff]
        %v555 = vld [vmem:[#allocation2 + $0x158] sm:$0xff]
        %v556 = vld [vmem:[#allocation2 + $0x160] sm:$0xff]
        %v557 = vld [vmem:[#allocation2 + $0x168] sm:$0xff]
        %v558 = vld [vmem:[#allocation2 + $0x170] sm:$0xff]
        %v559 = vld [vmem:[#allocation2 + $0x178] sm:$0xff]
        %v560 = vld [vmem:[#allocation2 + $0x180] sm:$0xff]
        %v561 = vld [vmem:[#allocation2 + $0x188] sm:$0xff]
        %v562 = vld [vmem:[#allocation2 + $0x190] sm:$0xff]
        %v563 = vld [vmem:[#allocation2 + $0x198] sm:$0xff]
        %v564 = vld [vmem:[#allocation2 + $0x1a0] sm:$0xff]
        %v565 = vld [vmem:[#allocation2 + $0x1a8] sm:$0xff]
        %v566 = vld [vmem:[#allocation2 + $0x1b0] sm:$0xff]
        %v567 = vld [vmem:[#allocation2 + $0x1b8] sm:$0xff]
        %v568 = vld [vmem:[#allocation2 + $0x1c0] sm:$0xff]
        %v569 = vld [vmem:[#allocation2 + $0x1c8] sm:$0xff]
        %v570 = vld [vmem:[#allocation2 + $0x1d0] sm:$0xff]
        %v571 = vld [vmem:[#allocation2 + $0x1d8] sm:$0xff]
        %v572 = vld [vmem:[#allocation2 + $0x1e0] sm:$0xff]
        %v573 = vld [vmem:[#allocation2 + $0x1e8] sm:$0xff]
        %v574 = vld [vmem:[#allocation2 + $0x1f0] sm:$0xff]
        %v575 = vld [vmem:[#allocation2 + $0x1f8] sm:$0xff]
        %v576 = vld [vmem:[#allocation2 + $0x200] sm:$0xff]
        %v577 = vld [vmem:[#allocation2 + $0x208] sm:$0xff]
        %v578 = vld [vmem:[#allocation2 + $0x210] sm:$0xff]
        %v579 = vld [vmem:[#allocation2 + $0x218] sm:$0xff]
        %v580 = vld [vmem:[#allocation2 + $0x220] sm:$0xff]
        %v581 = vld [vmem:[#allocation2 + $0x228] sm:$0xff]
        %v582 = vld [vmem:[#allocation2 + $0x230] sm:$0xff]
        %v583 = vld [vmem:[#allocation2 + $0x238] sm:$0xff]
        %v584 = vld [vmem:[#allocation2 + $0x240] sm:$0xff]
        %v585 = vld [vmem:[#allocation2 + $0x248] sm:$0xff]
        %v586 = vld [vmem:[#allocation2 + $0x250] sm:$0xff]
        %v587 = vld [vmem:[#allocation2 + $0x258] sm:$0xff]
        %v588 = vld [vmem:[#allocation2 + $0x260] sm:$0xff]
        %v589 = vld [vmem:[#allocation2 + $0x268] sm:$0xff]
        %v590 = vld [vmem:[#allocation2 + $0x270] sm:$0xff]
        %v591 = vld [vmem:[#allocation2 + $0x278] sm:$0xff]
        %v592 = vld [vmem:[#allocation2 + $0x280] sm:$0xff]
        %v593 = vld [vmem:[#allocation2 + $0x288] sm:$0xff]
        %v594 = vld [vmem:[#allocation2 + $0x290] sm:$0xff]
        %v595 = vld [vmem:[#allocation2 + $0x298] sm:$0xff]
        %v596 = vld [vmem:[#allocation2 + $0x2a0] sm:$0xff]
        %v597 = vld [vmem:[#allocation2 + $0x2a8] sm:$0xff]
        %v598 = vld [vmem:[#allocation2 + $0x2b0] sm:$0xff]
        %v599 = vld [vmem:[#allocation2 + $0x2b8] sm:$0xff]
        %v600 = vld [vmem:[#allocation2 + $0x2c0] sm:$0xff]
        %v601 = vld [vmem:[#allocation2 + $0x2c8] sm:$0xff]
        %v602 = vld [vmem:[#allocation2 + $0x2d0] sm:$0xff]
        %v603 = vld [vmem:[#allocation2 + $0x2d8] sm:$0xff]
        %v604 = vld [vmem:[#allocation2 + $0x2e0] sm:$0xff]
        %v605 = vld [vmem:[#allocation2 + $0x2e8] sm:$0xff]
        %v606 = vld [vmem:[#allocation2 + $0x2f0] sm:$0xff]
        %v607 = vld [vmem:[#allocation2 + $0x2f8] sm:$0xff]
        %v608 = vld [vmem:[#allocation2 + $0x300] sm:$0xff]
        %v609 = vld [vmem:[#allocation2 + $0x308] sm:$0xff]
        %v610 = vld [vmem:[#allocation2 + $0x310] sm:$0xff]
        %v611 = vld [vmem:[#allocation2 + $0x318] sm:$0xff]
        %v612 = vld [vmem:[#allocation2 + $0x320] sm:$0xff]
        %v613 = vld [vmem:[#allocation2 + $0x328] sm:$0xff]
        %v614 = vld [vmem:[#allocation2 + $0x330] sm:$0xff]
        %v615 = vld [vmem:[#allocation2 + $0x338] sm:$0xff]
        %v616 = vld [vmem:[#allocation2 + $0x340] sm:$0xff]
        %v617 = vld [vmem:[#allocation2 + $0x348] sm:$0xff]
        %v618 = vld [vmem:[#allocation2 + $0x350] sm:$0xff]
        %v619 = vld [vmem:[#allocation2 + $0x358] sm:$0xff]
        %v620 = vld [vmem:[#allocation2 + $0x360] sm:$0xff]
        %v621 = vld [vmem:[#allocation2 + $0x368] sm:$0xff]
        %v622 = vld [vmem:[#allocation2 + $0x370] sm:$0xff]
        %v623 = vld [vmem:[#allocation2 + $0x378] sm:$0xff]
        %v624 = vld [vmem:[#allocation2 + $0x380] sm:$0xff]
        %v625 = vld [vmem:[#allocation2 + $0x388] sm:$0xff]
        %v626 = vld [vmem:[#allocation2 + $0x390] sm:$0xff]
        %v627 = vld [vmem:[#allocation2 + $0x398] sm:$0xff]
        %v628 = vld [vmem:[#allocation2 + $0x3a0] sm:$0xff]
        %v629 = vld [vmem:[#allocation2 + $0x3a8] sm:$0xff]
        %v630 = vld [vmem:[#allocation2 + $0x3b0] sm:$0xff]
        %v631 = vld [vmem:[#allocation2 + $0x3b8] sm:$0xff]
        %v632 = vld [vmem:[#allocation2 + $0x3c0] sm:$0xff]
        %v633 = vld [vmem:[#allocation2 + $0x3c8] sm:$0xff]
        %v634 = vld [vmem:[#allocation2 + $0x3d0] sm:$0xff]
        %v635 = vld [vmem:[#allocation2 + $0x3d8] sm:$0xff]
        %v636 = vld [vmem:[#allocation2 + $0x3e0] sm:$0xff]
        %v637 = vld [vmem:[#allocation2 + $0x3e8] sm:$0xff]
        %v638 = vld [vmem:[#allocation2 + $0x3f0] sm:$0xff]
        %v639 = vld [vmem:[#allocation2 + $0x3f8] sm:$0xff]
        %v640 = vld [vmem:[%s366] sm:$0xf]
        %v641 = vld [vmem:[%s366 + $0x4] sm:$0xf]
        %v642 = vld [vmem:[%s366 + $0x8] sm:$0xf]
        %v643 = vld [vmem:[%s366 + $0xc] sm:$0xf]
        %v644 = vld [vmem:[%s366 + $0x10] sm:$0xf]
        %v645 = vld [vmem:[%s366 + $0x14] sm:$0xf]
        %v646 = vld [vmem:[%s366 + $0x18] sm:$0xf]
        %v647 = vld [vmem:[%s366 + $0x1c] sm:$0xf]
        %v648 = vld [vmem:[%s366 + $0x20] sm:$0xf]
        %v649 = vld [vmem:[%s366 + $0x24] sm:$0xf]
        %v650 = vld [vmem:[%s366 + $0x28] sm:$0xf]
        %v651 = vld [vmem:[%s366 + $0x2c] sm:$0xf]
        %v652 = vld [vmem:[%s366 + $0x30] sm:$0xf]
        %v653 = vld [vmem:[%s366 + $0x34] sm:$0xf]
        %v654 = vld [vmem:[%s366 + $0x38] sm:$0xf]
        %v655 = vld [vmem:[%s366 + $0x3c] sm:$0xf]
        %v656 = vld [vmem:[%s366 + $0x40] sm:$0xf]
        %v657 = vld [vmem:[%s366 + $0x44] sm:$0xf]
        %v658 = vld [vmem:[%s366 + $0x48] sm:$0xf]
        %v659 = vld [vmem:[%s366 + $0x4c] sm:$0xf]
        %v660 = vld [vmem:[%s366 + $0x50] sm:$0xf]
        %v661 = vld [vmem:[%s366 + $0x54] sm:$0xf]
        %v662 = vld [vmem:[%s366 + $0x58] sm:$0xf]
        %v663 = vld [vmem:[%s366 + $0x5c] sm:$0xf]
        %v664 = vld [vmem:[%s366 + $0x60] sm:$0xf]
        %v665 = vld [vmem:[%s366 + $0x64] sm:$0xf]
        %v666 = vld [vmem:[%s366 + $0x68] sm:$0xf]
        %v667 = vld [vmem:[%s366 + $0x6c] sm:$0xf]
        %v668 = vld [vmem:[%s366 + $0x70] sm:$0xf]
        %v669 = vld [vmem:[%s366 + $0x74] sm:$0xf]
        %v670 = vld [vmem:[%s366 + $0x78] sm:$0xf]
        %v671 = vld [vmem:[%s366 + $0x7c] sm:$0xf]
        %v672 = vld [vmem:[%s366 + $0x80] sm:$0xf]
        %v673 = vld [vmem:[%s366 + $0x84] sm:$0xf]
        %v674 = vld [vmem:[%s366 + $0x88] sm:$0xf]
        %v675 = vld [vmem:[%s366 + $0x8c] sm:$0xf]
        %v676 = vld [vmem:[%s366 + $0x90] sm:$0xf]
        %v677 = vld [vmem:[%s366 + $0x94] sm:$0xf]
        %v678 = vld [vmem:[%s366 + $0x98] sm:$0xf]
        %v679 = vld [vmem:[%s366 + $0x9c] sm:$0xf]
        %v680 = vld [vmem:[%s366 + $0xa0] sm:$0xf]
        %v681 = vld [vmem:[%s366 + $0xa4] sm:$0xf]
        %v682 = vld [vmem:[%s366 + $0xa8] sm:$0xf]
        %v683 = vld [vmem:[%s366 + $0xac] sm:$0xf]
        %v684 = vld [vmem:[%s366 + $0xb0] sm:$0xf]
        %v685 = vld [vmem:[%s366 + $0xb4] sm:$0xf]
        %v686 = vld [vmem:[%s366 + $0xb8] sm:$0xf]
        %v687 = vld [vmem:[%s366 + $0xbc] sm:$0xf]
        %v688 = vld [vmem:[%s366 + $0xc0] sm:$0xf]
        %v689 = vld [vmem:[%s366 + $0xc4] sm:$0xf]
        %v690 = vld [vmem:[%s366 + $0xc8] sm:$0xf]
        %v691 = vld [vmem:[%s366 + $0xcc] sm:$0xf]
        %v692 = vld [vmem:[%s366 + $0xd0] sm:$0xf]
        %v693 = vld [vmem:[%s366 + $0xd4] sm:$0xf]
        %v694 = vld [vmem:[%s366 + $0xd8] sm:$0xf]
        %v695 = vld [vmem:[%s366 + $0xdc] sm:$0xf]
        %v696 = vld [vmem:[%s366 + $0xe0] sm:$0xf]
        %v697 = vld [vmem:[%s366 + $0xe4] sm:$0xf]
        %v698 = vld [vmem:[%s366 + $0xe8] sm:$0xf]
        %v699 = vld [vmem:[%s366 + $0xec] sm:$0xf]
        %v700 = vld [vmem:[%s366 + $0xf0] sm:$0xf]
        %v701 = vld [vmem:[%s366 + $0xf4] sm:$0xf]
        %v702 = vld [vmem:[%s366 + $0xf8] sm:$0xf]
        %v703 = vld [vmem:[%s366 + $0xfc] sm:$0xf]
        %v704 = vld [vmem:[%s313] sm:$0xff]
        %v705 = vld [vmem:[%s313 + $0x8] sm:$0xff]
        %v706 = vld [vmem:[%s313 + $0x10] sm:$0xff]
        %v707 = vld [vmem:[%s313 + $0x18] sm:$0xff]
        %v708 = vld [vmem:[%s313 + $0x20] sm:$0x33]
        %v773 = vunpack.c.l.b16 %v640
        %v774 = vunpack.c.l.b16 %v641
        %v775 = vunpack.c.l.b16 %v642
        %v776 = vunpack.c.l.b16 %v643
        %v777 = vunpack.c.l.b16 %v644
        %v778 = vunpack.c.l.b16 %v645
        %v779 = vunpack.c.l.b16 %v646
        %v780 = vunpack.c.l.b16 %v647
        %v781 = vunpack.c.l.b16 %v648
        %v782 = vunpack.c.l.b16 %v649
        %v783 = vunpack.c.l.b16 %v650
        %v784 = vunpack.c.l.b16 %v651
        %v785 = vunpack.c.l.b16 %v652
        %v786 = vunpack.c.l.b16 %v653
        %v787 = vunpack.c.l.b16 %v654
        %v788 = vunpack.c.l.b16 %v655
        %v789 = vunpack.c.l.b16 %v656
        %v790 = vunpack.c.l.b16 %v657
        %v791 = vunpack.c.l.b16 %v658
        %v792 = vunpack.c.l.b16 %v659
        %v793 = vunpack.c.l.b16 %v660
        %v794 = vunpack.c.l.b16 %v661
        %v795 = vunpack.c.l.b16 %v662
        %v796 = vunpack.c.l.b16 %v663
        %v797 = vunpack.c.l.b16 %v664
        %v798 = vunpack.c.l.b16 %v665
        %v799 = vunpack.c.l.b16 %v666
        %v800 = vunpack.c.l.b16 %v667
        %v801 = vunpack.c.l.b16 %v668
        %v802 = vunpack.c.l.b16 %v669
        %v803 = vunpack.c.l.b16 %v670
        %v804 = vunpack.c.l.b16 %v671
        %v805 = vunpack.c.l.b16 %v672
        %v806 = vunpack.c.l.b16 %v673
        %v807 = vunpack.c.l.b16 %v674
        %v808 = vunpack.c.l.b16 %v675
        %v809 = vunpack.c.l.b16 %v676
        %v810 = vunpack.c.l.b16 %v677
        %v811 = vunpack.c.l.b16 %v678
        %v812 = vunpack.c.l.b16 %v679
        %v813 = vunpack.c.l.b16 %v680
        %v814 = vunpack.c.l.b16 %v681
        %v815 = vunpack.c.l.b16 %v682
        %v816 = vunpack.c.l.b16 %v683
        %v817 = vunpack.c.l.b16 %v684
        %v818 = vunpack.c.l.b16 %v685
        %v819 = vunpack.c.l.b16 %v686
        %v820 = vunpack.c.l.b16 %v687
        %v821 = vunpack.c.l.b16 %v688
        %v822 = vunpack.c.l.b16 %v689
        %v823 = vunpack.c.l.b16 %v690
        %v824 = vunpack.c.l.b16 %v691
        %v825 = vunpack.c.l.b16 %v692
        %v826 = vunpack.c.l.b16 %v693
        %v827 = vunpack.c.l.b16 %v694
        %v828 = vunpack.c.l.b16 %v695
        %v829 = vunpack.c.l.b16 %v696
        %v830 = vunpack.c.l.b16 %v697
        %v831 = vunpack.c.l.b16 %v698
        %v832 = vunpack.c.l.b16 %v699
        %v833 = vunpack.c.l.b16 %v700
        %v834 = vunpack.c.l.b16 %v701
        %v835 = vunpack.c.l.b16 %v702
        %v836 = vunpack.c.l.b16 %v703
        %v837 = vpack.c.b16 %v774, %v773
        %v838 = vpack.c.b16 %v776, %v775
        %v839 = vpack.c.b16 %v778, %v777
        %v840 = vpack.c.b16 %v780, %v779
        %v841 = vpack.c.b16 %v782, %v781
        %v842 = vpack.c.b16 %v784, %v783
        %v843 = vpack.c.b16 %v786, %v785
        %v844 = vpack.c.b16 %v788, %v787
        %v845 = vpack.c.b16 %v790, %v789
        %v846 = vpack.c.b16 %v792, %v791
        %v847 = vpack.c.b16 %v794, %v793
        %v848 = vpack.c.b16 %v796, %v795
        %v849 = vpack.c.b16 %v798, %v797
        %v850 = vpack.c.b16 %v800, %v799
        %v851 = vpack.c.b16 %v802, %v801
        %v852 = vpack.c.b16 %v804, %v803
        %v853 = vpack.c.b16 %v806, %v805
        %v854 = vpack.c.b16 %v808, %v807
        %v855 = vpack.c.b16 %v810, %v809
        %v856 = vpack.c.b16 %v812, %v811
        %v857 = vpack.c.b16 %v814, %v813
        %v858 = vpack.c.b16 %v816, %v815
        %v859 = vpack.c.b16 %v818, %v817
        %v860 = vpack.c.b16 %v820, %v819
        %v861 = vpack.c.b16 %v822, %v821
        %v862 = vpack.c.b16 %v824, %v823
        %v863 = vpack.c.b16 %v826, %v825
        %v864 = vpack.c.b16 %v828, %v827
        %v865 = vpack.c.b16 %v830, %v829
        %v866 = vpack.c.b16 %v832, %v831
        %v867 = vpack.c.b16 %v834, %v833
        %v868 = vpack.c.b16 %v836, %v835
        %v874 = vunpack.c.l.b16 %v704
        %v875 = vunpack.c.h.b16 %v704
        %v876 = vunpack.c.l.b16 %v705
        %v877 = vunpack.c.h.b16 %v705
        %v878 = vunpack.c.l.b16 %v706
        %v879 = vunpack.c.h.b16 %v706
        %v880 = vunpack.c.l.b16 %v707
        %v881 = vunpack.c.h.b16 %v707
        %v882 = vunpack.c.l.b16 %v708
        %v883 = vunpack.c.h.b16 %v708
        %v884 = vpack.c.b16 %v876, %v874
        %v885 = vpack.c.b16 %v877, %v875
        %v886 = vpack.c.b16 %v880, %v878
        %v887 = vpack.c.b16 %v881, %v879
        %v888 = vpack.c.b16 %v882, %v882
        %v889 = vpack.c.b16 %v883, %v883
        %vm894 = vcmask 293888
        %v896 = vsel %vm894, %v837, 0
        %v899 = vsel %vm894, %v838, 0
        %v902 = vsel %vm894, %v839, 0
        %v905 = vsel %vm894, %v840, 0
        %v908 = vsel %vm894, %v841, 0
        %v911 = vsel %vm894, %v842, 0
        %v914 = vsel %vm894, %v843, 0
        %v917 = vsel %vm894, %v844, 0
        %v920 = vsel %vm894, %v845, 0
        %v923 = vsel %vm894, %v846, 0
        %v926 = vsel %vm894, %v847, 0
        %v929 = vsel %vm894, %v848, 0
        %v932 = vsel %vm894, %v849, 0
        %v935 = vsel %vm894, %v850, 0
        %v938 = vsel %vm894, %v851, 0
        %v941 = vsel %vm894, %v852, 0
        %v944 = vsel %vm894, %v853, 0
        %v947 = vsel %vm894, %v854, 0
        %v950 = vsel %vm894, %v855, 0
        %v953 = vsel %vm894, %v856, 0
        %v956 = vsel %vm894, %v857, 0
        %v959 = vsel %vm894, %v858, 0
        %v962 = vsel %vm894, %v859, 0
        %v965 = vsel %vm894, %v860, 0
        %v968 = vsel %vm894, %v861, 0
        %v971 = vsel %vm894, %v862, 0
        %v974 = vsel %vm894, %v863, 0
        %v977 = vsel %vm894, %v864, 0
        %v980 = vsel %vm894, %v865, 0
        %v983 = vsel %vm894, %v866, 0
        %v986 = vsel %vm894, %v867, 0
        %v989 = vsel %vm894, %v868, 0
        %vm991 = vcmask 1041408
        %v993 = vsel %vm991, %v888, 0
        %v996 = vsel %vm991, %v889, 0
        %998 = vmatprep.subr.bf16.mxu0 %v885
        %999 = vmatpush1.bf16.msra.mxu0 %v884
        %1000 = vmatprep.subr.bf16.mxu0 %v887
        %1001 = vmatpush1.bf16.msra.mxu0 %v886
        %1002 = vmatprep.subr.bf16.mxu0 %v996
        %1003 = vmatpush1.bf16.msra.mxu0 %v993
        %1004 = vmatprep.subr.bf16.mxu0 0
        %1005 = vmatpush1.bf16.msra.mxu0 0
        %1006 = vmatprep.subr.bf16.mxu0 0
        %1007 = vmatpush1.bf16.msra.mxu0 0
        %1008 = vmatprep.subr.bf16.mxu0 0
        %1009 = vmatpush1.bf16.msra.mxu0 0
        %1010 = vmatprep.subr.bf16.mxu0 0
        %1011 = vmatpush1.bf16.msra.mxu0 0
        %1012 = vmatprep.subr.bf16.mxu0 0
        %1013 = vmatpush1.bf16.msra.mxu0 0
        %1014 = vmatprep.subr.bf16.mxu0 0
        %1015 = vmatpush1.bf16.msra.mxu0 0
        %1016 = vmatprep.subr.bf16.mxu0 0
        %1017 = vmatpush1.bf16.msra.mxu0 0
        %1018 = vmatprep.subr.bf16.mxu0 0
        %1019 = vmatpush1.bf16.msra.mxu0 0
        %1020 = vmatprep.subr.bf16.mxu0 0
        %1021 = vmatpush1.bf16.msra.mxu0 0
        %1022 = vmatprep.subr.bf16.mxu0 0
        %1023 = vmatpush1.bf16.msra.mxu0 0
        %1024 = vmatprep.subr.bf16.mxu0 0
        %1025 = vmatpush1.bf16.msra.mxu0 0
        %1026 = vmatprep.subr.bf16.mxu0 0
        %1027 = vmatpush1.bf16.msra.mxu0 0
        %1028 = vmatprep.subr.bf16.mxu0 0
        %1029 = vmatpush1.bf16.msra.mxu0 0
        %1030 = vmatprep.mubr.bf16.mxu0 0
        %1031 = vmatmul.mubr.bf16.gmra.mrb[0].mxu0 %v896
        %v1032 = vpop.f32.mrb[0].mxu0
        %v1033 = vadd.f32 0.0, %v1032
        %v1034 = vpop.f32.mrb[0].mxu0
        %v1035 = vadd.f32 0.0, %v1034
        %v1036 = vpop.f32.mrb[0].mxu0
        %v1037 = vadd.f32 0.0, %v1036
        %v1038 = vpop.f32.mrb[0].mxu0
        %v1039 = vadd.f32 0.0, %v1038
        %1040 = vmatprep.mubr.bf16.mxu0 0
        %1041 = vmatmul.mubr.bf16.gmra.mrb[0].mxu0 %v899
        %v1042 = vpop.f32.mrb[0].mxu0
        %v1043 = vadd.f32 0.0, %v1042
        %v1044 = vpop.f32.mrb[0].mxu0
        %v1045 = vadd.f32 0.0, %v1044
        %v1046 = vpop.f32.mrb[0].mxu0
        %v1047 = vadd.f32 0.0, %v1046
        %v1048 = vpop.f32.mrb[0].mxu0
        %v1049 = vadd.f32 0.0, %v1048
        %1050 = vmatprep.mubr.bf16.mxu0 0
        %1051 = vmatmul.mubr.bf16.gmra.mrb[0].mxu0 %v902
        %v1052 = vpop.f32.mrb[0].mxu0
        %v1053 = vadd.f32 0.0, %v1052
        %v1054 = vpop.f32.mrb[0].mxu0
        %v1055 = vadd.f32 0.0, %v1054
        %v1056 = vpop.f32.mrb[0].mxu0
        %v1057 = vadd.f32 0.0, %v1056
        %v1058 = vpop.f32.mrb[0].mxu0
        %v1059 = vadd.f32 0.0, %v1058
        %1060 = vmatprep.mubr.bf16.mxu0 0
        %1061 = vmatmul.mubr.bf16.gmra.mrb[0].mxu0 %v905
        %v1062 = vpop.f32.mrb[0].mxu0
        %v1063 = vadd.f32 0.0, %v1062
        %v1064 = vpop.f32.mrb[0].mxu0
        %v1065 = vadd.f32 0.0, %v1064
        %v1066 = vpop.f32.mrb[0].mxu0
        %v1067 = vadd.f32 0.0, %v1066
        %v1068 = vpop.f32.mrb[0].mxu0
        %v1069 = vadd.f32 0.0, %v1068
        %1070 = vmatprep.mubr.bf16.mxu0 0
        %1071 = vmatmul.mubr.bf16.gmra.mrb[0].mxu0 %v908
        %v1072 = vpop.f32.mrb[0].mxu0
        %v1073 = vadd.f32 0.0, %v1072
        %v1074 = vpop.f32.mrb[0].mxu0
        %v1075 = vadd.f32 0.0, %v1074
        %v1076 = vpop.f32.mrb[0].mxu0
        %v1077 = vadd.f32 0.0, %v1076
        %v1078 = vpop.f32.mrb[0].mxu0
        %v1079 = vadd.f32 0.0, %v1078
        %1080 = vmatprep.mubr.bf16.mxu0 0
        %1081 = vmatmul.mubr.bf16.gmra.mrb[0].mxu0 %v911
        %v1082 = vpop.f32.mrb[0].mxu0
        %v1083 = vadd.f32 0.0, %v1082
        %v1084 = vpop.f32.mrb[0].mxu0
        %v1085 = vadd.f32 0.0, %v1084
        %v1086 = vpop.f32.mrb[0].mxu0
        %v1087 = vadd.f32 0.0, %v1086
        %v1088 = vpop.f32.mrb[0].mxu0
        %v1089 = vadd.f32 0.0, %v1088
        %1090 = vmatprep.mubr.bf16.mxu0 0
        %1091 = vmatmul.mubr.bf16.gmra.mrb[0].mxu0 %v914
        %v1092 = vpop.f32.mrb[0].mxu0
        %v1093 = vadd.f32 0.0, %v1092
        %v1094 = vpop.f32.mrb[0].mxu0
        %v1095 = vadd.f32 0.0, %v1094
        %v1096 = vpop.f32.mrb[0].mxu0
        %v1097 = vadd.f32 0.0, %v1096
        %v1098 = vpop.f32.mrb[0].mxu0
        %v1099 = vadd.f32 0.0, %v1098
        %1100 = vmatprep.mubr.bf16.mxu0 0
        %1101 = vmatmul.mubr.bf16.gmra.mrb[0].mxu0 %v917
        %v1102 = vpop.f32.mrb[0].mxu0
        %v1103 = vadd.f32 0.0, %v1102
        %v1104 = vpop.f32.mrb[0].mxu0
        %v1105 = vadd.f32 0.0, %v1104
        %v1106 = vpop.f32.mrb[0].mxu0
        %v1107 = vadd.f32 0.0, %v1106
        %v1108 = vpop.f32.mrb[0].mxu0
        %v1109 = vadd.f32 0.0, %v1108
        %1110 = vmatprep.mubr.bf16.mxu0 0
        %1111 = vmatmul.mubr.bf16.gmra.mrb[0].mxu0 %v920
        %v1112 = vpop.f32.mrb[0].mxu0
        %v1113 = vadd.f32 0.0, %v1112
        %v1114 = vpop.f32.mrb[0].mxu0
        %v1115 = vadd.f32 0.0, %v1114
        %v1116 = vpop.f32.mrb[0].mxu0
        %v1117 = vadd.f32 0.0, %v1116
        %v1118 = vpop.f32.mrb[0].mxu0
        %v1119 = vadd.f32 0.0, %v1118
        %1120 = vmatprep.mubr.bf16.mxu0 0
        %1121 = vmatmul.mubr.bf16.gmra.mrb[0].mxu0 %v923
        %v1122 = vpop.f32.mrb[0].mxu0
        %v1123 = vadd.f32 0.0, %v1122
        %v1124 = vpop.f32.mrb[0].mxu0
        %v1125 = vadd.f32 0.0, %v1124
        %v1126 = vpop.f32.mrb[0].mxu0
        %v1127 = vadd.f32 0.0, %v1126
        %v1128 = vpop.f32.mrb[0].mxu0
        %v1129 = vadd.f32 0.0, %v1128
        %1130 = vmatprep.mubr.bf16.mxu0 0
        %1131 = vmatmul.mubr.bf16.gmra.mrb[0].mxu0 %v926
        %v1132 = vpop.f32.mrb[0].mxu0
        %v1133 = vadd.f32 0.0, %v1132
        %v1134 = vpop.f32.mrb[0].mxu0
        %v1135 = vadd.f32 0.0, %v1134
        %v1136 = vpop.f32.mrb[0].mxu0
        %v1137 = vadd.f32 0.0, %v1136
        %v1138 = vpop.f32.mrb[0].mxu0
        %v1139 = vadd.f32 0.0, %v1138
        %1140 = vmatprep.mubr.bf16.mxu0 0
        %1141 = vmatmul.mubr.bf16.gmra.mrb[0].mxu0 %v929
        %v1142 = vpop.f32.mrb[0].mxu0
        %v1143 = vadd.f32 0.0, %v1142
        %v1144 = vpop.f32.mrb[0].mxu0
        %v1145 = vadd.f32 0.0, %v1144
        %v1146 = vpop.f32.mrb[0].mxu0
        %v1147 = vadd.f32 0.0, %v1146
        %v1148 = vpop.f32.mrb[0].mxu0
        %v1149 = vadd.f32 0.0, %v1148
        %1150 = vmatprep.mubr.bf16.mxu0 0
        %1151 = vmatmul.mubr.bf16.gmra.mrb[0].mxu0 %v932
        %v1152 = vpop.f32.mrb[0].mxu0
        %v1153 = vadd.f32 0.0, %v1152
        %v1154 = vpop.f32.mrb[0].mxu0
        %v1155 = vadd.f32 0.0, %v1154
        %v1156 = vpop.f32.mrb[0].mxu0
        %v1157 = vadd.f32 0.0, %v1156
        %v1158 = vpop.f32.mrb[0].mxu0
        %v1159 = vadd.f32 0.0, %v1158
        %1160 = vmatprep.mubr.bf16.mxu0 0
        %1161 = vmatmul.mubr.bf16.gmra.mrb[0].mxu0 %v935
        %v1162 = vpop.f32.mrb[0].mxu0
        %v1163 = vadd.f32 0.0, %v1162
        %v1164 = vpop.f32.mrb[0].mxu0
        %v1165 = vadd.f32 0.0, %v1164
        %v1166 = vpop.f32.mrb[0].mxu0
        %v1167 = vadd.f32 0.0, %v1166
        %v1168 = vpop.f32.mrb[0].mxu0
        %v1169 = vadd.f32 0.0, %v1168
        %1170 = vmatprep.mubr.bf16.mxu0 0
        %1171 = vmatmul.mubr.bf16.gmra.mrb[0].mxu0 %v938
        %v1172 = vpop.f32.mrb[0].mxu0
        %v1173 = vadd.f32 0.0, %v1172
        %v1174 = vpop.f32.mrb[0].mxu0
        %v1175 = vadd.f32 0.0, %v1174
        %v1176 = vpop.f32.mrb[0].mxu0
        %v1177 = vadd.f32 0.0, %v1176
        %v1178 = vpop.f32.mrb[0].mxu0
        %v1179 = vadd.f32 0.0, %v1178
        %1180 = vmatprep.mubr.bf16.mxu0 0
        %1181 = vmatmul.mubr.bf16.gmra.mrb[0].mxu0 %v941
        %v1182 = vpop.f32.mrb[0].mxu0
        %v1183 = vadd.f32 0.0, %v1182
        %v1184 = vpop.f32.mrb[0].mxu0
        %v1185 = vadd.f32 0.0, %v1184
        %v1186 = vpop.f32.mrb[0].mxu0
        %v1187 = vadd.f32 0.0, %v1186
        %v1188 = vpop.f32.mrb[0].mxu0
        %v1189 = vadd.f32 0.0, %v1188
        %1190 = vmatprep.mubr.bf16.mxu0 0
        %1191 = vmatmul.mubr.bf16.gmra.mrb[0].mxu0 %v944
        %v1192 = vpop.f32.mrb[0].mxu0
        %v1193 = vadd.f32 0.0, %v1192
        %v1194 = vpop.f32.mrb[0].mxu0
        %v1195 = vadd.f32 0.0, %v1194
        %v1196 = vpop.f32.mrb[0].mxu0
        %v1197 = vadd.f32 0.0, %v1196
        %v1198 = vpop.f32.mrb[0].mxu0
        %v1199 = vadd.f32 0.0, %v1198
        %1200 = vmatprep.mubr.bf16.mxu0 0
        %1201 = vmatmul.mubr.bf16.gmra.mrb[0].mxu0 %v947
        %v1202 = vpop.f32.mrb[0].mxu0
        %v1203 = vadd.f32 0.0, %v1202
        %v1204 = vpop.f32.mrb[0].mxu0
        %v1205 = vadd.f32 0.0, %v1204
        %v1206 = vpop.f32.mrb[0].mxu0
        %v1207 = vadd.f32 0.0, %v1206
        %v1208 = vpop.f32.mrb[0].mxu0
        %v1209 = vadd.f32 0.0, %v1208
        %1210 = vmatprep.mubr.bf16.mxu0 0
        %1211 = vmatmul.mubr.bf16.gmra.mrb[0].mxu0 %v950
        %v1212 = vpop.f32.mrb[0].mxu0
        %v1213 = vadd.f32 0.0, %v1212
        %v1214 = vpop.f32.mrb[0].mxu0
        %v1215 = vadd.f32 0.0, %v1214
        %v1216 = vpop.f32.mrb[0].mxu0
        %v1217 = vadd.f32 0.0, %v1216
        %v1218 = vpop.f32.mrb[0].mxu0
        %v1219 = vadd.f32 0.0, %v1218
        %1220 = vmatprep.mubr.bf16.mxu0 0
        %1221 = vmatmul.mubr.bf16.gmra.mrb[0].mxu0 %v953
        %v1222 = vpop.f32.mrb[0].mxu0
        %v1223 = vadd.f32 0.0, %v1222
        %v1224 = vpop.f32.mrb[0].mxu0
        %v1225 = vadd.f32 0.0, %v1224
        %v1226 = vpop.f32.mrb[0].mxu0
        %v1227 = vadd.f32 0.0, %v1226
        %v1228 = vpop.f32.mrb[0].mxu0
        %v1229 = vadd.f32 0.0, %v1228
        %1230 = vmatprep.mubr.bf16.mxu0 0
        %1231 = vmatmul.mubr.bf16.gmra.mrb[0].mxu0 %v956
        %v1232 = vpop.f32.mrb[0].mxu0
        %v1233 = vadd.f32 0.0, %v1232
        %v1234 = vpop.f32.mrb[0].mxu0
        %v1235 = vadd.f32 0.0, %v1234
        %v1236 = vpop.f32.mrb[0].mxu0
        %v1237 = vadd.f32 0.0, %v1236
        %v1238 = vpop.f32.mrb[0].mxu0
        %v1239 = vadd.f32 0.0, %v1238
        %1240 = vmatprep.mubr.bf16.mxu0 0
        %1241 = vmatmul.mubr.bf16.gmra.mrb[0].mxu0 %v959
        %v1242 = vpop.f32.mrb[0].mxu0
        %v1243 = vadd.f32 0.0, %v1242
        %v1244 = vpop.f32.mrb[0].mxu0
        %v1245 = vadd.f32 0.0, %v1244
        %v1246 = vpop.f32.mrb[0].mxu0
        %v1247 = vadd.f32 0.0, %v1246
        %v1248 = vpop.f32.mrb[0].mxu0
        %v1249 = vadd.f32 0.0, %v1248
        %1250 = vmatprep.mubr.bf16.mxu0 0
        %1251 = vmatmul.mubr.bf16.gmra.mrb[0].mxu0 %v962
        %v1252 = vpop.f32.mrb[0].mxu0
        %v1253 = vadd.f32 0.0, %v1252
        %v1254 = vpop.f32.mrb[0].mxu0
        %v1255 = vadd.f32 0.0, %v1254
        %v1256 = vpop.f32.mrb[0].mxu0
        %v1257 = vadd.f32 0.0, %v1256
        %v1258 = vpop.f32.mrb[0].mxu0
        %v1259 = vadd.f32 0.0, %v1258
        %1260 = vmatprep.mubr.bf16.mxu0 0
        %1261 = vmatmul.mubr.bf16.gmra.mrb[0].mxu0 %v965
        %v1262 = vpop.f32.mrb[0].mxu0
        %v1263 = vadd.f32 0.0, %v1262
        %v1264 = vpop.f32.mrb[0].mxu0
        %v1265 = vadd.f32 0.0, %v1264
        %v1266 = vpop.f32.mrb[0].mxu0
        %v1267 = vadd.f32 0.0, %v1266
        %v1268 = vpop.f32.mrb[0].mxu0
        %v1269 = vadd.f32 0.0, %v1268
        %1270 = vmatprep.mubr.bf16.mxu0 0
        %1271 = vmatmul.mubr.bf16.gmra.mrb[0].mxu0 %v968
        %v1272 = vpop.f32.mrb[0].mxu0
        %v1273 = vadd.f32 0.0, %v1272
        %v1274 = vpop.f32.mrb[0].mxu0
        %v1275 = vadd.f32 0.0, %v1274
        %v1276 = vpop.f32.mrb[0].mxu0
        %v1277 = vadd.f32 0.0, %v1276
        %v1278 = vpop.f32.mrb[0].mxu0
        %v1279 = vadd.f32 0.0, %v1278
        %1280 = vmatprep.mubr.bf16.mxu0 0
        %1281 = vmatmul.mubr.bf16.gmra.mrb[0].mxu0 %v971
        %v1282 = vpop.f32.mrb[0].mxu0
        %v1283 = vadd.f32 0.0, %v1282
        %v1284 = vpop.f32.mrb[0].mxu0
        %v1285 = vadd.f32 0.0, %v1284
        %v1286 = vpop.f32.mrb[0].mxu0
        %v1287 = vadd.f32 0.0, %v1286
        %v1288 = vpop.f32.mrb[0].mxu0
        %v1289 = vadd.f32 0.0, %v1288
        %1290 = vmatprep.mubr.bf16.mxu0 0
        %1291 = vmatmul.mubr.bf16.gmra.mrb[0].mxu0 %v974
        %v1292 = vpop.f32.mrb[0].mxu0
        %v1293 = vadd.f32 0.0, %v1292
        %v1294 = vpop.f32.mrb[0].mxu0
        %v1295 = vadd.f32 0.0, %v1294
        %v1296 = vpop.f32.mrb[0].mxu0
        %v1297 = vadd.f32 0.0, %v1296
        %v1298 = vpop.f32.mrb[0].mxu0
        %v1299 = vadd.f32 0.0, %v1298
        %1300 = vmatprep.mubr.bf16.mxu0 0
        %1301 = vmatmul.mubr.bf16.gmra.mrb[0].mxu0 %v977
        %v1302 = vpop.f32.mrb[0].mxu0
        %v1303 = vadd.f32 0.0, %v1302
        %v1304 = vpop.f32.mrb[0].mxu0
        %v1305 = vadd.f32 0.0, %v1304
        %v1306 = vpop.f32.mrb[0].mxu0
        %v1307 = vadd.f32 0.0, %v1306
        %v1308 = vpop.f32.mrb[0].mxu0
        %v1309 = vadd.f32 0.0, %v1308
        %1310 = vmatprep.mubr.bf16.mxu0 0
        %1311 = vmatmul.mubr.bf16.gmra.mrb[0].mxu0 %v980
        %v1312 = vpop.f32.mrb[0].mxu0
        %v1313 = vadd.f32 0.0, %v1312
        %v1314 = vpop.f32.mrb[0].mxu0
        %v1315 = vadd.f32 0.0, %v1314
        %v1316 = vpop.f32.mrb[0].mxu0
        %v1317 = vadd.f32 0.0, %v1316
        %v1318 = vpop.f32.mrb[0].mxu0
        %v1319 = vadd.f32 0.0, %v1318
        %1320 = vmatprep.mubr.bf16.mxu0 0
        %1321 = vmatmul.mubr.bf16.gmra.mrb[0].mxu0 %v983
        %v1322 = vpop.f32.mrb[0].mxu0
        %v1323 = vadd.f32 0.0, %v1322
        %v1324 = vpop.f32.mrb[0].mxu0
        %v1325 = vadd.f32 0.0, %v1324
        %v1326 = vpop.f32.mrb[0].mxu0
        %v1327 = vadd.f32 0.0, %v1326
        %v1328 = vpop.f32.mrb[0].mxu0
        %v1329 = vadd.f32 0.0, %v1328
        %1330 = vmatprep.mubr.bf16.mxu0 0
        %1331 = vmatmul.mubr.bf16.gmra.mrb[0].mxu0 %v986
        %v1332 = vpop.f32.mrb[0].mxu0
        %v1333 = vadd.f32 0.0, %v1332
        %v1334 = vpop.f32.mrb[0].mxu0
        %v1335 = vadd.f32 0.0, %v1334
        %v1336 = vpop.f32.mrb[0].mxu0
        %v1337 = vadd.f32 0.0, %v1336
        %v1338 = vpop.f32.mrb[0].mxu0
        %v1339 = vadd.f32 0.0, %v1338
        %1340 = vmatprep.mubr.bf16.mxu0 0
        %1341 = vmatmul.mubr.bf16.gmra.mrb[0].mxu0 %v989
        %v1342 = vpop.f32.mrb[0].mxu0
        %v1343 = vadd.f32 0.0, %v1342
        %v1344 = vpop.f32.mrb[0].mxu0
        %v1345 = vadd.f32 0.0, %v1344
        %v1346 = vpop.f32.mrb[0].mxu0
        %v1347 = vadd.f32 0.0, %v1346
        %v1348 = vpop.f32.mrb[0].mxu0
        %v1349 = vadd.f32 0.0, %v1348
        %1350 = vdwg.mxu0
        %v1351 = vadd.f32 %v512, %v1033
        %v1352 = vadd.f32 %v513, %v1035
        %v1353 = vadd.f32 %v514, %v1037
        %v1354 = vadd.f32 %v515, %v1039
        %v1355 = vadd.f32 %v516, %v1043
        %v1356 = vadd.f32 %v517, %v1045
        %v1357 = vadd.f32 %v518, %v1047
        %v1358 = vadd.f32 %v519, %v1049
        %v1359 = vadd.f32 %v520, %v1053
        %v1360 = vadd.f32 %v521, %v1055
        %v1361 = vadd.f32 %v522, %v1057
        %v1362 = vadd.f32 %v523, %v1059
        %v1363 = vadd.f32 %v524, %v1063
        %v1364 = vadd.f32 %v525, %v1065
        %v1365 = vadd.f32 %v526, %v1067
        %v1366 = vadd.f32 %v527, %v1069
        %v1367 = vadd.f32 %v528, %v1073
        %v1368 = vadd.f32 %v529, %v1075
        %v1369 = vadd.f32 %v530, %v1077
        %v1370 = vadd.f32 %v531, %v1079
        %v1371 = vadd.f32 %v532, %v1083
        %v1372 = vadd.f32 %v533, %v1085
        %v1373 = vadd.f32 %v534, %v1087
        %v1374 = vadd.f32 %v535, %v1089
        %v1375 = vadd.f32 %v536, %v1093
        %v1376 = vadd.f32 %v537, %v1095
        %v1377 = vadd.f32 %v538, %v1097
        %v1378 = vadd.f32 %v539, %v1099
        %v1379 = vadd.f32 %v540, %v1103
        %v1380 = vadd.f32 %v541, %v1105
        %v1381 = vadd.f32 %v542, %v1107
        %v1382 = vadd.f32 %v543, %v1109
        %v1383 = vadd.f32 %v544, %v1113
        %v1384 = vadd.f32 %v545, %v1115
        %v1385 = vadd.f32 %v546, %v1117
        %v1386 = vadd.f32 %v547, %v1119
        %v1387 = vadd.f32 %v548, %v1123
        %v1388 = vadd.f32 %v549, %v1125
        %v1389 = vadd.f32 %v550, %v1127
        %v1390 = vadd.f32 %v551, %v1129
        %v1391 = vadd.f32 %v552, %v1133
        %v1392 = vadd.f32 %v553, %v1135
        %v1393 = vadd.f32 %v554, %v1137
        %v1394 = vadd.f32 %v555, %v1139
        %v1395 = vadd.f32 %v556, %v1143
        %v1396 = vadd.f32 %v557, %v1145
        %v1397 = vadd.f32 %v558, %v1147
        %v1398 = vadd.f32 %v559, %v1149
        %v1399 = vadd.f32 %v560, %v1153
        %v1400 = vadd.f32 %v561, %v1155
        %v1401 = vadd.f32 %v562, %v1157
        %v1402 = vadd.f32 %v563, %v1159
        %v1403 = vadd.f32 %v564, %v1163
        %v1404 = vadd.f32 %v565, %v1165
        %v1405 = vadd.f32 %v566, %v1167
        %v1406 = vadd.f32 %v567, %v1169
        %v1407 = vadd.f32 %v568, %v1173
        %v1408 = vadd.f32 %v569, %v1175
        %v1409 = vadd.f32 %v570, %v1177
        %v1410 = vadd.f32 %v571, %v1179
        %v1411 = vadd.f32 %v572, %v1183
        %v1412 = vadd.f32 %v573, %v1185
        %v1413 = vadd.f32 %v574, %v1187
        %v1414 = vadd.f32 %v575, %v1189
        %v1415 = vadd.f32 %v576, %v1193
        %v1416 = vadd.f32 %v577, %v1195
        %v1417 = vadd.f32 %v578, %v1197
        %v1418 = vadd.f32 %v579, %v1199
        %v1419 = vadd.f32 %v580, %v1203
        %v1420 = vadd.f32 %v581, %v1205
        %v1421 = vadd.f32 %v582, %v1207
        %v1422 = vadd.f32 %v583, %v1209
        %v1423 = vadd.f32 %v584, %v1213
        %v1424 = vadd.f32 %v585, %v1215
        %v1425 = vadd.f32 %v586, %v1217
        %v1426 = vadd.f32 %v587, %v1219
        %v1427 = vadd.f32 %v588, %v1223
        %v1428 = vadd.f32 %v589, %v1225
        %v1429 = vadd.f32 %v590, %v1227
        %v1430 = vadd.f32 %v591, %v1229
        %v1431 = vadd.f32 %v592, %v1233
        %v1432 = vadd.f32 %v593, %v1235
        %v1433 = vadd.f32 %v594, %v1237
        %v1434 = vadd.f32 %v595, %v1239
        %v1435 = vadd.f32 %v596, %v1243
        %v1436 = vadd.f32 %v597, %v1245
        %v1437 = vadd.f32 %v598, %v1247
        %v1438 = vadd.f32 %v599, %v1249
        %v1439 = vadd.f32 %v600, %v1253
        %v1440 = vadd.f32 %v601, %v1255
        %v1441 = vadd.f32 %v602, %v1257
        %v1442 = vadd.f32 %v603, %v1259
        %v1443 = vadd.f32 %v604, %v1263
        %v1444 = vadd.f32 %v605, %v1265
        %v1445 = vadd.f32 %v606, %v1267
        %v1446 = vadd.f32 %v607, %v1269
        %v1447 = vadd.f32 %v608, %v1273
        %v1448 = vadd.f32 %v609, %v1275
        %v1449 = vadd.f32 %v610, %v1277
        %v1450 = vadd.f32 %v611, %v1279
        %v1451 = vadd.f32 %v612, %v1283
        %v1452 = vadd.f32 %v613, %v1285
        %v1453 = vadd.f32 %v614, %v1287
        %v1454 = vadd.f32 %v615, %v1289
        %v1455 = vadd.f32 %v616, %v1293
        %v1456 = vadd.f32 %v617, %v1295
        %v1457 = vadd.f32 %v618, %v1297
        %v1458 = vadd.f32 %v619, %v1299
        %v1459 = vadd.f32 %v620, %v1303
        %v1460 = vadd.f32 %v621, %v1305
        %v1461 = vadd.f32 %v622, %v1307
        %v1462 = vadd.f32 %v623, %v1309
        %v1463 = vadd.f32 %v624, %v1313
        %v1464 = vadd.f32 %v625, %v1315
        %v1465 = vadd.f32 %v626, %v1317
        %v1466 = vadd.f32 %v627, %v1319
        %v1467 = vadd.f32 %v628, %v1323
        %v1468 = vadd.f32 %v629, %v1325
        %v1469 = vadd.f32 %v630, %v1327
        %v1470 = vadd.f32 %v631, %v1329
        %v1471 = vadd.f32 %v632, %v1333
        %v1472 = vadd.f32 %v633, %v1335
        %v1473 = vadd.f32 %v634, %v1337
        %v1474 = vadd.f32 %v635, %v1339
        %v1475 = vadd.f32 %v636, %v1343
        %v1476 = vadd.f32 %v637, %v1345
        %v1477 = vadd.f32 %v638, %v1347
        %v1478 = vadd.f32 %v639, %v1349
        %1479 = vst [vmem:[#allocation2] sm:$0xff] %v1351
        %1480 = vst [vmem:[#allocation2 + $0x8] sm:$0xff] %v1352
        %1481 = vst [vmem:[#allocation2 + $0x10] sm:$0xff] %v1353
        %1482 = vst [vmem:[#allocation2 + $0x18] sm:$0xff] %v1354
        %1483 = vst [vmem:[#allocation2 + $0x20] sm:$0xff] %v1355
        %1484 = vst [vmem:[#allocation2 + $0x28] sm:$0xff] %v1356
        %1485 = vst [vmem:[#allocation2 + $0x30] sm:$0xff] %v1357
        %1486 = vst [vmem:[#allocation2 + $0x38] sm:$0xff] %v1358
        %1487 = vst [vmem:[#allocation2 + $0x40] sm:$0xff] %v1359
        %1488 = vst [vmem:[#allocation2 + $0x48] sm:$0xff] %v1360
        %1489 = vst [vmem:[#allocation2 + $0x50] sm:$0xff] %v1361
        %1490 = vst [vmem:[#allocation2 + $0x58] sm:$0xff] %v1362
        %1491 = vst [vmem:[#allocation2 + $0x60] sm:$0xff] %v1363
        %1492 = vst [vmem:[#allocation2 + $0x68] sm:$0xff] %v1364
        %1493 = vst [vmem:[#allocation2 + $0x70] sm:$0xff] %v1365
        %1494 = vst [vmem:[#allocation2 + $0x78] sm:$0xff] %v1366
        %1495 = vst [vmem:[#allocation2 + $0x80] sm:$0xff] %v1367
        %1496 = vst [vmem:[#allocation2 + $0x88] sm:$0xff] %v1368
        %1497 = vst [vmem:[#allocation2 + $0x90] sm:$0xff] %v1369
        %1498 = vst [vmem:[#allocation2 + $0x98] sm:$0xff] %v1370
        %1499 = vst [vmem:[#allocation2 + $0xa0] sm:$0xff] %v1371
        %1500 = vst [vmem:[#allocation2 + $0xa8] sm:$0xff] %v1372
        %1501 = vst [vmem:[#allocation2 + $0xb0] sm:$0xff] %v1373
        %1502 = vst [vmem:[#allocation2 + $0xb8] sm:$0xff] %v1374
        %1503 = vst [vmem:[#allocation2 + $0xc0] sm:$0xff] %v1375
        %1504 = vst [vmem:[#allocation2 + $0xc8] sm:$0xff] %v1376
        %1505 = vst [vmem:[#allocation2 + $0xd0] sm:$0xff] %v1377
        %1506 = vst [vmem:[#allocation2 + $0xd8] sm:$0xff] %v1378
        %1507 = vst [vmem:[#allocation2 + $0xe0] sm:$0xff] %v1379
        %1508 = vst [vmem:[#allocation2 + $0xe8] sm:$0xff] %v1380
        %1509 = vst [vmem:[#allocation2 + $0xf0] sm:$0xff] %v1381
        %1510 = vst [vmem:[#allocation2 + $0xf8] sm:$0xff] %v1382
        %1511 = vst [vmem:[#allocation2 + $0x100] sm:$0xff] %v1383
        %1512 = vst [vmem:[#allocation2 + $0x108] sm:$0xff] %v1384
        %1513 = vst [vmem:[#allocation2 + $0x110] sm:$0xff] %v1385
        %1514 = vst [vmem:[#allocation2 + $0x118] sm:$0xff] %v1386
        %1515 = vst [vmem:[#allocation2 + $0x120] sm:$0xff] %v1387
        %1516 = vst [vmem:[#allocation2 + $0x128] sm:$0xff] %v1388
        %1517 = vst [vmem:[#allocation2 + $0x130] sm:$0xff] %v1389
        %1518 = vst [vmem:[#allocation2 + $0x138] sm:$0xff] %v1390
        %1519 = vst [vmem:[#allocation2 + $0x140] sm:$0xff] %v1391
        %1520 = vst [vmem:[#allocation2 + $0x148] sm:$0xff] %v1392
        %1521 = vst [vmem:[#allocation2 + $0x150] sm:$0xff] %v1393
        %1522 = vst [vmem:[#allocation2 + $0x158] sm:$0xff] %v1394
        %1523 = vst [vmem:[#allocation2 + $0x160] sm:$0xff] %v1395
        %1524 = vst [vmem:[#allocation2 + $0x168] sm:$0xff] %v1396
        %1525 = vst [vmem:[#allocation2 + $0x170] sm:$0xff] %v1397
        %1526 = vst [vmem:[#allocation2 + $0x178] sm:$0xff] %v1398
        %1527 = vst [vmem:[#allocation2 + $0x180] sm:$0xff] %v1399
        %1528 = vst [vmem:[#allocation2 + $0x188] sm:$0xff] %v1400
        %1529 = vst [vmem:[#allocation2 + $0x190] sm:$0xff] %v1401
        %1530 = vst [vmem:[#allocation2 + $0x198] sm:$0xff] %v1402
        %1531 = vst [vmem:[#allocation2 + $0x1a0] sm:$0xff] %v1403
        %1532 = vst [vmem:[#allocation2 + $0x1a8] sm:$0xff] %v1404
        %1533 = vst [vmem:[#allocation2 + $0x1b0] sm:$0xff] %v1405
        %1534 = vst [vmem:[#allocation2 + $0x1b8] sm:$0xff] %v1406
        %1535 = vst [vmem:[#allocation2 + $0x1c0] sm:$0xff] %v1407
        %1536 = vst [vmem:[#allocation2 + $0x1c8] sm:$0xff] %v1408
        %1537 = vst [vmem:[#allocation2 + $0x1d0] sm:$0xff] %v1409
        %1538 = vst [vmem:[#allocation2 + $0x1d8] sm:$0xff] %v1410
        %1539 = vst [vmem:[#allocation2 + $0x1e0] sm:$0xff] %v1411
        %1540 = vst [vmem:[#allocation2 + $0x1e8] sm:$0xff] %v1412
        %1541 = vst [vmem:[#allocation2 + $0x1f0] sm:$0xff] %v1413
        %1542 = vst [vmem:[#allocation2 + $0x1f8] sm:$0xff] %v1414
        %1543 = vst [vmem:[#allocation2 + $0x200] sm:$0xff] %v1415
        %1544 = vst [vmem:[#allocation2 + $0x208] sm:$0xff] %v1416
        %1545 = vst [vmem:[#allocation2 + $0x210] sm:$0xff] %v1417
        %1546 = vst [vmem:[#allocation2 + $0x218] sm:$0xff] %v1418
        %1547 = vst [vmem:[#allocation2 + $0x220] sm:$0xff] %v1419
        %1548 = vst [vmem:[#allocation2 + $0x228] sm:$0xff] %v1420
        %1549 = vst [vmem:[#allocation2 + $0x230] sm:$0xff] %v1421
        %1550 = vst [vmem:[#allocation2 + $0x238] sm:$0xff] %v1422
        %1551 = vst [vmem:[#allocation2 + $0x240] sm:$0xff] %v1423
        %1552 = vst [vmem:[#allocation2 + $0x248] sm:$0xff] %v1424
        %1553 = vst [vmem:[#allocation2 + $0x250] sm:$0xff] %v1425
        %1554 = vst [vmem:[#allocation2 + $0x258] sm:$0xff] %v1426
        %1555 = vst [vmem:[#allocation2 + $0x260] sm:$0xff] %v1427
        %1556 = vst [vmem:[#allocation2 + $0x268] sm:$0xff] %v1428
        %1557 = vst [vmem:[#allocation2 + $0x270] sm:$0xff] %v1429
        %1558 = vst [vmem:[#allocation2 + $0x278] sm:$0xff] %v1430
        %1559 = vst [vmem:[#allocation2 + $0x280] sm:$0xff] %v1431
        %1560 = vst [vmem:[#allocation2 + $0x288] sm:$0xff] %v1432
        %1561 = vst [vmem:[#allocation2 + $0x290] sm:$0xff] %v1433
        %1562 = vst [vmem:[#allocation2 + $0x298] sm:$0xff] %v1434
        %1563 = vst [vmem:[#allocation2 + $0x2a0] sm:$0xff] %v1435
        %1564 = vst [vmem:[#allocation2 + $0x2a8] sm:$0xff] %v1436
        %1565 = vst [vmem:[#allocation2 + $0x2b0] sm:$0xff] %v1437
        %1566 = vst [vmem:[#allocation2 + $0x2b8] sm:$0xff] %v1438
        %1567 = vst [vmem:[#allocation2 + $0x2c0] sm:$0xff] %v1439
        %1568 = vst [vmem:[#allocation2 + $0x2c8] sm:$0xff] %v1440
        %1569 = vst [vmem:[#allocation2 + $0x2d0] sm:$0xff] %v1441
        %1570 = vst [vmem:[#allocation2 + $0x2d8] sm:$0xff] %v1442
        %1571 = vst [vmem:[#allocation2 + $0x2e0] sm:$0xff] %v1443
        %1572 = vst [vmem:[#allocation2 + $0x2e8] sm:$0xff] %v1444
        %1573 = vst [vmem:[#allocation2 + $0x2f0] sm:$0xff] %v1445
        %1574 = vst [vmem:[#allocation2 + $0x2f8] sm:$0xff] %v1446
        %1575 = vst [vmem:[#allocation2 + $0x300] sm:$0xff] %v1447
        %1576 = vst [vmem:[#allocation2 + $0x308] sm:$0xff] %v1448
        %1577 = vst [vmem:[#allocation2 + $0x310] sm:$0xff] %v1449
        %1578 = vst [vmem:[#allocation2 + $0x318] sm:$0xff] %v1450
        %1579 = vst [vmem:[#allocation2 + $0x320] sm:$0xff] %v1451
        %1580 = vst [vmem:[#allocation2 + $0x328] sm:$0xff] %v1452
        %1581 = vst [vmem:[#allocation2 + $0x330] sm:$0xff] %v1453
        %1582 = vst [vmem:[#allocation2 + $0x338] sm:$0xff] %v1454
        %1583 = vst [vmem:[#allocation2 + $0x340] sm:$0xff] %v1455
        %1584 = vst [vmem:[#allocation2 + $0x348] sm:$0xff] %v1456
        %1585 = vst [vmem:[#allocation2 + $0x350] sm:$0xff] %v1457
        %1586 = vst [vmem:[#allocation2 + $0x358] sm:$0xff] %v1458
        %1587 = vst [vmem:[#allocation2 + $0x360] sm:$0xff] %v1459
        %1588 = vst [vmem:[#allocation2 + $0x368] sm:$0xff] %v1460
        %1589 = vst [vmem:[#allocation2 + $0x370] sm:$0xff] %v1461
        %1590 = vst [vmem:[#allocation2 + $0x378] sm:$0xff] %v1462
        %1591 = vst [vmem:[#allocation2 + $0x380] sm:$0xff] %v1463
        %1592 = vst [vmem:[#allocation2 + $0x388] sm:$0xff] %v1464
        %1593 = vst [vmem:[#allocation2 + $0x390] sm:$0xff] %v1465
        %1594 = vst [vmem:[#allocation2 + $0x398] sm:$0xff] %v1466
        %1595 = vst [vmem:[#allocation2 + $0x3a0] sm:$0xff] %v1467
        %1596 = vst [vmem:[#allocation2 + $0x3a8] sm:$0xff] %v1468
        %1597 = vst [vmem:[#allocation2 + $0x3b0] sm:$0xff] %v1469
        %1598 = vst [vmem:[#allocation2 + $0x3b8] sm:$0xff] %v1470
        %1599 = vst [vmem:[#allocation2 + $0x3c0] sm:$0xff] %v1471
        %1600 = vst [vmem:[#allocation2 + $0x3c8] sm:$0xff] %v1472
        %1601 = vst [vmem:[#allocation2 + $0x3d0] sm:$0xff] %v1473
        %1602 = vst [vmem:[#allocation2 + $0x3d8] sm:$0xff] %v1474
        %1603 = vst [vmem:[#allocation2 + $0x3e0] sm:$0xff] %v1475
        %1604 = vst [vmem:[#allocation2 + $0x3e8] sm:$0xff] %v1476
        %1605 = vst [vmem:[#allocation2 + $0x3f0] sm:$0xff] %v1477
        %1606 = vst [vmem:[#allocation2 + $0x3f8] sm:$0xff] %v1478
        // Predicated region
        $region75: #{upconv_forward.3} parent=65 // pred_check
          %p1607 = pneg %p380
        $region76: #{upconv_forward.3} parent=65 // pred_check_branch
          %1609 = sbr.rel (%p1607) target = $region78
        $region77: #{upconv_forward.3} parent=65 // pred_region
          %v1610 = vld [vmem:[#allocation2] sm:$0xff]
          %v1611 = vld [vmem:[#allocation2 + $0x8] sm:$0xff]
          %v1612 = vld [vmem:[#allocation2 + $0x10] sm:$0xff]
          %v1613 = vld [vmem:[#allocation2 + $0x18] sm:$0xff]
          %v1614 = vld [vmem:[#allocation2 + $0x20] sm:$0xff]
          %v1615 = vld [vmem:[#allocation2 + $0x28] sm:$0xff]
          %v1616 = vld [vmem:[#allocation2 + $0x30] sm:$0xff]
          %v1617 = vld [vmem:[#allocation2 + $0x38] sm:$0xff]
          %v1618 = vld [vmem:[#allocation2 + $0x40] sm:$0xff]
          %v1619 = vld [vmem:[#allocation2 + $0x48] sm:$0xff]
          %v1620 = vld [vmem:[#allocation2 + $0x50] sm:$0xff]
          %v1621 = vld [vmem:[#allocation2 + $0x58] sm:$0xff]
          %v1622 = vld [vmem:[#allocation2 + $0x60] sm:$0xff]
          %v1623 = vld [vmem:[#allocation2 + $0x68] sm:$0xff]
          %v1624 = vld [vmem:[#allocation2 + $0x70] sm:$0xff]
          %v1625 = vld [vmem:[#allocation2 + $0x78] sm:$0xff]
          %v1626 = vld [vmem:[#allocation2 + $0x80] sm:$0xff]
          %v1627 = vld [vmem:[#allocation2 + $0x88] sm:$0xff]
          %v1628 = vld [vmem:[#allocation2 + $0x90] sm:$0xff]
          %v1629 = vld [vmem:[#allocation2 + $0x98] sm:$0xff]
          %v1630 = vld [vmem:[#allocation2 + $0xa0] sm:$0xff]
          %v1631 = vld [vmem:[#allocation2 + $0xa8] sm:$0xff]
          %v1632 = vld [vmem:[#allocation2 + $0xb0] sm:$0xff]
          %v1633 = vld [vmem:[#allocation2 + $0xb8] sm:$0xff]
          %v1634 = vld [vmem:[#allocation2 + $0xc0] sm:$0xff]
          %v1635 = vld [vmem:[#allocation2 + $0xc8] sm:$0xff]
          %v1636 = vld [vmem:[#allocation2 + $0xd0] sm:$0xff]
          %v1637 = vld [vmem:[#allocation2 + $0xd8] sm:$0xff]
          %v1638 = vld [vmem:[#allocation2 + $0xe0] sm:$0xff]
          %v1639 = vld [vmem:[#allocation2 + $0xe8] sm:$0xff]
          %v1640 = vld [vmem:[#allocation2 + $0xf0] sm:$0xff]
          %v1641 = vld [vmem:[#allocation2 + $0xf8] sm:$0xff]
          %v1642 = vld [vmem:[#allocation2 + $0x100] sm:$0xff]
          %v1643 = vld [vmem:[#allocation2 + $0x108] sm:$0xff]
          %v1644 = vld [vmem:[#allocation2 + $0x110] sm:$0xff]
          %v1645 = vld [vmem:[#allocation2 + $0x118] sm:$0xff]
          %v1646 = vld [vmem:[#allocation2 + $0x120] sm:$0xff]
          %v1647 = vld [vmem:[#allocation2 + $0x128] sm:$0xff]
          %v1648 = vld [vmem:[#allocation2 + $0x130] sm:$0xff]
          %v1649 = vld [vmem:[#allocation2 + $0x138] sm:$0xff]
          %v1650 = vld [vmem:[#allocation2 + $0x140] sm:$0xff]
          %v1651 = vld [vmem:[#allocation2 + $0x148] sm:$0xff]
          %v1652 = vld [vmem:[#allocation2 + $0x150] sm:$0xff]
          %v1653 = vld [vmem:[#allocation2 + $0x158] sm:$0xff]
          %v1654 = vld [vmem:[#allocation2 + $0x160] sm:$0xff]
          %v1655 = vld [vmem:[#allocation2 + $0x168] sm:$0xff]
          %v1656 = vld [vmem:[#allocation2 + $0x170] sm:$0xff]
          %v1657 = vld [vmem:[#allocation2 + $0x178] sm:$0xff]
          %v1658 = vld [vmem:[#allocation2 + $0x180] sm:$0xff]
          %v1659 = vld [vmem:[#allocation2 + $0x188] sm:$0xff]
          %v1660 = vld [vmem:[#allocation2 + $0x190] sm:$0xff]
          %v1661 = vld [vmem:[#allocation2 + $0x198] sm:$0xff]
          %v1662 = vld [vmem:[#allocation2 + $0x1a0] sm:$0xff]
          %v1663 = vld [vmem:[#allocation2 + $0x1a8] sm:$0xff]
          %v1664 = vld [vmem:[#allocation2 + $0x1b0] sm:$0xff]
          %v1665 = vld [vmem:[#allocation2 + $0x1b8] sm:$0xff]
          %v1666 = vld [vmem:[#allocation2 + $0x1c0] sm:$0xff]
          %v1667 = vld [vmem:[#allocation2 + $0x1c8] sm:$0xff]
          %v1668 = vld [vmem:[#allocation2 + $0x1d0] sm:$0xff]
          %v1669 = vld [vmem:[#allocation2 + $0x1d8] sm:$0xff]
          %v1670 = vld [vmem:[#allocation2 + $0x1e0] sm:$0xff]
          %v1671 = vld [vmem:[#allocation2 + $0x1e8] sm:$0xff]
          %v1672 = vld [vmem:[#allocation2 + $0x1f0] sm:$0xff]
          %v1673 = vld [vmem:[#allocation2 + $0x1f8] sm:$0xff]
          %v1674 = vld [vmem:[#allocation2 + $0x200] sm:$0xff]
          %v1675 = vld [vmem:[#allocation2 + $0x208] sm:$0xff]
          %v1676 = vld [vmem:[#allocation2 + $0x210] sm:$0xff]
          %v1677 = vld [vmem:[#allocation2 + $0x218] sm:$0xff]
          %v1678 = vld [vmem:[#allocation2 + $0x220] sm:$0xff]
          %v1679 = vld [vmem:[#allocation2 + $0x228] sm:$0xff]
          %v1680 = vld [vmem:[#allocation2 + $0x230] sm:$0xff]
          %v1681 = vld [vmem:[#allocation2 + $0x238] sm:$0xff]
          %v1682 = vld [vmem:[#allocation2 + $0x240] sm:$0xff]
          %v1683 = vld [vmem:[#allocation2 + $0x248] sm:$0xff]
          %v1684 = vld [vmem:[#allocation2 + $0x250] sm:$0xff]
          %v1685 = vld [vmem:[#allocation2 + $0x258] sm:$0xff]
          %v1686 = vld [vmem:[#allocation2 + $0x260] sm:$0xff]
          %v1687 = vld [vmem:[#allocation2 + $0x268] sm:$0xff]
          %v1688 = vld [vmem:[#allocation2 + $0x270] sm:$0xff]
          %v1689 = vld [vmem:[#allocation2 + $0x278] sm:$0xff]
          %v1690 = vld [vmem:[#allocation2 + $0x280] sm:$0xff]
          %v1691 = vld [vmem:[#allocation2 + $0x288] sm:$0xff]
          %v1692 = vld [vmem:[#allocation2 + $0x290] sm:$0xff]
          %v1693 = vld [vmem:[#allocation2 + $0x298] sm:$0xff]
          %v1694 = vld [vmem:[#allocation2 + $0x2a0] sm:$0xff]
          %v1695 = vld [vmem:[#allocation2 + $0x2a8] sm:$0xff]
          %v1696 = vld [vmem:[#allocation2 + $0x2b0] sm:$0xff]
          %v1697 = vld [vmem:[#allocation2 + $0x2b8] sm:$0xff]
          %v1698 = vld [vmem:[#allocation2 + $0x2c0] sm:$0xff]
          %v1699 = vld [vmem:[#allocation2 + $0x2c8] sm:$0xff]
          %v1700 = vld [vmem:[#allocation2 + $0x2d0] sm:$0xff]
          %v1701 = vld [vmem:[#allocation2 + $0x2d8] sm:$0xff]
          %v1702 = vld [vmem:[#allocation2 + $0x2e0] sm:$0xff]
          %v1703 = vld [vmem:[#allocation2 + $0x2e8] sm:$0xff]
          %v1704 = vld [vmem:[#allocation2 + $0x2f0] sm:$0xff]
          %v1705 = vld [vmem:[#allocation2 + $0x2f8] sm:$0xff]
          %v1706 = vld [vmem:[#allocation2 + $0x300] sm:$0xff]
          %v1707 = vld [vmem:[#allocation2 + $0x308] sm:$0xff]
          %v1708 = vld [vmem:[#allocation2 + $0x310] sm:$0xff]
          %v1709 = vld [vmem:[#allocation2 + $0x318] sm:$0xff]
          %v1710 = vld [vmem:[#allocation2 + $0x320] sm:$0xff]
          %v1711 = vld [vmem:[#allocation2 + $0x328] sm:$0xff]
          %v1712 = vld [vmem:[#allocation2 + $0x330] sm:$0xff]
          %v1713 = vld [vmem:[#allocation2 + $0x338] sm:$0xff]
          %v1714 = vld [vmem:[#allocation2 + $0x340] sm:$0xff]
          %v1715 = vld [vmem:[#allocation2 + $0x348] sm:$0xff]
          %v1716 = vld [vmem:[#allocation2 + $0x350] sm:$0xff]
          %v1717 = vld [vmem:[#allocation2 + $0x358] sm:$0xff]
          %v1718 = vld [vmem:[#allocation2 + $0x360] sm:$0xff]
          %v1719 = vld [vmem:[#allocation2 + $0x368] sm:$0xff]
          %v1720 = vld [vmem:[#allocation2 + $0x370] sm:$0xff]
          %v1721 = vld [vmem:[#allocation2 + $0x378] sm:$0xff]
          %v1722 = vld [vmem:[#allocation2 + $0x380] sm:$0xff]
          %v1723 = vld [vmem:[#allocation2 + $0x388] sm:$0xff]
          %v1724 = vld [vmem:[#allocation2 + $0x390] sm:$0xff]
          %v1725 = vld [vmem:[#allocation2 + $0x398] sm:$0xff]
          %v1726 = vld [vmem:[#allocation2 + $0x3a0] sm:$0xff]
          %v1727 = vld [vmem:[#allocation2 + $0x3a8] sm:$0xff]
          %v1728 = vld [vmem:[#allocation2 + $0x3b0] sm:$0xff]
          %v1729 = vld [vmem:[#allocation2 + $0x3b8] sm:$0xff]
          %v1730 = vld [vmem:[#allocation2 + $0x3c0] sm:$0xff]
          %v1731 = vld [vmem:[#allocation2 + $0x3c8] sm:$0xff]
          %v1732 = vld [vmem:[#allocation2 + $0x3d0] sm:$0xff]
          %v1733 = vld [vmem:[#allocation2 + $0x3d8] sm:$0xff]
          %v1734 = vld [vmem:[#allocation2 + $0x3e0] sm:$0xff]
          %v1735 = vld [vmem:[#allocation2 + $0x3e8] sm:$0xff]
          %v1736 = vld [vmem:[#allocation2 + $0x3f0] sm:$0xff]
          %v1737 = vld [vmem:[#allocation2 + $0x3f8] sm:$0xff]
          %v1738 = vld [vmem:[%s373] sm:$0x3]
          %v1740 = vlaneseq
          %v1741 = vshrl.u32 %v1740, 7
          %v1742 = vsub.s32 0, %v1741
          %v1743 = vrot.slane %v1738, %v1742
          %v1744 = vlaneseq
          %v1745 = vshrl.u32 %v1744, 7
          %v1746 = vsub.s32 1, %v1745
          %v1747 = vrot.slane %v1738, %v1746
          %v1750 = vadd.f32 %v1610, %v1743
          %v1751 = vadd.f32 %v1611, %v1747
          %v1752 = vadd.f32 %v1612, %v1743
          %v1753 = vadd.f32 %v1613, %v1747
          %v1754 = vadd.f32 %v1614, %v1743
          %v1755 = vadd.f32 %v1615, %v1747
          %v1756 = vadd.f32 %v1616, %v1743
          %v1757 = vadd.f32 %v1617, %v1747
          %v1758 = vadd.f32 %v1618, %v1743
          %v1759 = vadd.f32 %v1619, %v1747
          %v1760 = vadd.f32 %v1620, %v1743
          %v1761 = vadd.f32 %v1621, %v1747
          %v1762 = vadd.f32 %v1622, %v1743
          %v1763 = vadd.f32 %v1623, %v1747
          %v1764 = vadd.f32 %v1624, %v1743
          %v1765 = vadd.f32 %v1625, %v1747
          %v1766 = vadd.f32 %v1626, %v1743
          %v1767 = vadd.f32 %v1627, %v1747
          %v1768 = vadd.f32 %v1628, %v1743
          %v1769 = vadd.f32 %v1629, %v1747
          %v1770 = vadd.f32 %v1630, %v1743
          %v1771 = vadd.f32 %v1631, %v1747
          %v1772 = vadd.f32 %v1632, %v1743
          %v1773 = vadd.f32 %v1633, %v1747
          %v1774 = vadd.f32 %v1634, %v1743
          %v1775 = vadd.f32 %v1635, %v1747
          %v1776 = vadd.f32 %v1636, %v1743
          %v1777 = vadd.f32 %v1637, %v1747
          %v1778 = vadd.f32 %v1638, %v1743
          %v1779 = vadd.f32 %v1639, %v1747
          %v1780 = vadd.f32 %v1640, %v1743
          %v1781 = vadd.f32 %v1641, %v1747
          %v1782 = vadd.f32 %v1642, %v1743
          %v1783 = vadd.f32 %v1643, %v1747
          %v1784 = vadd.f32 %v1644, %v1743
          %v1785 = vadd.f32 %v1645, %v1747
          %v1786 = vadd.f32 %v1646, %v1743
          %v1787 = vadd.f32 %v1647, %v1747
          %v1788 = vadd.f32 %v1648, %v1743
          %v1789 = vadd.f32 %v1649, %v1747
          %v1790 = vadd.f32 %v1650, %v1743
          %v1791 = vadd.f32 %v1651, %v1747
          %v1792 = vadd.f32 %v1652, %v1743
          %v1793 = vadd.f32 %v1653, %v1747
          %v1794 = vadd.f32 %v1654, %v1743
          %v1795 = vadd.f32 %v1655, %v1747
          %v1796 = vadd.f32 %v1656, %v1743
          %v1797 = vadd.f32 %v1657, %v1747
          %v1798 = vadd.f32 %v1658, %v1743
          %v1799 = vadd.f32 %v1659, %v1747
          %v1800 = vadd.f32 %v1660, %v1743
          %v1801 = vadd.f32 %v1661, %v1747
          %v1802 = vadd.f32 %v1662, %v1743
          %v1803 = vadd.f32 %v1663, %v1747
          %v1804 = vadd.f32 %v1664, %v1743
          %v1805 = vadd.f32 %v1665, %v1747
          %v1806 = vadd.f32 %v1666, %v1743
          %v1807 = vadd.f32 %v1667, %v1747
          %v1808 = vadd.f32 %v1668, %v1743
          %v1809 = vadd.f32 %v1669, %v1747
          %v1810 = vadd.f32 %v1670, %v1743
          %v1811 = vadd.f32 %v1671, %v1747
          %v1812 = vadd.f32 %v1672, %v1743
          %v1813 = vadd.f32 %v1673, %v1747
          %v1814 = vadd.f32 %v1674, %v1743
          %v1815 = vadd.f32 %v1675, %v1747
          %v1816 = vadd.f32 %v1676, %v1743
          %v1817 = vadd.f32 %v1677, %v1747
          %v1818 = vadd.f32 %v1678, %v1743
          %v1819 = vadd.f32 %v1679, %v1747
          %v1820 = vadd.f32 %v1680, %v1743
          %v1821 = vadd.f32 %v1681, %v1747
          %v1822 = vadd.f32 %v1682, %v1743
          %v1823 = vadd.f32 %v1683, %v1747
          %v1824 = vadd.f32 %v1684, %v1743
          %v1825 = vadd.f32 %v1685, %v1747
          %v1826 = vadd.f32 %v1686, %v1743
          %v1827 = vadd.f32 %v1687, %v1747
          %v1828 = vadd.f32 %v1688, %v1743
          %v1829 = vadd.f32 %v1689, %v1747
          %v1830 = vadd.f32 %v1690, %v1743
          %v1831 = vadd.f32 %v1691, %v1747
          %v1832 = vadd.f32 %v1692, %v1743
          %v1833 = vadd.f32 %v1693, %v1747
          %v1834 = vadd.f32 %v1694, %v1743
          %v1835 = vadd.f32 %v1695, %v1747
          %v1836 = vadd.f32 %v1696, %v1743
          %v1837 = vadd.f32 %v1697, %v1747
          %v1838 = vadd.f32 %v1698, %v1743
          %v1839 = vadd.f32 %v1699, %v1747
          %v1840 = vadd.f32 %v1700, %v1743
          %v1841 = vadd.f32 %v1701, %v1747
          %v1842 = vadd.f32 %v1702, %v1743
          %v1843 = vadd.f32 %v1703, %v1747
          %v1844 = vadd.f32 %v1704, %v1743
          %v1845 = vadd.f32 %v1705, %v1747
          %v1846 = vadd.f32 %v1706, %v1743
          %v1847 = vadd.f32 %v1707, %v1747
          %v1848 = vadd.f32 %v1708, %v1743
          %v1849 = vadd.f32 %v1709, %v1747
          %v1850 = vadd.f32 %v1710, %v1743
          %v1851 = vadd.f32 %v1711, %v1747
          %v1852 = vadd.f32 %v1712, %v1743
          %v1853 = vadd.f32 %v1713, %v1747
          %v1854 = vadd.f32 %v1714, %v1743
          %v1855 = vadd.f32 %v1715, %v1747
          %v1856 = vadd.f32 %v1716, %v1743
          %v1857 = vadd.f32 %v1717, %v1747
          %v1858 = vadd.f32 %v1718, %v1743
          %v1859 = vadd.f32 %v1719, %v1747
          %v1860 = vadd.f32 %v1720, %v1743
          %v1861 = vadd.f32 %v1721, %v1747
          %v1862 = vadd.f32 %v1722, %v1743
          %v1863 = vadd.f32 %v1723, %v1747
          %v1864 = vadd.f32 %v1724, %v1743
          %v1865 = vadd.f32 %v1725, %v1747
          %v1866 = vadd.f32 %v1726, %v1743
          %v1867 = vadd.f32 %v1727, %v1747
          %v1868 = vadd.f32 %v1728, %v1743
          %v1869 = vadd.f32 %v1729, %v1747
          %v1870 = vadd.f32 %v1730, %v1743
          %v1871 = vadd.f32 %v1731, %v1747
          %v1872 = vadd.f32 %v1732, %v1743
          %v1873 = vadd.f32 %v1733, %v1747
          %v1874 = vadd.f32 %v1734, %v1743
          %v1875 = vadd.f32 %v1735, %v1747
          %v1876 = vadd.f32 %v1736, %v1743
          %v1877 = vadd.f32 %v1737, %v1747
          %v1878 = vpack.c.bf16 %v1752, %v1750
          %v1879 = vpack.c.bf16 %v1753, %v1751
          %v1880 = vpack.c.bf16 %v1756, %v1754
          %v1881 = vpack.c.bf16 %v1757, %v1755
          %v1882 = vpack.c.bf16 %v1760, %v1758
          %v1883 = vpack.c.bf16 %v1761, %v1759
          %v1884 = vpack.c.bf16 %v1764, %v1762
          %v1885 = vpack.c.bf16 %v1765, %v1763
          %v1886 = vpack.c.bf16 %v1768, %v1766
          %v1887 = vpack.c.bf16 %v1769, %v1767
          %v1888 = vpack.c.bf16 %v1772, %v1770
          %v1889 = vpack.c.bf16 %v1773, %v1771
          %v1890 = vpack.c.bf16 %v1776, %v1774
          %v1891 = vpack.c.bf16 %v1777, %v1775
          %v1892 = vpack.c.bf16 %v1780, %v1778
          %v1893 = vpack.c.bf16 %v1781, %v1779
          %v1894 = vpack.c.bf16 %v1784, %v1782
          %v1895 = vpack.c.bf16 %v1785, %v1783
          %v1896 = vpack.c.bf16 %v1788, %v1786
          %v1897 = vpack.c.bf16 %v1789, %v1787
          %v1898 = vpack.c.bf16 %v1792, %v1790
          %v1899 = vpack.c.bf16 %v1793, %v1791
          %v1900 = vpack.c.bf16 %v1796, %v1794
          %v1901 = vpack.c.bf16 %v1797, %v1795
          %v1902 = vpack.c.bf16 %v1800, %v1798
          %v1903 = vpack.c.bf16 %v1801, %v1799
          %v1904 = vpack.c.bf16 %v1804, %v1802
          %v1905 = vpack.c.bf16 %v1805, %v1803
          %v1906 = vpack.c.bf16 %v1808, %v1806
          %v1907 = vpack.c.bf16 %v1809, %v1807
          %v1908 = vpack.c.bf16 %v1812, %v1810
          %v1909 = vpack.c.bf16 %v1813, %v1811
          %v1910 = vpack.c.bf16 %v1816, %v1814
          %v1911 = vpack.c.bf16 %v1817, %v1815
          %v1912 = vpack.c.bf16 %v1820, %v1818
          %v1913 = vpack.c.bf16 %v1821, %v1819
          %v1914 = vpack.c.bf16 %v1824, %v1822
          %v1915 = vpack.c.bf16 %v1825, %v1823
          %v1916 = vpack.c.bf16 %v1828, %v1826
          %v1917 = vpack.c.bf16 %v1829, %v1827
          %v1918 = vpack.c.bf16 %v1832, %v1830
          %v1919 = vpack.c.bf16 %v1833, %v1831
          %v1920 = vpack.c.bf16 %v1836, %v1834
          %v1921 = vpack.c.bf16 %v1837, %v1835
          %v1922 = vpack.c.bf16 %v1840, %v1838
          %v1923 = vpack.c.bf16 %v1841, %v1839
          %v1924 = vpack.c.bf16 %v1844, %v1842
          %v1925 = vpack.c.bf16 %v1845, %v1843
          %v1926 = vpack.c.bf16 %v1848, %v1846
          %v1927 = vpack.c.bf16 %v1849, %v1847
          %v1928 = vpack.c.bf16 %v1852, %v1850
          %v1929 = vpack.c.bf16 %v1853, %v1851
          %v1930 = vpack.c.bf16 %v1856, %v1854
          %v1931 = vpack.c.bf16 %v1857, %v1855
          %v1932 = vpack.c.bf16 %v1860, %v1858
          %v1933 = vpack.c.bf16 %v1861, %v1859
          %v1934 = vpack.c.bf16 %v1864, %v1862
          %v1935 = vpack.c.bf16 %v1865, %v1863
          %v1936 = vpack.c.bf16 %v1868, %v1866
          %v1937 = vpack.c.bf16 %v1869, %v1867
          %v1938 = vpack.c.bf16 %v1872, %v1870
          %v1939 = vpack.c.bf16 %v1873, %v1871
          %v1940 = vpack.c.bf16 %v1876, %v1874
          %v1941 = vpack.c.bf16 %v1877, %v1875
          %v2006 = vunpack.c.l.b16 %v1878
          %v2007 = vunpack.c.l.b16 %v1879
          %v2008 = vunpack.c.h.b16 %v1878
          %v2009 = vunpack.c.h.b16 %v1879
          %v2010 = vunpack.c.l.b16 %v1880
          %v2011 = vunpack.c.l.b16 %v1881
          %v2012 = vunpack.c.h.b16 %v1880
          %v2013 = vunpack.c.h.b16 %v1881
          %v2014 = vunpack.c.l.b16 %v1882
          %v2015 = vunpack.c.l.b16 %v1883
          %v2016 = vunpack.c.h.b16 %v1882
          %v2017 = vunpack.c.h.b16 %v1883
          %v2018 = vunpack.c.l.b16 %v1884
          %v2019 = vunpack.c.l.b16 %v1885
          %v2020 = vunpack.c.h.b16 %v1884
          %v2021 = vunpack.c.h.b16 %v1885
          %v2022 = vunpack.c.l.b16 %v1886
          %v2023 = vunpack.c.l.b16 %v1887
          %v2024 = vunpack.c.h.b16 %v1886
          %v2025 = vunpack.c.h.b16 %v1887
          %v2026 = vunpack.c.l.b16 %v1888
          %v2027 = vunpack.c.l.b16 %v1889
          %v2028 = vunpack.c.h.b16 %v1888
          %v2029 = vunpack.c.h.b16 %v1889
          %v2030 = vunpack.c.l.b16 %v1890
          %v2031 = vunpack.c.l.b16 %v1891
          %v2032 = vunpack.c.h.b16 %v1890
          %v2033 = vunpack.c.h.b16 %v1891
          %v2034 = vunpack.c.l.b16 %v1892
          %v2035 = vunpack.c.l.b16 %v1893
          %v2036 = vunpack.c.h.b16 %v1892
          %v2037 = vunpack.c.h.b16 %v1893
          %v2038 = vunpack.c.l.b16 %v1894
          %v2039 = vunpack.c.l.b16 %v1895
          %v2040 = vunpack.c.h.b16 %v1894
          %v2041 = vunpack.c.h.b16 %v1895
          %v2042 = vunpack.c.l.b16 %v1896
          %v2043 = vunpack.c.l.b16 %v1897
          %v2044 = vunpack.c.h.b16 %v1896
          %v2045 = vunpack.c.h.b16 %v1897
          %v2046 = vunpack.c.l.b16 %v1898
          %v2047 = vunpack.c.l.b16 %v1899
          %v2048 = vunpack.c.h.b16 %v1898
          %v2049 = vunpack.c.h.b16 %v1899
          %v2050 = vunpack.c.l.b16 %v1900
          %v2051 = vunpack.c.l.b16 %v1901
          %v2052 = vunpack.c.h.b16 %v1900
          %v2053 = vunpack.c.h.b16 %v1901
          %v2054 = vunpack.c.l.b16 %v1902
          %v2055 = vunpack.c.l.b16 %v1903
          %v2056 = vunpack.c.h.b16 %v1902
          %v2057 = vunpack.c.h.b16 %v1903
          %v2058 = vunpack.c.l.b16 %v1904
          %v2059 = vunpack.c.l.b16 %v1905
          %v2060 = vunpack.c.h.b16 %v1904
          %v2061 = vunpack.c.h.b16 %v1905
          %v2062 = vunpack.c.l.b16 %v1906
          %v2063 = vunpack.c.l.b16 %v1907
          %v2064 = vunpack.c.h.b16 %v1906
          %v2065 = vunpack.c.h.b16 %v1907
          %v2066 = vunpack.c.l.b16 %v1908
          %v2067 = vunpack.c.l.b16 %v1909
          %v2068 = vunpack.c.h.b16 %v1908
          %v2069 = vunpack.c.h.b16 %v1909
          %v2070 = vunpack.c.l.b16 %v1910
          %v2071 = vunpack.c.l.b16 %v1911
          %v2072 = vunpack.c.h.b16 %v1910
          %v2073 = vunpack.c.h.b16 %v1911
          %v2074 = vunpack.c.l.b16 %v1912
          %v2075 = vunpack.c.l.b16 %v1913
          %v2076 = vunpack.c.h.b16 %v1912
          %v2077 = vunpack.c.h.b16 %v1913
          %v2078 = vunpack.c.l.b16 %v1914
          %v2079 = vunpack.c.l.b16 %v1915
          %v2080 = vunpack.c.h.b16 %v1914
          %v2081 = vunpack.c.h.b16 %v1915
          %v2082 = vunpack.c.l.b16 %v1916
          %v2083 = vunpack.c.l.b16 %v1917
          %v2084 = vunpack.c.h.b16 %v1916
          %v2085 = vunpack.c.h.b16 %v1917
          %v2086 = vunpack.c.l.b16 %v1918
          %v2087 = vunpack.c.l.b16 %v1919
          %v2088 = vunpack.c.h.b16 %v1918
          %v2089 = vunpack.c.h.b16 %v1919
          %v2090 = vunpack.c.l.b16 %v1920
          %v2091 = vunpack.c.l.b16 %v1921
          %v2092 = vunpack.c.h.b16 %v1920
          %v2093 = vunpack.c.h.b16 %v1921
          %v2094 = vunpack.c.l.b16 %v1922
          %v2095 = vunpack.c.l.b16 %v1923
          %v2096 = vunpack.c.h.b16 %v1922
          %v2097 = vunpack.c.h.b16 %v1923
          %v2098 = vunpack.c.l.b16 %v1924
          %v2099 = vunpack.c.l.b16 %v1925
          %v2100 = vunpack.c.h.b16 %v1924
          %v2101 = vunpack.c.h.b16 %v1925
          %v2102 = vunpack.c.l.b16 %v1926
          %v2103 = vunpack.c.l.b16 %v1927
          %v2104 = vunpack.c.h.b16 %v1926
          %v2105 = vunpack.c.h.b16 %v1927
          %v2106 = vunpack.c.l.b16 %v1928
          %v2107 = vunpack.c.l.b16 %v1929
          %v2108 = vunpack.c.h.b16 %v1928
          %v2109 = vunpack.c.h.b16 %v1929
          %v2110 = vunpack.c.l.b16 %v1930
          %v2111 = vunpack.c.l.b16 %v1931
          %v2112 = vunpack.c.h.b16 %v1930
          %v2113 = vunpack.c.h.b16 %v1931
          %v2114 = vunpack.c.l.b16 %v1932
          %v2115 = vunpack.c.l.b16 %v1933
          %v2116 = vunpack.c.h.b16 %v1932
          %v2117 = vunpack.c.h.b16 %v1933
          %v2118 = vunpack.c.l.b16 %v1934
          %v2119 = vunpack.c.l.b16 %v1935
          %v2120 = vunpack.c.h.b16 %v1934
          %v2121 = vunpack.c.h.b16 %v1935
          %v2122 = vunpack.c.l.b16 %v1936
          %v2123 = vunpack.c.l.b16 %v1937
          %v2124 = vunpack.c.h.b16 %v1936
          %v2125 = vunpack.c.h.b16 %v1937
          %v2126 = vunpack.c.l.b16 %v1938
          %v2127 = vunpack.c.l.b16 %v1939
          %v2128 = vunpack.c.h.b16 %v1938
          %v2129 = vunpack.c.h.b16 %v1939
          %v2130 = vunpack.c.l.b16 %v1940
          %v2131 = vunpack.c.l.b16 %v1941
          %v2132 = vunpack.c.h.b16 %v1940
          %v2133 = vunpack.c.h.b16 %v1941
          %v2134 = vpack.c.b16 %v2007, %v2006
          %v2135 = vpack.c.b16 %v2009, %v2008
          %v2136 = vpack.c.b16 %v2011, %v2010
          %v2137 = vpack.c.b16 %v2013, %v2012
          %v2138 = vpack.c.b16 %v2015, %v2014
          %v2139 = vpack.c.b16 %v2017, %v2016
          %v2140 = vpack.c.b16 %v2019, %v2018
          %v2141 = vpack.c.b16 %v2021, %v2020
          %v2142 = vpack.c.b16 %v2023, %v2022
          %v2143 = vpack.c.b16 %v2025, %v2024
          %v2144 = vpack.c.b16 %v2027, %v2026
          %v2145 = vpack.c.b16 %v2029, %v2028
          %v2146 = vpack.c.b16 %v2031, %v2030
          %v2147 = vpack.c.b16 %v2033, %v2032
          %v2148 = vpack.c.b16 %v2035, %v2034
          %v2149 = vpack.c.b16 %v2037, %v2036
          %v2150 = vpack.c.b16 %v2039, %v2038
          %v2151 = vpack.c.b16 %v2041, %v2040
          %v2152 = vpack.c.b16 %v2043, %v2042
          %v2153 = vpack.c.b16 %v2045, %v2044
          %v2154 = vpack.c.b16 %v2047, %v2046
          %v2155 = vpack.c.b16 %v2049, %v2048
          %v2156 = vpack.c.b16 %v2051, %v2050
          %v2157 = vpack.c.b16 %v2053, %v2052
          %v2158 = vpack.c.b16 %v2055, %v2054
          %v2159 = vpack.c.b16 %v2057, %v2056
          %v2160 = vpack.c.b16 %v2059, %v2058
          %v2161 = vpack.c.b16 %v2061, %v2060
          %v2162 = vpack.c.b16 %v2063, %v2062
          %v2163 = vpack.c.b16 %v2065, %v2064
          %v2164 = vpack.c.b16 %v2067, %v2066
          %v2165 = vpack.c.b16 %v2069, %v2068
          %v2166 = vpack.c.b16 %v2071, %v2070
          %v2167 = vpack.c.b16 %v2073, %v2072
          %v2168 = vpack.c.b16 %v2075, %v2074
          %v2169 = vpack.c.b16 %v2077, %v2076
          %v2170 = vpack.c.b16 %v2079, %v2078
          %v2171 = vpack.c.b16 %v2081, %v2080
          %v2172 = vpack.c.b16 %v2083, %v2082
          %v2173 = vpack.c.b16 %v2085, %v2084
          %v2174 = vpack.c.b16 %v2087, %v2086
          %v2175 = vpack.c.b16 %v2089, %v2088
          %v2176 = vpack.c.b16 %v2091, %v2090
          %v2177 = vpack.c.b16 %v2093, %v2092
          %v2178 = vpack.c.b16 %v2095, %v2094
          %v2179 = vpack.c.b16 %v2097, %v2096
          %v2180 = vpack.c.b16 %v2099, %v2098
          %v2181 = vpack.c.b16 %v2101, %v2100
          %v2182 = vpack.c.b16 %v2103, %v2102
          %v2183 = vpack.c.b16 %v2105, %v2104
          %v2184 = vpack.c.b16 %v2107, %v2106
          %v2185 = vpack.c.b16 %v2109, %v2108
          %v2186 = vpack.c.b16 %v2111, %v2110
          %v2187 = vpack.c.b16 %v2113, %v2112
          %v2188 = vpack.c.b16 %v2115, %v2114
          %v2189 = vpack.c.b16 %v2117, %v2116
          %v2190 = vpack.c.b16 %v2119, %v2118
          %v2191 = vpack.c.b16 %v2121, %v2120
          %v2192 = vpack.c.b16 %v2123, %v2122
          %v2193 = vpack.c.b16 %v2125, %v2124
          %v2194 = vpack.c.b16 %v2127, %v2126
          %v2195 = vpack.c.b16 %v2129, %v2128
          %v2196 = vpack.c.b16 %v2131, %v2130
          %v2197 = vpack.c.b16 %v2133, %v2132
          %2262 = vst [vmem:[%s344] sm:$0xff] %v2134
          %2263 = vst [vmem:[%s344 + $0x8] sm:$0xff] %v2135
          %2264 = vst [vmem:[%s344 + $0x10] sm:$0xff] %v2136
          %2265 = vst [vmem:[%s344 + $0x18] sm:$0xff] %v2137
          %2266 = vst [vmem:[%s344 + $0x20] sm:$0xff] %v2138
          %2267 = vst [vmem:[%s344 + $0x28] sm:$0xff] %v2139
          %2268 = vst [vmem:[%s344 + $0x30] sm:$0xff] %v2140
          %2269 = vst [vmem:[%s344 + $0x38] sm:$0xff] %v2141
          %2270 = vst [vmem:[%s344 + $0x40] sm:$0xff] %v2142
          %2271 = vst [vmem:[%s344 + $0x48] sm:$0xff] %v2143
          %2272 = vst [vmem:[%s344 + $0x50] sm:$0xff] %v2144
          %2273 = vst [vmem:[%s344 + $0x58] sm:$0xff] %v2145
          %2274 = vst [vmem:[%s344 + $0x60] sm:$0xff] %v2146
          %2275 = vst [vmem:[%s344 + $0x68] sm:$0xff] %v2147
          %2276 = vst [vmem:[%s344 + $0x70] sm:$0xff] %v2148
          %2277 = vst [vmem:[%s344 + $0x78] sm:$0xff] %v2149
          %2278 = vst [vmem:[%s344 + $0x80] sm:$0xff] %v2150
          %2279 = vst [vmem:[%s344 + $0x88] sm:$0xff] %v2151
          %2280 = vst [vmem:[%s344 + $0x90] sm:$0xff] %v2152
          %2281 = vst [vmem:[%s344 + $0x98] sm:$0xff] %v2153
          %2282 = vst [vmem:[%s344 + $0xa0] sm:$0xff] %v2154
          %2283 = vst [vmem:[%s344 + $0xa8] sm:$0xff] %v2155
          %2284 = vst [vmem:[%s344 + $0xb0] sm:$0xff] %v2156
          %2285 = vst [vmem:[%s344 + $0xb8] sm:$0xff] %v2157
          %2286 = vst [vmem:[%s344 + $0xc0] sm:$0xff] %v2158
          %2287 = vst [vmem:[%s344 + $0xc8] sm:$0xff] %v2159
          %2288 = vst [vmem:[%s344 + $0xd0] sm:$0xff] %v2160
          %2289 = vst [vmem:[%s344 + $0xd8] sm:$0xff] %v2161
          %2290 = vst [vmem:[%s344 + $0xe0] sm:$0xff] %v2162
          %2291 = vst [vmem:[%s344 + $0xe8] sm:$0xff] %v2163
          %2292 = vst [vmem:[%s344 + $0xf0] sm:$0xff] %v2164
          %2293 = vst [vmem:[%s344 + $0xf8] sm:$0xff] %v2165
          %2294 = vst [vmem:[%s344 + $0x100] sm:$0xff] %v2166
          %2295 = vst [vmem:[%s344 + $0x108] sm:$0xff] %v2167
          %2296 = vst [vmem:[%s344 + $0x110] sm:$0xff] %v2168
          %2297 = vst [vmem:[%s344 + $0x118] sm:$0xff] %v2169
          %2298 = vst [vmem:[%s344 + $0x120] sm:$0xff] %v2170
          %2299 = vst [vmem:[%s344 + $0x128] sm:$0xff] %v2171
          %2300 = vst [vmem:[%s344 + $0x130] sm:$0xff] %v2172
          %2301 = vst [vmem:[%s344 + $0x138] sm:$0xff] %v2173
          %2302 = vst [vmem:[%s344 + $0x140] sm:$0xff] %v2174
          %2303 = vst [vmem:[%s344 + $0x148] sm:$0xff] %v2175
          %2304 = vst [vmem:[%s344 + $0x150] sm:$0xff] %v2176
          %2305 = vst [vmem:[%s344 + $0x158] sm:$0xff] %v2177
          %2306 = vst [vmem:[%s344 + $0x160] sm:$0xff] %v2178
          %2307 = vst [vmem:[%s344 + $0x168] sm:$0xff] %v2179
          %2308 = vst [vmem:[%s344 + $0x170] sm:$0xff] %v2180
          %2309 = vst [vmem:[%s344 + $0x178] sm:$0xff] %v2181
          %2310 = vst [vmem:[%s344 + $0x180] sm:$0xff] %v2182
          %2311 = vst [vmem:[%s344 + $0x188] sm:$0xff] %v2183
          %2312 = vst [vmem:[%s344 + $0x190] sm:$0xff] %v2184
          %2313 = vst [vmem:[%s344 + $0x198] sm:$0xff] %v2185
          %2314 = vst [vmem:[%s344 + $0x1a0] sm:$0xff] %v2186
          %2315 = vst [vmem:[%s344 + $0x1a8] sm:$0xff] %v2187
          %2316 = vst [vmem:[%s344 + $0x1b0] sm:$0xff] %v2188
          %2317 = vst [vmem:[%s344 + $0x1b8] sm:$0xff] %v2189
          %2318 = vst [vmem:[%s344 + $0x1c0] sm:$0xff] %v2190
          %2319 = vst [vmem:[%s344 + $0x1c8] sm:$0xff] %v2191
          %2320 = vst [vmem:[%s344 + $0x1d0] sm:$0xff] %v2192
          %2321 = vst [vmem:[%s344 + $0x1d8] sm:$0xff] %v2193
          %2322 = vst [vmem:[%s344 + $0x1e0] sm:$0xff] %v2194
          %2323 = vst [vmem:[%s344 + $0x1e8] sm:$0xff] %v2195
          %2324 = vst [vmem:[%s344 + $0x1f0] sm:$0xff] %v2196
          %2325 = vst [vmem:[%s344 + $0x1f8] sm:$0xff] %v2197
          %v2326 = vadd.f32 %v1750, %v1752
          %v2327 = vadd.f32 %v2326, %v1754
          %v2328 = vadd.f32 %v2327, %v1756
          %v2329 = vadd.f32 %v2328, %v1758
          %v2330 = vadd.f32 %v2329, %v1760
          %v2331 = vadd.f32 %v2330, %v1762
          %v2332 = vadd.f32 %v2331, %v1764
          %v2333 = vadd.f32 %v2332, %v1766
          %v2334 = vadd.f32 %v2333, %v1768
          %v2335 = vadd.f32 %v2334, %v1770
          %v2336 = vadd.f32 %v2335, %v1772
          %v2337 = vadd.f32 %v2336, %v1774
          %v2338 = vadd.f32 %v2337, %v1776
          %v2339 = vadd.f32 %v2338, %v1778
          %v2340 = vadd.f32 %v2339, %v1780
          %v2341 = vadd.f32 %v2340, %v1782
          %v2342 = vadd.f32 %v2341, %v1784
          %v2343 = vadd.f32 %v2342, %v1786
          %v2344 = vadd.f32 %v2343, %v1788
          %v2345 = vadd.f32 %v2344, %v1790
          %v2346 = vadd.f32 %v2345, %v1792
          %v2347 = vadd.f32 %v2346, %v1794
          %v2348 = vadd.f32 %v2347, %v1796
          %v2349 = vadd.f32 %v2348, %v1798
          %v2350 = vadd.f32 %v2349, %v1800
          %v2351 = vadd.f32 %v2350, %v1802
          %v2352 = vadd.f32 %v2351, %v1804
          %v2353 = vadd.f32 %v2352, %v1806
          %v2354 = vadd.f32 %v2353, %v1808
          %v2355 = vadd.f32 %v2354, %v1810
          %v2356 = vadd.f32 %v2355, %v1812
          %v2357 = vadd.f32 %v2356, %v1814
          %v2358 = vadd.f32 %v2357, %v1816
          %v2359 = vadd.f32 %v2358, %v1818
          %v2360 = vadd.f32 %v2359, %v1820
          %v2361 = vadd.f32 %v2360, %v1822
          %v2362 = vadd.f32 %v2361, %v1824
          %v2363 = vadd.f32 %v2362, %v1826
          %v2364 = vadd.f32 %v2363, %v1828
          %v2365 = vadd.f32 %v2364, %v1830
          %v2366 = vadd.f32 %v2365, %v1832
          %v2367 = vadd.f32 %v2366, %v1834
          %v2368 = vadd.f32 %v2367, %v1836
          %v2369 = vadd.f32 %v2368, %v1838
          %v2370 = vadd.f32 %v2369, %v1840
          %v2371 = vadd.f32 %v2370, %v1842
          %v2372 = vadd.f32 %v2371, %v1844
          %v2373 = vadd.f32 %v2372, %v1846
          %v2374 = vadd.f32 %v2373, %v1848
          %v2375 = vadd.f32 %v2374, %v1850
          %v2376 = vadd.f32 %v2375, %v1852
          %v2377 = vadd.f32 %v2376, %v1854
          %v2378 = vadd.f32 %v2377, %v1856
          %v2379 = vadd.f32 %v2378, %v1858
          %v2380 = vadd.f32 %v2379, %v1860
          %v2381 = vadd.f32 %v2380, %v1862
          %v2382 = vadd.f32 %v2381, %v1864
          %v2383 = vadd.f32 %v2382, %v1866
          %v2384 = vadd.f32 %v2383, %v1868
          %v2385 = vadd.f32 %v2384, %v1870
          %v2386 = vadd.f32 %v2385, %v1872
          %v2387 = vadd.f32 %v2386, %v1874
          %v2388 = vadd.f32 %v2387, %v1876
          %v2389 = vrot.slane %v2388, 4
          %v2390 = vadd.f32 %v2388, %v2389
          %v2391 = vrot.slane %v2390, 2
          %v2392 = vadd.f32 %v2390, %v2391
          %v2393 = vrot.slane %v2392, 1
          %v2394 = vadd.f32 %v2392, %v2393
          %v2395 = vadd.f32 %v1751, %v1753
          %v2396 = vadd.f32 %v2395, %v1755
          %v2397 = vadd.f32 %v2396, %v1757
          %v2398 = vadd.f32 %v2397, %v1759
          %v2399 = vadd.f32 %v2398, %v1761
          %v2400 = vadd.f32 %v2399, %v1763
          %v2401 = vadd.f32 %v2400, %v1765
          %v2402 = vadd.f32 %v2401, %v1767
          %v2403 = vadd.f32 %v2402, %v1769
          %v2404 = vadd.f32 %v2403, %v1771
          %v2405 = vadd.f32 %v2404, %v1773
          %v2406 = vadd.f32 %v2405, %v1775
          %v2407 = vadd.f32 %v2406, %v1777
          %v2408 = vadd.f32 %v2407, %v1779
          %v2409 = vadd.f32 %v2408, %v1781
          %v2410 = vadd.f32 %v2409, %v1783
          %v2411 = vadd.f32 %v2410, %v1785
          %v2412 = vadd.f32 %v2411, %v1787
          %v2413 = vadd.f32 %v2412, %v1789
          %v2414 = vadd.f32 %v2413, %v1791
          %v2415 = vadd.f32 %v2414, %v1793
          %v2416 = vadd.f32 %v2415, %v1795
          %v2417 = vadd.f32 %v2416, %v1797
          %v2418 = vadd.f32 %v2417, %v1799
          %v2419 = vadd.f32 %v2418, %v1801
          %v2420 = vadd.f32 %v2419, %v1803
          %v2421 = vadd.f32 %v2420, %v1805
          %v2422 = vadd.f32 %v2421, %v1807
          %v2423 = vadd.f32 %v2422, %v1809
          %v2424 = vadd.f32 %v2423, %v1811
          %v2425 = vadd.f32 %v2424, %v1813
          %v2426 = vadd.f32 %v2425, %v1815
          %v2427 = vadd.f32 %v2426, %v1817
          %v2428 = vadd.f32 %v2427, %v1819
          %v2429 = vadd.f32 %v2428, %v1821
          %v2430 = vadd.f32 %v2429, %v1823
          %v2431 = vadd.f32 %v2430, %v1825
          %v2432 = vadd.f32 %v2431, %v1827
          %v2433 = vadd.f32 %v2432, %v1829
          %v2434 = vadd.f32 %v2433, %v1831
          %v2435 = vadd.f32 %v2434, %v1833
          %v2436 = vadd.f32 %v2435, %v1835
          %v2437 = vadd.f32 %v2436, %v1837
          %v2438 = vadd.f32 %v2437, %v1839
          %v2439 = vadd.f32 %v2438, %v1841
          %v2440 = vadd.f32 %v2439, %v1843
          %v2441 = vadd.f32 %v2440, %v1845
          %v2442 = vadd.f32 %v2441, %v1847
          %v2443 = vadd.f32 %v2442, %v1849
          %v2444 = vadd.f32 %v2443, %v1851
          %v2445 = vadd.f32 %v2444, %v1853
          %v2446 = vadd.f32 %v2445, %v1855
          %v2447 = vadd.f32 %v2446, %v1857
          %v2448 = vadd.f32 %v2447, %v1859
          %v2449 = vadd.f32 %v2448, %v1861
          %v2450 = vadd.f32 %v2449, %v1863
          %v2451 = vadd.f32 %v2450, %v1865
          %v2452 = vadd.f32 %v2451, %v1867
          %v2453 = vadd.f32 %v2452, %v1869
          %v2454 = vadd.f32 %v2453, %v1871
          %v2455 = vadd.f32 %v2454, %v1873
          %v2456 = vadd.f32 %v2455, %v1875
          %v2457 = vadd.f32 %v2456, %v1877
          %v2458 = vrot.slane %v2457, 4
          %v2459 = vadd.f32 %v2457, %v2458
          %v2460 = vrot.slane %v2459, 2
          %v2461 = vadd.f32 %v2459, %v2460
          %v2462 = vrot.slane %v2461, 1
          %v2463 = vadd.f32 %v2461, %v2462
          %2464 = vst [vmem:[%s351] sm:$0xff] %v2394
          %2465 = vst [vmem:[%s351 + $0x8] sm:$0xff] %v2463
          %v2466 = vmul.f32 %v1750, %v1750
          %v2467 = vmul.f32 %v1751, %v1751
          %v2468 = vmul.f32 %v1752, %v1752
          %v2469 = vmul.f32 %v1753, %v1753
          %v2470 = vmul.f32 %v1754, %v1754
          %v2471 = vmul.f32 %v1755, %v1755
          %v2472 = vmul.f32 %v1756, %v1756
          %v2473 = vmul.f32 %v1757, %v1757
          %v2474 = vmul.f32 %v1758, %v1758
          %v2475 = vmul.f32 %v1759, %v1759
          %v2476 = vmul.f32 %v1760, %v1760
          %v2477 = vmul.f32 %v1761, %v1761
          %v2478 = vmul.f32 %v1762, %v1762
          %v2479 = vmul.f32 %v1763, %v1763
          %v2480 = vmul.f32 %v1764, %v1764
          %v2481 = vmul.f32 %v1765, %v1765
          %v2482 = vmul.f32 %v1766, %v1766
          %v2483 = vmul.f32 %v1767, %v1767
          %v2484 = vmul.f32 %v1768, %v1768
          %v2485 = vmul.f32 %v1769, %v1769
          %v2486 = vmul.f32 %v1770, %v1770
          %v2487 = vmul.f32 %v1771, %v1771
          %v2488 = vmul.f32 %v1772, %v1772
          %v2489 = vmul.f32 %v1773, %v1773
          %v2490 = vmul.f32 %v1774, %v1774
          %v2491 = vmul.f32 %v1775, %v1775
          %v2492 = vmul.f32 %v1776, %v1776
          %v2493 = vmul.f32 %v1777, %v1777
          %v2494 = vmul.f32 %v1778, %v1778
          %v2495 = vmul.f32 %v1779, %v1779
          %v2496 = vmul.f32 %v1780, %v1780
          %v2497 = vmul.f32 %v1781, %v1781
          %v2498 = vmul.f32 %v1782, %v1782
          %v2499 = vmul.f32 %v1783, %v1783
          %v2500 = vmul.f32 %v1784, %v1784
          %v2501 = vmul.f32 %v1785, %v1785
          %v2502 = vmul.f32 %v1786, %v1786
          %v2503 = vmul.f32 %v1787, %v1787
          %v2504 = vmul.f32 %v1788, %v1788
          %v2505 = vmul.f32 %v1789, %v1789
          %v2506 = vmul.f32 %v1790, %v1790
          %v2507 = vmul.f32 %v1791, %v1791
          %v2508 = vmul.f32 %v1792, %v1792
          %v2509 = vmul.f32 %v1793, %v1793
          %v2510 = vmul.f32 %v1794, %v1794
          %v2511 = vmul.f32 %v1795, %v1795
          %v2512 = vmul.f32 %v1796, %v1796
          %v2513 = vmul.f32 %v1797, %v1797
          %v2514 = vmul.f32 %v1798, %v1798
          %v2515 = vmul.f32 %v1799, %v1799
          %v2516 = vmul.f32 %v1800, %v1800
          %v2517 = vmul.f32 %v1801, %v1801
          %v2518 = vmul.f32 %v1802, %v1802
          %v2519 = vmul.f32 %v1803, %v1803
          %v2520 = vmul.f32 %v1804, %v1804
          %v2521 = vmul.f32 %v1805, %v1805
          %v2522 = vmul.f32 %v1806, %v1806
          %v2523 = vmul.f32 %v1807, %v1807
          %v2524 = vmul.f32 %v1808, %v1808
          %v2525 = vmul.f32 %v1809, %v1809
          %v2526 = vmul.f32 %v1810, %v1810
          %v2527 = vmul.f32 %v1811, %v1811
          %v2528 = vmul.f32 %v1812, %v1812
          %v2529 = vmul.f32 %v1813, %v1813
          %v2530 = vmul.f32 %v1814, %v1814
          %v2531 = vmul.f32 %v1815, %v1815
          %v2532 = vmul.f32 %v1816, %v1816
          %v2533 = vmul.f32 %v1817, %v1817
          %v2534 = vmul.f32 %v1818, %v1818
          %v2535 = vmul.f32 %v1819, %v1819
          %v2536 = vmul.f32 %v1820, %v1820
          %v2537 = vmul.f32 %v1821, %v1821
          %v2538 = vmul.f32 %v1822, %v1822
          %v2539 = vmul.f32 %v1823, %v1823
          %v2540 = vmul.f32 %v1824, %v1824
          %v2541 = vmul.f32 %v1825, %v1825
          %v2542 = vmul.f32 %v1826, %v1826
          %v2543 = vmul.f32 %v1827, %v1827
          %v2544 = vmul.f32 %v1828, %v1828
          %v2545 = vmul.f32 %v1829, %v1829
          %v2546 = vmul.f32 %v1830, %v1830
          %v2547 = vmul.f32 %v1831, %v1831
          %v2548 = vmul.f32 %v1832, %v1832
          %v2549 = vmul.f32 %v1833, %v1833
          %v2550 = vmul.f32 %v1834, %v1834
          %v2551 = vmul.f32 %v1835, %v1835
          %v2552 = vmul.f32 %v1836, %v1836
          %v2553 = vmul.f32 %v1837, %v1837
          %v2554 = vmul.f32 %v1838, %v1838
          %v2555 = vmul.f32 %v1839, %v1839
          %v2556 = vmul.f32 %v1840, %v1840
          %v2557 = vmul.f32 %v1841, %v1841
          %v2558 = vmul.f32 %v1842, %v1842
          %v2559 = vmul.f32 %v1843, %v1843
          %v2560 = vmul.f32 %v1844, %v1844
          %v2561 = vmul.f32 %v1845, %v1845
          %v2562 = vmul.f32 %v1846, %v1846
          %v2563 = vmul.f32 %v1847, %v1847
          %v2564 = vmul.f32 %v1848, %v1848
          %v2565 = vmul.f32 %v1849, %v1849
          %v2566 = vmul.f32 %v1850, %v1850
          %v2567 = vmul.f32 %v1851, %v1851
          %v2568 = vmul.f32 %v1852, %v1852
          %v2569 = vmul.f32 %v1853, %v1853
          %v2570 = vmul.f32 %v1854, %v1854
          %v2571 = vmul.f32 %v1855, %v1855
          %v2572 = vmul.f32 %v1856, %v1856
          %v2573 = vmul.f32 %v1857, %v1857
          %v2574 = vmul.f32 %v1858, %v1858
          %v2575 = vmul.f32 %v1859, %v1859
          %v2576 = vmul.f32 %v1860, %v1860
          %v2577 = vmul.f32 %v1861, %v1861
          %v2578 = vmul.f32 %v1862, %v1862
          %v2579 = vmul.f32 %v1863, %v1863
          %v2580 = vmul.f32 %v1864, %v1864
          %v2581 = vmul.f32 %v1865, %v1865
          %v2582 = vmul.f32 %v1866, %v1866
          %v2583 = vmul.f32 %v1867, %v1867
          %v2584 = vmul.f32 %v1868, %v1868
          %v2585 = vmul.f32 %v1869, %v1869
          %v2586 = vmul.f32 %v1870, %v1870
          %v2587 = vmul.f32 %v1871, %v1871
          %v2588 = vmul.f32 %v1872, %v1872
          %v2589 = vmul.f32 %v1873, %v1873
          %v2590 = vmul.f32 %v1874, %v1874
          %v2591 = vmul.f32 %v1875, %v1875
          %v2592 = vmul.f32 %v1876, %v1876
          %v2593 = vmul.f32 %v1877, %v1877
          %v2594 = vadd.f32 %v2466, %v2468
          %v2595 = vadd.f32 %v2594, %v2470
          %v2596 = vadd.f32 %v2595, %v2472
          %v2597 = vadd.f32 %v2596, %v2474
          %v2598 = vadd.f32 %v2597, %v2476
          %v2599 = vadd.f32 %v2598, %v2478
          %v2600 = vadd.f32 %v2599, %v2480
          %v2601 = vadd.f32 %v2600, %v2482
          %v2602 = vadd.f32 %v2601, %v2484
          %v2603 = vadd.f32 %v2602, %v2486
          %v2604 = vadd.f32 %v2603, %v2488
          %v2605 = vadd.f32 %v2604, %v2490
          %v2606 = vadd.f32 %v2605, %v2492
          %v2607 = vadd.f32 %v2606, %v2494
          %v2608 = vadd.f32 %v2607, %v2496
          %v2609 = vadd.f32 %v2608, %v2498
          %v2610 = vadd.f32 %v2609, %v2500
          %v2611 = vadd.f32 %v2610, %v2502
          %v2612 = vadd.f32 %v2611, %v2504
          %v2613 = vadd.f32 %v2612, %v2506
          %v2614 = vadd.f32 %v2613, %v2508
          %v2615 = vadd.f32 %v2614, %v2510
          %v2616 = vadd.f32 %v2615, %v2512
          %v2617 = vadd.f32 %v2616, %v2514
          %v2618 = vadd.f32 %v2617, %v2516
          %v2619 = vadd.f32 %v2618, %v2518
          %v2620 = vadd.f32 %v2619, %v2520
          %v2621 = vadd.f32 %v2620, %v2522
          %v2622 = vadd.f32 %v2621, %v2524
          %v2623 = vadd.f32 %v2622, %v2526
          %v2624 = vadd.f32 %v2623, %v2528
          %v2625 = vadd.f32 %v2624, %v2530
          %v2626 = vadd.f32 %v2625, %v2532
          %v2627 = vadd.f32 %v2626, %v2534
          %v2628 = vadd.f32 %v2627, %v2536
          %v2629 = vadd.f32 %v2628, %v2538
          %v2630 = vadd.f32 %v2629, %v2540
          %v2631 = vadd.f32 %v2630, %v2542
          %v2632 = vadd.f32 %v2631, %v2544
          %v2633 = vadd.f32 %v2632, %v2546
          %v2634 = vadd.f32 %v2633, %v2548
          %v2635 = vadd.f32 %v2634, %v2550
          %v2636 = vadd.f32 %v2635, %v2552
          %v2637 = vadd.f32 %v2636, %v2554
          %v2638 = vadd.f32 %v2637, %v2556
          %v2639 = vadd.f32 %v2638, %v2558
          %v2640 = vadd.f32 %v2639, %v2560
          %v2641 = vadd.f32 %v2640, %v2562
          %v2642 = vadd.f32 %v2641, %v2564
          %v2643 = vadd.f32 %v2642, %v2566
          %v2644 = vadd.f32 %v2643, %v2568
          %v2645 = vadd.f32 %v2644, %v2570
          %v2646 = vadd.f32 %v2645, %v2572
          %v2647 = vadd.f32 %v2646, %v2574
          %v2648 = vadd.f32 %v2647, %v2576
          %v2649 = vadd.f32 %v2648, %v2578
          %v2650 = vadd.f32 %v2649, %v2580
          %v2651 = vadd.f32 %v2650, %v2582
          %v2652 = vadd.f32 %v2651, %v2584
          %v2653 = vadd.f32 %v2652, %v2586
          %v2654 = vadd.f32 %v2653, %v2588
          %v2655 = vadd.f32 %v2654, %v2590
          %v2656 = vadd.f32 %v2655, %v2592
          %v2657 = vrot.slane %v2656, 4
          %v2658 = vadd.f32 %v2656, %v2657
          %v2659 = vrot.slane %v2658, 2
          %v2660 = vadd.f32 %v2658, %v2659
          %v2661 = vrot.slane %v2660, 1
          %v2662 = vadd.f32 %v2660, %v2661
          %v2663 = vadd.f32 %v2467, %v2469
          %v2664 = vadd.f32 %v2663, %v2471
          %v2665 = vadd.f32 %v2664, %v2473
          %v2666 = vadd.f32 %v2665, %v2475
          %v2667 = vadd.f32 %v2666, %v2477
          %v2668 = vadd.f32 %v2667, %v2479
          %v2669 = vadd.f32 %v2668, %v2481
          %v2670 = vadd.f32 %v2669, %v2483
          %v2671 = vadd.f32 %v2670, %v2485
          %v2672 = vadd.f32 %v2671, %v2487
          %v2673 = vadd.f32 %v2672, %v2489
          %v2674 = vadd.f32 %v2673, %v2491
          %v2675 = vadd.f32 %v2674, %v2493
          %v2676 = vadd.f32 %v2675, %v2495
          %v2677 = vadd.f32 %v2676, %v2497
          %v2678 = vadd.f32 %v2677, %v2499
          %v2679 = vadd.f32 %v2678, %v2501
          %v2680 = vadd.f32 %v2679, %v2503
          %v2681 = vadd.f32 %v2680, %v2505
          %v2682 = vadd.f32 %v2681, %v2507
          %v2683 = vadd.f32 %v2682, %v2509
          %v2684 = vadd.f32 %v2683, %v2511
          %v2685 = vadd.f32 %v2684, %v2513
          %v2686 = vadd.f32 %v2685, %v2515
          %v2687 = vadd.f32 %v2686, %v2517
          %v2688 = vadd.f32 %v2687, %v2519
          %v2689 = vadd.f32 %v2688, %v2521
          %v2690 = vadd.f32 %v2689, %v2523
          %v2691 = vadd.f32 %v2690, %v2525
          %v2692 = vadd.f32 %v2691, %v2527
          %v2693 = vadd.f32 %v2692, %v2529
          %v2694 = vadd.f32 %v2693, %v2531
          %v2695 = vadd.f32 %v2694, %v2533
          %v2696 = vadd.f32 %v2695, %v2535
          %v2697 = vadd.f32 %v2696, %v2537
          %v2698 = vadd.f32 %v2697, %v2539
          %v2699 = vadd.f32 %v2698, %v2541
          %v2700 = vadd.f32 %v2699, %v2543
          %v2701 = vadd.f32 %v2700, %v2545
          %v2702 = vadd.f32 %v2701, %v2547
          %v2703 = vadd.f32 %v2702, %v2549
          %v2704 = vadd.f32 %v2703, %v2551
          %v2705 = vadd.f32 %v2704, %v2553
          %v2706 = vadd.f32 %v2705, %v2555
          %v2707 = vadd.f32 %v2706, %v2557
          %v2708 = vadd.f32 %v2707, %v2559
          %v2709 = vadd.f32 %v2708, %v2561
          %v2710 = vadd.f32 %v2709, %v2563
          %v2711 = vadd.f32 %v2710, %v2565
          %v2712 = vadd.f32 %v2711, %v2567
          %v2713 = vadd.f32 %v2712, %v2569
          %v2714 = vadd.f32 %v2713, %v2571
          %v2715 = vadd.f32 %v2714, %v2573
          %v2716 = vadd.f32 %v2715, %v2575
          %v2717 = vadd.f32 %v2716, %v2577
          %v2718 = vadd.f32 %v2717, %v2579
          %v2719 = vadd.f32 %v2718, %v2581
          %v2720 = vadd.f32 %v2719, %v2583
          %v2721 = vadd.f32 %v2720, %v2585
          %v2722 = vadd.f32 %v2721, %v2587
          %v2723 = vadd.f32 %v2722, %v2589
          %v2724 = vadd.f32 %v2723, %v2591
          %v2725 = vadd.f32 %v2724, %v2593
          %v2726 = vrot.slane %v2725, 4
          %v2727 = vadd.f32 %v2725, %v2726
          %v2728 = vrot.slane %v2727, 2
          %v2729 = vadd.f32 %v2727, %v2728
          %v2730 = vrot.slane %v2729, 1
          %v2731 = vadd.f32 %v2729, %v2730
          %2732 = vst [vmem:[%s358] sm:$0xff] %v2662
          %2733 = vst [vmem:[%s358 + $0x8] sm:$0xff] %v2731
        $region78: #{upconv_forward.3} parent=65 // pred_fallthru
          _
        %s2734 = sand.u32 %s134, 1
        %s2735 = sand.u32 %s134, 1
        %s2736 = smul.addr %s2735, 512
        %s2737 = scalar_lea.vmem [#allocation4], %s2736
        %s2738 = sand.u32 %s162, 1
        %s2739 = scalar_lea.sflag [#allocation6], %s2738
        %s2740 = sand.u32 %s162, 1
        %s2741 = smul.addr %s2740, 16
        %s2742 = scalar_lea.vmem [#allocation5], %s2741
        %s2743 = sand.u32 %s190, 1
        %s2744 = scalar_lea.sflag [#allocation8], %s2743
        %s2745 = sand.u32 %s190, 1
        %s2746 = smul.addr %s2745, 16
        %s2747 = scalar_lea.vmem [#allocation7], %s2746
        // Predicated region
        $region79: #{upconv_forward.3} parent=65 // pred_check
          %p2748 = pneg %p144
        $region80: #{upconv_forward.3} parent=65 // pred_check_branch
          %2750 = sbr.rel (%p2748) target = $region82
        $region81: #{upconv_forward.3} parent=65 // pred_region
          %s2751 = smul.u32 64, %s28
          %s2752 = smul.u32 2, %s29
          %s2753 = smul.addr %s2751, 4
          %s2754 = sadd.s32 %s2752, %s2753
          %s2755 = smul.addr %s2754, 4
          %s2756 = scalar_lea.vmem %s3, %s2755
          // Predicated region
          $region83: #{upconv_forward.3} parent=81 // pred_check
            _
          $region84: #{upconv_forward.3} parent=81 // pred_check_branch
            %2758 = sbr.rel (0) target = $region86
          $region85: #{upconv_forward.3} parent=81 // pred_region
            // Predicated region
            $region87: #{upconv_forward.3} parent=85 // pred_check
              _
            $region88: #{upconv_forward.3} parent=85 // pred_check_branch
              %2760 = sbr.rel (0) target = $region90
            $region89: #{upconv_forward.3} parent=85 // pred_region
              // Predicated region
              $region102: #{upconv_forward.3} parent=89 // pred_check
                _
              $region103: #{upconv_forward.3} parent=89 // pred_check_branch
                %2901 = sbr.rel (0) target = $region105
              $region104: #{upconv_forward.3} parent=89 // pred_region
                loop: start=0, step=1, limit=1
                $region106: #{upconv_forward.3} parent=104 // loop_pre_header
                  _
                $region107: #{upconv_forward.3} parent=104 // loop_header
                  %s2903 = sphi 0, %s2907
                  %p2904 = scmp.ge.s32.totalorder %s2903, 1
                  %s2908 = sphi %s2737, %s2737
                  %s2909 = sphi %s2756, %s2756
                $region108: #{upconv_forward.3} parent=104 // loop_header_branch
                  %2906 = sbr.rel (%p2904) target = $region112
                $region109: #{upconv_forward.3} parent=104 // loop_body
                  %v2910 = vld [vmem:[%s2908] sm:$0xff]
                  %2911 = vst [vmem:[%s2909] sm:$0xff] %v2910
                  %v2912 = vld [vmem:[%s2908 + $0x8] sm:$0xff]
                  %2913 = vst [vmem:[%s2909 + $0x10] sm:$0xff] %v2912
                  %v2914 = vld [vmem:[%s2908 + $0x10] sm:$0xff]
                  %2915 = vst [vmem:[%s2909 + $0x20] sm:$0xff] %v2914
                  %v2916 = vld [vmem:[%s2908 + $0x18] sm:$0xff]
                  %2917 = vst [vmem:[%s2909 + $0x30] sm:$0xff] %v2916
                  %v2918 = vld [vmem:[%s2908 + $0x20] sm:$0xff]
                  %2919 = vst [vmem:[%s2909 + $0x40] sm:$0xff] %v2918
                  %v2920 = vld [vmem:[%s2908 + $0x28] sm:$0xff]
                  %2921 = vst [vmem:[%s2909 + $0x50] sm:$0xff] %v2920
                  %v2922 = vld [vmem:[%s2908 + $0x30] sm:$0xff]
                  %2923 = vst [vmem:[%s2909 + $0x60] sm:$0xff] %v2922
                  %v2924 = vld [vmem:[%s2908 + $0x38] sm:$0xff]
                  %2925 = vst [vmem:[%s2909 + $0x70] sm:$0xff] %v2924
                  %v2926 = vld [vmem:[%s2908 + $0x40] sm:$0xff]
                  %2927 = vst [vmem:[%s2909 + $0x80] sm:$0xff] %v2926
                  %v2928 = vld [vmem:[%s2908 + $0x48] sm:$0xff]
                  %2929 = vst [vmem:[%s2909 + $0x90] sm:$0xff] %v2928
                  %v2930 = vld [vmem:[%s2908 + $0x50] sm:$0xff]
                  %2931 = vst [vmem:[%s2909 + $0xa0] sm:$0xff] %v2930
                  %v2932 = vld [vmem:[%s2908 + $0x58] sm:$0xff]
                  %2933 = vst [vmem:[%s2909 + $0xb0] sm:$0xff] %v2932
                  %v2934 = vld [vmem:[%s2908 + $0x60] sm:$0xff]
                  %2935 = vst [vmem:[%s2909 + $0xc0] sm:$0xff] %v2934
                  %v2936 = vld [vmem:[%s2908 + $0x68] sm:$0xff]
                  %2937 = vst [vmem:[%s2909 + $0xd0] sm:$0xff] %v2936
                  %v2938 = vld [vmem:[%s2908 + $0x70] sm:$0xff]
                  %2939 = vst [vmem:[%s2909 + $0xe0] sm:$0xff] %v2938
                  %v2940 = vld [vmem:[%s2908 + $0x78] sm:$0xff]
                  %2941 = vst [vmem:[%s2909 + $0xf0] sm:$0xff] %v2940
                  %v2942 = vld [vmem:[%s2908 + $0x80] sm:$0xff]
                  %2943 = vst [vmem:[%s2909 + $0x100] sm:$0xff] %v2942
                  %v2944 = vld [vmem:[%s2908 + $0x88] sm:$0xff]
                  %2945 = vst [vmem:[%s2909 + $0x110] sm:$0xff] %v2944
                  %v2946 = vld [vmem:[%s2908 + $0x90] sm:$0xff]
                  %2947 = vst [vmem:[%s2909 + $0x120] sm:$0xff] %v2946
                  %v2948 = vld [vmem:[%s2908 + $0x98] sm:$0xff]
                  %2949 = vst [vmem:[%s2909 + $0x130] sm:$0xff] %v2948
                  %v2950 = vld [vmem:[%s2908 + $0xa0] sm:$0xff]
                  %2951 = vst [vmem:[%s2909 + $0x140] sm:$0xff] %v2950
                  %v2952 = vld [vmem:[%s2908 + $0xa8] sm:$0xff]
                  %2953 = vst [vmem:[%s2909 + $0x150] sm:$0xff] %v2952
                  %v2954 = vld [vmem:[%s2908 + $0xb0] sm:$0xff]
                  %2955 = vst [vmem:[%s2909 + $0x160] sm:$0xff] %v2954
                  %v2956 = vld [vmem:[%s2908 + $0xb8] sm:$0xff]
                  %2957 = vst [vmem:[%s2909 + $0x170] sm:$0xff] %v2956
                  %v2958 = vld [vmem:[%s2908 + $0xc0] sm:$0xff]
                  %2959 = vst [vmem:[%s2909 + $0x180] sm:$0xff] %v2958
                  %v2960 = vld [vmem:[%s2908 + $0xc8] sm:$0xff]
                  %2961 = vst [vmem:[%s2909 + $0x190] sm:$0xff] %v2960
                  %v2962 = vld [vmem:[%s2908 + $0xd0] sm:$0xff]
                  %2963 = vst [vmem:[%s2909 + $0x1a0] sm:$0xff] %v2962
                  %v2964 = vld [vmem:[%s2908 + $0xd8] sm:$0xff]
                  %2965 = vst [vmem:[%s2909 + $0x1b0] sm:$0xff] %v2964
                  %v2966 = vld [vmem:[%s2908 + $0xe0] sm:$0xff]
                  %2967 = vst [vmem:[%s2909 + $0x1c0] sm:$0xff] %v2966
                  %v2968 = vld [vmem:[%s2908 + $0xe8] sm:$0xff]
                  %2969 = vst [vmem:[%s2909 + $0x1d0] sm:$0xff] %v2968
                  %v2970 = vld [vmem:[%s2908 + $0xf0] sm:$0xff]
                  %2971 = vst [vmem:[%s2909 + $0x1e0] sm:$0xff] %v2970
                  %v2972 = vld [vmem:[%s2908 + $0xf8] sm:$0xff]
                  %2973 = vst [vmem:[%s2909 + $0x1f0] sm:$0xff] %v2972
                  %v2974 = vld [vmem:[%s2908 + $0x100] sm:$0xff]
                  %2975 = vst [vmem:[%s2909 + $0x200] sm:$0xff] %v2974
                  %v2976 = vld [vmem:[%s2908 + $0x108] sm:$0xff]
                  %2977 = vst [vmem:[%s2909 + $0x210] sm:$0xff] %v2976
                  %v2978 = vld [vmem:[%s2908 + $0x110] sm:$0xff]
                  %2979 = vst [vmem:[%s2909 + $0x220] sm:$0xff] %v2978
                  %v2980 = vld [vmem:[%s2908 + $0x118] sm:$0xff]
                  %2981 = vst [vmem:[%s2909 + $0x230] sm:$0xff] %v2980
                  %v2982 = vld [vmem:[%s2908 + $0x120] sm:$0xff]
                  %2983 = vst [vmem:[%s2909 + $0x240] sm:$0xff] %v2982
                  %v2984 = vld [vmem:[%s2908 + $0x128] sm:$0xff]
                  %2985 = vst [vmem:[%s2909 + $0x250] sm:$0xff] %v2984
                  %v2986 = vld [vmem:[%s2908 + $0x130] sm:$0xff]
                  %2987 = vst [vmem:[%s2909 + $0x260] sm:$0xff] %v2986
                  %v2988 = vld [vmem:[%s2908 + $0x138] sm:$0xff]
                  %2989 = vst [vmem:[%s2909 + $0x270] sm:$0xff] %v2988
                  %v2990 = vld [vmem:[%s2908 + $0x140] sm:$0xff]
                  %2991 = vst [vmem:[%s2909 + $0x280] sm:$0xff] %v2990
                  %v2992 = vld [vmem:[%s2908 + $0x148] sm:$0xff]
                  %2993 = vst [vmem:[%s2909 + $0x290] sm:$0xff] %v2992
                  %v2994 = vld [vmem:[%s2908 + $0x150] sm:$0xff]
                  %2995 = vst [vmem:[%s2909 + $0x2a0] sm:$0xff] %v2994
                  %v2996 = vld [vmem:[%s2908 + $0x158] sm:$0xff]
                  %2997 = vst [vmem:[%s2909 + $0x2b0] sm:$0xff] %v2996
                  %v2998 = vld [vmem:[%s2908 + $0x160] sm:$0xff]
                  %2999 = vst [vmem:[%s2909 + $0x2c0] sm:$0xff] %v2998
                  %v3000 = vld [vmem:[%s2908 + $0x168] sm:$0xff]
                  %3001 = vst [vmem:[%s2909 + $0x2d0] sm:$0xff] %v3000
                  %v3002 = vld [vmem:[%s2908 + $0x170] sm:$0xff]
                  %3003 = vst [vmem:[%s2909 + $0x2e0] sm:$0xff] %v3002
                  %v3004 = vld [vmem:[%s2908 + $0x178] sm:$0xff]
                  %3005 = vst [vmem:[%s2909 + $0x2f0] sm:$0xff] %v3004
                  %v3006 = vld [vmem:[%s2908 + $0x180] sm:$0xff]
                  %3007 = vst [vmem:[%s2909 + $0x300] sm:$0xff] %v3006
                  %v3008 = vld [vmem:[%s2908 + $0x188] sm:$0xff]
                  %3009 = vst [vmem:[%s2909 + $0x310] sm:$0xff] %v3008
                  %v3010 = vld [vmem:[%s2908 + $0x190] sm:$0xff]
                  %3011 = vst [vmem:[%s2909 + $0x320] sm:$0xff] %v3010
                  %v3012 = vld [vmem:[%s2908 + $0x198] sm:$0xff]
                  %3013 = vst [vmem:[%s2909 + $0x330] sm:$0xff] %v3012
                  %v3014 = vld [vmem:[%s2908 + $0x1a0] sm:$0xff]
                  %3015 = vst [vmem:[%s2909 + $0x340] sm:$0xff] %v3014
                  %v3016 = vld [vmem:[%s2908 + $0x1a8] sm:$0xff]
                  %3017 = vst [vmem:[%s2909 + $0x350] sm:$0xff] %v3016
                  %v3018 = vld [vmem:[%s2908 + $0x1b0] sm:$0xff]
                  %3019 = vst [vmem:[%s2909 + $0x360] sm:$0xff] %v3018
                  %v3020 = vld [vmem:[%s2908 + $0x1b8] sm:$0xff]
                  %3021 = vst [vmem:[%s2909 + $0x370] sm:$0xff] %v3020
                  %v3022 = vld [vmem:[%s2908 + $0x1c0] sm:$0xff]
                  %3023 = vst [vmem:[%s2909 + $0x380] sm:$0xff] %v3022
                  %v3024 = vld [vmem:[%s2908 + $0x1c8] sm:$0xff]
                  %3025 = vst [vmem:[%s2909 + $0x390] sm:$0xff] %v3024
                  %v3026 = vld [vmem:[%s2908 + $0x1d0] sm:$0xff]
                  %3027 = vst [vmem:[%s2909 + $0x3a0] sm:$0xff] %v3026
                  %v3028 = vld [vmem:[%s2908 + $0x1d8] sm:$0xff]
                  %3029 = vst [vmem:[%s2909 + $0x3b0] sm:$0xff] %v3028
                  %v3030 = vld [vmem:[%s2908 + $0x1e0] sm:$0xff]
                  %3031 = vst [vmem:[%s2909 + $0x3c0] sm:$0xff] %v3030
                  %v3032 = vld [vmem:[%s2908 + $0x1e8] sm:$0xff]
                  %3033 = vst [vmem:[%s2909 + $0x3d0] sm:$0xff] %v3032
                  %v3034 = vld [vmem:[%s2908 + $0x1f0] sm:$0xff]
                  %3035 = vst [vmem:[%s2909 + $0x3e0] sm:$0xff] %v3034
                  %v3036 = vld [vmem:[%s2908 + $0x1f8] sm:$0xff]
                  %3037 = vst [vmem:[%s2909 + $0x3f0] sm:$0xff] %v3036
                $region110: #{upconv_forward.3} parent=104 // loop_footer
                  %s2907 = sadd.s32 1, %s2903
                $region111: #{upconv_forward.3} parent=104 // loop_footer_branch
                  %2902 = sbr.rel target = $region107
                $region112: #{upconv_forward.3} parent=104 // loop_exit
                  _
              $region105: #{upconv_forward.3} parent=89 // pred_fallthru
                _
              // Predicated region
              $region113: #{upconv_forward.3} parent=89 // pred_check
                _
              $region114: #{upconv_forward.3} parent=89 // pred_check_branch
                %3039 = sbr.rel target = $region116
              $region115: #{upconv_forward.3} parent=89 // pred_region
                _
              $region116: #{upconv_forward.3} parent=89 // pred_fallthru
                _
            $region90: #{upconv_forward.3} parent=85 // pred_fallthru
              _
            // Predicated region
            $region91: #{upconv_forward.3} parent=85 // pred_check
              _
            $region92: #{upconv_forward.3} parent=85 // pred_check_branch
              %2762 = sbr.rel target = $region94
            $region93: #{upconv_forward.3} parent=85 // pred_region
              loop: start=0, step=1, limit=1
              $region95: #{upconv_forward.3} parent=93 // loop_pre_header
                _
              $region96: #{upconv_forward.3} parent=93 // loop_header
                %s2765 = sphi 0, %s2769
                %p2766 = scmp.ge.s32.totalorder %s2765, 1
                %s2770 = sphi %s2737, %s2737
                %s2771 = sphi %s2756, %s2756
              $region97: #{upconv_forward.3} parent=93 // loop_header_branch
                %2768 = sbr.rel (%p2766) target = $region101
              $region98: #{upconv_forward.3} parent=93 // loop_body
                %v2772 = vld [vmem:[%s2770] sm:$0xff]
                %2773 = vst [vmem:[%s2771] sm:$0xff] %v2772
                %v2774 = vld [vmem:[%s2770 + $0x8] sm:$0xff]
                %2775 = vst [vmem:[%s2771 + $0x10] sm:$0xff] %v2774
                %v2776 = vld [vmem:[%s2770 + $0x10] sm:$0xff]
                %2777 = vst [vmem:[%s2771 + $0x20] sm:$0xff] %v2776
                %v2778 = vld [vmem:[%s2770 + $0x18] sm:$0xff]
                %2779 = vst [vmem:[%s2771 + $0x30] sm:$0xff] %v2778
                %v2780 = vld [vmem:[%s2770 + $0x20] sm:$0xff]
                %2781 = vst [vmem:[%s2771 + $0x40] sm:$0xff] %v2780
                %v2782 = vld [vmem:[%s2770 + $0x28] sm:$0xff]
                %2783 = vst [vmem:[%s2771 + $0x50] sm:$0xff] %v2782
                %v2784 = vld [vmem:[%s2770 + $0x30] sm:$0xff]
                %2785 = vst [vmem:[%s2771 + $0x60] sm:$0xff] %v2784
                %v2786 = vld [vmem:[%s2770 + $0x38] sm:$0xff]
                %2787 = vst [vmem:[%s2771 + $0x70] sm:$0xff] %v2786
                %v2788 = vld [vmem:[%s2770 + $0x40] sm:$0xff]
                %2789 = vst [vmem:[%s2771 + $0x80] sm:$0xff] %v2788
                %v2790 = vld [vmem:[%s2770 + $0x48] sm:$0xff]
                %2791 = vst [vmem:[%s2771 + $0x90] sm:$0xff] %v2790
                %v2792 = vld [vmem:[%s2770 + $0x50] sm:$0xff]
                %2793 = vst [vmem:[%s2771 + $0xa0] sm:$0xff] %v2792
                %v2794 = vld [vmem:[%s2770 + $0x58] sm:$0xff]
                %2795 = vst [vmem:[%s2771 + $0xb0] sm:$0xff] %v2794
                %v2796 = vld [vmem:[%s2770 + $0x60] sm:$0xff]
                %2797 = vst [vmem:[%s2771 + $0xc0] sm:$0xff] %v2796
                %v2798 = vld [vmem:[%s2770 + $0x68] sm:$0xff]
                %2799 = vst [vmem:[%s2771 + $0xd0] sm:$0xff] %v2798
                %v2800 = vld [vmem:[%s2770 + $0x70] sm:$0xff]
                %2801 = vst [vmem:[%s2771 + $0xe0] sm:$0xff] %v2800
                %v2802 = vld [vmem:[%s2770 + $0x78] sm:$0xff]
                %2803 = vst [vmem:[%s2771 + $0xf0] sm:$0xff] %v2802
                %v2804 = vld [vmem:[%s2770 + $0x80] sm:$0xff]
                %2805 = vst [vmem:[%s2771 + $0x100] sm:$0xff] %v2804
                %v2806 = vld [vmem:[%s2770 + $0x88] sm:$0xff]
                %2807 = vst [vmem:[%s2771 + $0x110] sm:$0xff] %v2806
                %v2808 = vld [vmem:[%s2770 + $0x90] sm:$0xff]
                %2809 = vst [vmem:[%s2771 + $0x120] sm:$0xff] %v2808
                %v2810 = vld [vmem:[%s2770 + $0x98] sm:$0xff]
                %2811 = vst [vmem:[%s2771 + $0x130] sm:$0xff] %v2810
                %v2812 = vld [vmem:[%s2770 + $0xa0] sm:$0xff]
                %2813 = vst [vmem:[%s2771 + $0x140] sm:$0xff] %v2812
                %v2814 = vld [vmem:[%s2770 + $0xa8] sm:$0xff]
                %2815 = vst [vmem:[%s2771 + $0x150] sm:$0xff] %v2814
                %v2816 = vld [vmem:[%s2770 + $0xb0] sm:$0xff]
                %2817 = vst [vmem:[%s2771 + $0x160] sm:$0xff] %v2816
                %v2818 = vld [vmem:[%s2770 + $0xb8] sm:$0xff]
                %2819 = vst [vmem:[%s2771 + $0x170] sm:$0xff] %v2818
                %v2820 = vld [vmem:[%s2770 + $0xc0] sm:$0xff]
                %2821 = vst [vmem:[%s2771 + $0x180] sm:$0xff] %v2820
                %v2822 = vld [vmem:[%s2770 + $0xc8] sm:$0xff]
                %2823 = vst [vmem:[%s2771 + $0x190] sm:$0xff] %v2822
                %v2824 = vld [vmem:[%s2770 + $0xd0] sm:$0xff]
                %2825 = vst [vmem:[%s2771 + $0x1a0] sm:$0xff] %v2824
                %v2826 = vld [vmem:[%s2770 + $0xd8] sm:$0xff]
                %2827 = vst [vmem:[%s2771 + $0x1b0] sm:$0xff] %v2826
                %v2828 = vld [vmem:[%s2770 + $0xe0] sm:$0xff]
                %2829 = vst [vmem:[%s2771 + $0x1c0] sm:$0xff] %v2828
                %v2830 = vld [vmem:[%s2770 + $0xe8] sm:$0xff]
                %2831 = vst [vmem:[%s2771 + $0x1d0] sm:$0xff] %v2830
                %v2832 = vld [vmem:[%s2770 + $0xf0] sm:$0xff]
                %2833 = vst [vmem:[%s2771 + $0x1e0] sm:$0xff] %v2832
                %v2834 = vld [vmem:[%s2770 + $0xf8] sm:$0xff]
                %2835 = vst [vmem:[%s2771 + $0x1f0] sm:$0xff] %v2834
                %v2836 = vld [vmem:[%s2770 + $0x100] sm:$0xff]
                %2837 = vst [vmem:[%s2771 + $0x200] sm:$0xff] %v2836
                %v2838 = vld [vmem:[%s2770 + $0x108] sm:$0xff]
                %2839 = vst [vmem:[%s2771 + $0x210] sm:$0xff] %v2838
                %v2840 = vld [vmem:[%s2770 + $0x110] sm:$0xff]
                %2841 = vst [vmem:[%s2771 + $0x220] sm:$0xff] %v2840
                %v2842 = vld [vmem:[%s2770 + $0x118] sm:$0xff]
                %2843 = vst [vmem:[%s2771 + $0x230] sm:$0xff] %v2842
                %v2844 = vld [vmem:[%s2770 + $0x120] sm:$0xff]
                %2845 = vst [vmem:[%s2771 + $0x240] sm:$0xff] %v2844
                %v2846 = vld [vmem:[%s2770 + $0x128] sm:$0xff]
                %2847 = vst [vmem:[%s2771 + $0x250] sm:$0xff] %v2846
                %v2848 = vld [vmem:[%s2770 + $0x130] sm:$0xff]
                %2849 = vst [vmem:[%s2771 + $0x260] sm:$0xff] %v2848
                %v2850 = vld [vmem:[%s2770 + $0x138] sm:$0xff]
                %2851 = vst [vmem:[%s2771 + $0x270] sm:$0xff] %v2850
                %v2852 = vld [vmem:[%s2770 + $0x140] sm:$0xff]
                %2853 = vst [vmem:[%s2771 + $0x280] sm:$0xff] %v2852
                %v2854 = vld [vmem:[%s2770 + $0x148] sm:$0xff]
                %2855 = vst [vmem:[%s2771 + $0x290] sm:$0xff] %v2854
                %v2856 = vld [vmem:[%s2770 + $0x150] sm:$0xff]
                %2857 = vst [vmem:[%s2771 + $0x2a0] sm:$0xff] %v2856
                %v2858 = vld [vmem:[%s2770 + $0x158] sm:$0xff]
                %2859 = vst [vmem:[%s2771 + $0x2b0] sm:$0xff] %v2858
                %v2860 = vld [vmem:[%s2770 + $0x160] sm:$0xff]
                %2861 = vst [vmem:[%s2771 + $0x2c0] sm:$0xff] %v2860
                %v2862 = vld [vmem:[%s2770 + $0x168] sm:$0xff]
                %2863 = vst [vmem:[%s2771 + $0x2d0] sm:$0xff] %v2862
                %v2864 = vld [vmem:[%s2770 + $0x170] sm:$0xff]
                %2865 = vst [vmem:[%s2771 + $0x2e0] sm:$0xff] %v2864
                %v2866 = vld [vmem:[%s2770 + $0x178] sm:$0xff]
                %2867 = vst [vmem:[%s2771 + $0x2f0] sm:$0xff] %v2866
                %v2868 = vld [vmem:[%s2770 + $0x180] sm:$0xff]
                %2869 = vst [vmem:[%s2771 + $0x300] sm:$0xff] %v2868
                %v2870 = vld [vmem:[%s2770 + $0x188] sm:$0xff]
                %2871 = vst [vmem:[%s2771 + $0x310] sm:$0xff] %v2870
                %v2872 = vld [vmem:[%s2770 + $0x190] sm:$0xff]
                %2873 = vst [vmem:[%s2771 + $0x320] sm:$0xff] %v2872
                %v2874 = vld [vmem:[%s2770 + $0x198] sm:$0xff]
                %2875 = vst [vmem:[%s2771 + $0x330] sm:$0xff] %v2874
                %v2876 = vld [vmem:[%s2770 + $0x1a0] sm:$0xff]
                %2877 = vst [vmem:[%s2771 + $0x340] sm:$0xff] %v2876
                %v2878 = vld [vmem:[%s2770 + $0x1a8] sm:$0xff]
                %2879 = vst [vmem:[%s2771 + $0x350] sm:$0xff] %v2878
                %v2880 = vld [vmem:[%s2770 + $0x1b0] sm:$0xff]
                %2881 = vst [vmem:[%s2771 + $0x360] sm:$0xff] %v2880
                %v2882 = vld [vmem:[%s2770 + $0x1b8] sm:$0xff]
                %2883 = vst [vmem:[%s2771 + $0x370] sm:$0xff] %v2882
                %v2884 = vld [vmem:[%s2770 + $0x1c0] sm:$0xff]
                %2885 = vst [vmem:[%s2771 + $0x380] sm:$0xff] %v2884
                %v2886 = vld [vmem:[%s2770 + $0x1c8] sm:$0xff]
                %2887 = vst [vmem:[%s2771 + $0x390] sm:$0xff] %v2886
                %v2888 = vld [vmem:[%s2770 + $0x1d0] sm:$0xff]
                %2889 = vst [vmem:[%s2771 + $0x3a0] sm:$0xff] %v2888
                %v2890 = vld [vmem:[%s2770 + $0x1d8] sm:$0xff]
                %2891 = vst [vmem:[%s2771 + $0x3b0] sm:$0xff] %v2890
                %v2892 = vld [vmem:[%s2770 + $0x1e0] sm:$0xff]
                %2893 = vst [vmem:[%s2771 + $0x3c0] sm:$0xff] %v2892
                %v2894 = vld [vmem:[%s2770 + $0x1e8] sm:$0xff]
                %2895 = vst [vmem:[%s2771 + $0x3d0] sm:$0xff] %v2894
                %v2896 = vld [vmem:[%s2770 + $0x1f0] sm:$0xff]
                %2897 = vst [vmem:[%s2771 + $0x3e0] sm:$0xff] %v2896
                %v2898 = vld [vmem:[%s2770 + $0x1f8] sm:$0xff]
                %2899 = vst [vmem:[%s2771 + $0x3f0] sm:$0xff] %v2898
              $region99: #{upconv_forward.3} parent=93 // loop_footer
                %s2769 = sadd.s32 1, %s2765
              $region100: #{upconv_forward.3} parent=93 // loop_footer_branch
                %2764 = sbr.rel target = $region96
              $region101: #{upconv_forward.3} parent=93 // loop_exit
                _
            $region94: #{upconv_forward.3} parent=85 // pred_fallthru
              _
          $region86: #{upconv_forward.3} parent=81 // pred_fallthru
            _
          %3040 = vnop
        $region82: #{upconv_forward.3} parent=65 // pred_fallthru
          _
        // Predicated region
        $region117: #{upconv_forward.3} parent=65 // pred_check
          %p3041 = pneg %p172
        $region118: #{upconv_forward.3} parent=65 // pred_check_branch
          %3043 = sbr.rel (%p3041) target = $region120
        $region119: #{upconv_forward.3} parent=65 // pred_region
          %s3044 = smul.u32 2, %s29
          %s3046 = ssub.s32 256, 256
          %3047 = vsyncadd %s2739, %s3046
          %s3048 = smul.addr %s28, 4
          %s3049 = sadd.s32 %s3044, %s3048
          %s3050 = smul.addr %s3049, 128
          %s3051 = scalar_lea.hbm %s4, %s3050
          %s3053 = sshll.u32 %s2742, 4
          %s3054 = int_to_ptr.vmem [resolvable:$true] %s3053
          %3056 = dma.vmem_to_hbm [thread:$0]  %s3054, 256, %s3051, %s2739
        $region120: #{upconv_forward.3} parent=65 // pred_fallthru
          _
        // Predicated region
        $region121: #{upconv_forward.3} parent=65 // pred_check
          %p3057 = pneg %p200
        $region122: #{upconv_forward.3} parent=65 // pred_check_branch
          %3059 = sbr.rel (%p3057) target = $region124
        $region123: #{upconv_forward.3} parent=65 // pred_region
          %s3060 = smul.u32 2, %s29
          %s3062 = ssub.s32 256, 256
          %3063 = vsyncadd %s2744, %s3062
          %s3064 = smul.addr %s28, 4
          %s3065 = sadd.s32 %s3060, %s3064
          %s3066 = smul.addr %s3065, 128
          %s3067 = scalar_lea.hbm %s5, %s3066
          %s3069 = sshll.u32 %s2747, 4
          %s3070 = int_to_ptr.vmem [resolvable:$true] %s3069
          %3072 = dma.vmem_to_hbm [thread:$0]  %s3070, 256, %s3067, %s2744
        $region124: #{upconv_forward.3} parent=65 // pred_fallthru
          _
      $region66: #{upconv_forward.3} parent=5 // pred_fallthru
        _
      %p3073 = scmp.le.s32.totalorder 2, %s18
      // Predicated region
      $region125: #{upconv_forward.3} parent=5 // pred_check
        %p3074 = pneg %p3073
      $region126: #{upconv_forward.3} parent=5 // pred_check_branch
        %3076 = sbr.rel (%p3074) target = $region128
      $region127: #{upconv_forward.3} parent=5 // pred_region
        %s3077 = ssub.s32 %s18, 2
        // Predicated region
        $region129: #{upconv_forward.3} parent=127 // pred_check
          %p3078 = pneg %p150
        $region130: #{upconv_forward.3} parent=127 // pred_check_branch
          %3080 = sbr.rel (%p3078) target = $region132
        $region131: #{upconv_forward.3} parent=127 // pred_region
          %s3081 = sand.u32 %s135, 1
          %s3082 = sand.u32 %s135, 1
          %s3083 = smul.addr %s3082, 512
          %s3084 = scalar_lea.vmem [#allocation4], %s3083
        $region132: #{upconv_forward.3} parent=127 // pred_fallthru
          _
        // Predicated region
        $region133: #{upconv_forward.3} parent=127 // pred_check
          %p3085 = pneg %p178
        $region134: #{upconv_forward.3} parent=127 // pred_check_branch
          %3087 = sbr.rel (%p3085) target = $region136
        $region135: #{upconv_forward.3} parent=127 // pred_region
          %s3088 = sand.u32 %s163, 1
          %s3089 = scalar_lea.sflag [#allocation6], %s3088
          %s3090 = sand.u32 %s163, 1
          %s3091 = smul.addr %s3090, 16
          %s3092 = scalar_lea.vmem [#allocation5], %s3091
          %3093 = dma.done %s3089, 256
        $region136: #{upconv_forward.3} parent=127 // pred_fallthru
          _
        // Predicated region
        $region137: #{upconv_forward.3} parent=127 // pred_check
          %p3094 = pneg %p206
        $region138: #{upconv_forward.3} parent=127 // pred_check_branch
          %3096 = sbr.rel (%p3094) target = $region140
        $region139: #{upconv_forward.3} parent=127 // pred_region
          %s3097 = sand.u32 %s191, 1
          %s3098 = scalar_lea.sflag [#allocation8], %s3097
          %s3099 = sand.u32 %s191, 1
          %s3100 = smul.addr %s3099, 16
          %s3101 = scalar_lea.vmem [#allocation7], %s3100
          %3102 = dma.done %s3098, 256
        $region140: #{upconv_forward.3} parent=127 // pred_fallthru
          _
      $region128: #{upconv_forward.3} parent=5 // pred_fallthru
        _
    $region6: #{upconv_forward.3} parent=1 // loop_footer
      %s22 = sadd.s32 1, %s18
    $region7: #{upconv_forward.3} parent=1 // loop_footer_branch
      %17 = sbr.rel target = $region3
    $region8: #{upconv_forward.3} parent=1 // loop_exit
      _
    %3103 = vsyncpa [#allocation6], 1
    %s3104 = scalar_lea.sflag [#allocation6], 1
    %3105 = vsyncpa %s3104, 1
    %3106 = vsyncpa [#allocation8], 1
    %s3107 = scalar_lea.sflag [#allocation8], 1
    %3108 = vsyncpa %s3107, 1

// kernel: upconv_forward.4
$region0: #{upconv_forward.4}
  #allocation0 [shape = 'u32[]', space=smem, size = 0x4, offset = 0x4, fixed_abs, tag = 'smem constant byte address 0x4 - core index']
  #allocation1 [shape = 'u32[144,128]{1,0:T(1,128)}', space=vmem, size = 0x12000, scoped, tag = 'internal scratch']
  #allocation2 [shape = 'f32[512,128]{1,0:T(8,128)}', space=vmem, size = 0x40000, scoped, tag = 'scratch operand']
  %s0 = inlined_call_operand.vmem [shape: bf16[2048,36], index: 0, kind: input, shape index: {}]
  %s1 = inlined_call_operand.vmem [shape: bf16[36,128], index: 1, kind: input, shape index: {}]
  %s2 = inlined_call_operand.vmem [shape: f32[1,128], index: 2, kind: input, shape index: {}]
  %s3 = inlined_call_operand.vmem [shape: bf16[2048,128], index: 3, kind: output, shape index: {0}]
  %s4 = inlined_call_operand.vmem [shape: f32[32,128], index: 4, kind: output, shape index: {1}]
  %s5 = inlined_call_operand.vmem [shape: f32[32,128], index: 5, kind: output, shape index: {2}]
  %6 = xla_tuple %s3, %s4, %s5
  %s7 = sld [smem:[#allocation0]]
  $region69: #{upconv_forward.4} parent=0
    _
  %s9 = ssub.s32 1, %s7
  %s10 = scalar_select 0, %s9, %s7
  loop: start=0, step=1, limit=6
  $region2: #{upconv_forward.4} parent=0 // loop_pre_header
    _
  $region3: #{upconv_forward.4} parent=0 // loop_header
    %s12 = sphi 0, %s16
    %p13 = scmp.ge.s32.totalorder %s12, 6
    %s19 = sphi 0, %s38
    %s20 = sphi 0, %s34
    %s21 = sphi 0, %s30
    %s22 = sphi 0, %s19
    %s23 = sphi 0, %s20
    %s24 = sphi 0, %s21
    %s25 = sphi 0, %s22
    %s26 = sphi 0, %s23
    %s27 = sphi 0, %s24
    %s43 = sphi 0, %s45
    %s46 = sphi 0, %s43
    %s47 = sphi 0, %s46
    %s63 = sphi 0, %s47
    %s71 = sphi 0, %s73
    %s74 = sphi 0, %s71
    %s75 = sphi 0, %s74
    %s91 = sphi 0, %s75
    %s97 = sphi 0, %s99
    %s100 = sphi 0, %s97
    %s101 = sphi 0, %s100
    %s117 = sphi 0, %s101
    %s125 = sphi 0, %s127
    %s128 = sphi 0, %s125
    %s129 = sphi 0, %s128
    %s145 = sphi 0, %s129
    %s153 = sphi 0, %s155
    %s156 = sphi 0, %s153
    %s157 = sphi 0, %s156
    %s173 = sphi 0, %s157
    %s181 = sphi 0, %s183
    %s184 = sphi 0, %s181
    %s185 = sphi 0, %s184
    %s201 = sphi 0, %s185
  $region4: #{upconv_forward.4} parent=0 // loop_header_branch
    %15 = sbr.rel (%p13) target = $region8
  $region5: #{upconv_forward.4} parent=0 // loop_body
    %s17 = ssub.s32 %s12, 1
    %s18 = ssub.s32 %s12, 2
    %s28 = sadd.s32 1, %s21
    %p29 = scmp.ge.s32.totalorder %s28, 1
    %s30 = scalar_select %p29, 0, %s28
    %s31 = sadd.s32 1, %s20
    %s32 = scalar_select %p29, %s31, %s20
    %p33 = scmp.ge.s32.totalorder %s32, 1
    %s34 = scalar_select %p33, 0, %s32
    %s35 = sadd.s32 1, %s19
    %s36 = scalar_select %p33, %s35, %s19
    %p37 = scmp.ge.s32.totalorder %s36, 4
    %s38 = scalar_select %p37, 0, %s36
    %s39 = ssub.s32 %s19, %s38
    %s40 = ssub.s32 %s21, %s30
    %s41 = sor.u32 %s39, %s40
    %p42 = scmp.eq.s32.totalorder %s41, 0
    %s44 = sadd.s32 %s43, 1
    %s45 = scalar_select %p42, %s43, %s44
    %p48 = pneg %p42
    %p49 = scmp.eq.s32.totalorder %s12, 3
    %p50 = por %p48, %p49
    %p51 = scmp.ne.s32.totalorder %s43, %s46
    %p52 = scmp.eq.s32.totalorder %s12, 0
    %p53 = por %p51, %p52
    %p54 = scmp.ne.s32.totalorder %s43, %s46
    %p55 = scmp.eq.s32.totalorder %s17, 3
    %p56 = por %p54, %p55
    %p57 = scmp.ne.s32.totalorder %s46, %s47
    %p58 = scmp.eq.s32.totalorder %s17, 0
    %p59 = por %p57, %p58
    %p60 = scmp.ne.s32.totalorder %s46, %s47
    %p61 = scmp.eq.s32.totalorder %s18, 3
    %p62 = por %p60, %p61
    %p64 = scmp.ne.s32.totalorder %s47, %s63
    %p65 = scmp.eq.s32.totalorder %s18, 0
    %p66 = por %p64, %p65
    %s67 = ssub.s32 %s21, %s30
    %s68 = ssub.s32 %s20, %s34
    %s69 = sor.u32 %s67, %s68
    %p70 = scmp.eq.s32.totalorder %s69, 0
    %s72 = sadd.s32 %s71, 1
    %s73 = scalar_select %p70, %s71, %s72
    %p76 = pneg %p70
    %p77 = scmp.eq.s32.totalorder %s12, 3
    %p78 = por %p76, %p77
    %p79 = scmp.ne.s32.totalorder %s71, %s74
    %p80 = scmp.eq.s32.totalorder %s12, 0
    %p81 = por %p79, %p80
    %p82 = scmp.ne.s32.totalorder %s71, %s74
    %p83 = scmp.eq.s32.totalorder %s17, 3
    %p84 = por %p82, %p83
    %p85 = scmp.ne.s32.totalorder %s74, %s75
    %p86 = scmp.eq.s32.totalorder %s17, 0
    %p87 = por %p85, %p86
    %p88 = scmp.ne.s32.totalorder %s74, %s75
    %p89 = scmp.eq.s32.totalorder %s18, 3
    %p90 = por %p88, %p89
    %p92 = scmp.ne.s32.totalorder %s75, %s91
    %p93 = scmp.eq.s32.totalorder %s18, 0
    %p94 = por %p92, %p93
    %s95 = ssub.s32 %s20, %s34
    %p96 = scmp.eq.s32.totalorder %s95, 0
    %s98 = sadd.s32 %s97, 1
    %s99 = scalar_select %p96, %s97, %s98
    %p102 = pneg %p96
    %p103 = scmp.eq.s32.totalorder %s12, 3
    %p104 = por %p102, %p103
    %p105 = scmp.ne.s32.totalorder %s97, %s100
    %p106 = scmp.eq.s32.totalorder %s12, 0
    %p107 = por %p105, %p106
    %p108 = scmp.ne.s32.totalorder %s97, %s100
    %p109 = scmp.eq.s32.totalorder %s17, 3
    %p110 = por %p108, %p109
    %p111 = scmp.ne.s32.totalorder %s100, %s101
    %p112 = scmp.eq.s32.totalorder %s17, 0
    %p113 = por %p111, %p112
    %p114 = scmp.ne.s32.totalorder %s100, %s101
    %p115 = scmp.eq.s32.totalorder %s18, 3
    %p116 = por %p114, %p115
    %p118 = scmp.ne.s32.totalorder %s101, %s117
    %p119 = scmp.eq.s32.totalorder %s18, 0
    %p120 = por %p118, %p119
    %s121 = ssub.s32 %s19, %s38
    %s122 = ssub.s32 %s20, %s34
    %s123 = sor.u32 %s121, %s122
    %p124 = scmp.eq.s32.totalorder %s123, 0
    %s126 = sadd.s32 %s125, 1
    %s127 = scalar_select %p124, %s125, %s126
    %p130 = pneg %p124
    %p131 = scmp.eq.s32.totalorder %s12, 3
    %p132 = por %p130, %p131
    %p133 = scmp.ne.s32.totalorder %s125, %s128
    %p134 = scmp.eq.s32.totalorder %s12, 0
    %p135 = por %p133, %p134
    %p136 = scmp.ne.s32.totalorder %s125, %s128
    %p137 = scmp.eq.s32.totalorder %s17, 3
    %p138 = por %p136, %p137
    %p139 = scmp.ne.s32.totalorder %s128, %s129
    %p140 = scmp.eq.s32.totalorder %s17, 0
    %p141 = por %p139, %p140
    %p142 = scmp.ne.s32.totalorder %s128, %s129
    %p143 = scmp.eq.s32.totalorder %s18, 3
    %p144 = por %p142, %p143
    %p146 = scmp.ne.s32.totalorder %s129, %s145
    %p147 = scmp.eq.s32.totalorder %s18, 0
    %p148 = por %p146, %p147
    %s149 = ssub.s32 %s19, %s38
    %s150 = ssub.s32 %s20, %s34
    %s151 = sor.u32 %s149, %s150
    %p152 = scmp.eq.s32.totalorder %s151, 0
    %s154 = sadd.s32 %s153, 1
    %s155 = scalar_select %p152, %s153, %s154
    %p158 = pneg %p152
    %p159 = scmp.eq.s32.totalorder %s12, 3
    %p160 = por %p158, %p159
    %p161 = scmp.ne.s32.totalorder %s153, %s156
    %p162 = scmp.eq.s32.totalorder %s12, 0
    %p163 = por %p161, %p162
    %p164 = scmp.ne.s32.totalorder %s153, %s156
    %p165 = scmp.eq.s32.totalorder %s17, 3
    %p166 = por %p164, %p165
    %p167 = scmp.ne.s32.totalorder %s156, %s157
    %p168 = scmp.eq.s32.totalorder %s17, 0
    %p169 = por %p167, %p168
    %p170 = scmp.ne.s32.totalorder %s156, %s157
    %p171 = scmp.eq.s32.totalorder %s18, 3
    %p172 = por %p170, %p171
    %p174 = scmp.ne.s32.totalorder %s157, %s173
    %p175 = scmp.eq.s32.totalorder %s18, 0
    %p176 = por %p174, %p175
    %s177 = ssub.s32 %s19, %s38
    %s178 = ssub.s32 %s20, %s34
    %s179 = sor.u32 %s177, %s178
    %p180 = scmp.eq.s32.totalorder %s179, 0
    %s182 = sadd.s32 %s181, 1
    %s183 = scalar_select %p180, %s181, %s182
    %p186 = pneg %p180
    %p187 = scmp.eq.s32.totalorder %s12, 3
    %p188 = por %p186, %p187
    %p189 = scmp.ne.s32.totalorder %s181, %s184
    %p190 = scmp.eq.s32.totalorder %s12, 0
    %p191 = por %p189, %p190
    %p192 = scmp.ne.s32.totalorder %s181, %s184
    %p193 = scmp.eq.s32.totalorder %s17, 3
    %p194 = por %p192, %p193
    %p195 = scmp.ne.s32.totalorder %s184, %s185
    %p196 = scmp.eq.s32.totalorder %s17, 0
    %p197 = por %p195, %p196
    %p198 = scmp.ne.s32.totalorder %s184, %s185
    %p199 = scmp.eq.s32.totalorder %s18, 3
    %p200 = por %p198, %p199
    %p202 = scmp.ne.s32.totalorder %s185, %s201
    %p203 = scmp.eq.s32.totalorder %s18, 0
    %p204 = por %p202, %p203
    %p205 = scmp.le.s32.totalorder 1, %s12
    %p206 = scmp.lt.s32.totalorder %s12, 5
    %p207 = pnand %p205, %p206
    %p208 = pneg %p207
    // Predicated region
    $region9: #{upconv_forward.4} parent=5 // pred_check
      _
    $region10: #{upconv_forward.4} parent=5 // pred_check_branch
      %210 = sbr.rel (%p207) target = $region12
    $region11: #{upconv_forward.4} parent=5 // pred_region
      %s211 = ssub.s32 %s12, 1
      // Predicated region
      $region13: #{upconv_forward.4} parent=11 // pred_check
        %p212 = pneg %p87
      $region14: #{upconv_forward.4} parent=11 // pred_check_branch
        %214 = sbr.rel (%p212) target = $region16
      $region15: #{upconv_forward.4} parent=11 // pred_region
        %s215 = smul.u32 5, %s24
        %p216 = scmp.lt.s32.totalorder %s215, 4
        %s217 = scalar_select %p216, %s215, 4
        %p218 = scmp.lt.s32.totalorder %s23, 0
        %s219 = scalar_select %p218, %s23, 0
        %s220 = sadd.s32 %s219, %s217
        %s221 = smul.addr %s220, 4
        %s222 = scalar_lea.vmem %s1, %s221
        %s223 = smul.u32 5, %s24
      $region16: #{upconv_forward.4} parent=11 // pred_fallthru
        _
      // Predicated region
      $region17: #{upconv_forward.4} parent=11 // pred_check
        %p224 = pneg %p113
      $region18: #{upconv_forward.4} parent=11 // pred_check_branch
        %226 = sbr.rel (%p224) target = $region20
      $region19: #{upconv_forward.4} parent=11 // pred_region
        %p227 = scmp.lt.s32.totalorder %s23, 0
        %s228 = scalar_select %p227, %s23, 0
        %s229 = scalar_lea.vmem %s2, %s228
      $region20: #{upconv_forward.4} parent=11 // pred_fallthru
        _
    $region12: #{upconv_forward.4} parent=5 // pred_fallthru
      _
    %p230 = scmp.lt.s32.totalorder %s12, 4
    // Predicated region
    $region21: #{upconv_forward.4} parent=5 // pred_check
      %p231 = pneg %p230
    $region22: #{upconv_forward.4} parent=5 // pred_check_branch
      %233 = sbr.rel (%p231) target = $region24
    $region23: #{upconv_forward.4} parent=5 // pred_region
      // Predicated region
      $region25: #{upconv_forward.4} parent=23 // pred_check
        %p234 = pneg %p53
      $region26: #{upconv_forward.4} parent=23 // pred_check_branch
        %236 = sbr.rel (%p234) target = $region28
      $region27: #{upconv_forward.4} parent=23 // pred_region
        %s237 = smul.u32 64, %s19
        %p238 = scmp.lt.s32.totalorder %s237, 255
        %s239 = scalar_select %p238, %s237, 255
        %p240 = scmp.lt.s32.totalorder %s21, 0
        %s241 = scalar_select %p240, %s21, 0
        %s242 = sadd.s32 %s241, %s239
        %s243 = smul.addr %s242, 4
        %s244 = scalar_lea.vmem %s0, %s243
        %s245 = smul.u32 64, %s19
      $region28: #{upconv_forward.4} parent=23 // pred_fallthru
        _
    $region24: #{upconv_forward.4} parent=5 // pred_fallthru
      _
    %p246 = scmp.le.s32.totalorder 1, %s12
    %p247 = scmp.lt.s32.totalorder %s12, 5
    %p248 = pnand %p246, %p247
    %p249 = pneg %p248
    // Predicated region
    $region29: #{upconv_forward.4} parent=5 // pred_check
      _
    $region30: #{upconv_forward.4} parent=5 // pred_check_branch
      %251 = sbr.rel (%p248) target = $region32
    $region31: #{upconv_forward.4} parent=5 // pred_region
      %s252 = ssub.s32 %s12, 1
      %s253 = smul.u32 64, %s22
      %p254 = scmp.lt.s32.totalorder %s253, 255
      %s255 = scalar_select %p254, %s253, 255
      %p256 = scmp.lt.s32.totalorder %s24, 0
      %s257 = scalar_select %p256, %s24, 0
      %s258 = sadd.s32 %s257, %s255
      %s259 = smul.addr %s258, 4
      %s260 = scalar_lea.vmem %s0, %s259
      %p261 = pneg %p59
      %p262 = pneg %p56
      %s263 = smul.u32 5, %s24
      %p264 = scmp.lt.s32.totalorder %s263, 4
      %s265 = scalar_select %p264, %s263, 4
      %p266 = scmp.lt.s32.totalorder %s23, 0
      %s267 = scalar_select %p266, %s23, 0
      %s268 = sadd.s32 %s267, %s265
      %s269 = smul.addr %s268, 4
      %s270 = scalar_lea.vmem %s1, %s269
      %p271 = pneg %p87
      %p272 = pneg %p84
      %p273 = scmp.lt.s32.totalorder %s23, 0
      %s274 = scalar_select %p273, %s23, 0
      %s275 = scalar_lea.vmem %s2, %s274
      %p276 = pneg %p113
      %p277 = pneg %p110
      %p278 = pneg %p141
      %p279 = pneg %p138
      %s280 = smul.u32 64, %s22
      %p281 = scmp.lt.s32.totalorder %s280, 255
      %s282 = scalar_select %p281, %s280, 255
      %p283 = scmp.lt.s32.totalorder %s23, 0
      %s284 = scalar_select %p283, %s23, 0
      %s285 = sadd.s32 %s284, %s282
      %s286 = smul.addr %s285, 4
      %s287 = scalar_lea.vmem %s3, %s286
      %p288 = pneg %p169
      %p289 = pneg %p166
      %p290 = scmp.lt.s32.totalorder %s22, 3
      %s291 = scalar_select %p290, %s22, 3
      %p292 = scmp.lt.s32.totalorder %s23, 0
      %s293 = scalar_select %p292, %s23, 0
      %s294 = sadd.s32 %s293, %s291
      %s295 = smul.addr %s294, 8
      %s296 = scalar_lea.vmem %s4, %s295
      %p297 = pneg %p197
      %p298 = pneg %p194
      %p299 = scmp.lt.s32.totalorder %s22, 3
      %s300 = scalar_select %p299, %s22, 3
      %p301 = scmp.lt.s32.totalorder %s23, 0
      %s302 = scalar_select %p301, %s23, 0
      %s303 = sadd.s32 %s302, %s300
      %s304 = smul.addr %s303, 8
      %s305 = scalar_lea.vmem %s5, %s304
      %s306 = smul.u32 64, %s22
      %p307 = scmp.lt.s32.totalorder %s306, 255
      %s308 = scalar_select %p307, %s306, 255
      %p309 = scmp.lt.s32.totalorder %s24, 0
      %s310 = scalar_select %p309, %s24, 0
      %s311 = sadd.s32 %s310, %s308
      %s312 = smul.addr %s311, 4
      %s313 = scalar_lea.vmem %s0, %s312
      %s314 = smul.u32 64, %s22
      %s315 = smul.u32 5, %s24
      %p316 = scmp.lt.s32.totalorder %s315, 4
      %s317 = scalar_select %p316, %s315, 4
      %p318 = scmp.lt.s32.totalorder %s23, 0
      %s319 = scalar_select %p318, %s23, 0
      %s320 = sadd.s32 %s319, %s317
      %s321 = smul.addr %s320, 4
      %s322 = scalar_lea.vmem %s1, %s321
      %s323 = smul.u32 5, %s24
      %p324 = scmp.lt.s32.totalorder %s23, 0
      %s325 = scalar_select %p324, %s23, 0
      %s326 = scalar_lea.vmem %s2, %s325
      %s327 = smul.u32 64, %s22
      %p328 = scmp.lt.s32.totalorder %s327, 255
      %s329 = scalar_select %p328, %s327, 255
      %p330 = scmp.lt.s32.totalorder %s23, 0
      %s331 = scalar_select %p330, %s23, 0
      %s332 = sadd.s32 %s331, %s329
      %s333 = smul.addr %s332, 4
      %s334 = scalar_lea.vmem %s3, %s333
      %s335 = smul.u32 64, %s22
      %p336 = scmp.lt.s32.totalorder %s22, 3
      %s337 = scalar_select %p336, %s22, 3
      %p338 = scmp.lt.s32.totalorder %s23, 0
      %s339 = scalar_select %p338, %s23, 0
      %s340 = sadd.s32 %s339, %s337
      %s341 = smul.addr %s340, 8
      %s342 = scalar_lea.vmem %s4, %s341
      %p343 = scmp.lt.s32.totalorder %s22, 3
      %s344 = scalar_select %p343, %s22, 3
      %p345 = scmp.lt.s32.totalorder %s23, 0
      %s346 = scalar_select %p345, %s23, 0
      %s347 = sadd.s32 %s346, %s344
      %s348 = smul.addr %s347, 8
      %s349 = scalar_lea.vmem %s5, %s348
      %p351 = scmp.eq.s32.totalorder %s24, 0
      // Predicated region
      $region33: #{upconv_forward.4} parent=31 // pred_check
        %p352 = pneg %p351
      $region34: #{upconv_forward.4} parent=31 // pred_check_branch
        %354 = sbr.rel (%p352) target = $region36
      $region35: #{upconv_forward.4} parent=31 // pred_region
        %355 = vst [vmem:[#allocation2] sm:$0xff] 0.0
        %356 = vst [vmem:[#allocation2 + $0x8] sm:$0xff] 0.0
        %357 = vst [vmem:[#allocation2 + $0x10] sm:$0xff] 0.0
        %358 = vst [vmem:[#allocation2 + $0x18] sm:$0xff] 0.0
        %359 = vst [vmem:[#allocation2 + $0x20] sm:$0xff] 0.0
        %360 = vst [vmem:[#allocation2 + $0x28] sm:$0xff] 0.0
        %361 = vst [vmem:[#allocation2 + $0x30] sm:$0xff] 0.0
        %362 = vst [vmem:[#allocation2 + $0x38] sm:$0xff] 0.0
        %363 = vst [vmem:[#allocation2 + $0x40] sm:$0xff] 0.0
        %364 = vst [vmem:[#allocation2 + $0x48] sm:$0xff] 0.0
        %365 = vst [vmem:[#allocation2 + $0x50] sm:$0xff] 0.0
        %366 = vst [vmem:[#allocation2 + $0x58] sm:$0xff] 0.0
        %367 = vst [vmem:[#allocation2 + $0x60] sm:$0xff] 0.0
        %368 = vst [vmem:[#allocation2 + $0x68] sm:$0xff] 0.0
        %369 = vst [vmem:[#allocation2 + $0x70] sm:$0xff] 0.0
        %370 = vst [vmem:[#allocation2 + $0x78] sm:$0xff] 0.0
        %371 = vst [vmem:[#allocation2 + $0x80] sm:$0xff] 0.0
        %372 = vst [vmem:[#allocation2 + $0x88] sm:$0xff] 0.0
        %373 = vst [vmem:[#allocation2 + $0x90] sm:$0xff] 0.0
        %374 = vst [vmem:[#allocation2 + $0x98] sm:$0xff] 0.0
        %375 = vst [vmem:[#allocation2 + $0xa0] sm:$0xff] 0.0
        %376 = vst [vmem:[#allocation2 + $0xa8] sm:$0xff] 0.0
        %377 = vst [vmem:[#allocation2 + $0xb0] sm:$0xff] 0.0
        %378 = vst [vmem:[#allocation2 + $0xb8] sm:$0xff] 0.0
        %379 = vst [vmem:[#allocation2 + $0xc0] sm:$0xff] 0.0
        %380 = vst [vmem:[#allocation2 + $0xc8] sm:$0xff] 0.0
        %381 = vst [vmem:[#allocation2 + $0xd0] sm:$0xff] 0.0
        %382 = vst [vmem:[#allocation2 + $0xd8] sm:$0xff] 0.0
        %383 = vst [vmem:[#allocation2 + $0xe0] sm:$0xff] 0.0
        %384 = vst [vmem:[#allocation2 + $0xe8] sm:$0xff] 0.0
        %385 = vst [vmem:[#allocation2 + $0xf0] sm:$0xff] 0.0
        %386 = vst [vmem:[#allocation2 + $0xf8] sm:$0xff] 0.0
        %387 = vst [vmem:[#allocation2 + $0x100] sm:$0xff] 0.0
        %388 = vst [vmem:[#allocation2 + $0x108] sm:$0xff] 0.0
        %389 = vst [vmem:[#allocation2 + $0x110] sm:$0xff] 0.0
        %390 = vst [vmem:[#allocation2 + $0x118] sm:$0xff] 0.0
        %391 = vst [vmem:[#allocation2 + $0x120] sm:$0xff] 0.0
        %392 = vst [vmem:[#allocation2 + $0x128] sm:$0xff] 0.0
        %393 = vst [vmem:[#allocation2 + $0x130] sm:$0xff] 0.0
        %394 = vst [vmem:[#allocation2 + $0x138] sm:$0xff] 0.0
        %395 = vst [vmem:[#allocation2 + $0x140] sm:$0xff] 0.0
        %396 = vst [vmem:[#allocation2 + $0x148] sm:$0xff] 0.0
        %397 = vst [vmem:[#allocation2 + $0x150] sm:$0xff] 0.0
        %398 = vst [vmem:[#allocation2 + $0x158] sm:$0xff] 0.0
        %399 = vst [vmem:[#allocation2 + $0x160] sm:$0xff] 0.0
        %400 = vst [vmem:[#allocation2 + $0x168] sm:$0xff] 0.0
        %401 = vst [vmem:[#allocation2 + $0x170] sm:$0xff] 0.0
        %402 = vst [vmem:[#allocation2 + $0x178] sm:$0xff] 0.0
        %403 = vst [vmem:[#allocation2 + $0x180] sm:$0xff] 0.0
        %404 = vst [vmem:[#allocation2 + $0x188] sm:$0xff] 0.0
        %405 = vst [vmem:[#allocation2 + $0x190] sm:$0xff] 0.0
        %406 = vst [vmem:[#allocation2 + $0x198] sm:$0xff] 0.0
        %407 = vst [vmem:[#allocation2 + $0x1a0] sm:$0xff] 0.0
        %408 = vst [vmem:[#allocation2 + $0x1a8] sm:$0xff] 0.0
        %409 = vst [vmem:[#allocation2 + $0x1b0] sm:$0xff] 0.0
        %410 = vst [vmem:[#allocation2 + $0x1b8] sm:$0xff] 0.0
        %411 = vst [vmem:[#allocation2 + $0x1c0] sm:$0xff] 0.0
        %412 = vst [vmem:[#allocation2 + $0x1c8] sm:$0xff] 0.0
        %413 = vst [vmem:[#allocation2 + $0x1d0] sm:$0xff] 0.0
        %414 = vst [vmem:[#allocation2 + $0x1d8] sm:$0xff] 0.0
        %415 = vst [vmem:[#allocation2 + $0x1e0] sm:$0xff] 0.0
        %416 = vst [vmem:[#allocation2 + $0x1e8] sm:$0xff] 0.0
        %417 = vst [vmem:[#allocation2 + $0x1f0] sm:$0xff] 0.0
        %418 = vst [vmem:[#allocation2 + $0x1f8] sm:$0xff] 0.0
      $region36: #{upconv_forward.4} parent=31 // pred_fallthru
        _
      %v419 = vld [vmem:[#allocation2] sm:$0xff]
      %v420 = vld [vmem:[#allocation2 + $0x8] sm:$0xff]
      %v421 = vld [vmem:[#allocation2 + $0x10] sm:$0xff]
      %v422 = vld [vmem:[#allocation2 + $0x18] sm:$0xff]
      %v423 = vld [vmem:[#allocation2 + $0x20] sm:$0xff]
      %v424 = vld [vmem:[#allocation2 + $0x28] sm:$0xff]
      %v425 = vld [vmem:[#allocation2 + $0x30] sm:$0xff]
      %v426 = vld [vmem:[#allocation2 + $0x38] sm:$0xff]
      %v427 = vld [vmem:[#allocation2 + $0x40] sm:$0xff]
      %v428 = vld [vmem:[#allocation2 + $0x48] sm:$0xff]
      %v429 = vld [vmem:[#allocation2 + $0x50] sm:$0xff]
      %v430 = vld [vmem:[#allocation2 + $0x58] sm:$0xff]
      %v431 = vld [vmem:[#allocation2 + $0x60] sm:$0xff]
      %v432 = vld [vmem:[#allocation2 + $0x68] sm:$0xff]
      %v433 = vld [vmem:[#allocation2 + $0x70] sm:$0xff]
      %v434 = vld [vmem:[#allocation2 + $0x78] sm:$0xff]
      %v435 = vld [vmem:[#allocation2 + $0x80] sm:$0xff]
      %v436 = vld [vmem:[#allocation2 + $0x88] sm:$0xff]
      %v437 = vld [vmem:[#allocation2 + $0x90] sm:$0xff]
      %v438 = vld [vmem:[#allocation2 + $0x98] sm:$0xff]
      %v439 = vld [vmem:[#allocation2 + $0xa0] sm:$0xff]
      %v440 = vld [vmem:[#allocation2 + $0xa8] sm:$0xff]
      %v441 = vld [vmem:[#allocation2 + $0xb0] sm:$0xff]
      %v442 = vld [vmem:[#allocation2 + $0xb8] sm:$0xff]
      %v443 = vld [vmem:[#allocation2 + $0xc0] sm:$0xff]
      %v444 = vld [vmem:[#allocation2 + $0xc8] sm:$0xff]
      %v445 = vld [vmem:[#allocation2 + $0xd0] sm:$0xff]
      %v446 = vld [vmem:[#allocation2 + $0xd8] sm:$0xff]
      %v447 = vld [vmem:[#allocation2 + $0xe0] sm:$0xff]
      %v448 = vld [vmem:[#allocation2 + $0xe8] sm:$0xff]
      %v449 = vld [vmem:[#allocation2 + $0xf0] sm:$0xff]
      %v450 = vld [vmem:[#allocation2 + $0xf8] sm:$0xff]
      %v451 = vld [vmem:[#allocation2 + $0x100] sm:$0xff]
      %v452 = vld [vmem:[#allocation2 + $0x108] sm:$0xff]
      %v453 = vld [vmem:[#allocation2 + $0x110] sm:$0xff]
      %v454 = vld [vmem:[#allocation2 + $0x118] sm:$0xff]
      %v455 = vld [vmem:[#allocation2 + $0x120] sm:$0xff]
      %v456 = vld [vmem:[#allocation2 + $0x128] sm:$0xff]
      %v457 = vld [vmem:[#allocation2 + $0x130] sm:$0xff]
      %v458 = vld [vmem:[#allocation2 + $0x138] sm:$0xff]
      %v459 = vld [vmem:[#allocation2 + $0x140] sm:$0xff]
      %v460 = vld [vmem:[#allocation2 + $0x148] sm:$0xff]
      %v461 = vld [vmem:[#allocation2 + $0x150] sm:$0xff]
      %v462 = vld [vmem:[#allocation2 + $0x158] sm:$0xff]
      %v463 = vld [vmem:[#allocation2 + $0x160] sm:$0xff]
      %v464 = vld [vmem:[#allocation2 + $0x168] sm:$0xff]
      %v465 = vld [vmem:[#allocation2 + $0x170] sm:$0xff]
      %v466 = vld [vmem:[#allocation2 + $0x178] sm:$0xff]
      %v467 = vld [vmem:[#allocation2 + $0x180] sm:$0xff]
      %v468 = vld [vmem:[#allocation2 + $0x188] sm:$0xff]
      %v469 = vld [vmem:[#allocation2 + $0x190] sm:$0xff]
      %v470 = vld [vmem:[#allocation2 + $0x198] sm:$0xff]
      %v471 = vld [vmem:[#allocation2 + $0x1a0] sm:$0xff]
      %v472 = vld [vmem:[#allocation2 + $0x1a8] sm:$0xff]
      %v473 = vld [vmem:[#allocation2 + $0x1b0] sm:$0xff]
      %v474 = vld [vmem:[#allocation2 + $0x1b8] sm:$0xff]
      %v475 = vld [vmem:[#allocation2 + $0x1c0] sm:$0xff]
      %v476 = vld [vmem:[#allocation2 + $0x1c8] sm:$0xff]
      %v477 = vld [vmem:[#allocation2 + $0x1d0] sm:$0xff]
      %v478 = vld [vmem:[#allocation2 + $0x1d8] sm:$0xff]
      %v479 = vld [vmem:[#allocation2 + $0x1e0] sm:$0xff]
      %v480 = vld [vmem:[#allocation2 + $0x1e8] sm:$0xff]
      %v481 = vld [vmem:[#allocation2 + $0x1f0] sm:$0xff]
      %v482 = vld [vmem:[#allocation2 + $0x1f8] sm:$0xff]
      %v483 = vld [vmem:[%s313] sm:$0xf]
      %v484 = vld [vmem:[%s313 + $0x4] sm:$0xf]
      %v485 = vld [vmem:[%s313 + $0x8] sm:$0xf]
      %v486 = vld [vmem:[%s313 + $0xc] sm:$0xf]
      %v487 = vld [vmem:[%s313 + $0x10] sm:$0xf]
      %v488 = vld [vmem:[%s313 + $0x14] sm:$0xf]
      %v489 = vld [vmem:[%s313 + $0x18] sm:$0xf]
      %v490 = vld [vmem:[%s313 + $0x1c] sm:$0xf]
      %v491 = vld [vmem:[%s313 + $0x20] sm:$0xf]
      %v492 = vld [vmem:[%s313 + $0x24] sm:$0xf]
      %v493 = vld [vmem:[%s313 + $0x28] sm:$0xf]
      %v494 = vld [vmem:[%s313 + $0x2c] sm:$0xf]
      %v495 = vld [vmem:[%s313 + $0x30] sm:$0xf]
      %v496 = vld [vmem:[%s313 + $0x34] sm:$0xf]
      %v497 = vld [vmem:[%s313 + $0x38] sm:$0xf]
      %v498 = vld [vmem:[%s313 + $0x3c] sm:$0xf]
      %v499 = vld [vmem:[%s313 + $0x40] sm:$0xf]
      %v500 = vld [vmem:[%s313 + $0x44] sm:$0xf]
      %v501 = vld [vmem:[%s313 + $0x48] sm:$0xf]
      %v502 = vld [vmem:[%s313 + $0x4c] sm:$0xf]
      %v503 = vld [vmem:[%s313 + $0x50] sm:$0xf]
      %v504 = vld [vmem:[%s313 + $0x54] sm:$0xf]
      %v505 = vld [vmem:[%s313 + $0x58] sm:$0xf]
      %v506 = vld [vmem:[%s313 + $0x5c] sm:$0xf]
      %v507 = vld [vmem:[%s313 + $0x60] sm:$0xf]
      %v508 = vld [vmem:[%s313 + $0x64] sm:$0xf]
      %v509 = vld [vmem:[%s313 + $0x68] sm:$0xf]
      %v510 = vld [vmem:[%s313 + $0x6c] sm:$0xf]
      %v511 = vld [vmem:[%s313 + $0x70] sm:$0xf]
      %v512 = vld [vmem:[%s313 + $0x74] sm:$0xf]
      %v513 = vld [vmem:[%s313 + $0x78] sm:$0xf]
      %v514 = vld [vmem:[%s313 + $0x7c] sm:$0xf]
      %v515 = vld [vmem:[%s313 + $0x80] sm:$0xf]
      %v516 = vld [vmem:[%s313 + $0x84] sm:$0xf]
      %v517 = vld [vmem:[%s313 + $0x88] sm:$0xf]
      %v518 = vld [vmem:[%s313 + $0x8c] sm:$0xf]
      %v519 = vld [vmem:[%s313 + $0x90] sm:$0xf]
      %v520 = vld [vmem:[%s313 + $0x94] sm:$0xf]
      %v521 = vld [vmem:[%s313 + $0x98] sm:$0xf]
      %v522 = vld [vmem:[%s313 + $0x9c] sm:$0xf]
      %v523 = vld [vmem:[%s313 + $0xa0] sm:$0xf]
      %v524 = vld [vmem:[%s313 + $0xa4] sm:$0xf]
      %v525 = vld [vmem:[%s313 + $0xa8] sm:$0xf]
      %v526 = vld [vmem:[%s313 + $0xac] sm:$0xf]
      %v527 = vld [vmem:[%s313 + $0xb0] sm:$0xf]
      %v528 = vld [vmem:[%s313 + $0xb4] sm:$0xf]
      %v529 = vld [vmem:[%s313 + $0xb8] sm:$0xf]
      %v530 = vld [vmem:[%s313 + $0xbc] sm:$0xf]
      %v531 = vld [vmem:[%s313 + $0xc0] sm:$0xf]
      %v532 = vld [vmem:[%s313 + $0xc4] sm:$0xf]
      %v533 = vld [vmem:[%s313 + $0xc8] sm:$0xf]
      %v534 = vld [vmem:[%s313 + $0xcc] sm:$0xf]
      %v535 = vld [vmem:[%s313 + $0xd0] sm:$0xf]
      %v536 = vld [vmem:[%s313 + $0xd4] sm:$0xf]
      %v537 = vld [vmem:[%s313 + $0xd8] sm:$0xf]
      %v538 = vld [vmem:[%s313 + $0xdc] sm:$0xf]
      %v539 = vld [vmem:[%s313 + $0xe0] sm:$0xf]
      %v540 = vld [vmem:[%s313 + $0xe4] sm:$0xf]
      %v541 = vld [vmem:[%s313 + $0xe8] sm:$0xf]
      %v542 = vld [vmem:[%s313 + $0xec] sm:$0xf]
      %v543 = vld [vmem:[%s313 + $0xf0] sm:$0xf]
      %v544 = vld [vmem:[%s313 + $0xf4] sm:$0xf]
      %v545 = vld [vmem:[%s313 + $0xf8] sm:$0xf]
      %v546 = vld [vmem:[%s313 + $0xfc] sm:$0xf]
      %v547 = vld [vmem:[%s322] sm:$0xf]
      %v548 = vld [vmem:[%s322 + $0x4] sm:$0xf]
      %v549 = vld [vmem:[%s322 + $0x8] sm:$0xf]
      %v550 = vld [vmem:[%s322 + $0xc] sm:$0xf]
      %v551 = vld [vmem:[%s322 + $0x10] sm:$0x3]
      %v616 = vunpack.c.l.b16 %v483
      %v617 = vunpack.c.l.b16 %v484
      %v618 = vunpack.c.l.b16 %v485
      %v619 = vunpack.c.l.b16 %v486
      %v620 = vunpack.c.l.b16 %v487
      %v621 = vunpack.c.l.b16 %v488
      %v622 = vunpack.c.l.b16 %v489
      %v623 = vunpack.c.l.b16 %v490
      %v624 = vunpack.c.l.b16 %v491
      %v625 = vunpack.c.l.b16 %v492
      %v626 = vunpack.c.l.b16 %v493
      %v627 = vunpack.c.l.b16 %v494
      %v628 = vunpack.c.l.b16 %v495
      %v629 = vunpack.c.l.b16 %v496
      %v630 = vunpack.c.l.b16 %v497
      %v631 = vunpack.c.l.b16 %v498
      %v632 = vunpack.c.l.b16 %v499
      %v633 = vunpack.c.l.b16 %v500
      %v634 = vunpack.c.l.b16 %v501
      %v635 = vunpack.c.l.b16 %v502
      %v636 = vunpack.c.l.b16 %v503
      %v637 = vunpack.c.l.b16 %v504
      %v638 = vunpack.c.l.b16 %v505
      %v639 = vunpack.c.l.b16 %v506
      %v640 = vunpack.c.l.b16 %v507
      %v641 = vunpack.c.l.b16 %v508
      %v642 = vunpack.c.l.b16 %v509
      %v643 = vunpack.c.l.b16 %v510
      %v644 = vunpack.c.l.b16 %v511
      %v645 = vunpack.c.l.b16 %v512
      %v646 = vunpack.c.l.b16 %v513
      %v647 = vunpack.c.l.b16 %v514
      %v648 = vunpack.c.l.b16 %v515
      %v649 = vunpack.c.l.b16 %v516
      %v650 = vunpack.c.l.b16 %v517
      %v651 = vunpack.c.l.b16 %v518
      %v652 = vunpack.c.l.b16 %v519
      %v653 = vunpack.c.l.b16 %v520
      %v654 = vunpack.c.l.b16 %v521
      %v655 = vunpack.c.l.b16 %v522
      %v656 = vunpack.c.l.b16 %v523
      %v657 = vunpack.c.l.b16 %v524
      %v658 = vunpack.c.l.b16 %v525
      %v659 = vunpack.c.l.b16 %v526
      %v660 = vunpack.c.l.b16 %v527
      %v661 = vunpack.c.l.b16 %v528
      %v662 = vunpack.c.l.b16 %v529
      %v663 = vunpack.c.l.b16 %v530
      %v664 = vunpack.c.l.b16 %v531
      %v665 = vunpack.c.l.b16 %v532
      %v666 = vunpack.c.l.b16 %v533
      %v667 = vunpack.c.l.b16 %v534
      %v668 = vunpack.c.l.b16 %v535
      %v669 = vunpack.c.l.b16 %v536
      %v670 = vunpack.c.l.b16 %v537
      %v671 = vunpack.c.l.b16 %v538
      %v672 = vunpack.c.l.b16 %v539
      %v673 = vunpack.c.l.b16 %v540
      %v674 = vunpack.c.l.b16 %v541
      %v675 = vunpack.c.l.b16 %v542
      %v676 = vunpack.c.l.b16 %v543
      %v677 = vunpack.c.l.b16 %v544
      %v678 = vunpack.c.l.b16 %v545
      %v679 = vunpack.c.l.b16 %v546
      %v680 = vpack.c.b16 %v617, %v616
      %v681 = vpack.c.b16 %v619, %v618
      %v682 = vpack.c.b16 %v621, %v620
      %v683 = vpack.c.b16 %v623, %v622
      %v684 = vpack.c.b16 %v625, %v624
      %v685 = vpack.c.b16 %v627, %v626
      %v686 = vpack.c.b16 %v629, %v628
      %v687 = vpack.c.b16 %v631, %v630
      %v688 = vpack.c.b16 %v633, %v632
      %v689 = vpack.c.b16 %v635, %v634
      %v690 = vpack.c.b16 %v637, %v636
      %v691 = vpack.c.b16 %v639, %v638
      %v692 = vpack.c.b16 %v641, %v640
      %v693 = vpack.c.b16 %v643, %v642
      %v694 = vpack.c.b16 %v645, %v644
      %v695 = vpack.c.b16 %v647, %v646
      %v696 = vpack.c.b16 %v649, %v648
      %v697 = vpack.c.b16 %v651, %v650
      %v698 = vpack.c.b16 %v653, %v652
      %v699 = vpack.c.b16 %v655, %v654
      %v700 = vpack.c.b16 %v657, %v656
      %v701 = vpack.c.b16 %v659, %v658
      %v702 = vpack.c.b16 %v661, %v660
      %v703 = vpack.c.b16 %v663, %v662
      %v704 = vpack.c.b16 %v665, %v664
      %v705 = vpack.c.b16 %v667, %v666
      %v706 = vpack.c.b16 %v669, %v668
      %v707 = vpack.c.b16 %v671, %v670
      %v708 = vpack.c.b16 %v673, %v672
      %v709 = vpack.c.b16 %v675, %v674
      %v710 = vpack.c.b16 %v677, %v676
      %v711 = vpack.c.b16 %v679, %v678
      %v717 = vunpack.c.l.b16 %v547
      %v718 = vunpack.c.l.b16 %v548
      %v719 = vunpack.c.l.b16 %v549
      %v720 = vunpack.c.l.b16 %v550
      %v721 = vunpack.c.l.b16 %v551
      %v722 = vpack.c.b16 %v718, %v717
      %v723 = vpack.c.b16 %v720, %v719
      %v724 = vpack.c.b16 %v721, %v721
      %vm727 = vcmask 293888
      %v729 = vsel %vm727, %v680, 0
      %v732 = vsel %vm727, %v681, 0
      %v735 = vsel %vm727, %v682, 0
      %v738 = vsel %vm727, %v683, 0
      %v741 = vsel %vm727, %v684, 0
      %v744 = vsel %vm727, %v685, 0
      %v747 = vsel %vm727, %v686, 0
      %v750 = vsel %vm727, %v687, 0
      %v753 = vsel %vm727, %v688, 0
      %v756 = vsel %vm727, %v689, 0
      %v759 = vsel %vm727, %v690, 0
      %v762 = vsel %vm727, %v691, 0
      %v765 = vsel %vm727, %v692, 0
      %v768 = vsel %vm727, %v693, 0
      %v771 = vsel %vm727, %v694, 0
      %v774 = vsel %vm727, %v695, 0
      %v777 = vsel %vm727, %v696, 0
      %v780 = vsel %vm727, %v697, 0
      %v783 = vsel %vm727, %v698, 0
      %v786 = vsel %vm727, %v699, 0
      %v789 = vsel %vm727, %v700, 0
      %v792 = vsel %vm727, %v701, 0
      %v795 = vsel %vm727, %v702, 0
      %v798 = vsel %vm727, %v703, 0
      %v801 = vsel %vm727, %v704, 0
      %v804 = vsel %vm727, %v705, 0
      %v807 = vsel %vm727, %v706, 0
      %v810 = vsel %vm727, %v707, 0
      %v813 = vsel %vm727, %v708, 0
      %v816 = vsel %vm727, %v709, 0
      %v819 = vsel %vm727, %v710, 0
      %v822 = vsel %vm727, %v711, 0
      %vm824 = vcmask 1041408
      %v826 = vsel %vm824, %v724, 0
      %828 = vmatprep.subr.bf16.mxu0 0
      %829 = vmatpush1.bf16.msra.mxu0 %v722
      %830 = vmatprep.subr.bf16.mxu0 0
      %831 = vmatpush1.bf16.msra.mxu0 %v723
      %832 = vmatprep.subr.bf16.mxu0 0
      %833 = vmatpush1.bf16.msra.mxu0 %v826
      %834 = vmatprep.subr.bf16.mxu0 0
      %835 = vmatpush1.bf16.msra.mxu0 0
      %836 = vmatprep.subr.bf16.mxu0 0
      %837 = vmatpush1.bf16.msra.mxu0 0
      %838 = vmatprep.subr.bf16.mxu0 0
      %839 = vmatpush1.bf16.msra.mxu0 0
      %840 = vmatprep.subr.bf16.mxu0 0
      %841 = vmatpush1.bf16.msra.mxu0 0
      %842 = vmatprep.subr.bf16.mxu0 0
      %843 = vmatpush1.bf16.msra.mxu0 0
      %844 = vmatprep.subr.bf16.mxu0 0
      %845 = vmatpush1.bf16.msra.mxu0 0
      %846 = vmatprep.subr.bf16.mxu0 0
      %847 = vmatpush1.bf16.msra.mxu0 0
      %848 = vmatprep.subr.bf16.mxu0 0
      %849 = vmatpush1.bf16.msra.mxu0 0
      %850 = vmatprep.subr.bf16.mxu0 0
      %851 = vmatpush1.bf16.msra.mxu0 0
      %852 = vmatprep.subr.bf16.mxu0 0
      %853 = vmatpush1.bf16.msra.mxu0 0
      %854 = vmatprep.subr.bf16.mxu0 0
      %855 = vmatpush1.bf16.msra.mxu0 0
      %856 = vmatprep.subr.bf16.mxu0 0
      %857 = vmatpush1.bf16.msra.mxu0 0
      %858 = vmatprep.subr.bf16.mxu0 0
      %859 = vmatpush1.bf16.msra.mxu0 0
      %860 = vmatprep.mubr.bf16.mxu0 0
      %861 = vmatmul.mubr.bf16.gmra.mrb[0].mxu0 %v729
      %v862 = vpop.f32.mrb[0].mxu0
      %v863 = vadd.f32 0.0, %v862
      %v864 = vpop.f32.mrb[0].mxu0
      %v865 = vpop.f32.mrb[0].mxu0
      %v866 = vadd.f32 0.0, %v865
      %v867 = vpop.f32.mrb[0].mxu0
      %868 = vmatprep.mubr.bf16.mxu0 0
      %869 = vmatmul.mubr.bf16.gmra.mrb[0].mxu0 %v732
      %v870 = vpop.f32.mrb[0].mxu0
      %v871 = vadd.f32 0.0, %v870
      %v872 = vpop.f32.mrb[0].mxu0
      %v873 = vpop.f32.mrb[0].mxu0
      %v874 = vadd.f32 0.0, %v873
      %v875 = vpop.f32.mrb[0].mxu0
      %876 = vmatprep.mubr.bf16.mxu0 0
      %877 = vmatmul.mubr.bf16.gmra.mrb[0].mxu0 %v735
      %v878 = vpop.f32.mrb[0].mxu0
      %v879 = vadd.f32 0.0, %v878
      %v880 = vpop.f32.mrb[0].mxu0
      %v881 = vpop.f32.mrb[0].mxu0
      %v882 = vadd.f32 0.0, %v881
      %v883 = vpop.f32.mrb[0].mxu0
      %884 = vmatprep.mubr.bf16.mxu0 0
      %885 = vmatmul.mubr.bf16.gmra.mrb[0].mxu0 %v738
      %v886 = vpop.f32.mrb[0].mxu0
      %v887 = vadd.f32 0.0, %v886
      %v888 = vpop.f32.mrb[0].mxu0
      %v889 = vpop.f32.mrb[0].mxu0
      %v890 = vadd.f32 0.0, %v889
      %v891 = vpop.f32.mrb[0].mxu0
      %892 = vmatprep.mubr.bf16.mxu0 0
      %893 = vmatmul.mubr.bf16.gmra.mrb[0].mxu0 %v741
      %v894 = vpop.f32.mrb[0].mxu0
      %v895 = vadd.f32 0.0, %v894
      %v896 = vpop.f32.mrb[0].mxu0
      %v897 = vpop.f32.mrb[0].mxu0
      %v898 = vadd.f32 0.0, %v897
      %v899 = vpop.f32.mrb[0].mxu0
      %900 = vmatprep.mubr.bf16.mxu0 0
      %901 = vmatmul.mubr.bf16.gmra.mrb[0].mxu0 %v744
      %v902 = vpop.f32.mrb[0].mxu0
      %v903 = vadd.f32 0.0, %v902
      %v904 = vpop.f32.mrb[0].mxu0
      %v905 = vpop.f32.mrb[0].mxu0
      %v906 = vadd.f32 0.0, %v905
      %v907 = vpop.f32.mrb[0].mxu0
      %908 = vmatprep.mubr.bf16.mxu0 0
      %909 = vmatmul.mubr.bf16.gmra.mrb[0].mxu0 %v747
      %v910 = vpop.f32.mrb[0].mxu0
      %v911 = vadd.f32 0.0, %v910
      %v912 = vpop.f32.mrb[0].mxu0
      %v913 = vpop.f32.mrb[0].mxu0
      %v914 = vadd.f32 0.0, %v913
      %v915 = vpop.f32.mrb[0].mxu0
      %916 = vmatprep.mubr.bf16.mxu0 0
      %917 = vmatmul.mubr.bf16.gmra.mrb[0].mxu0 %v750
      %v918 = vpop.f32.mrb[0].mxu0
      %v919 = vadd.f32 0.0, %v918
      %v920 = vpop.f32.mrb[0].mxu0
      %v921 = vpop.f32.mrb[0].mxu0
      %v922 = vadd.f32 0.0, %v921
      %v923 = vpop.f32.mrb[0].mxu0
      %924 = vmatprep.mubr.bf16.mxu0 0
      %925 = vmatmul.mubr.bf16.gmra.mrb[0].mxu0 %v753
      %v926 = vpop.f32.mrb[0].mxu0
      %v927 = vadd.f32 0.0, %v926
      %v928 = vpop.f32.mrb[0].mxu0
      %v929 = vpop.f32.mrb[0].mxu0
      %v930 = vadd.f32 0.0, %v929
      %v931 = vpop.f32.mrb[0].mxu0
      %932 = vmatprep.mubr.bf16.mxu0 0
      %933 = vmatmul.mubr.bf16.gmra.mrb[0].mxu0 %v756
      %v934 = vpop.f32.mrb[0].mxu0
      %v935 = vadd.f32 0.0, %v934
      %v936 = vpop.f32.mrb[0].mxu0
      %v937 = vpop.f32.mrb[0].mxu0
      %v938 = vadd.f32 0.0, %v937
      %v939 = vpop.f32.mrb[0].mxu0
      %940 = vmatprep.mubr.bf16.mxu0 0
      %941 = vmatmul.mubr.bf16.gmra.mrb[0].mxu0 %v759
      %v942 = vpop.f32.mrb[0].mxu0
      %v943 = vadd.f32 0.0, %v942
      %v944 = vpop.f32.mrb[0].mxu0
      %v945 = vpop.f32.mrb[0].mxu0
      %v946 = vadd.f32 0.0, %v945
      %v947 = vpop.f32.mrb[0].mxu0
      %948 = vmatprep.mubr.bf16.mxu0 0
      %949 = vmatmul.mubr.bf16.gmra.mrb[0].mxu0 %v762
      %v950 = vpop.f32.mrb[0].mxu0
      %v951 = vadd.f32 0.0, %v950
      %v952 = vpop.f32.mrb[0].mxu0
      %v953 = vpop.f32.mrb[0].mxu0
      %v954 = vadd.f32 0.0, %v953
      %v955 = vpop.f32.mrb[0].mxu0
      %956 = vmatprep.mubr.bf16.mxu0 0
      %957 = vmatmul.mubr.bf16.gmra.mrb[0].mxu0 %v765
      %v958 = vpop.f32.mrb[0].mxu0
      %v959 = vadd.f32 0.0, %v958
      %v960 = vpop.f32.mrb[0].mxu0
      %v961 = vpop.f32.mrb[0].mxu0
      %v962 = vadd.f32 0.0, %v961
      %v963 = vpop.f32.mrb[0].mxu0
      %964 = vmatprep.mubr.bf16.mxu0 0
      %965 = vmatmul.mubr.bf16.gmra.mrb[0].mxu0 %v768
      %v966 = vpop.f32.mrb[0].mxu0
      %v967 = vadd.f32 0.0, %v966
      %v968 = vpop.f32.mrb[0].mxu0
      %v969 = vpop.f32.mrb[0].mxu0
      %v970 = vadd.f32 0.0, %v969
      %v971 = vpop.f32.mrb[0].mxu0
      %972 = vmatprep.mubr.bf16.mxu0 0
      %973 = vmatmul.mubr.bf16.gmra.mrb[0].mxu0 %v771
      %v974 = vpop.f32.mrb[0].mxu0
      %v975 = vadd.f32 0.0, %v974
      %v976 = vpop.f32.mrb[0].mxu0
      %v977 = vpop.f32.mrb[0].mxu0
      %v978 = vadd.f32 0.0, %v977
      %v979 = vpop.f32.mrb[0].mxu0
      %980 = vmatprep.mubr.bf16.mxu0 0
      %981 = vmatmul.mubr.bf16.gmra.mrb[0].mxu0 %v774
      %v982 = vpop.f32.mrb[0].mxu0
      %v983 = vadd.f32 0.0, %v982
      %v984 = vpop.f32.mrb[0].mxu0
      %v985 = vpop.f32.mrb[0].mxu0
      %v986 = vadd.f32 0.0, %v985
      %v987 = vpop.f32.mrb[0].mxu0
      %988 = vmatprep.mubr.bf16.mxu0 0
      %989 = vmatmul.mubr.bf16.gmra.mrb[0].mxu0 %v777
      %v990 = vpop.f32.mrb[0].mxu0
      %v991 = vadd.f32 0.0, %v990
      %v992 = vpop.f32.mrb[0].mxu0
      %v993 = vpop.f32.mrb[0].mxu0
      %v994 = vadd.f32 0.0, %v993
      %v995 = vpop.f32.mrb[0].mxu0
      %996 = vmatprep.mubr.bf16.mxu0 0
      %997 = vmatmul.mubr.bf16.gmra.mrb[0].mxu0 %v780
      %v998 = vpop.f32.mrb[0].mxu0
      %v999 = vadd.f32 0.0, %v998
      %v1000 = vpop.f32.mrb[0].mxu0
      %v1001 = vpop.f32.mrb[0].mxu0
      %v1002 = vadd.f32 0.0, %v1001
      %v1003 = vpop.f32.mrb[0].mxu0
      %1004 = vmatprep.mubr.bf16.mxu0 0
      %1005 = vmatmul.mubr.bf16.gmra.mrb[0].mxu0 %v783
      %v1006 = vpop.f32.mrb[0].mxu0
      %v1007 = vadd.f32 0.0, %v1006
      %v1008 = vpop.f32.mrb[0].mxu0
      %v1009 = vpop.f32.mrb[0].mxu0
      %v1010 = vadd.f32 0.0, %v1009
      %v1011 = vpop.f32.mrb[0].mxu0
      %1012 = vmatprep.mubr.bf16.mxu0 0
      %1013 = vmatmul.mubr.bf16.gmra.mrb[0].mxu0 %v786
      %v1014 = vpop.f32.mrb[0].mxu0
      %v1015 = vadd.f32 0.0, %v1014
      %v1016 = vpop.f32.mrb[0].mxu0
      %v1017 = vpop.f32.mrb[0].mxu0
      %v1018 = vadd.f32 0.0, %v1017
      %v1019 = vpop.f32.mrb[0].mxu0
      %1020 = vmatprep.mubr.bf16.mxu0 0
      %1021 = vmatmul.mubr.bf16.gmra.mrb[0].mxu0 %v789
      %v1022 = vpop.f32.mrb[0].mxu0
      %v1023 = vadd.f32 0.0, %v1022
      %v1024 = vpop.f32.mrb[0].mxu0
      %v1025 = vpop.f32.mrb[0].mxu0
      %v1026 = vadd.f32 0.0, %v1025
      %v1027 = vpop.f32.mrb[0].mxu0
      %1028 = vmatprep.mubr.bf16.mxu0 0
      %1029 = vmatmul.mubr.bf16.gmra.mrb[0].mxu0 %v792
      %v1030 = vpop.f32.mrb[0].mxu0
      %v1031 = vadd.f32 0.0, %v1030
      %v1032 = vpop.f32.mrb[0].mxu0
      %v1033 = vpop.f32.mrb[0].mxu0
      %v1034 = vadd.f32 0.0, %v1033
      %v1035 = vpop.f32.mrb[0].mxu0
      %1036 = vmatprep.mubr.bf16.mxu0 0
      %1037 = vmatmul.mubr.bf16.gmra.mrb[0].mxu0 %v795
      %v1038 = vpop.f32.mrb[0].mxu0
      %v1039 = vadd.f32 0.0, %v1038
      %v1040 = vpop.f32.mrb[0].mxu0
      %v1041 = vpop.f32.mrb[0].mxu0
      %v1042 = vadd.f32 0.0, %v1041
      %v1043 = vpop.f32.mrb[0].mxu0
      %1044 = vmatprep.mubr.bf16.mxu0 0
      %1045 = vmatmul.mubr.bf16.gmra.mrb[0].mxu0 %v798
      %v1046 = vpop.f32.mrb[0].mxu0
      %v1047 = vadd.f32 0.0, %v1046
      %v1048 = vpop.f32.mrb[0].mxu0
      %v1049 = vpop.f32.mrb[0].mxu0
      %v1050 = vadd.f32 0.0, %v1049
      %v1051 = vpop.f32.mrb[0].mxu0
      %1052 = vmatprep.mubr.bf16.mxu0 0
      %1053 = vmatmul.mubr.bf16.gmra.mrb[0].mxu0 %v801
      %v1054 = vpop.f32.mrb[0].mxu0
      %v1055 = vadd.f32 0.0, %v1054
      %v1056 = vpop.f32.mrb[0].mxu0
      %v1057 = vpop.f32.mrb[0].mxu0
      %v1058 = vadd.f32 0.0, %v1057
      %v1059 = vpop.f32.mrb[0].mxu0
      %1060 = vmatprep.mubr.bf16.mxu0 0
      %1061 = vmatmul.mubr.bf16.gmra.mrb[0].mxu0 %v804
      %v1062 = vpop.f32.mrb[0].mxu0
      %v1063 = vadd.f32 0.0, %v1062
      %v1064 = vpop.f32.mrb[0].mxu0
      %v1065 = vpop.f32.mrb[0].mxu0
      %v1066 = vadd.f32 0.0, %v1065
      %v1067 = vpop.f32.mrb[0].mxu0
      %1068 = vmatprep.mubr.bf16.mxu0 0
      %1069 = vmatmul.mubr.bf16.gmra.mrb[0].mxu0 %v807
      %v1070 = vpop.f32.mrb[0].mxu0
      %v1071 = vadd.f32 0.0, %v1070
      %v1072 = vpop.f32.mrb[0].mxu0
      %v1073 = vpop.f32.mrb[0].mxu0
      %v1074 = vadd.f32 0.0, %v1073
      %v1075 = vpop.f32.mrb[0].mxu0
      %1076 = vmatprep.mubr.bf16.mxu0 0
      %1077 = vmatmul.mubr.bf16.gmra.mrb[0].mxu0 %v810
      %v1078 = vpop.f32.mrb[0].mxu0
      %v1079 = vadd.f32 0.0, %v1078
      %v1080 = vpop.f32.mrb[0].mxu0
      %v1081 = vpop.f32.mrb[0].mxu0
      %v1082 = vadd.f32 0.0, %v1081
      %v1083 = vpop.f32.mrb[0].mxu0
      %1084 = vmatprep.mubr.bf16.mxu0 0
      %1085 = vmatmul.mubr.bf16.gmra.mrb[0].mxu0 %v813
      %v1086 = vpop.f32.mrb[0].mxu0
      %v1087 = vadd.f32 0.0, %v1086
      %v1088 = vpop.f32.mrb[0].mxu0
      %v1089 = vpop.f32.mrb[0].mxu0
      %v1090 = vadd.f32 0.0, %v1089
      %v1091 = vpop.f32.mrb[0].mxu0
      %1092 = vmatprep.mubr.bf16.mxu0 0
      %1093 = vmatmul.mubr.bf16.gmra.mrb[0].mxu0 %v816
      %v1094 = vpop.f32.mrb[0].mxu0
      %v1095 = vadd.f32 0.0, %v1094
      %v1096 = vpop.f32.mrb[0].mxu0
      %v1097 = vpop.f32.mrb[0].mxu0
      %v1098 = vadd.f32 0.0, %v1097
      %v1099 = vpop.f32.mrb[0].mxu0
      %1100 = vmatprep.mubr.bf16.mxu0 0
      %1101 = vmatmul.mubr.bf16.gmra.mrb[0].mxu0 %v819
      %v1102 = vpop.f32.mrb[0].mxu0
      %v1103 = vadd.f32 0.0, %v1102
      %v1104 = vpop.f32.mrb[0].mxu0
      %v1105 = vpop.f32.mrb[0].mxu0
      %v1106 = vadd.f32 0.0, %v1105
      %v1107 = vpop.f32.mrb[0].mxu0
      %1108 = vmatprep.mubr.bf16.mxu0 0
      %1109 = vmatmul.mubr.bf16.gmra.mrb[0].mxu0 %v822
      %v1110 = vpop.f32.mrb[0].mxu0
      %v1111 = vadd.f32 0.0, %v1110
      %v1112 = vpop.f32.mrb[0].mxu0
      %v1113 = vpop.f32.mrb[0].mxu0
      %v1114 = vadd.f32 0.0, %v1113
      %v1115 = vpop.f32.mrb[0].mxu0
      %1116 = vdwg.mxu0
      %v1117 = vadd.f32 %v419, %v863
      %v1118 = vadd.f32 %v420, %v866
      %v1119 = vadd.f32 %v421, %v871
      %v1120 = vadd.f32 %v422, %v874
      %v1121 = vadd.f32 %v423, %v879
      %v1122 = vadd.f32 %v424, %v882
      %v1123 = vadd.f32 %v425, %v887
      %v1124 = vadd.f32 %v426, %v890
      %v1125 = vadd.f32 %v427, %v895
      %v1126 = vadd.f32 %v428, %v898
      %v1127 = vadd.f32 %v429, %v903
      %v1128 = vadd.f32 %v430, %v906
      %v1129 = vadd.f32 %v431, %v911
      %v1130 = vadd.f32 %v432, %v914
      %v1131 = vadd.f32 %v433, %v919
      %v1132 = vadd.f32 %v434, %v922
      %v1133 = vadd.f32 %v435, %v927
      %v1134 = vadd.f32 %v436, %v930
      %v1135 = vadd.f32 %v437, %v935
      %v1136 = vadd.f32 %v438, %v938
      %v1137 = vadd.f32 %v439, %v943
      %v1138 = vadd.f32 %v440, %v946
      %v1139 = vadd.f32 %v441, %v951
      %v1140 = vadd.f32 %v442, %v954
      %v1141 = vadd.f32 %v443, %v959
      %v1142 = vadd.f32 %v444, %v962
      %v1143 = vadd.f32 %v445, %v967
      %v1144 = vadd.f32 %v446, %v970
      %v1145 = vadd.f32 %v447, %v975
      %v1146 = vadd.f32 %v448, %v978
      %v1147 = vadd.f32 %v449, %v983
      %v1148 = vadd.f32 %v450, %v986
      %v1149 = vadd.f32 %v451, %v991
      %v1150 = vadd.f32 %v452, %v994
      %v1151 = vadd.f32 %v453, %v999
      %v1152 = vadd.f32 %v454, %v1002
      %v1153 = vadd.f32 %v455, %v1007
      %v1154 = vadd.f32 %v456, %v1010
      %v1155 = vadd.f32 %v457, %v1015
      %v1156 = vadd.f32 %v458, %v1018
      %v1157 = vadd.f32 %v459, %v1023
      %v1158 = vadd.f32 %v460, %v1026
      %v1159 = vadd.f32 %v461, %v1031
      %v1160 = vadd.f32 %v462, %v1034
      %v1161 = vadd.f32 %v463, %v1039
      %v1162 = vadd.f32 %v464, %v1042
      %v1163 = vadd.f32 %v465, %v1047
      %v1164 = vadd.f32 %v466, %v1050
      %v1165 = vadd.f32 %v467, %v1055
      %v1166 = vadd.f32 %v468, %v1058
      %v1167 = vadd.f32 %v469, %v1063
      %v1168 = vadd.f32 %v470, %v1066
      %v1169 = vadd.f32 %v471, %v1071
      %v1170 = vadd.f32 %v472, %v1074
      %v1171 = vadd.f32 %v473, %v1079
      %v1172 = vadd.f32 %v474, %v1082
      %v1173 = vadd.f32 %v475, %v1087
      %v1174 = vadd.f32 %v476, %v1090
      %v1175 = vadd.f32 %v477, %v1095
      %v1176 = vadd.f32 %v478, %v1098
      %v1177 = vadd.f32 %v479, %v1103
      %v1178 = vadd.f32 %v480, %v1106
      %v1179 = vadd.f32 %v481, %v1111
      %v1180 = vadd.f32 %v482, %v1114
      %1181 = vst [vmem:[#allocation2] sm:$0xff] %v1117
      %1182 = vst [vmem:[#allocation2 + $0x8] sm:$0xff] %v1118
      %1183 = vst [vmem:[#allocation2 + $0x10] sm:$0xff] %v1119
      %1184 = vst [vmem:[#allocation2 + $0x18] sm:$0xff] %v1120
      %1185 = vst [vmem:[#allocation2 + $0x20] sm:$0xff] %v1121
      %1186 = vst [vmem:[#allocation2 + $0x28] sm:$0xff] %v1122
      %1187 = vst [vmem:[#allocation2 + $0x30] sm:$0xff] %v1123
      %1188 = vst [vmem:[#allocation2 + $0x38] sm:$0xff] %v1124
      %1189 = vst [vmem:[#allocation2 + $0x40] sm:$0xff] %v1125
      %1190 = vst [vmem:[#allocation2 + $0x48] sm:$0xff] %v1126
      %1191 = vst [vmem:[#allocation2 + $0x50] sm:$0xff] %v1127
      %1192 = vst [vmem:[#allocation2 + $0x58] sm:$0xff] %v1128
      %1193 = vst [vmem:[#allocation2 + $0x60] sm:$0xff] %v1129
      %1194 = vst [vmem:[#allocation2 + $0x68] sm:$0xff] %v1130
      %1195 = vst [vmem:[#allocation2 + $0x70] sm:$0xff] %v1131
      %1196 = vst [vmem:[#allocation2 + $0x78] sm:$0xff] %v1132
      %1197 = vst [vmem:[#allocation2 + $0x80] sm:$0xff] %v1133
      %1198 = vst [vmem:[#allocation2 + $0x88] sm:$0xff] %v1134
      %1199 = vst [vmem:[#allocation2 + $0x90] sm:$0xff] %v1135
      %1200 = vst [vmem:[#allocation2 + $0x98] sm:$0xff] %v1136
      %1201 = vst [vmem:[#allocation2 + $0xa0] sm:$0xff] %v1137
      %1202 = vst [vmem:[#allocation2 + $0xa8] sm:$0xff] %v1138
      %1203 = vst [vmem:[#allocation2 + $0xb0] sm:$0xff] %v1139
      %1204 = vst [vmem:[#allocation2 + $0xb8] sm:$0xff] %v1140
      %1205 = vst [vmem:[#allocation2 + $0xc0] sm:$0xff] %v1141
      %1206 = vst [vmem:[#allocation2 + $0xc8] sm:$0xff] %v1142
      %1207 = vst [vmem:[#allocation2 + $0xd0] sm:$0xff] %v1143
      %1208 = vst [vmem:[#allocation2 + $0xd8] sm:$0xff] %v1144
      %1209 = vst [vmem:[#allocation2 + $0xe0] sm:$0xff] %v1145
      %1210 = vst [vmem:[#allocation2 + $0xe8] sm:$0xff] %v1146
      %1211 = vst [vmem:[#allocation2 + $0xf0] sm:$0xff] %v1147
      %1212 = vst [vmem:[#allocation2 + $0xf8] sm:$0xff] %v1148
      %1213 = vst [vmem:[#allocation2 + $0x100] sm:$0xff] %v1149
      %1214 = vst [vmem:[#allocation2 + $0x108] sm:$0xff] %v1150
      %1215 = vst [vmem:[#allocation2 + $0x110] sm:$0xff] %v1151
      %1216 = vst [vmem:[#allocation2 + $0x118] sm:$0xff] %v1152
      %1217 = vst [vmem:[#allocation2 + $0x120] sm:$0xff] %v1153
      %1218 = vst [vmem:[#allocation2 + $0x128] sm:$0xff] %v1154
      %1219 = vst [vmem:[#allocation2 + $0x130] sm:$0xff] %v1155
      %1220 = vst [vmem:[#allocation2 + $0x138] sm:$0xff] %v1156
      %1221 = vst [vmem:[#allocation2 + $0x140] sm:$0xff] %v1157
      %1222 = vst [vmem:[#allocation2 + $0x148] sm:$0xff] %v1158
      %1223 = vst [vmem:[#allocation2 + $0x150] sm:$0xff] %v1159
      %1224 = vst [vmem:[#allocation2 + $0x158] sm:$0xff] %v1160
      %1225 = vst [vmem:[#allocation2 + $0x160] sm:$0xff] %v1161
      %1226 = vst [vmem:[#allocation2 + $0x168] sm:$0xff] %v1162
      %1227 = vst [vmem:[#allocation2 + $0x170] sm:$0xff] %v1163
      %1228 = vst [vmem:[#allocation2 + $0x178] sm:$0xff] %v1164
      %1229 = vst [vmem:[#allocation2 + $0x180] sm:$0xff] %v1165
      %1230 = vst [vmem:[#allocation2 + $0x188] sm:$0xff] %v1166
      %1231 = vst [vmem:[#allocation2 + $0x190] sm:$0xff] %v1167
      %1232 = vst [vmem:[#allocation2 + $0x198] sm:$0xff] %v1168
      %1233 = vst [vmem:[#allocation2 + $0x1a0] sm:$0xff] %v1169
      %1234 = vst [vmem:[#allocation2 + $0x1a8] sm:$0xff] %v1170
      %1235 = vst [vmem:[#allocation2 + $0x1b0] sm:$0xff] %v1171
      %1236 = vst [vmem:[#allocation2 + $0x1b8] sm:$0xff] %v1172
      %1237 = vst [vmem:[#allocation2 + $0x1c0] sm:$0xff] %v1173
      %1238 = vst [vmem:[#allocation2 + $0x1c8] sm:$0xff] %v1174
      %1239 = vst [vmem:[#allocation2 + $0x1d0] sm:$0xff] %v1175
      %1240 = vst [vmem:[#allocation2 + $0x1d8] sm:$0xff] %v1176
      %1241 = vst [vmem:[#allocation2 + $0x1e0] sm:$0xff] %v1177
      %1242 = vst [vmem:[#allocation2 + $0x1e8] sm:$0xff] %v1178
      %1243 = vst [vmem:[#allocation2 + $0x1f0] sm:$0xff] %v1179
      %1244 = vst [vmem:[#allocation2 + $0x1f8] sm:$0xff] %v1180
      // Predicated region
      $region37: #{upconv_forward.4} parent=31 // pred_check
        %p1245 = pneg %p351
      $region38: #{upconv_forward.4} parent=31 // pred_check_branch
        %1247 = sbr.rel (%p1245) target = $region40
      $region39: #{upconv_forward.4} parent=31 // pred_region
        %v1248 = vld [vmem:[#allocation2] sm:$0xff]
        %v1249 = vld [vmem:[#allocation2 + $0x8] sm:$0xff]
        %v1250 = vld [vmem:[#allocation2 + $0x10] sm:$0xff]
        %v1251 = vld [vmem:[#allocation2 + $0x18] sm:$0xff]
        %v1252 = vld [vmem:[#allocation2 + $0x20] sm:$0xff]
        %v1253 = vld [vmem:[#allocation2 + $0x28] sm:$0xff]
        %v1254 = vld [vmem:[#allocation2 + $0x30] sm:$0xff]
        %v1255 = vld [vmem:[#allocation2 + $0x38] sm:$0xff]
        %v1256 = vld [vmem:[#allocation2 + $0x40] sm:$0xff]
        %v1257 = vld [vmem:[#allocation2 + $0x48] sm:$0xff]
        %v1258 = vld [vmem:[#allocation2 + $0x50] sm:$0xff]
        %v1259 = vld [vmem:[#allocation2 + $0x58] sm:$0xff]
        %v1260 = vld [vmem:[#allocation2 + $0x60] sm:$0xff]
        %v1261 = vld [vmem:[#allocation2 + $0x68] sm:$0xff]
        %v1262 = vld [vmem:[#allocation2 + $0x70] sm:$0xff]
        %v1263 = vld [vmem:[#allocation2 + $0x78] sm:$0xff]
        %v1264 = vld [vmem:[#allocation2 + $0x80] sm:$0xff]
        %v1265 = vld [vmem:[#allocation2 + $0x88] sm:$0xff]
        %v1266 = vld [vmem:[#allocation2 + $0x90] sm:$0xff]
        %v1267 = vld [vmem:[#allocation2 + $0x98] sm:$0xff]
        %v1268 = vld [vmem:[#allocation2 + $0xa0] sm:$0xff]
        %v1269 = vld [vmem:[#allocation2 + $0xa8] sm:$0xff]
        %v1270 = vld [vmem:[#allocation2 + $0xb0] sm:$0xff]
        %v1271 = vld [vmem:[#allocation2 + $0xb8] sm:$0xff]
        %v1272 = vld [vmem:[#allocation2 + $0xc0] sm:$0xff]
        %v1273 = vld [vmem:[#allocation2 + $0xc8] sm:$0xff]
        %v1274 = vld [vmem:[#allocation2 + $0xd0] sm:$0xff]
        %v1275 = vld [vmem:[#allocation2 + $0xd8] sm:$0xff]
        %v1276 = vld [vmem:[#allocation2 + $0xe0] sm:$0xff]
        %v1277 = vld [vmem:[#allocation2 + $0xe8] sm:$0xff]
        %v1278 = vld [vmem:[#allocation2 + $0xf0] sm:$0xff]
        %v1279 = vld [vmem:[#allocation2 + $0xf8] sm:$0xff]
        %v1280 = vld [vmem:[#allocation2 + $0x100] sm:$0xff]
        %v1281 = vld [vmem:[#allocation2 + $0x108] sm:$0xff]
        %v1282 = vld [vmem:[#allocation2 + $0x110] sm:$0xff]
        %v1283 = vld [vmem:[#allocation2 + $0x118] sm:$0xff]
        %v1284 = vld [vmem:[#allocation2 + $0x120] sm:$0xff]
        %v1285 = vld [vmem:[#allocation2 + $0x128] sm:$0xff]
        %v1286 = vld [vmem:[#allocation2 + $0x130] sm:$0xff]
        %v1287 = vld [vmem:[#allocation2 + $0x138] sm:$0xff]
        %v1288 = vld [vmem:[#allocation2 + $0x140] sm:$0xff]
        %v1289 = vld [vmem:[#allocation2 + $0x148] sm:$0xff]
        %v1290 = vld [vmem:[#allocation2 + $0x150] sm:$0xff]
        %v1291 = vld [vmem:[#allocation2 + $0x158] sm:$0xff]
        %v1292 = vld [vmem:[#allocation2 + $0x160] sm:$0xff]
        %v1293 = vld [vmem:[#allocation2 + $0x168] sm:$0xff]
        %v1294 = vld [vmem:[#allocation2 + $0x170] sm:$0xff]
        %v1295 = vld [vmem:[#allocation2 + $0x178] sm:$0xff]
        %v1296 = vld [vmem:[#allocation2 + $0x180] sm:$0xff]
        %v1297 = vld [vmem:[#allocation2 + $0x188] sm:$0xff]
        %v1298 = vld [vmem:[#allocation2 + $0x190] sm:$0xff]
        %v1299 = vld [vmem:[#allocation2 + $0x198] sm:$0xff]
        %v1300 = vld [vmem:[#allocation2 + $0x1a0] sm:$0xff]
        %v1301 = vld [vmem:[#allocation2 + $0x1a8] sm:$0xff]
        %v1302 = vld [vmem:[#allocation2 + $0x1b0] sm:$0xff]
        %v1303 = vld [vmem:[#allocation2 + $0x1b8] sm:$0xff]
        %v1304 = vld [vmem:[#allocation2 + $0x1c0] sm:$0xff]
        %v1305 = vld [vmem:[#allocation2 + $0x1c8] sm:$0xff]
        %v1306 = vld [vmem:[#allocation2 + $0x1d0] sm:$0xff]
        %v1307 = vld [vmem:[#allocation2 + $0x1d8] sm:$0xff]
        %v1308 = vld [vmem:[#allocation2 + $0x1e0] sm:$0xff]
        %v1309 = vld [vmem:[#allocation2 + $0x1e8] sm:$0xff]
        %v1310 = vld [vmem:[#allocation2 + $0x1f0] sm:$0xff]
        %v1311 = vld [vmem:[#allocation2 + $0x1f8] sm:$0xff]
        %v1312 = vld [vmem:[%s326] sm:$0x1]
        %v1314 = vlaneseq
        %v1315 = vshrl.u32 %v1314, 7
        %v1316 = vsub.s32 0, %v1315
        %v1317 = vrot.slane %v1312, %v1316
        %v1319 = vadd.f32 %v1248, %v1317
        %v1320 = vadd.f32 %v1249, %v1317
        %v1321 = vadd.f32 %v1250, %v1317
        %v1322 = vadd.f32 %v1251, %v1317
        %v1323 = vadd.f32 %v1252, %v1317
        %v1324 = vadd.f32 %v1253, %v1317
        %v1325 = vadd.f32 %v1254, %v1317
        %v1326 = vadd.f32 %v1255, %v1317
        %v1327 = vadd.f32 %v1256, %v1317
        %v1328 = vadd.f32 %v1257, %v1317
        %v1329 = vadd.f32 %v1258, %v1317
        %v1330 = vadd.f32 %v1259, %v1317
        %v1331 = vadd.f32 %v1260, %v1317
        %v1332 = vadd.f32 %v1261, %v1317
        %v1333 = vadd.f32 %v1262, %v1317
        %v1334 = vadd.f32 %v1263, %v1317
        %v1335 = vadd.f32 %v1264, %v1317
        %v1336 = vadd.f32 %v1265, %v1317
        %v1337 = vadd.f32 %v1266, %v1317
        %v1338 = vadd.f32 %v1267, %v1317
        %v1339 = vadd.f32 %v1268, %v1317
        %v1340 = vadd.f32 %v1269, %v1317
        %v1341 = vadd.f32 %v1270, %v1317
        %v1342 = vadd.f32 %v1271, %v1317
        %v1343 = vadd.f32 %v1272, %v1317
        %v1344 = vadd.f32 %v1273, %v1317
        %v1345 = vadd.f32 %v1274, %v1317
        %v1346 = vadd.f32 %v1275, %v1317
        %v1347 = vadd.f32 %v1276, %v1317
        %v1348 = vadd.f32 %v1277, %v1317
        %v1349 = vadd.f32 %v1278, %v1317
        %v1350 = vadd.f32 %v1279, %v1317
        %v1351 = vadd.f32 %v1280, %v1317
        %v1352 = vadd.f32 %v1281, %v1317
        %v1353 = vadd.f32 %v1282, %v1317
        %v1354 = vadd.f32 %v1283, %v1317
        %v1355 = vadd.f32 %v1284, %v1317
        %v1356 = vadd.f32 %v1285, %v1317
        %v1357 = vadd.f32 %v1286, %v1317
        %v1358 = vadd.f32 %v1287, %v1317
        %v1359 = vadd.f32 %v1288, %v1317
        %v1360 = vadd.f32 %v1289, %v1317
        %v1361 = vadd.f32 %v1290, %v1317
        %v1362 = vadd.f32 %v1291, %v1317
        %v1363 = vadd.f32 %v1292, %v1317
        %v1364 = vadd.f32 %v1293, %v1317
        %v1365 = vadd.f32 %v1294, %v1317
        %v1366 = vadd.f32 %v1295, %v1317
        %v1367 = vadd.f32 %v1296, %v1317
        %v1368 = vadd.f32 %v1297, %v1317
        %v1369 = vadd.f32 %v1298, %v1317
        %v1370 = vadd.f32 %v1299, %v1317
        %v1371 = vadd.f32 %v1300, %v1317
        %v1372 = vadd.f32 %v1301, %v1317
        %v1373 = vadd.f32 %v1302, %v1317
        %v1374 = vadd.f32 %v1303, %v1317
        %v1375 = vadd.f32 %v1304, %v1317
        %v1376 = vadd.f32 %v1305, %v1317
        %v1377 = vadd.f32 %v1306, %v1317
        %v1378 = vadd.f32 %v1307, %v1317
        %v1379 = vadd.f32 %v1308, %v1317
        %v1380 = vadd.f32 %v1309, %v1317
        %v1381 = vadd.f32 %v1310, %v1317
        %v1382 = vadd.f32 %v1311, %v1317
        %v1383 = vpack.c.bf16 %v1320, %v1319
        %v1384 = vpack.c.bf16 %v1322, %v1321
        %v1385 = vpack.c.bf16 %v1324, %v1323
        %v1386 = vpack.c.bf16 %v1326, %v1325
        %v1387 = vpack.c.bf16 %v1328, %v1327
        %v1388 = vpack.c.bf16 %v1330, %v1329
        %v1389 = vpack.c.bf16 %v1332, %v1331
        %v1390 = vpack.c.bf16 %v1334, %v1333
        %v1391 = vpack.c.bf16 %v1336, %v1335
        %v1392 = vpack.c.bf16 %v1338, %v1337
        %v1393 = vpack.c.bf16 %v1340, %v1339
        %v1394 = vpack.c.bf16 %v1342, %v1341
        %v1395 = vpack.c.bf16 %v1344, %v1343
        %v1396 = vpack.c.bf16 %v1346, %v1345
        %v1397 = vpack.c.bf16 %v1348, %v1347
        %v1398 = vpack.c.bf16 %v1350, %v1349
        %v1399 = vpack.c.bf16 %v1352, %v1351
        %v1400 = vpack.c.bf16 %v1354, %v1353
        %v1401 = vpack.c.bf16 %v1356, %v1355
        %v1402 = vpack.c.bf16 %v1358, %v1357
        %v1403 = vpack.c.bf16 %v1360, %v1359
        %v1404 = vpack.c.bf16 %v1362, %v1361
        %v1405 = vpack.c.bf16 %v1364, %v1363
        %v1406 = vpack.c.bf16 %v1366, %v1365
        %v1407 = vpack.c.bf16 %v1368, %v1367
        %v1408 = vpack.c.bf16 %v1370, %v1369
        %v1409 = vpack.c.bf16 %v1372, %v1371
        %v1410 = vpack.c.bf16 %v1374, %v1373
        %v1411 = vpack.c.bf16 %v1376, %v1375
        %v1412 = vpack.c.bf16 %v1378, %v1377
        %v1413 = vpack.c.bf16 %v1380, %v1379
        %v1414 = vpack.c.bf16 %v1382, %v1381
        %v1447 = vunpack.c.l.b16 %v1383
        %v1448 = vunpack.c.h.b16 %v1383
        %v1449 = vunpack.c.l.b16 %v1384
        %v1450 = vunpack.c.h.b16 %v1384
        %v1451 = vunpack.c.l.b16 %v1385
        %v1452 = vunpack.c.h.b16 %v1385
        %v1453 = vunpack.c.l.b16 %v1386
        %v1454 = vunpack.c.h.b16 %v1386
        %v1455 = vunpack.c.l.b16 %v1387
        %v1456 = vunpack.c.h.b16 %v1387
        %v1457 = vunpack.c.l.b16 %v1388
        %v1458 = vunpack.c.h.b16 %v1388
        %v1459 = vunpack.c.l.b16 %v1389
        %v1460 = vunpack.c.h.b16 %v1389
        %v1461 = vunpack.c.l.b16 %v1390
        %v1462 = vunpack.c.h.b16 %v1390
        %v1463 = vunpack.c.l.b16 %v1391
        %v1464 = vunpack.c.h.b16 %v1391
        %v1465 = vunpack.c.l.b16 %v1392
        %v1466 = vunpack.c.h.b16 %v1392
        %v1467 = vunpack.c.l.b16 %v1393
        %v1468 = vunpack.c.h.b16 %v1393
        %v1469 = vunpack.c.l.b16 %v1394
        %v1470 = vunpack.c.h.b16 %v1394
        %v1471 = vunpack.c.l.b16 %v1395
        %v1472 = vunpack.c.h.b16 %v1395
        %v1473 = vunpack.c.l.b16 %v1396
        %v1474 = vunpack.c.h.b16 %v1396
        %v1475 = vunpack.c.l.b16 %v1397
        %v1476 = vunpack.c.h.b16 %v1397
        %v1477 = vunpack.c.l.b16 %v1398
        %v1478 = vunpack.c.h.b16 %v1398
        %v1479 = vunpack.c.l.b16 %v1399
        %v1480 = vunpack.c.h.b16 %v1399
        %v1481 = vunpack.c.l.b16 %v1400
        %v1482 = vunpack.c.h.b16 %v1400
        %v1483 = vunpack.c.l.b16 %v1401
        %v1484 = vunpack.c.h.b16 %v1401
        %v1485 = vunpack.c.l.b16 %v1402
        %v1486 = vunpack.c.h.b16 %v1402
        %v1487 = vunpack.c.l.b16 %v1403
        %v1488 = vunpack.c.h.b16 %v1403
        %v1489 = vunpack.c.l.b16 %v1404
        %v1490 = vunpack.c.h.b16 %v1404
        %v1491 = vunpack.c.l.b16 %v1405
        %v1492 = vunpack.c.h.b16 %v1405
        %v1493 = vunpack.c.l.b16 %v1406
        %v1494 = vunpack.c.h.b16 %v1406
        %v1495 = vunpack.c.l.b16 %v1407
        %v1496 = vunpack.c.h.b16 %v1407
        %v1497 = vunpack.c.l.b16 %v1408
        %v1498 = vunpack.c.h.b16 %v1408
        %v1499 = vunpack.c.l.b16 %v1409
        %v1500 = vunpack.c.h.b16 %v1409
        %v1501 = vunpack.c.l.b16 %v1410
        %v1502 = vunpack.c.h.b16 %v1410
        %v1503 = vunpack.c.l.b16 %v1411
        %v1504 = vunpack.c.h.b16 %v1411
        %v1505 = vunpack.c.l.b16 %v1412
        %v1506 = vunpack.c.h.b16 %v1412
        %v1507 = vunpack.c.l.b16 %v1413
        %v1508 = vunpack.c.h.b16 %v1413
        %v1509 = vunpack.c.l.b16 %v1414
        %v1510 = vunpack.c.h.b16 %v1414
        %v1511 = vpack.c.b16 %v1447, %v1447
        %v1512 = vpack.c.b16 %v1448, %v1448
        %v1513 = vpack.c.b16 %v1449, %v1449
        %v1514 = vpack.c.b16 %v1450, %v1450
        %v1515 = vpack.c.b16 %v1451, %v1451
        %v1516 = vpack.c.b16 %v1452, %v1452
        %v1517 = vpack.c.b16 %v1453, %v1453
        %v1518 = vpack.c.b16 %v1454, %v1454
        %v1519 = vpack.c.b16 %v1455, %v1455
        %v1520 = vpack.c.b16 %v1456, %v1456
        %v1521 = vpack.c.b16 %v1457, %v1457
        %v1522 = vpack.c.b16 %v1458, %v1458
        %v1523 = vpack.c.b16 %v1459, %v1459
        %v1524 = vpack.c.b16 %v1460, %v1460
        %v1525 = vpack.c.b16 %v1461, %v1461
        %v1526 = vpack.c.b16 %v1462, %v1462
        %v1527 = vpack.c.b16 %v1463, %v1463
        %v1528 = vpack.c.b16 %v1464, %v1464
        %v1529 = vpack.c.b16 %v1465, %v1465
        %v1530 = vpack.c.b16 %v1466, %v1466
        %v1531 = vpack.c.b16 %v1467, %v1467
        %v1532 = vpack.c.b16 %v1468, %v1468
        %v1533 = vpack.c.b16 %v1469, %v1469
        %v1534 = vpack.c.b16 %v1470, %v1470
        %v1535 = vpack.c.b16 %v1471, %v1471
        %v1536 = vpack.c.b16 %v1472, %v1472
        %v1537 = vpack.c.b16 %v1473, %v1473
        %v1538 = vpack.c.b16 %v1474, %v1474
        %v1539 = vpack.c.b16 %v1475, %v1475
        %v1540 = vpack.c.b16 %v1476, %v1476
        %v1541 = vpack.c.b16 %v1477, %v1477
        %v1542 = vpack.c.b16 %v1478, %v1478
        %v1543 = vpack.c.b16 %v1479, %v1479
        %v1544 = vpack.c.b16 %v1480, %v1480
        %v1545 = vpack.c.b16 %v1481, %v1481
        %v1546 = vpack.c.b16 %v1482, %v1482
        %v1547 = vpack.c.b16 %v1483, %v1483
        %v1548 = vpack.c.b16 %v1484, %v1484
        %v1549 = vpack.c.b16 %v1485, %v1485
        %v1550 = vpack.c.b16 %v1486, %v1486
        %v1551 = vpack.c.b16 %v1487, %v1487
        %v1552 = vpack.c.b16 %v1488, %v1488
        %v1553 = vpack.c.b16 %v1489, %v1489
        %v1554 = vpack.c.b16 %v1490, %v1490
        %v1555 = vpack.c.b16 %v1491, %v1491
        %v1556 = vpack.c.b16 %v1492, %v1492
        %v1557 = vpack.c.b16 %v1493, %v1493
        %v1558 = vpack.c.b16 %v1494, %v1494
        %v1559 = vpack.c.b16 %v1495, %v1495
        %v1560 = vpack.c.b16 %v1496, %v1496
        %v1561 = vpack.c.b16 %v1497, %v1497
        %v1562 = vpack.c.b16 %v1498, %v1498
        %v1563 = vpack.c.b16 %v1499, %v1499
        %v1564 = vpack.c.b16 %v1500, %v1500
        %v1565 = vpack.c.b16 %v1501, %v1501
        %v1566 = vpack.c.b16 %v1502, %v1502
        %v1567 = vpack.c.b16 %v1503, %v1503
        %v1568 = vpack.c.b16 %v1504, %v1504
        %v1569 = vpack.c.b16 %v1505, %v1505
        %v1570 = vpack.c.b16 %v1506, %v1506
        %v1571 = vpack.c.b16 %v1507, %v1507
        %v1572 = vpack.c.b16 %v1508, %v1508
        %v1573 = vpack.c.b16 %v1509, %v1509
        %v1574 = vpack.c.b16 %v1510, %v1510
        %1639 = vst [vmem:[%s334] sm:$0xf] %v1511
        %1640 = vst [vmem:[%s334 + $0x4] sm:$0xf] %v1512
        %1641 = vst [vmem:[%s334 + $0x8] sm:$0xf] %v1513
        %1642 = vst [vmem:[%s334 + $0xc] sm:$0xf] %v1514
        %1643 = vst [vmem:[%s334 + $0x10] sm:$0xf] %v1515
        %1644 = vst [vmem:[%s334 + $0x14] sm:$0xf] %v1516
        %1645 = vst [vmem:[%s334 + $0x18] sm:$0xf] %v1517
        %1646 = vst [vmem:[%s334 + $0x1c] sm:$0xf] %v1518
        %1647 = vst [vmem:[%s334 + $0x20] sm:$0xf] %v1519
        %1648 = vst [vmem:[%s334 + $0x24] sm:$0xf] %v1520
        %1649 = vst [vmem:[%s334 + $0x28] sm:$0xf] %v1521
        %1650 = vst [vmem:[%s334 + $0x2c] sm:$0xf] %v1522
        %1651 = vst [vmem:[%s334 + $0x30] sm:$0xf] %v1523
        %1652 = vst [vmem:[%s334 + $0x34] sm:$0xf] %v1524
        %1653 = vst [vmem:[%s334 + $0x38] sm:$0xf] %v1525
        %1654 = vst [vmem:[%s334 + $0x3c] sm:$0xf] %v1526
        %1655 = vst [vmem:[%s334 + $0x40] sm:$0xf] %v1527
        %1656 = vst [vmem:[%s334 + $0x44] sm:$0xf] %v1528
        %1657 = vst [vmem:[%s334 + $0x48] sm:$0xf] %v1529
        %1658 = vst [vmem:[%s334 + $0x4c] sm:$0xf] %v1530
        %1659 = vst [vmem:[%s334 + $0x50] sm:$0xf] %v1531
        %1660 = vst [vmem:[%s334 + $0x54] sm:$0xf] %v1532
        %1661 = vst [vmem:[%s334 + $0x58] sm:$0xf] %v1533
        %1662 = vst [vmem:[%s334 + $0x5c] sm:$0xf] %v1534
        %1663 = vst [vmem:[%s334 + $0x60] sm:$0xf] %v1535
        %1664 = vst [vmem:[%s334 + $0x64] sm:$0xf] %v1536
        %1665 = vst [vmem:[%s334 + $0x68] sm:$0xf] %v1537
        %1666 = vst [vmem:[%s334 + $0x6c] sm:$0xf] %v1538
        %1667 = vst [vmem:[%s334 + $0x70] sm:$0xf] %v1539
        %1668 = vst [vmem:[%s334 + $0x74] sm:$0xf] %v1540
        %1669 = vst [vmem:[%s334 + $0x78] sm:$0xf] %v1541
        %1670 = vst [vmem:[%s334 + $0x7c] sm:$0xf] %v1542
        %1671 = vst [vmem:[%s334 + $0x80] sm:$0xf] %v1543
        %1672 = vst [vmem:[%s334 + $0x84] sm:$0xf] %v1544
        %1673 = vst [vmem:[%s334 + $0x88] sm:$0xf] %v1545
        %1674 = vst [vmem:[%s334 + $0x8c] sm:$0xf] %v1546
        %1675 = vst [vmem:[%s334 + $0x90] sm:$0xf] %v1547
        %1676 = vst [vmem:[%s334 + $0x94] sm:$0xf] %v1548
        %1677 = vst [vmem:[%s334 + $0x98] sm:$0xf] %v1549
        %1678 = vst [vmem:[%s334 + $0x9c] sm:$0xf] %v1550
        %1679 = vst [vmem:[%s334 + $0xa0] sm:$0xf] %v1551
        %1680 = vst [vmem:[%s334 + $0xa4] sm:$0xf] %v1552
        %1681 = vst [vmem:[%s334 + $0xa8] sm:$0xf] %v1553
        %1682 = vst [vmem:[%s334 + $0xac] sm:$0xf] %v1554
        %1683 = vst [vmem:[%s334 + $0xb0] sm:$0xf] %v1555
        %1684 = vst [vmem:[%s334 + $0xb4] sm:$0xf] %v1556
        %1685 = vst [vmem:[%s334 + $0xb8] sm:$0xf] %v1557
        %1686 = vst [vmem:[%s334 + $0xbc] sm:$0xf] %v1558
        %1687 = vst [vmem:[%s334 + $0xc0] sm:$0xf] %v1559
        %1688 = vst [vmem:[%s334 + $0xc4] sm:$0xf] %v1560
        %1689 = vst [vmem:[%s334 + $0xc8] sm:$0xf] %v1561
        %1690 = vst [vmem:[%s334 + $0xcc] sm:$0xf] %v1562
        %1691 = vst [vmem:[%s334 + $0xd0] sm:$0xf] %v1563
        %1692 = vst [vmem:[%s334 + $0xd4] sm:$0xf] %v1564
        %1693 = vst [vmem:[%s334 + $0xd8] sm:$0xf] %v1565
        %1694 = vst [vmem:[%s334 + $0xdc] sm:$0xf] %v1566
        %1695 = vst [vmem:[%s334 + $0xe0] sm:$0xf] %v1567
        %1696 = vst [vmem:[%s334 + $0xe4] sm:$0xf] %v1568
        %1697 = vst [vmem:[%s334 + $0xe8] sm:$0xf] %v1569
        %1698 = vst [vmem:[%s334 + $0xec] sm:$0xf] %v1570
        %1699 = vst [vmem:[%s334 + $0xf0] sm:$0xf] %v1571
        %1700 = vst [vmem:[%s334 + $0xf4] sm:$0xf] %v1572
        %1701 = vst [vmem:[%s334 + $0xf8] sm:$0xf] %v1573
        %1702 = vst [vmem:[%s334 + $0xfc] sm:$0xf] %v1574
        %v1703 = vadd.f32 %v1319, %v1320
        %v1704 = vadd.f32 %v1703, %v1321
        %v1705 = vadd.f32 %v1704, %v1322
        %v1706 = vadd.f32 %v1705, %v1323
        %v1707 = vadd.f32 %v1706, %v1324
        %v1708 = vadd.f32 %v1707, %v1325
        %v1709 = vadd.f32 %v1708, %v1326
        %v1710 = vadd.f32 %v1709, %v1327
        %v1711 = vadd.f32 %v1710, %v1328
        %v1712 = vadd.f32 %v1711, %v1329
        %v1713 = vadd.f32 %v1712, %v1330
        %v1714 = vadd.f32 %v1713, %v1331
        %v1715 = vadd.f32 %v1714, %v1332
        %v1716 = vadd.f32 %v1715, %v1333
        %v1717 = vadd.f32 %v1716, %v1334
        %v1718 = vadd.f32 %v1717, %v1335
        %v1719 = vadd.f32 %v1718, %v1336
        %v1720 = vadd.f32 %v1719, %v1337
        %v1721 = vadd.f32 %v1720, %v1338
        %v1722 = vadd.f32 %v1721, %v1339
        %v1723 = vadd.f32 %v1722, %v1340
        %v1724 = vadd.f32 %v1723, %v1341
        %v1725 = vadd.f32 %v1724, %v1342
        %v1726 = vadd.f32 %v1725, %v1343
        %v1727 = vadd.f32 %v1726, %v1344
        %v1728 = vadd.f32 %v1727, %v1345
        %v1729 = vadd.f32 %v1728, %v1346
        %v1730 = vadd.f32 %v1729, %v1347
        %v1731 = vadd.f32 %v1730, %v1348
        %v1732 = vadd.f32 %v1731, %v1349
        %v1733 = vadd.f32 %v1732, %v1350
        %v1734 = vadd.f32 %v1733, %v1351
        %v1735 = vadd.f32 %v1734, %v1352
        %v1736 = vadd.f32 %v1735, %v1353
        %v1737 = vadd.f32 %v1736, %v1354
        %v1738 = vadd.f32 %v1737, %v1355
        %v1739 = vadd.f32 %v1738, %v1356
        %v1740 = vadd.f32 %v1739, %v1357
        %v1741 = vadd.f32 %v1740, %v1358
        %v1742 = vadd.f32 %v1741, %v1359
        %v1743 = vadd.f32 %v1742, %v1360
        %v1744 = vadd.f32 %v1743, %v1361
        %v1745 = vadd.f32 %v1744, %v1362
        %v1746 = vadd.f32 %v1745, %v1363
        %v1747 = vadd.f32 %v1746, %v1364
        %v1748 = vadd.f32 %v1747, %v1365
        %v1749 = vadd.f32 %v1748, %v1366
        %v1750 = vadd.f32 %v1749, %v1367
        %v1751 = vadd.f32 %v1750, %v1368
        %v1752 = vadd.f32 %v1751, %v1369
        %v1753 = vadd.f32 %v1752, %v1370
        %v1754 = vadd.f32 %v1753, %v1371
        %v1755 = vadd.f32 %v1754, %v1372
        %v1756 = vadd.f32 %v1755, %v1373
        %v1757 = vadd.f32 %v1756, %v1374
        %v1758 = vadd.f32 %v1757, %v1375
        %v1759 = vadd.f32 %v1758, %v1376
        %v1760 = vadd.f32 %v1759, %v1377
        %v1761 = vadd.f32 %v1760, %v1378
        %v1762 = vadd.f32 %v1761, %v1379
        %v1763 = vadd.f32 %v1762, %v1380
        %v1764 = vadd.f32 %v1763, %v1381
        %v1765 = vadd.f32 %v1764, %v1382
        %v1766 = vrot.slane %v1765, 4
        %v1767 = vadd.f32 %v1765, %v1766
        %v1768 = vrot.slane %v1767, 2
        %v1769 = vadd.f32 %v1767, %v1768
        %v1770 = vrot.slane %v1769, 1
        %v1771 = vadd.f32 %v1769, %v1770
        %1772 = vst [vmem:[%s342] sm:$0xff] %v1771
        %v1773 = vmul.f32 %v1319, %v1319
        %v1774 = vmul.f32 %v1320, %v1320
        %v1775 = vmul.f32 %v1321, %v1321
        %v1776 = vmul.f32 %v1322, %v1322
        %v1777 = vmul.f32 %v1323, %v1323
        %v1778 = vmul.f32 %v1324, %v1324
        %v1779 = vmul.f32 %v1325, %v1325
        %v1780 = vmul.f32 %v1326, %v1326
        %v1781 = vmul.f32 %v1327, %v1327
        %v1782 = vmul.f32 %v1328, %v1328
        %v1783 = vmul.f32 %v1329, %v1329
        %v1784 = vmul.f32 %v1330, %v1330
        %v1785 = vmul.f32 %v1331, %v1331
        %v1786 = vmul.f32 %v1332, %v1332
        %v1787 = vmul.f32 %v1333, %v1333
        %v1788 = vmul.f32 %v1334, %v1334
        %v1789 = vmul.f32 %v1335, %v1335
        %v1790 = vmul.f32 %v1336, %v1336
        %v1791 = vmul.f32 %v1337, %v1337
        %v1792 = vmul.f32 %v1338, %v1338
        %v1793 = vmul.f32 %v1339, %v1339
        %v1794 = vmul.f32 %v1340, %v1340
        %v1795 = vmul.f32 %v1341, %v1341
        %v1796 = vmul.f32 %v1342, %v1342
        %v1797 = vmul.f32 %v1343, %v1343
        %v1798 = vmul.f32 %v1344, %v1344
        %v1799 = vmul.f32 %v1345, %v1345
        %v1800 = vmul.f32 %v1346, %v1346
        %v1801 = vmul.f32 %v1347, %v1347
        %v1802 = vmul.f32 %v1348, %v1348
        %v1803 = vmul.f32 %v1349, %v1349
        %v1804 = vmul.f32 %v1350, %v1350
        %v1805 = vmul.f32 %v1351, %v1351
        %v1806 = vmul.f32 %v1352, %v1352
        %v1807 = vmul.f32 %v1353, %v1353
        %v1808 = vmul.f32 %v1354, %v1354
        %v1809 = vmul.f32 %v1355, %v1355
        %v1810 = vmul.f32 %v1356, %v1356
        %v1811 = vmul.f32 %v1357, %v1357
        %v1812 = vmul.f32 %v1358, %v1358
        %v1813 = vmul.f32 %v1359, %v1359
        %v1814 = vmul.f32 %v1360, %v1360
        %v1815 = vmul.f32 %v1361, %v1361
        %v1816 = vmul.f32 %v1362, %v1362
        %v1817 = vmul.f32 %v1363, %v1363
        %v1818 = vmul.f32 %v1364, %v1364
        %v1819 = vmul.f32 %v1365, %v1365
        %v1820 = vmul.f32 %v1366, %v1366
        %v1821 = vmul.f32 %v1367, %v1367
        %v1822 = vmul.f32 %v1368, %v1368
        %v1823 = vmul.f32 %v1369, %v1369
        %v1824 = vmul.f32 %v1370, %v1370
        %v1825 = vmul.f32 %v1371, %v1371
        %v1826 = vmul.f32 %v1372, %v1372
        %v1827 = vmul.f32 %v1373, %v1373
        %v1828 = vmul.f32 %v1374, %v1374
        %v1829 = vmul.f32 %v1375, %v1375
        %v1830 = vmul.f32 %v1376, %v1376
        %v1831 = vmul.f32 %v1377, %v1377
        %v1832 = vmul.f32 %v1378, %v1378
        %v1833 = vmul.f32 %v1379, %v1379
        %v1834 = vmul.f32 %v1380, %v1380
        %v1835 = vmul.f32 %v1381, %v1381
        %v1836 = vmul.f32 %v1382, %v1382
        %v1837 = vadd.f32 %v1773, %v1774
        %v1838 = vadd.f32 %v1837, %v1775
        %v1839 = vadd.f32 %v1838, %v1776
        %v1840 = vadd.f32 %v1839, %v1777
        %v1841 = vadd.f32 %v1840, %v1778
        %v1842 = vadd.f32 %v1841, %v1779
        %v1843 = vadd.f32 %v1842, %v1780
        %v1844 = vadd.f32 %v1843, %v1781
        %v1845 = vadd.f32 %v1844, %v1782
        %v1846 = vadd.f32 %v1845, %v1783
        %v1847 = vadd.f32 %v1846, %v1784
        %v1848 = vadd.f32 %v1847, %v1785
        %v1849 = vadd.f32 %v1848, %v1786
        %v1850 = vadd.f32 %v1849, %v1787
        %v1851 = vadd.f32 %v1850, %v1788
        %v1852 = vadd.f32 %v1851, %v1789
        %v1853 = vadd.f32 %v1852, %v1790
        %v1854 = vadd.f32 %v1853, %v1791
        %v1855 = vadd.f32 %v1854, %v1792
        %v1856 = vadd.f32 %v1855, %v1793
        %v1857 = vadd.f32 %v1856, %v1794
        %v1858 = vadd.f32 %v1857, %v1795
        %v1859 = vadd.f32 %v1858, %v1796
        %v1860 = vadd.f32 %v1859, %v1797
        %v1861 = vadd.f32 %v1860, %v1798
        %v1862 = vadd.f32 %v1861, %v1799
        %v1863 = vadd.f32 %v1862, %v1800
        %v1864 = vadd.f32 %v1863, %v1801
        %v1865 = vadd.f32 %v1864, %v1802
        %v1866 = vadd.f32 %v1865, %v1803
        %v1867 = vadd.f32 %v1866, %v1804
        %v1868 = vadd.f32 %v1867, %v1805
        %v1869 = vadd.f32 %v1868, %v1806
        %v1870 = vadd.f32 %v1869, %v1807
        %v1871 = vadd.f32 %v1870, %v1808
        %v1872 = vadd.f32 %v1871, %v1809
        %v1873 = vadd.f32 %v1872, %v1810
        %v1874 = vadd.f32 %v1873, %v1811
        %v1875 = vadd.f32 %v1874, %v1812
        %v1876 = vadd.f32 %v1875, %v1813
        %v1877 = vadd.f32 %v1876, %v1814
        %v1878 = vadd.f32 %v1877, %v1815
        %v1879 = vadd.f32 %v1878, %v1816
        %v1880 = vadd.f32 %v1879, %v1817
        %v1881 = vadd.f32 %v1880, %v1818
        %v1882 = vadd.f32 %v1881, %v1819
        %v1883 = vadd.f32 %v1882, %v1820
        %v1884 = vadd.f32 %v1883, %v1821
        %v1885 = vadd.f32 %v1884, %v1822
        %v1886 = vadd.f32 %v1885, %v1823
        %v1887 = vadd.f32 %v1886, %v1824
        %v1888 = vadd.f32 %v1887, %v1825
        %v1889 = vadd.f32 %v1888, %v1826
        %v1890 = vadd.f32 %v1889, %v1827
        %v1891 = vadd.f32 %v1890, %v1828
        %v1892 = vadd.f32 %v1891, %v1829
        %v1893 = vadd.f32 %v1892, %v1830
        %v1894 = vadd.f32 %v1893, %v1831
        %v1895 = vadd.f32 %v1894, %v1832
        %v1896 = vadd.f32 %v1895, %v1833
        %v1897 = vadd.f32 %v1896, %v1834
        %v1898 = vadd.f32 %v1897, %v1835
        %v1899 = vadd.f32 %v1898, %v1836
        %v1900 = vrot.slane %v1899, 4
        %v1901 = vadd.f32 %v1899, %v1900
        %v1902 = vrot.slane %v1901, 2
        %v1903 = vadd.f32 %v1901, %v1902
        %v1904 = vrot.slane %v1903, 1
        %v1905 = vadd.f32 %v1903, %v1904
        %1906 = vst [vmem:[%s349] sm:$0xff] %v1905
      $region40: #{upconv_forward.4} parent=31 // pred_fallthru
        _
      %s1907 = smul.u32 64, %s22
      %p1908 = scmp.lt.s32.totalorder %s1907, 255
      %s1909 = scalar_select %p1908, %s1907, 255
      %p1910 = scmp.lt.s32.totalorder %s23, 0
      %s1911 = scalar_select %p1910, %s23, 0
      %s1912 = sadd.s32 %s1911, %s1909
      %s1913 = smul.addr %s1912, 4
      %s1914 = scalar_lea.vmem %s3, %s1913
      %p1915 = scmp.lt.s32.totalorder %s22, 3
      %s1916 = scalar_select %p1915, %s22, 3
      %p1917 = scmp.lt.s32.totalorder %s23, 0
      %s1918 = scalar_select %p1917, %s23, 0
      %s1919 = sadd.s32 %s1918, %s1916
      %s1920 = smul.addr %s1919, 8
      %s1921 = scalar_lea.vmem %s4, %s1920
      %p1922 = scmp.lt.s32.totalorder %s22, 3
      %s1923 = scalar_select %p1922, %s22, 3
      %p1924 = scmp.lt.s32.totalorder %s23, 0
      %s1925 = scalar_select %p1924, %s23, 0
      %s1926 = sadd.s32 %s1925, %s1923
      %s1927 = smul.addr %s1926, 8
      %s1928 = scalar_lea.vmem %s5, %s1927
      // Predicated region
      $region41: #{upconv_forward.4} parent=31 // pred_check
        %p1929 = pneg %p138
      $region42: #{upconv_forward.4} parent=31 // pred_check_branch
        %1931 = sbr.rel (%p1929) target = $region44
      $region43: #{upconv_forward.4} parent=31 // pred_region
        %s1932 = smul.u32 64, %s22
      $region44: #{upconv_forward.4} parent=31 // pred_fallthru
        _
      // Predicated region
      $region45: #{upconv_forward.4} parent=31 // pred_check
        %p1933 = pneg %p166
      $region46: #{upconv_forward.4} parent=31 // pred_check_branch
        %1935 = sbr.rel (%p1933) target = $region48
      $region47: #{upconv_forward.4} parent=31 // pred_region
        _
      $region48: #{upconv_forward.4} parent=31 // pred_fallthru
        _
      // Predicated region
      $region49: #{upconv_forward.4} parent=31 // pred_check
        %p1936 = pneg %p194
      $region50: #{upconv_forward.4} parent=31 // pred_check_branch
        %1938 = sbr.rel (%p1936) target = $region52
      $region51: #{upconv_forward.4} parent=31 // pred_region
        _
      $region52: #{upconv_forward.4} parent=31 // pred_fallthru
        _
    $region32: #{upconv_forward.4} parent=5 // pred_fallthru
      _
    %p1939 = scmp.le.s32.totalorder 2, %s12
    // Predicated region
    $region53: #{upconv_forward.4} parent=5 // pred_check
      %p1940 = pneg %p1939
    $region54: #{upconv_forward.4} parent=5 // pred_check_branch
      %1942 = sbr.rel (%p1940) target = $region56
    $region55: #{upconv_forward.4} parent=5 // pred_region
      %s1943 = ssub.s32 %s12, 2
      // Predicated region
      $region57: #{upconv_forward.4} parent=55 // pred_check
        %p1944 = pneg %p144
      $region58: #{upconv_forward.4} parent=55 // pred_check_branch
        %1946 = sbr.rel (%p1944) target = $region60
      $region59: #{upconv_forward.4} parent=55 // pred_region
        %s1947 = smul.u32 64, %s25
        %p1948 = scmp.lt.s32.totalorder %s1947, 255
        %s1949 = scalar_select %p1948, %s1947, 255
        %p1950 = scmp.lt.s32.totalorder %s26, 0
        %s1951 = scalar_select %p1950, %s26, 0
        %s1952 = sadd.s32 %s1951, %s1949
        %s1953 = smul.addr %s1952, 4
        %s1954 = scalar_lea.vmem %s3, %s1953
      $region60: #{upconv_forward.4} parent=55 // pred_fallthru
        _
      // Predicated region
      $region61: #{upconv_forward.4} parent=55 // pred_check
        %p1955 = pneg %p172
      $region62: #{upconv_forward.4} parent=55 // pred_check_branch
        %1957 = sbr.rel (%p1955) target = $region64
      $region63: #{upconv_forward.4} parent=55 // pred_region
        %p1958 = scmp.lt.s32.totalorder %s25, 3
        %s1959 = scalar_select %p1958, %s25, 3
        %p1960 = scmp.lt.s32.totalorder %s26, 0
        %s1961 = scalar_select %p1960, %s26, 0
        %s1962 = sadd.s32 %s1961, %s1959
        %s1963 = smul.addr %s1962, 8
        %s1964 = scalar_lea.vmem %s4, %s1963
      $region64: #{upconv_forward.4} parent=55 // pred_fallthru
        _
      // Predicated region
      $region65: #{upconv_forward.4} parent=55 // pred_check
        %p1965 = pneg %p200
      $region66: #{upconv_forward.4} parent=55 // pred_check_branch
        %1967 = sbr.rel (%p1965) target = $region68
      $region67: #{upconv_forward.4} parent=55 // pred_region
        %p1968 = scmp.lt.s32.totalorder %s25, 3
        %s1969 = scalar_select %p1968, %s25, 3
        %p1970 = scmp.lt.s32.totalorder %s26, 0
        %s1971 = scalar_select %p1970, %s26, 0
        %s1972 = sadd.s32 %s1971, %s1969
        %s1973 = smul.addr %s1972, 8
        %s1974 = scalar_lea.vmem %s5, %s1973
      $region68: #{upconv_forward.4} parent=55 // pred_fallthru
        _
    $region56: #{upconv_forward.4} parent=5 // pred_fallthru
      _
  $region6: #{upconv_forward.4} parent=0 // loop_footer
    %s16 = sadd.s32 1, %s12
  $region7: #{upconv_forward.4} parent=0 // loop_footer_branch
    %11 = sbr.rel target = $region3
  $region8: #{upconv_forward.4} parent=0 // loop_exit
    _

// kernel: upconv_forward.5
$region0: #{upconv_forward.5}
  #allocation0 [shape = 'u32[]', space=smem, size = 0x4, offset = 0x4, fixed_abs, tag = 'smem constant byte address 0x4 - core index']
  #allocation1 [shape = 'u32[144,128]{1,0:T(1,128)}', space=vmem, size = 0x12000, scoped, tag = 'internal scratch']
  %s0 = inlined_call_operand.vmem [shape: bf16[2048,128], index: 0, kind: input, shape index: {}]
  %s1 = inlined_call_operand.vmem [shape: f32[1,128], index: 1, kind: input, shape index: {}]
  %s2 = inlined_call_operand.vmem [shape: f32[1,128], index: 2, kind: input, shape index: {}]
  %s3 = inlined_call_operand.vmem [shape: f32[2048,128], index: 3, kind: output, shape index: {}]
  %s4 = sld [smem:[#allocation0]]
  $region22: #{upconv_forward.5} parent=0
    _
  %s6 = ssub.s32 1, %s4
  %s7 = scalar_select 0, %s6, %s4
  // Predicated region
  $region2: #{upconv_forward.5} parent=0 // pred_check
    _
  $region3: #{upconv_forward.5} parent=0 // pred_check_branch
    %9 = sbr.rel (0) target = $region5
  $region4: #{upconv_forward.5} parent=0 // pred_region
    _
  $region5: #{upconv_forward.5} parent=0 // pred_fallthru
    _
  // Predicated region
  $region6: #{upconv_forward.5} parent=0 // pred_check
    _
  $region7: #{upconv_forward.5} parent=0 // pred_check_branch
    %11 = sbr.rel (0) target = $region9
  $region8: #{upconv_forward.5} parent=0 // pred_region
    _
  $region9: #{upconv_forward.5} parent=0 // pred_fallthru
    _
  // Predicated region
  $region10: #{upconv_forward.5} parent=0 // pred_check
    _
  $region11: #{upconv_forward.5} parent=0 // pred_check_branch
    %13 = sbr.rel (0) target = $region13
  $region12: #{upconv_forward.5} parent=0 // pred_region
    _
  $region13: #{upconv_forward.5} parent=0 // pred_fallthru
    _
  %v14 = vld [vmem:[%s0] sm:$0xf]
  %v15 = vld [vmem:[%s0 + $0x4] sm:$0xf]
  %v16 = vld [vmem:[%s0 + $0x8] sm:$0xf]
  %v17 = vld [vmem:[%s0 + $0xc] sm:$0xf]
  %v18 = vld [vmem:[%s0 + $0x10] sm:$0xf]
  %v19 = vld [vmem:[%s0 + $0x14] sm:$0xf]
  %v20 = vld [vmem:[%s0 + $0x18] sm:$0xf]
  %v21 = vld [vmem:[%s0 + $0x1c] sm:$0xf]
  %v22 = vld [vmem:[%s0 + $0x20] sm:$0xf]
  %v23 = vld [vmem:[%s0 + $0x24] sm:$0xf]
  %v24 = vld [vmem:[%s0 + $0x28] sm:$0xf]
  %v25 = vld [vmem:[%s0 + $0x2c] sm:$0xf]
  %v26 = vld [vmem:[%s0 + $0x30] sm:$0xf]
  %v27 = vld [vmem:[%s0 + $0x34] sm:$0xf]
  %v28 = vld [vmem:[%s0 + $0x38] sm:$0xf]
  %v29 = vld [vmem:[%s0 + $0x3c] sm:$0xf]
  %v30 = vld [vmem:[%s0 + $0x40] sm:$0xf]
  %v31 = vld [vmem:[%s0 + $0x44] sm:$0xf]
  %v32 = vld [vmem:[%s0 + $0x48] sm:$0xf]
  %v33 = vld [vmem:[%s0 + $0x4c] sm:$0xf]
  %v34 = vld [vmem:[%s0 + $0x50] sm:$0xf]
  %v35 = vld [vmem:[%s0 + $0x54] sm:$0xf]
  %v36 = vld [vmem:[%s0 + $0x58] sm:$0xf]
  %v37 = vld [vmem:[%s0 + $0x5c] sm:$0xf]
  %v38 = vld [vmem:[%s0 + $0x60] sm:$0xf]
  %v39 = vld [vmem:[%s0 + $0x64] sm:$0xf]
  %v40 = vld [vmem:[%s0 + $0x68] sm:$0xf]
  %v41 = vld [vmem:[%s0 + $0x6c] sm:$0xf]
  %v42 = vld [vmem:[%s0 + $0x70] sm:$0xf]
  %v43 = vld [vmem:[%s0 + $0x74] sm:$0xf]
  %v44 = vld [vmem:[%s0 + $0x78] sm:$0xf]
  %v45 = vld [vmem:[%s0 + $0x7c] sm:$0xf]
  %v46 = vld [vmem:[%s0 + $0x80] sm:$0xf]
  %v47 = vld [vmem:[%s0 + $0x84] sm:$0xf]
  %v48 = vld [vmem:[%s0 + $0x88] sm:$0xf]
  %v49 = vld [vmem:[%s0 + $0x8c] sm:$0xf]
  %v50 = vld [vmem:[%s0 + $0x90] sm:$0xf]
  %v51 = vld [vmem:[%s0 + $0x94] sm:$0xf]
  %v52 = vld [vmem:[%s0 + $0x98] sm:$0xf]
  %v53 = vld [vmem:[%s0 + $0x9c] sm:$0xf]
  %v54 = vld [vmem:[%s0 + $0xa0] sm:$0xf]
  %v55 = vld [vmem:[%s0 + $0xa4] sm:$0xf]
  %v56 = vld [vmem:[%s0 + $0xa8] sm:$0xf]
  %v57 = vld [vmem:[%s0 + $0xac] sm:$0xf]
  %v58 = vld [vmem:[%s0 + $0xb0] sm:$0xf]
  %v59 = vld [vmem:[%s0 + $0xb4] sm:$0xf]
  %v60 = vld [vmem:[%s0 + $0xb8] sm:$0xf]
  %v61 = vld [vmem:[%s0 + $0xbc] sm:$0xf]
  %v62 = vld [vmem:[%s0 + $0xc0] sm:$0xf]
  %v63 = vld [vmem:[%s0 + $0xc4] sm:$0xf]
  %v64 = vld [vmem:[%s0 + $0xc8] sm:$0xf]
  %v65 = vld [vmem:[%s0 + $0xcc] sm:$0xf]
  %v66 = vld [vmem:[%s0 + $0xd0] sm:$0xf]
  %v67 = vld [vmem:[%s0 + $0xd4] sm:$0xf]
  %v68 = vld [vmem:[%s0 + $0xd8] sm:$0xf]
  %v69 = vld [vmem:[%s0 + $0xdc] sm:$0xf]
  %v70 = vld [vmem:[%s0 + $0xe0] sm:$0xf]
  %v71 = vld [vmem:[%s0 + $0xe4] sm:$0xf]
  %v72 = vld [vmem:[%s0 + $0xe8] sm:$0xf]
  %v73 = vld [vmem:[%s0 + $0xec] sm:$0xf]
  %v74 = vld [vmem:[%s0 + $0xf0] sm:$0xf]
  %v75 = vld [vmem:[%s0 + $0xf4] sm:$0xf]
  %v76 = vld [vmem:[%s0 + $0xf8] sm:$0xf]
  %v77 = vld [vmem:[%s0 + $0xfc] sm:$0xf]
  %v78 = vld [vmem:[%s0 + $0x100] sm:$0xf]
  %v79 = vld [vmem:[%s0 + $0x104] sm:$0xf]
  %v80 = vld [vmem:[%s0 + $0x108] sm:$0xf]
  %v81 = vld [vmem:[%s0 + $0x10c] sm:$0xf]
  %v82 = vld [vmem:[%s0 + $0x110] sm:$0xf]
  %v83 = vld [vmem:[%s0 + $0x114] sm:$0xf]
  %v84 = vld [vmem:[%s0 + $0x118] sm:$0xf]
  %v85 = vld [vmem:[%s0 + $0x11c] sm:$0xf]
  %v86 = vld [vmem:[%s0 + $0x120] sm:$0xf]
  %v87 = vld [vmem:[%s0 + $0x124] sm:$0xf]
  %v88 = vld [vmem:[%s0 + $0x128] sm:$0xf]
  %v89 = vld [vmem:[%s0 + $0x12c] sm:$0xf]
  %v90 = vld [vmem:[%s0 + $0x130] sm:$0xf]
  %v91 = vld [vmem:[%s0 + $0x134] sm:$0xf]
  %v92 = vld [vmem:[%s0 + $0x138] sm:$0xf]
  %v93 = vld [vmem:[%s0 + $0x13c] sm:$0xf]
  %v94 = vld [vmem:[%s0 + $0x140] sm:$0xf]
  %v95 = vld [vmem:[%s0 + $0x144] sm:$0xf]
  %v96 = vld [vmem:[%s0 + $0x148] sm:$0xf]
  %v97 = vld [vmem:[%s0 + $0x14c] sm:$0xf]
  %v98 = vld [vmem:[%s0 + $0x150] sm:$0xf]
  %v99 = vld [vmem:[%s0 + $0x154] sm:$0xf]
  %v100 = vld [vmem:[%s0 + $0x158] sm:$0xf]
  %v101 = vld [vmem:[%s0 + $0x15c] sm:$0xf]
  %v102 = vld [vmem:[%s0 + $0x160] sm:$0xf]
  %v103 = vld [vmem:[%s0 + $0x164] sm:$0xf]
  %v104 = vld [vmem:[%s0 + $0x168] sm:$0xf]
  %v105 = vld [vmem:[%s0 + $0x16c] sm:$0xf]
  %v106 = vld [vmem:[%s0 + $0x170] sm:$0xf]
  %v107 = vld [vmem:[%s0 + $0x174] sm:$0xf]
  %v108 = vld [vmem:[%s0 + $0x178] sm:$0xf]
  %v109 = vld [vmem:[%s0 + $0x17c] sm:$0xf]
  %v110 = vld [vmem:[%s0 + $0x180] sm:$0xf]
  %v111 = vld [vmem:[%s0 + $0x184] sm:$0xf]
  %v112 = vld [vmem:[%s0 + $0x188] sm:$0xf]
  %v113 = vld [vmem:[%s0 + $0x18c] sm:$0xf]
  %v114 = vld [vmem:[%s0 + $0x190] sm:$0xf]
  %v115 = vld [vmem:[%s0 + $0x194] sm:$0xf]
  %v116 = vld [vmem:[%s0 + $0x198] sm:$0xf]
  %v117 = vld [vmem:[%s0 + $0x19c] sm:$0xf]
  %v118 = vld [vmem:[%s0 + $0x1a0] sm:$0xf]
  %v119 = vld [vmem:[%s0 + $0x1a4] sm:$0xf]
  %v120 = vld [vmem:[%s0 + $0x1a8] sm:$0xf]
  %v121 = vld [vmem:[%s0 + $0x1ac] sm:$0xf]
  %v122 = vld [vmem:[%s0 + $0x1b0] sm:$0xf]
  %v123 = vld [vmem:[%s0 + $0x1b4] sm:$0xf]
  %v124 = vld [vmem:[%s0 + $0x1b8] sm:$0xf]
  %v125 = vld [vmem:[%s0 + $0x1bc] sm:$0xf]
  %v126 = vld [vmem:[%s0 + $0x1c0] sm:$0xf]
  %v127 = vld [vmem:[%s0 + $0x1c4] sm:$0xf]
  %v128 = vld [vmem:[%s0 + $0x1c8] sm:$0xf]
  %v129 = vld [vmem:[%s0 + $0x1cc] sm:$0xf]
  %v130 = vld [vmem:[%s0 + $0x1d0] sm:$0xf]
  %v131 = vld [vmem:[%s0 + $0x1d4] sm:$0xf]
  %v132 = vld [vmem:[%s0 + $0x1d8] sm:$0xf]
  %v133 = vld [vmem:[%s0 + $0x1dc] sm:$0xf]
  %v134 = vld [vmem:[%s0 + $0x1e0] sm:$0xf]
  %v135 = vld [vmem:[%s0 + $0x1e4] sm:$0xf]
  %v136 = vld [vmem:[%s0 + $0x1e8] sm:$0xf]
  %v137 = vld [vmem:[%s0 + $0x1ec] sm:$0xf]
  %v138 = vld [vmem:[%s0 + $0x1f0] sm:$0xf]
  %v139 = vld [vmem:[%s0 + $0x1f4] sm:$0xf]
  %v140 = vld [vmem:[%s0 + $0x1f8] sm:$0xf]
  %v141 = vld [vmem:[%s0 + $0x1fc] sm:$0xf]
  %v142 = vld [vmem:[%s0 + $0x200] sm:$0xf]
  %v143 = vld [vmem:[%s0 + $0x204] sm:$0xf]
  %v144 = vld [vmem:[%s0 + $0x208] sm:$0xf]
  %v145 = vld [vmem:[%s0 + $0x20c] sm:$0xf]
  %v146 = vld [vmem:[%s0 + $0x210] sm:$0xf]
  %v147 = vld [vmem:[%s0 + $0x214] sm:$0xf]
  %v148 = vld [vmem:[%s0 + $0x218] sm:$0xf]
  %v149 = vld [vmem:[%s0 + $0x21c] sm:$0xf]
  %v150 = vld [vmem:[%s0 + $0x220] sm:$0xf]
  %v151 = vld [vmem:[%s0 + $0x224] sm:$0xf]
  %v152 = vld [vmem:[%s0 + $0x228] sm:$0xf]
  %v153 = vld [vmem:[%s0 + $0x22c] sm:$0xf]
  %v154 = vld [vmem:[%s0 + $0x230] sm:$0xf]
  %v155 = vld [vmem:[%s0 + $0x234] sm:$0xf]
  %v156 = vld [vmem:[%s0 + $0x238] sm:$0xf]
  %v157 = vld [vmem:[%s0 + $0x23c] sm:$0xf]
  %v158 = vld [vmem:[%s0 + $0x240] sm:$0xf]
  %v159 = vld [vmem:[%s0 + $0x244] sm:$0xf]
  %v160 = vld [vmem:[%s0 + $0x248] sm:$0xf]
  %v161 = vld [vmem:[%s0 + $0x24c] sm:$0xf]
  %v162 = vld [vmem:[%s0 + $0x250] sm:$0xf]
  %v163 = vld [vmem:[%s0 + $0x254] sm:$0xf]
  %v164 = vld [vmem:[%s0 + $0x258] sm:$0xf]
  %v165 = vld [vmem:[%s0 + $0x25c] sm:$0xf]
  %v166 = vld [vmem:[%s0 + $0x260] sm:$0xf]
  %v167 = vld [vmem:[%s0 + $0x264] sm:$0xf]
  %v168 = vld [vmem:[%s0 + $0x268] sm:$0xf]
  %v169 = vld [vmem:[%s0 + $0x26c] sm:$0xf]
  %v170 = vld [vmem:[%s0 + $0x270] sm:$0xf]
  %v171 = vld [vmem:[%s0 + $0x274] sm:$0xf]
  %v172 = vld [vmem:[%s0 + $0x278] sm:$0xf]
  %v173 = vld [vmem:[%s0 + $0x27c] sm:$0xf]
  %v174 = vld [vmem:[%s0 + $0x280] sm:$0xf]
  %v175 = vld [vmem:[%s0 + $0x284] sm:$0xf]
  %v176 = vld [vmem:[%s0 + $0x288] sm:$0xf]
  %v177 = vld [vmem:[%s0 + $0x28c] sm:$0xf]
  %v178 = vld [vmem:[%s0 + $0x290] sm:$0xf]
  %v179 = vld [vmem:[%s0 + $0x294] sm:$0xf]
  %v180 = vld [vmem:[%s0 + $0x298] sm:$0xf]
  %v181 = vld [vmem:[%s0 + $0x29c] sm:$0xf]
  %v182 = vld [vmem:[%s0 + $0x2a0] sm:$0xf]
  %v183 = vld [vmem:[%s0 + $0x2a4] sm:$0xf]
  %v184 = vld [vmem:[%s0 + $0x2a8] sm:$0xf]
  %v185 = vld [vmem:[%s0 + $0x2ac] sm:$0xf]
  %v186 = vld [vmem:[%s0 + $0x2b0] sm:$0xf]
  %v187 = vld [vmem:[%s0 + $0x2b4] sm:$0xf]
  %v188 = vld [vmem:[%s0 + $0x2b8] sm:$0xf]
  %v189 = vld [vmem:[%s0 + $0x2bc] sm:$0xf]
  %v190 = vld [vmem:[%s0 + $0x2c0] sm:$0xf]
  %v191 = vld [vmem:[%s0 + $0x2c4] sm:$0xf]
  %v192 = vld [vmem:[%s0 + $0x2c8] sm:$0xf]
  %v193 = vld [vmem:[%s0 + $0x2cc] sm:$0xf]
  %v194 = vld [vmem:[%s0 + $0x2d0] sm:$0xf]
  %v195 = vld [vmem:[%s0 + $0x2d4] sm:$0xf]
  %v196 = vld [vmem:[%s0 + $0x2d8] sm:$0xf]
  %v197 = vld [vmem:[%s0 + $0x2dc] sm:$0xf]
  %v198 = vld [vmem:[%s0 + $0x2e0] sm:$0xf]
  %v199 = vld [vmem:[%s0 + $0x2e4] sm:$0xf]
  %v200 = vld [vmem:[%s0 + $0x2e8] sm:$0xf]
  %v201 = vld [vmem:[%s0 + $0x2ec] sm:$0xf]
  %v202 = vld [vmem:[%s0 + $0x2f0] sm:$0xf]
  %v203 = vld [vmem:[%s0 + $0x2f4] sm:$0xf]
  %v204 = vld [vmem:[%s0 + $0x2f8] sm:$0xf]
  %v205 = vld [vmem:[%s0 + $0x2fc] sm:$0xf]
  %v206 = vld [vmem:[%s0 + $0x300] sm:$0xf]
  %v207 = vld [vmem:[%s0 + $0x304] sm:$0xf]
  %v208 = vld [vmem:[%s0 + $0x308] sm:$0xf]
  %v209 = vld [vmem:[%s0 + $0x30c] sm:$0xf]
  %v210 = vld [vmem:[%s0 + $0x310] sm:$0xf]
  %v211 = vld [vmem:[%s0 + $0x314] sm:$0xf]
  %v212 = vld [vmem:[%s0 + $0x318] sm:$0xf]
  %v213 = vld [vmem:[%s0 + $0x31c] sm:$0xf]
  %v214 = vld [vmem:[%s0 + $0x320] sm:$0xf]
  %v215 = vld [vmem:[%s0 + $0x324] sm:$0xf]
  %v216 = vld [vmem:[%s0 + $0x328] sm:$0xf]
  %v217 = vld [vmem:[%s0 + $0x32c] sm:$0xf]
  %v218 = vld [vmem:[%s0 + $0x330] sm:$0xf]
  %v219 = vld [vmem:[%s0 + $0x334] sm:$0xf]
  %v220 = vld [vmem:[%s0 + $0x338] sm:$0xf]
  %v221 = vld [vmem:[%s0 + $0x33c] sm:$0xf]
  %v222 = vld [vmem:[%s0 + $0x340] sm:$0xf]
  %v223 = vld [vmem:[%s0 + $0x344] sm:$0xf]
  %v224 = vld [vmem:[%s0 + $0x348] sm:$0xf]
  %v225 = vld [vmem:[%s0 + $0x34c] sm:$0xf]
  %v226 = vld [vmem:[%s0 + $0x350] sm:$0xf]
  %v227 = vld [vmem:[%s0 + $0x354] sm:$0xf]
  %v228 = vld [vmem:[%s0 + $0x358] sm:$0xf]
  %v229 = vld [vmem:[%s0 + $0x35c] sm:$0xf]
  %v230 = vld [vmem:[%s0 + $0x360] sm:$0xf]
  %v231 = vld [vmem:[%s0 + $0x364] sm:$0xf]
  %v232 = vld [vmem:[%s0 + $0x368] sm:$0xf]
  %v233 = vld [vmem:[%s0 + $0x36c] sm:$0xf]
  %v234 = vld [vmem:[%s0 + $0x370] sm:$0xf]
  %v235 = vld [vmem:[%s0 + $0x374] sm:$0xf]
  %v236 = vld [vmem:[%s0 + $0x378] sm:$0xf]
  %v237 = vld [vmem:[%s0 + $0x37c] sm:$0xf]
  %v238 = vld [vmem:[%s0 + $0x380] sm:$0xf]
  %v239 = vld [vmem:[%s0 + $0x384] sm:$0xf]
  %v240 = vld [vmem:[%s0 + $0x388] sm:$0xf]
  %v241 = vld [vmem:[%s0 + $0x38c] sm:$0xf]
  %v242 = vld [vmem:[%s0 + $0x390] sm:$0xf]
  %v243 = vld [vmem:[%s0 + $0x394] sm:$0xf]
  %v244 = vld [vmem:[%s0 + $0x398] sm:$0xf]
  %v245 = vld [vmem:[%s0 + $0x39c] sm:$0xf]
  %v246 = vld [vmem:[%s0 + $0x3a0] sm:$0xf]
  %v247 = vld [vmem:[%s0 + $0x3a4] sm:$0xf]
  %v248 = vld [vmem:[%s0 + $0x3a8] sm:$0xf]
  %v249 = vld [vmem:[%s0 + $0x3ac] sm:$0xf]
  %v250 = vld [vmem:[%s0 + $0x3b0] sm:$0xf]
  %v251 = vld [vmem:[%s0 + $0x3b4] sm:$0xf]
  %v252 = vld [vmem:[%s0 + $0x3b8] sm:$0xf]
  %v253 = vld [vmem:[%s0 + $0x3bc] sm:$0xf]
  %v254 = vld [vmem:[%s0 + $0x3c0] sm:$0xf]
  %v255 = vld [vmem:[%s0 + $0x3c4] sm:$0xf]
  %v256 = vld [vmem:[%s0 + $0x3c8] sm:$0xf]
  %v257 = vld [vmem:[%s0 + $0x3cc] sm:$0xf]
  %v258 = vld [vmem:[%s0 + $0x3d0] sm:$0xf]
  %v259 = vld [vmem:[%s0 + $0x3d4] sm:$0xf]
  %v260 = vld [vmem:[%s0 + $0x3d8] sm:$0xf]
  %v261 = vld [vmem:[%s0 + $0x3dc] sm:$0xf]
  %v262 = vld [vmem:[%s0 + $0x3e0] sm:$0xf]
  %v263 = vld [vmem:[%s0 + $0x3e4] sm:$0xf]
  %v264 = vld [vmem:[%s0 + $0x3e8] sm:$0xf]
  %v265 = vld [vmem:[%s0 + $0x3ec] sm:$0xf]
  %v266 = vld [vmem:[%s0 + $0x3f0] sm:$0xf]
  %v267 = vld [vmem:[%s0 + $0x3f4] sm:$0xf]
  %v268 = vld [vmem:[%s0 + $0x3f8] sm:$0xf]
  %v269 = vld [vmem:[%s0 + $0x3fc] sm:$0xf]
  %v270 = vunpack.c.l.bf16 %v14
  %v271 = vunpack.c.l.bf16 %v15
  %v272 = vunpack.c.l.bf16 %v16
  %v273 = vunpack.c.l.bf16 %v17
  %v274 = vunpack.c.l.bf16 %v18
  %v275 = vunpack.c.l.bf16 %v19
  %v276 = vunpack.c.l.bf16 %v20
  %v277 = vunpack.c.l.bf16 %v21
  %v278 = vunpack.c.l.bf16 %v22
  %v279 = vunpack.c.l.bf16 %v23
  %v280 = vunpack.c.l.bf16 %v24
  %v281 = vunpack.c.l.bf16 %v25
  %v282 = vunpack.c.l.bf16 %v26
  %v283 = vunpack.c.l.bf16 %v27
  %v284 = vunpack.c.l.bf16 %v28
  %v285 = vunpack.c.l.bf16 %v29
  %v286 = vunpack.c.l.bf16 %v30
  %v287 = vunpack.c.l.bf16 %v31
  %v288 = vunpack.c.l.bf16 %v32
  %v289 = vunpack.c.l.bf16 %v33
  %v290 = vunpack.c.l.bf16 %v34
  %v291 = vunpack.c.l.bf16 %v35
  %v292 = vunpack.c.l.bf16 %v36
  %v293 = vunpack.c.l.bf16 %v37
  %v294 = vunpack.c.l.bf16 %v38
  %v295 = vunpack.c.l.bf16 %v39
  %v296 = vunpack.c.l.bf16 %v40
  %v297 = vunpack.c.l.bf16 %v41
  %v298 = vunpack.c.l.bf16 %v42
  %v299 = vunpack.c.l.bf16 %v43
  %v300 = vunpack.c.l.bf16 %v44
  %v301 = vunpack.c.l.bf16 %v45
  %v302 = vunpack.c.l.bf16 %v46
  %v303 = vunpack.c.l.bf16 %v47
  %v304 = vunpack.c.l.bf16 %v48
  %v305 = vunpack.c.l.bf16 %v49
  %v306 = vunpack.c.l.bf16 %v50
  %v307 = vunpack.c.l.bf16 %v51
  %v308 = vunpack.c.l.bf16 %v52
  %v309 = vunpack.c.l.bf16 %v53
  %v310 = vunpack.c.l.bf16 %v54
  %v311 = vunpack.c.l.bf16 %v55
  %v312 = vunpack.c.l.bf16 %v56
  %v313 = vunpack.c.l.bf16 %v57
  %v314 = vunpack.c.l.bf16 %v58
  %v315 = vunpack.c.l.bf16 %v59
  %v316 = vunpack.c.l.bf16 %v60
  %v317 = vunpack.c.l.bf16 %v61
  %v318 = vunpack.c.l.bf16 %v62
  %v319 = vunpack.c.l.bf16 %v63
  %v320 = vunpack.c.l.bf16 %v64
  %v321 = vunpack.c.l.bf16 %v65
  %v322 = vunpack.c.l.bf16 %v66
  %v323 = vunpack.c.l.bf16 %v67
  %v324 = vunpack.c.l.bf16 %v68
  %v325 = vunpack.c.l.bf16 %v69
  %v326 = vunpack.c.l.bf16 %v70
  %v327 = vunpack.c.l.bf16 %v71
  %v328 = vunpack.c.l.bf16 %v72
  %v329 = vunpack.c.l.bf16 %v73
  %v330 = vunpack.c.l.bf16 %v74
  %v331 = vunpack.c.l.bf16 %v75
  %v332 = vunpack.c.l.bf16 %v76
  %v333 = vunpack.c.l.bf16 %v77
  %v334 = vunpack.c.l.bf16 %v78
  %v335 = vunpack.c.l.bf16 %v79
  %v336 = vunpack.c.l.bf16 %v80
  %v337 = vunpack.c.l.bf16 %v81
  %v338 = vunpack.c.l.bf16 %v82
  %v339 = vunpack.c.l.bf16 %v83
  %v340 = vunpack.c.l.bf16 %v84
  %v341 = vunpack.c.l.bf16 %v85
  %v342 = vunpack.c.l.bf16 %v86
  %v343 = vunpack.c.l.bf16 %v87
  %v344 = vunpack.c.l.bf16 %v88
  %v345 = vunpack.c.l.bf16 %v89
  %v346 = vunpack.c.l.bf16 %v90
  %v347 = vunpack.c.l.bf16 %v91
  %v348 = vunpack.c.l.bf16 %v92
  %v349 = vunpack.c.l.bf16 %v93
  %v350 = vunpack.c.l.bf16 %v94
  %v351 = vunpack.c.l.bf16 %v95
  %v352 = vunpack.c.l.bf16 %v96
  %v353 = vunpack.c.l.bf16 %v97
  %v354 = vunpack.c.l.bf16 %v98
  %v355 = vunpack.c.l.bf16 %v99
  %v356 = vunpack.c.l.bf16 %v100
  %v357 = vunpack.c.l.bf16 %v101
  %v358 = vunpack.c.l.bf16 %v102
  %v359 = vunpack.c.l.bf16 %v103
  %v360 = vunpack.c.l.bf16 %v104
  %v361 = vunpack.c.l.bf16 %v105
  %v362 = vunpack.c.l.bf16 %v106
  %v363 = vunpack.c.l.bf16 %v107
  %v364 = vunpack.c.l.bf16 %v108
  %v365 = vunpack.c.l.bf16 %v109
  %v366 = vunpack.c.l.bf16 %v110
  %v367 = vunpack.c.l.bf16 %v111
  %v368 = vunpack.c.l.bf16 %v112
  %v369 = vunpack.c.l.bf16 %v113
  %v370 = vunpack.c.l.bf16 %v114
  %v371 = vunpack.c.l.bf16 %v115
  %v372 = vunpack.c.l.bf16 %v116
  %v373 = vunpack.c.l.bf16 %v117
  %v374 = vunpack.c.l.bf16 %v118
  %v375 = vunpack.c.l.bf16 %v119
  %v376 = vunpack.c.l.bf16 %v120
  %v377 = vunpack.c.l.bf16 %v121
  %v378 = vunpack.c.l.bf16 %v122
  %v379 = vunpack.c.l.bf16 %v123
  %v380 = vunpack.c.l.bf16 %v124
  %v381 = vunpack.c.l.bf16 %v125
  %v382 = vunpack.c.l.bf16 %v126
  %v383 = vunpack.c.l.bf16 %v127
  %v384 = vunpack.c.l.bf16 %v128
  %v385 = vunpack.c.l.bf16 %v129
  %v386 = vunpack.c.l.bf16 %v130
  %v387 = vunpack.c.l.bf16 %v131
  %v388 = vunpack.c.l.bf16 %v132
  %v389 = vunpack.c.l.bf16 %v133
  %v390 = vunpack.c.l.bf16 %v134
  %v391 = vunpack.c.l.bf16 %v135
  %v392 = vunpack.c.l.bf16 %v136
  %v393 = vunpack.c.l.bf16 %v137
  %v394 = vunpack.c.l.bf16 %v138
  %v395 = vunpack.c.l.bf16 %v139
  %v396 = vunpack.c.l.bf16 %v140
  %v397 = vunpack.c.l.bf16 %v141
  %v398 = vunpack.c.l.bf16 %v142
  %v399 = vunpack.c.l.bf16 %v143
  %v400 = vunpack.c.l.bf16 %v144
  %v401 = vunpack.c.l.bf16 %v145
  %v402 = vunpack.c.l.bf16 %v146
  %v403 = vunpack.c.l.bf16 %v147
  %v404 = vunpack.c.l.bf16 %v148
  %v405 = vunpack.c.l.bf16 %v149
  %v406 = vunpack.c.l.bf16 %v150
  %v407 = vunpack.c.l.bf16 %v151
  %v408 = vunpack.c.l.bf16 %v152
  %v409 = vunpack.c.l.bf16 %v153
  %v410 = vunpack.c.l.bf16 %v154
  %v411 = vunpack.c.l.bf16 %v155
  %v412 = vunpack.c.l.bf16 %v156
  %v413 = vunpack.c.l.bf16 %v157
  %v414 = vunpack.c.l.bf16 %v158
  %v415 = vunpack.c.l.bf16 %v159
  %v416 = vunpack.c.l.bf16 %v160
  %v417 = vunpack.c.l.bf16 %v161
  %v418 = vunpack.c.l.bf16 %v162
  %v419 = vunpack.c.l.bf16 %v163
  %v420 = vunpack.c.l.bf16 %v164
  %v421 = vunpack.c.l.bf16 %v165
  %v422 = vunpack.c.l.bf16 %v166
  %v423 = vunpack.c.l.bf16 %v167
  %v424 = vunpack.c.l.bf16 %v168
  %v425 = vunpack.c.l.bf16 %v169
  %v426 = vunpack.c.l.bf16 %v170
  %v427 = vunpack.c.l.bf16 %v171
  %v428 = vunpack.c.l.bf16 %v172
  %v429 = vunpack.c.l.bf16 %v173
  %v430 = vunpack.c.l.bf16 %v174
  %v431 = vunpack.c.l.bf16 %v175
  %v432 = vunpack.c.l.bf16 %v176
  %v433 = vunpack.c.l.bf16 %v177
  %v434 = vunpack.c.l.bf16 %v178
  %v435 = vunpack.c.l.bf16 %v179
  %v436 = vunpack.c.l.bf16 %v180
  %v437 = vunpack.c.l.bf16 %v181
  %v438 = vunpack.c.l.bf16 %v182
  %v439 = vunpack.c.l.bf16 %v183
  %v440 = vunpack.c.l.bf16 %v184
  %v441 = vunpack.c.l.bf16 %v185
  %v442 = vunpack.c.l.bf16 %v186
  %v443 = vunpack.c.l.bf16 %v187
  %v444 = vunpack.c.l.bf16 %v188
  %v445 = vunpack.c.l.bf16 %v189
  %v446 = vunpack.c.l.bf16 %v190
  %v447 = vunpack.c.l.bf16 %v191
  %v448 = vunpack.c.l.bf16 %v192
  %v449 = vunpack.c.l.bf16 %v193
  %v450 = vunpack.c.l.bf16 %v194
  %v451 = vunpack.c.l.bf16 %v195
  %v452 = vunpack.c.l.bf16 %v196
  %v453 = vunpack.c.l.bf16 %v197
  %v454 = vunpack.c.l.bf16 %v198
  %v455 = vunpack.c.l.bf16 %v199
  %v456 = vunpack.c.l.bf16 %v200
  %v457 = vunpack.c.l.bf16 %v201
  %v458 = vunpack.c.l.bf16 %v202
  %v459 = vunpack.c.l.bf16 %v203
  %v460 = vunpack.c.l.bf16 %v204
  %v461 = vunpack.c.l.bf16 %v205
  %v462 = vunpack.c.l.bf16 %v206
  %v463 = vunpack.c.l.bf16 %v207
  %v464 = vunpack.c.l.bf16 %v208
  %v465 = vunpack.c.l.bf16 %v209
  %v466 = vunpack.c.l.bf16 %v210
  %v467 = vunpack.c.l.bf16 %v211
  %v468 = vunpack.c.l.bf16 %v212
  %v469 = vunpack.c.l.bf16 %v213
  %v470 = vunpack.c.l.bf16 %v214
  %v471 = vunpack.c.l.bf16 %v215
  %v472 = vunpack.c.l.bf16 %v216
  %v473 = vunpack.c.l.bf16 %v217
  %v474 = vunpack.c.l.bf16 %v218
  %v475 = vunpack.c.l.bf16 %v219
  %v476 = vunpack.c.l.bf16 %v220
  %v477 = vunpack.c.l.bf16 %v221
  %v478 = vunpack.c.l.bf16 %v222
  %v479 = vunpack.c.l.bf16 %v223
  %v480 = vunpack.c.l.bf16 %v224
  %v481 = vunpack.c.l.bf16 %v225
  %v482 = vunpack.c.l.bf16 %v226
  %v483 = vunpack.c.l.bf16 %v227
  %v484 = vunpack.c.l.bf16 %v228
  %v485 = vunpack.c.l.bf16 %v229
  %v486 = vunpack.c.l.bf16 %v230
  %v487 = vunpack.c.l.bf16 %v231
  %v488 = vunpack.c.l.bf16 %v232
  %v489 = vunpack.c.l.bf16 %v233
  %v490 = vunpack.c.l.bf16 %v234
  %v491 = vunpack.c.l.bf16 %v235
  %v492 = vunpack.c.l.bf16 %v236
  %v493 = vunpack.c.l.bf16 %v237
  %v494 = vunpack.c.l.bf16 %v238
  %v495 = vunpack.c.l.bf16 %v239
  %v496 = vunpack.c.l.bf16 %v240
  %v497 = vunpack.c.l.bf16 %v241
  %v498 = vunpack.c.l.bf16 %v242
  %v499 = vunpack.c.l.bf16 %v243
  %v500 = vunpack.c.l.bf16 %v244
  %v501 = vunpack.c.l.bf16 %v245
  %v502 = vunpack.c.l.bf16 %v246
  %v503 = vunpack.c.l.bf16 %v247
  %v504 = vunpack.c.l.bf16 %v248
  %v505 = vunpack.c.l.bf16 %v249
  %v506 = vunpack.c.l.bf16 %v250
  %v507 = vunpack.c.l.bf16 %v251
  %v508 = vunpack.c.l.bf16 %v252
  %v509 = vunpack.c.l.bf16 %v253
  %v510 = vunpack.c.l.bf16 %v254
  %v511 = vunpack.c.l.bf16 %v255
  %v512 = vunpack.c.l.bf16 %v256
  %v513 = vunpack.c.l.bf16 %v257
  %v514 = vunpack.c.l.bf16 %v258
  %v515 = vunpack.c.l.bf16 %v259
  %v516 = vunpack.c.l.bf16 %v260
  %v517 = vunpack.c.l.bf16 %v261
  %v518 = vunpack.c.l.bf16 %v262
  %v519 = vunpack.c.l.bf16 %v263
  %v520 = vunpack.c.l.bf16 %v264
  %v521 = vunpack.c.l.bf16 %v265
  %v522 = vunpack.c.l.bf16 %v266
  %v523 = vunpack.c.l.bf16 %v267
  %v524 = vunpack.c.l.bf16 %v268
  %v525 = vunpack.c.l.bf16 %v269
  %v526 = vld [vmem:[%s1] sm:$0x1]
  %v528 = vlaneseq
  %v529 = vshrl.u32 %v528, 7
  %v530 = vsub.s32 0, %v529
  %v531 = vrot.slane %v526, %v530
  %v533 = vmul.f32 %v270, %v531
  %v534 = vmul.f32 %v271, %v531
  %v535 = vmul.f32 %v272, %v531
  %v536 = vmul.f32 %v273, %v531
  %v537 = vmul.f32 %v274, %v531
  %v538 = vmul.f32 %v275, %v531
  %v539 = vmul.f32 %v276, %v531
  %v540 = vmul.f32 %v277, %v531
  %v541 = vmul.f32 %v278, %v531
  %v542 = vmul.f32 %v279, %v531
  %v543 = vmul.f32 %v280, %v531
  %v544 = vmul.f32 %v281, %v531
  %v545 = vmul.f32 %v282, %v531
  %v546 = vmul.f32 %v283, %v531
  %v547 = vmul.f32 %v284, %v531
  %v548 = vmul.f32 %v285, %v531
  %v549 = vmul.f32 %v286, %v531
  %v550 = vmul.f32 %v287, %v531
  %v551 = vmul.f32 %v288, %v531
  %v552 = vmul.f32 %v289, %v531
  %v553 = vmul.f32 %v290, %v531
  %v554 = vmul.f32 %v291, %v531
  %v555 = vmul.f32 %v292, %v531
  %v556 = vmul.f32 %v293, %v531
  %v557 = vmul.f32 %v294, %v531
  %v558 = vmul.f32 %v295, %v531
  %v559 = vmul.f32 %v296, %v531
  %v560 = vmul.f32 %v297, %v531
  %v561 = vmul.f32 %v298, %v531
  %v562 = vmul.f32 %v299, %v531
  %v563 = vmul.f32 %v300, %v531
  %v564 = vmul.f32 %v301, %v531
  %v565 = vmul.f32 %v302, %v531
  %v566 = vmul.f32 %v303, %v531
  %v567 = vmul.f32 %v304, %v531
  %v568 = vmul.f32 %v305, %v531
  %v569 = vmul.f32 %v306, %v531
  %v570 = vmul.f32 %v307, %v531
  %v571 = vmul.f32 %v308, %v531
  %v572 = vmul.f32 %v309, %v531
  %v573 = vmul.f32 %v310, %v531
  %v574 = vmul.f32 %v311, %v531
  %v575 = vmul.f32 %v312, %v531
  %v576 = vmul.f32 %v313, %v531
  %v577 = vmul.f32 %v314, %v531
  %v578 = vmul.f32 %v315, %v531
  %v579 = vmul.f32 %v316, %v531
  %v580 = vmul.f32 %v317, %v531
  %v581 = vmul.f32 %v318, %v531
  %v582 = vmul.f32 %v319, %v531
  %v583 = vmul.f32 %v320, %v531
  %v584 = vmul.f32 %v321, %v531
  %v585 = vmul.f32 %v322, %v531
  %v586 = vmul.f32 %v323, %v531
  %v587 = vmul.f32 %v324, %v531
  %v588 = vmul.f32 %v325, %v531
  %v589 = vmul.f32 %v326, %v531
  %v590 = vmul.f32 %v327, %v531
  %v591 = vmul.f32 %v328, %v531
  %v592 = vmul.f32 %v329, %v531
  %v593 = vmul.f32 %v330, %v531
  %v594 = vmul.f32 %v331, %v531
  %v595 = vmul.f32 %v332, %v531
  %v596 = vmul.f32 %v333, %v531
  %v597 = vmul.f32 %v334, %v531
  %v598 = vmul.f32 %v335, %v531
  %v599 = vmul.f32 %v336, %v531
  %v600 = vmul.f32 %v337, %v531
  %v601 = vmul.f32 %v338, %v531
  %v602 = vmul.f32 %v339, %v531
  %v603 = vmul.f32 %v340, %v531
  %v604 = vmul.f32 %v341, %v531
  %v605 = vmul.f32 %v342, %v531
  %v606 = vmul.f32 %v343, %v531
  %v607 = vmul.f32 %v344, %v531
  %v608 = vmul.f32 %v345, %v531
  %v609 = vmul.f32 %v346, %v531
  %v610 = vmul.f32 %v347, %v531
  %v611 = vmul.f32 %v348, %v531
  %v612 = vmul.f32 %v349, %v531
  %v613 = vmul.f32 %v350, %v531
  %v614 = vmul.f32 %v351, %v531
  %v615 = vmul.f32 %v352, %v531
  %v616 = vmul.f32 %v353, %v531
  %v617 = vmul.f32 %v354, %v531
  %v618 = vmul.f32 %v355, %v531
  %v619 = vmul.f32 %v356, %v531
  %v620 = vmul.f32 %v357, %v531
  %v621 = vmul.f32 %v358, %v531
  %v622 = vmul.f32 %v359, %v531
  %v623 = vmul.f32 %v360, %v531
  %v624 = vmul.f32 %v361, %v531
  %v625 = vmul.f32 %v362, %v531
  %v626 = vmul.f32 %v363, %v531
  %v627 = vmul.f32 %v364, %v531
  %v628 = vmul.f32 %v365, %v531
  %v629 = vmul.f32 %v366, %v531
  %v630 = vmul.f32 %v367, %v531
  %v631 = vmul.f32 %v368, %v531
  %v632 = vmul.f32 %v369, %v531
  %v633 = vmul.f32 %v370, %v531
  %v634 = vmul.f32 %v371, %v531
  %v635 = vmul.f32 %v372, %v531
  %v636 = vmul.f32 %v373, %v531
  %v637 = vmul.f32 %v374, %v531
  %v638 = vmul.f32 %v375, %v531
  %v639 = vmul.f32 %v376, %v531
  %v640 = vmul.f32 %v377, %v531
  %v641 = vmul.f32 %v378, %v531
  %v642 = vmul.f32 %v379, %v531
  %v643 = vmul.f32 %v380, %v531
  %v644 = vmul.f32 %v381, %v531
  %v645 = vmul.f32 %v382, %v531
  %v646 = vmul.f32 %v383, %v531
  %v647 = vmul.f32 %v384, %v531
  %v648 = vmul.f32 %v385, %v531
  %v649 = vmul.f32 %v386, %v531
  %v650 = vmul.f32 %v387, %v531
  %v651 = vmul.f32 %v388, %v531
  %v652 = vmul.f32 %v389, %v531
  %v653 = vmul.f32 %v390, %v531
  %v654 = vmul.f32 %v391, %v531
  %v655 = vmul.f32 %v392, %v531
  %v656 = vmul.f32 %v393, %v531
  %v657 = vmul.f32 %v394, %v531
  %v658 = vmul.f32 %v395, %v531
  %v659 = vmul.f32 %v396, %v531
  %v660 = vmul.f32 %v397, %v531
  %v661 = vmul.f32 %v398, %v531
  %v662 = vmul.f32 %v399, %v531
  %v663 = vmul.f32 %v400, %v531
  %v664 = vmul.f32 %v401, %v531
  %v665 = vmul.f32 %v402, %v531
  %v666 = vmul.f32 %v403, %v531
  %v667 = vmul.f32 %v404, %v531
  %v668 = vmul.f32 %v405, %v531
  %v669 = vmul.f32 %v406, %v531
  %v670 = vmul.f32 %v407, %v531
  %v671 = vmul.f32 %v408, %v531
  %v672 = vmul.f32 %v409, %v531
  %v673 = vmul.f32 %v410, %v531
  %v674 = vmul.f32 %v411, %v531
  %v675 = vmul.f32 %v412, %v531
  %v676 = vmul.f32 %v413, %v531
  %v677 = vmul.f32 %v414, %v531
  %v678 = vmul.f32 %v415, %v531
  %v679 = vmul.f32 %v416, %v531
  %v680 = vmul.f32 %v417, %v531
  %v681 = vmul.f32 %v418, %v531
  %v682 = vmul.f32 %v419, %v531
  %v683 = vmul.f32 %v420, %v531
  %v684 = vmul.f32 %v421, %v531
  %v685 = vmul.f32 %v422, %v531
  %v686 = vmul.f32 %v423, %v531
  %v687 = vmul.f32 %v424, %v531
  %v688 = vmul.f32 %v425, %v531
  %v689 = vmul.f32 %v426, %v531
  %v690 = vmul.f32 %v427, %v531
  %v691 = vmul.f32 %v428, %v531
  %v692 = vmul.f32 %v429, %v531
  %v693 = vmul.f32 %v430, %v531
  %v694 = vmul.f32 %v431, %v531
  %v695 = vmul.f32 %v432, %v531
  %v696 = vmul.f32 %v433, %v531
  %v697 = vmul.f32 %v434, %v531
  %v698 = vmul.f32 %v435, %v531
  %v699 = vmul.f32 %v436, %v531
  %v700 = vmul.f32 %v437, %v531
  %v701 = vmul.f32 %v438, %v531
  %v702 = vmul.f32 %v439, %v531
  %v703 = vmul.f32 %v440, %v531
  %v704 = vmul.f32 %v441, %v531
  %v705 = vmul.f32 %v442, %v531
  %v706 = vmul.f32 %v443, %v531
  %v707 = vmul.f32 %v444, %v531
  %v708 = vmul.f32 %v445, %v531
  %v709 = vmul.f32 %v446, %v531
  %v710 = vmul.f32 %v447, %v531
  %v711 = vmul.f32 %v448, %v531
  %v712 = vmul.f32 %v449, %v531
  %v713 = vmul.f32 %v450, %v531
  %v714 = vmul.f32 %v451, %v531
  %v715 = vmul.f32 %v452, %v531
  %v716 = vmul.f32 %v453, %v531
  %v717 = vmul.f32 %v454, %v531
  %v718 = vmul.f32 %v455, %v531
  %v719 = vmul.f32 %v456, %v531
  %v720 = vmul.f32 %v457, %v531
  %v721 = vmul.f32 %v458, %v531
  %v722 = vmul.f32 %v459, %v531
  %v723 = vmul.f32 %v460, %v531
  %v724 = vmul.f32 %v461, %v531
  %v725 = vmul.f32 %v462, %v531
  %v726 = vmul.f32 %v463, %v531
  %v727 = vmul.f32 %v464, %v531
  %v728 = vmul.f32 %v465, %v531
  %v729 = vmul.f32 %v466, %v531
  %v730 = vmul.f32 %v467, %v531
  %v731 = vmul.f32 %v468, %v531
  %v732 = vmul.f32 %v469, %v531
  %v733 = vmul.f32 %v470, %v531
  %v734 = vmul.f32 %v471, %v531
  %v735 = vmul.f32 %v472, %v531
  %v736 = vmul.f32 %v473, %v531
  %v737 = vmul.f32 %v474, %v531
  %v738 = vmul.f32 %v475, %v531
  %v739 = vmul.f32 %v476, %v531
  %v740 = vmul.f32 %v477, %v531
  %v741 = vmul.f32 %v478, %v531
  %v742 = vmul.f32 %v479, %v531
  %v743 = vmul.f32 %v480, %v531
  %v744 = vmul.f32 %v481, %v531
  %v745 = vmul.f32 %v482, %v531
  %v746 = vmul.f32 %v483, %v531
  %v747 = vmul.f32 %v484, %v531
  %v748 = vmul.f32 %v485, %v531
  %v749 = vmul.f32 %v486, %v531
  %v750 = vmul.f32 %v487, %v531
  %v751 = vmul.f32 %v488, %v531
  %v752 = vmul.f32 %v489, %v531
  %v753 = vmul.f32 %v490, %v531
  %v754 = vmul.f32 %v491, %v531
  %v755 = vmul.f32 %v492, %v531
  %v756 = vmul.f32 %v493, %v531
  %v757 = vmul.f32 %v494, %v531
  %v758 = vmul.f32 %v495, %v531
  %v759 = vmul.f32 %v496, %v531
  %v760 = vmul.f32 %v497, %v531
  %v761 = vmul.f32 %v498, %v531
  %v762 = vmul.f32 %v499, %v531
  %v763 = vmul.f32 %v500, %v531
  %v764 = vmul.f32 %v501, %v531
  %v765 = vmul.f32 %v502, %v531
  %v766 = vmul.f32 %v503, %v531
  %v767 = vmul.f32 %v504, %v531
  %v768 = vmul.f32 %v505, %v531
  %v769 = vmul.f32 %v506, %v531
  %v770 = vmul.f32 %v507, %v531
  %v771 = vmul.f32 %v508, %v531
  %v772 = vmul.f32 %v509, %v531
  %v773 = vmul.f32 %v510, %v531
  %v774 = vmul.f32 %v511, %v531
  %v775 = vmul.f32 %v512, %v531
  %v776 = vmul.f32 %v513, %v531
  %v777 = vmul.f32 %v514, %v531
  %v778 = vmul.f32 %v515, %v531
  %v779 = vmul.f32 %v516, %v531
  %v780 = vmul.f32 %v517, %v531
  %v781 = vmul.f32 %v518, %v531
  %v782 = vmul.f32 %v519, %v531
  %v783 = vmul.f32 %v520, %v531
  %v784 = vmul.f32 %v521, %v531
  %v785 = vmul.f32 %v522, %v531
  %v786 = vmul.f32 %v523, %v531
  %v787 = vmul.f32 %v524, %v531
  %v788 = vmul.f32 %v525, %v531
  %v789 = vld [vmem:[%s2] sm:$0x1]
  %v791 = vlaneseq
  %v792 = vshrl.u32 %v791, 7
  %v793 = vsub.s32 0, %v792
  %v794 = vrot.slane %v789, %v793
  %v796 = vadd.f32 %v533, %v794
  %v797 = vadd.f32 %v534, %v794
  %v798 = vadd.f32 %v535, %v794
  %v799 = vadd.f32 %v536, %v794
  %v800 = vadd.f32 %v537, %v794
  %v801 = vadd.f32 %v538, %v794
  %v802 = vadd.f32 %v539, %v794
  %v803 = vadd.f32 %v540, %v794
  %v804 = vadd.f32 %v541, %v794
  %v805 = vadd.f32 %v542, %v794
  %v806 = vadd.f32 %v543, %v794
  %v807 = vadd.f32 %v544, %v794
  %v808 = vadd.f32 %v545, %v794
  %v809 = vadd.f32 %v546, %v794
  %v810 = vadd.f32 %v547, %v794
  %v811 = vadd.f32 %v548, %v794
  %v812 = vadd.f32 %v549, %v794
  %v813 = vadd.f32 %v550, %v794
  %v814 = vadd.f32 %v551, %v794
  %v815 = vadd.f32 %v552, %v794
  %v816 = vadd.f32 %v553, %v794
  %v817 = vadd.f32 %v554, %v794
  %v818 = vadd.f32 %v555, %v794
  %v819 = vadd.f32 %v556, %v794
  %v820 = vadd.f32 %v557, %v794
  %v821 = vadd.f32 %v558, %v794
  %v822 = vadd.f32 %v559, %v794
  %v823 = vadd.f32 %v560, %v794
  %v824 = vadd.f32 %v561, %v794
  %v825 = vadd.f32 %v562, %v794
  %v826 = vadd.f32 %v563, %v794
  %v827 = vadd.f32 %v564, %v794
  %v828 = vadd.f32 %v565, %v794
  %v829 = vadd.f32 %v566, %v794
  %v830 = vadd.f32 %v567, %v794
  %v831 = vadd.f32 %v568, %v794
  %v832 = vadd.f32 %v569, %v794
  %v833 = vadd.f32 %v570, %v794
  %v834 = vadd.f32 %v571, %v794
  %v835 = vadd.f32 %v572, %v794
  %v836 = vadd.f32 %v573, %v794
  %v837 = vadd.f32 %v574, %v794
  %v838 = vadd.f32 %v575, %v794
  %v839 = vadd.f32 %v576, %v794
  %v840 = vadd.f32 %v577, %v794
  %v841 = vadd.f32 %v578, %v794
  %v842 = vadd.f32 %v579, %v794
  %v843 = vadd.f32 %v580, %v794
  %v844 = vadd.f32 %v581, %v794
  %v845 = vadd.f32 %v582, %v794
  %v846 = vadd.f32 %v583, %v794
  %v847 = vadd.f32 %v584, %v794
  %v848 = vadd.f32 %v585, %v794
  %v849 = vadd.f32 %v586, %v794
  %v850 = vadd.f32 %v587, %v794
  %v851 = vadd.f32 %v588, %v794
  %v852 = vadd.f32 %v589, %v794
  %v853 = vadd.f32 %v590, %v794
  %v854 = vadd.f32 %v591, %v794
  %v855 = vadd.f32 %v592, %v794
  %v856 = vadd.f32 %v593, %v794
  %v857 = vadd.f32 %v594, %v794
  %v858 = vadd.f32 %v595, %v794
  %v859 = vadd.f32 %v596, %v794
  %v860 = vadd.f32 %v597, %v794
  %v861 = vadd.f32 %v598, %v794
  %v862 = vadd.f32 %v599, %v794
  %v863 = vadd.f32 %v600, %v794
  %v864 = vadd.f32 %v601, %v794
  %v865 = vadd.f32 %v602, %v794
  %v866 = vadd.f32 %v603, %v794
  %v867 = vadd.f32 %v604, %v794
  %v868 = vadd.f32 %v605, %v794
  %v869 = vadd.f32 %v606, %v794
  %v870 = vadd.f32 %v607, %v794
  %v871 = vadd.f32 %v608, %v794
  %v872 = vadd.f32 %v609, %v794
  %v873 = vadd.f32 %v610, %v794
  %v874 = vadd.f32 %v611, %v794
  %v875 = vadd.f32 %v612, %v794
  %v876 = vadd.f32 %v613, %v794
  %v877 = vadd.f32 %v614, %v794
  %v878 = vadd.f32 %v615, %v794
  %v879 = vadd.f32 %v616, %v794
  %v880 = vadd.f32 %v617, %v794
  %v881 = vadd.f32 %v618, %v794
  %v882 = vadd.f32 %v619, %v794
  %v883 = vadd.f32 %v620, %v794
  %v884 = vadd.f32 %v621, %v794
  %v885 = vadd.f32 %v622, %v794
  %v886 = vadd.f32 %v623, %v794
  %v887 = vadd.f32 %v624, %v794
  %v888 = vadd.f32 %v625, %v794
  %v889 = vadd.f32 %v626, %v794
  %v890 = vadd.f32 %v627, %v794
  %v891 = vadd.f32 %v628, %v794
  %v892 = vadd.f32 %v629, %v794
  %v893 = vadd.f32 %v630, %v794
  %v894 = vadd.f32 %v631, %v794
  %v895 = vadd.f32 %v632, %v794
  %v896 = vadd.f32 %v633, %v794
  %v897 = vadd.f32 %v634, %v794
  %v898 = vadd.f32 %v635, %v794
  %v899 = vadd.f32 %v636, %v794
  %v900 = vadd.f32 %v637, %v794
  %v901 = vadd.f32 %v638, %v794
  %v902 = vadd.f32 %v639, %v794
  %v903 = vadd.f32 %v640, %v794
  %v904 = vadd.f32 %v641, %v794
  %v905 = vadd.f32 %v642, %v794
  %v906 = vadd.f32 %v643, %v794
  %v907 = vadd.f32 %v644, %v794
  %v908 = vadd.f32 %v645, %v794
  %v909 = vadd.f32 %v646, %v794
  %v910 = vadd.f32 %v647, %v794
  %v911 = vadd.f32 %v648, %v794
  %v912 = vadd.f32 %v649, %v794
  %v913 = vadd.f32 %v650, %v794
  %v914 = vadd.f32 %v651, %v794
  %v915 = vadd.f32 %v652, %v794
  %v916 = vadd.f32 %v653, %v794
  %v917 = vadd.f32 %v654, %v794
  %v918 = vadd.f32 %v655, %v794
  %v919 = vadd.f32 %v656, %v794
  %v920 = vadd.f32 %v657, %v794
  %v921 = vadd.f32 %v658, %v794
  %v922 = vadd.f32 %v659, %v794
  %v923 = vadd.f32 %v660, %v794
  %v924 = vadd.f32 %v661, %v794
  %v925 = vadd.f32 %v662, %v794
  %v926 = vadd.f32 %v663, %v794
  %v927 = vadd.f32 %v664, %v794
  %v928 = vadd.f32 %v665, %v794
  %v929 = vadd.f32 %v666, %v794
  %v930 = vadd.f32 %v667, %v794
  %v931 = vadd.f32 %v668, %v794
  %v932 = vadd.f32 %v669, %v794
  %v933 = vadd.f32 %v670, %v794
  %v934 = vadd.f32 %v671, %v794
  %v935 = vadd.f32 %v672, %v794
  %v936 = vadd.f32 %v673, %v794
  %v937 = vadd.f32 %v674, %v794
  %v938 = vadd.f32 %v675, %v794
  %v939 = vadd.f32 %v676, %v794
  %v940 = vadd.f32 %v677, %v794
  %v941 = vadd.f32 %v678, %v794
  %v942 = vadd.f32 %v679, %v794
  %v943 = vadd.f32 %v680, %v794
  %v944 = vadd.f32 %v681, %v794
  %v945 = vadd.f32 %v682, %v794
  %v946 = vadd.f32 %v683, %v794
  %v947 = vadd.f32 %v684, %v794
  %v948 = vadd.f32 %v685, %v794
  %v949 = vadd.f32 %v686, %v794
  %v950 = vadd.f32 %v687, %v794
  %v951 = vadd.f32 %v688, %v794
  %v952 = vadd.f32 %v689, %v794
  %v953 = vadd.f32 %v690, %v794
  %v954 = vadd.f32 %v691, %v794
  %v955 = vadd.f32 %v692, %v794
  %v956 = vadd.f32 %v693, %v794
  %v957 = vadd.f32 %v694, %v794
  %v958 = vadd.f32 %v695, %v794
  %v959 = vadd.f32 %v696, %v794
  %v960 = vadd.f32 %v697, %v794
  %v961 = vadd.f32 %v698, %v794
  %v962 = vadd.f32 %v699, %v794
  %v963 = vadd.f32 %v700, %v794
  %v964 = vadd.f32 %v701, %v794
  %v965 = vadd.f32 %v702, %v794
  %v966 = vadd.f32 %v703, %v794
  %v967 = vadd.f32 %v704, %v794
  %v968 = vadd.f32 %v705, %v794
  %v969 = vadd.f32 %v706, %v794
  %v970 = vadd.f32 %v707, %v794
  %v971 = vadd.f32 %v708, %v794
  %v972 = vadd.f32 %v709, %v794
  %v973 = vadd.f32 %v710, %v794
  %v974 = vadd.f32 %v711, %v794
  %v975 = vadd.f32 %v712, %v794
  %v976 = vadd.f32 %v713, %v794
  %v977 = vadd.f32 %v714, %v794
  %v978 = vadd.f32 %v715, %v794
  %v979 = vadd.f32 %v716, %v794
  %v980 = vadd.f32 %v717, %v794
  %v981 = vadd.f32 %v718, %v794
  %v982 = vadd.f32 %v719, %v794
  %v983 = vadd.f32 %v720, %v794
  %v984 = vadd.f32 %v721, %v794
  %v985 = vadd.f32 %v722, %v794
  %v986 = vadd.f32 %v723, %v794
  %v987 = vadd.f32 %v724, %v794
  %v988 = vadd.f32 %v725, %v794
  %v989 = vadd.f32 %v726, %v794
  %v990 = vadd.f32 %v727, %v794
  %v991 = vadd.f32 %v728, %v794
  %v992 = vadd.f32 %v729, %v794
  %v993 = vadd.f32 %v730, %v794
  %v994 = vadd.f32 %v731, %v794
  %v995 = vadd.f32 %v732, %v794
  %v996 = vadd.f32 %v733, %v794
  %v997 = vadd.f32 %v734, %v794
  %v998 = vadd.f32 %v735, %v794
  %v999 = vadd.f32 %v736, %v794
  %v1000 = vadd.f32 %v737, %v794
  %v1001 = vadd.f32 %v738, %v794
  %v1002 = vadd.f32 %v739, %v794
  %v1003 = vadd.f32 %v740, %v794
  %v1004 = vadd.f32 %v741, %v794
  %v1005 = vadd.f32 %v742, %v794
  %v1006 = vadd.f32 %v743, %v794
  %v1007 = vadd.f32 %v744, %v794
  %v1008 = vadd.f32 %v745, %v794
  %v1009 = vadd.f32 %v746, %v794
  %v1010 = vadd.f32 %v747, %v794
  %v1011 = vadd.f32 %v748, %v794
  %v1012 = vadd.f32 %v749, %v794
  %v1013 = vadd.f32 %v750, %v794
  %v1014 = vadd.f32 %v751, %v794
  %v1015 = vadd.f32 %v752, %v794
  %v1016 = vadd.f32 %v753, %v794
  %v1017 = vadd.f32 %v754, %v794
  %v1018 = vadd.f32 %v755, %v794
  %v1019 = vadd.f32 %v756, %v794
  %v1020 = vadd.f32 %v757, %v794
  %v1021 = vadd.f32 %v758, %v794
  %v1022 = vadd.f32 %v759, %v794
  %v1023 = vadd.f32 %v760, %v794
  %v1024 = vadd.f32 %v761, %v794
  %v1025 = vadd.f32 %v762, %v794
  %v1026 = vadd.f32 %v763, %v794
  %v1027 = vadd.f32 %v764, %v794
  %v1028 = vadd.f32 %v765, %v794
  %v1029 = vadd.f32 %v766, %v794
  %v1030 = vadd.f32 %v767, %v794
  %v1031 = vadd.f32 %v768, %v794
  %v1032 = vadd.f32 %v769, %v794
  %v1033 = vadd.f32 %v770, %v794
  %v1034 = vadd.f32 %v771, %v794
  %v1035 = vadd.f32 %v772, %v794
  %v1036 = vadd.f32 %v773, %v794
  %v1037 = vadd.f32 %v774, %v794
  %v1038 = vadd.f32 %v775, %v794
  %v1039 = vadd.f32 %v776, %v794
  %v1040 = vadd.f32 %v777, %v794
  %v1041 = vadd.f32 %v778, %v794
  %v1042 = vadd.f32 %v779, %v794
  %v1043 = vadd.f32 %v780, %v794
  %v1044 = vadd.f32 %v781, %v794
  %v1045 = vadd.f32 %v782, %v794
  %v1046 = vadd.f32 %v783, %v794
  %v1047 = vadd.f32 %v784, %v794
  %v1048 = vadd.f32 %v785, %v794
  %v1049 = vadd.f32 %v786, %v794
  %v1050 = vadd.f32 %v787, %v794
  %v1051 = vadd.f32 %v788, %v794
  %v1052 = vmax.f32 %v796, 0.0
  %v1053 = vmax.f32 %v797, 0.0
  %v1054 = vmax.f32 %v798, 0.0
  %v1055 = vmax.f32 %v799, 0.0
  %v1056 = vmax.f32 %v800, 0.0
  %v1057 = vmax.f32 %v801, 0.0
  %v1058 = vmax.f32 %v802, 0.0
  %v1059 = vmax.f32 %v803, 0.0
  %v1060 = vmax.f32 %v804, 0.0
  %v1061 = vmax.f32 %v805, 0.0
  %v1062 = vmax.f32 %v806, 0.0
  %v1063 = vmax.f32 %v807, 0.0
  %v1064 = vmax.f32 %v808, 0.0
  %v1065 = vmax.f32 %v809, 0.0
  %v1066 = vmax.f32 %v810, 0.0
  %v1067 = vmax.f32 %v811, 0.0
  %v1068 = vmax.f32 %v812, 0.0
  %v1069 = vmax.f32 %v813, 0.0
  %v1070 = vmax.f32 %v814, 0.0
  %v1071 = vmax.f32 %v815, 0.0
  %v1072 = vmax.f32 %v816, 0.0
  %v1073 = vmax.f32 %v817, 0.0
  %v1074 = vmax.f32 %v818, 0.0
  %v1075 = vmax.f32 %v819, 0.0
  %v1076 = vmax.f32 %v820, 0.0
  %v1077 = vmax.f32 %v821, 0.0
  %v1078 = vmax.f32 %v822, 0.0
  %v1079 = vmax.f32 %v823, 0.0
  %v1080 = vmax.f32 %v824, 0.0
  %v1081 = vmax.f32 %v825, 0.0
  %v1082 = vmax.f32 %v826, 0.0
  %v1083 = vmax.f32 %v827, 0.0
  %v1084 = vmax.f32 %v828, 0.0
  %v1085 = vmax.f32 %v829, 0.0
  %v1086 = vmax.f32 %v830, 0.0
  %v1087 = vmax.f32 %v831, 0.0
  %v1088 = vmax.f32 %v832, 0.0
  %v1089 = vmax.f32 %v833, 0.0
  %v1090 = vmax.f32 %v834, 0.0
  %v1091 = vmax.f32 %v835, 0.0
  %v1092 = vmax.f32 %v836, 0.0
  %v1093 = vmax.f32 %v837, 0.0
  %v1094 = vmax.f32 %v838, 0.0
  %v1095 = vmax.f32 %v839, 0.0
  %v1096 = vmax.f32 %v840, 0.0
  %v1097 = vmax.f32 %v841, 0.0
  %v1098 = vmax.f32 %v842, 0.0
  %v1099 = vmax.f32 %v843, 0.0
  %v1100 = vmax.f32 %v844, 0.0
  %v1101 = vmax.f32 %v845, 0.0
  %v1102 = vmax.f32 %v846, 0.0
  %v1103 = vmax.f32 %v847, 0.0
  %v1104 = vmax.f32 %v848, 0.0
  %v1105 = vmax.f32 %v849, 0.0
  %v1106 = vmax.f32 %v850, 0.0
  %v1107 = vmax.f32 %v851, 0.0
  %v1108 = vmax.f32 %v852, 0.0
  %v1109 = vmax.f32 %v853, 0.0
  %v1110 = vmax.f32 %v854, 0.0
  %v1111 = vmax.f32 %v855, 0.0
  %v1112 = vmax.f32 %v856, 0.0
  %v1113 = vmax.f32 %v857, 0.0
  %v1114 = vmax.f32 %v858, 0.0
  %v1115 = vmax.f32 %v859, 0.0
  %v1116 = vmax.f32 %v860, 0.0
  %v1117 = vmax.f32 %v861, 0.0
  %v1118 = vmax.f32 %v862, 0.0
  %v1119 = vmax.f32 %v863, 0.0
  %v1120 = vmax.f32 %v864, 0.0
  %v1121 = vmax.f32 %v865, 0.0
  %v1122 = vmax.f32 %v866, 0.0
  %v1123 = vmax.f32 %v867, 0.0
  %v1124 = vmax.f32 %v868, 0.0
  %v1125 = vmax.f32 %v869, 0.0
  %v1126 = vmax.f32 %v870, 0.0
  %v1127 = vmax.f32 %v871, 0.0
  %v1128 = vmax.f32 %v872, 0.0
  %v1129 = vmax.f32 %v873, 0.0
  %v1130 = vmax.f32 %v874, 0.0
  %v1131 = vmax.f32 %v875, 0.0
  %v1132 = vmax.f32 %v876, 0.0
  %v1133 = vmax.f32 %v877, 0.0
  %v1134 = vmax.f32 %v878, 0.0
  %v1135 = vmax.f32 %v879, 0.0
  %v1136 = vmax.f32 %v880, 0.0
  %v1137 = vmax.f32 %v881, 0.0
  %v1138 = vmax.f32 %v882, 0.0
  %v1139 = vmax.f32 %v883, 0.0
  %v1140 = vmax.f32 %v884, 0.0
  %v1141 = vmax.f32 %v885, 0.0
  %v1142 = vmax.f32 %v886, 0.0
  %v1143 = vmax.f32 %v887, 0.0
  %v1144 = vmax.f32 %v888, 0.0
  %v1145 = vmax.f32 %v889, 0.0
  %v1146 = vmax.f32 %v890, 0.0
  %v1147 = vmax.f32 %v891, 0.0
  %v1148 = vmax.f32 %v892, 0.0
  %v1149 = vmax.f32 %v893, 0.0
  %v1150 = vmax.f32 %v894, 0.0
  %v1151 = vmax.f32 %v895, 0.0
  %v1152 = vmax.f32 %v896, 0.0
  %v1153 = vmax.f32 %v897, 0.0
  %v1154 = vmax.f32 %v898, 0.0
  %v1155 = vmax.f32 %v899, 0.0
  %v1156 = vmax.f32 %v900, 0.0
  %v1157 = vmax.f32 %v901, 0.0
  %v1158 = vmax.f32 %v902, 0.0
  %v1159 = vmax.f32 %v903, 0.0
  %v1160 = vmax.f32 %v904, 0.0
  %v1161 = vmax.f32 %v905, 0.0
  %v1162 = vmax.f32 %v906, 0.0
  %v1163 = vmax.f32 %v907, 0.0
  %v1164 = vmax.f32 %v908, 0.0
  %v1165 = vmax.f32 %v909, 0.0
  %v1166 = vmax.f32 %v910, 0.0
  %v1167 = vmax.f32 %v911, 0.0
  %v1168 = vmax.f32 %v912, 0.0
  %v1169 = vmax.f32 %v913, 0.0
  %v1170 = vmax.f32 %v914, 0.0
  %v1171 = vmax.f32 %v915, 0.0
  %v1172 = vmax.f32 %v916, 0.0
  %v1173 = vmax.f32 %v917, 0.0
  %v1174 = vmax.f32 %v918, 0.0
  %v1175 = vmax.f32 %v919, 0.0
  %v1176 = vmax.f32 %v920, 0.0
  %v1177 = vmax.f32 %v921, 0.0
  %v1178 = vmax.f32 %v922, 0.0
  %v1179 = vmax.f32 %v923, 0.0
  %v1180 = vmax.f32 %v924, 0.0
  %v1181 = vmax.f32 %v925, 0.0
  %v1182 = vmax.f32 %v926, 0.0
  %v1183 = vmax.f32 %v927, 0.0
  %v1184 = vmax.f32 %v928, 0.0
  %v1185 = vmax.f32 %v929, 0.0
  %v1186 = vmax.f32 %v930, 0.0
  %v1187 = vmax.f32 %v931, 0.0
  %v1188 = vmax.f32 %v932, 0.0
  %v1189 = vmax.f32 %v933, 0.0
  %v1190 = vmax.f32 %v934, 0.0
  %v1191 = vmax.f32 %v935, 0.0
  %v1192 = vmax.f32 %v936, 0.0
  %v1193 = vmax.f32 %v937, 0.0
  %v1194 = vmax.f32 %v938, 0.0
  %v1195 = vmax.f32 %v939, 0.0
  %v1196 = vmax.f32 %v940, 0.0
  %v1197 = vmax.f32 %v941, 0.0
  %v1198 = vmax.f32 %v942, 0.0
  %v1199 = vmax.f32 %v943, 0.0
  %v1200 = vmax.f32 %v944, 0.0
  %v1201 = vmax.f32 %v945, 0.0
  %v1202 = vmax.f32 %v946, 0.0
  %v1203 = vmax.f32 %v947, 0.0
  %v1204 = vmax.f32 %v948, 0.0
  %v1205 = vmax.f32 %v949, 0.0
  %v1206 = vmax.f32 %v950, 0.0
  %v1207 = vmax.f32 %v951, 0.0
  %v1208 = vmax.f32 %v952, 0.0
  %v1209 = vmax.f32 %v953, 0.0
  %v1210 = vmax.f32 %v954, 0.0
  %v1211 = vmax.f32 %v955, 0.0
  %v1212 = vmax.f32 %v956, 0.0
  %v1213 = vmax.f32 %v957, 0.0
  %v1214 = vmax.f32 %v958, 0.0
  %v1215 = vmax.f32 %v959, 0.0
  %v1216 = vmax.f32 %v960, 0.0
  %v1217 = vmax.f32 %v961, 0.0
  %v1218 = vmax.f32 %v962, 0.0
  %v1219 = vmax.f32 %v963, 0.0
  %v1220 = vmax.f32 %v964, 0.0
  %v1221 = vmax.f32 %v965, 0.0
  %v1222 = vmax.f32 %v966, 0.0
  %v1223 = vmax.f32 %v967, 0.0
  %v1224 = vmax.f32 %v968, 0.0
  %v1225 = vmax.f32 %v969, 0.0
  %v1226 = vmax.f32 %v970, 0.0
  %v1227 = vmax.f32 %v971, 0.0
  %v1228 = vmax.f32 %v972, 0.0
  %v1229 = vmax.f32 %v973, 0.0
  %v1230 = vmax.f32 %v974, 0.0
  %v1231 = vmax.f32 %v975, 0.0
  %v1232 = vmax.f32 %v976, 0.0
  %v1233 = vmax.f32 %v977, 0.0
  %v1234 = vmax.f32 %v978, 0.0
  %v1235 = vmax.f32 %v979, 0.0
  %v1236 = vmax.f32 %v980, 0.0
  %v1237 = vmax.f32 %v981, 0.0
  %v1238 = vmax.f32 %v982, 0.0
  %v1239 = vmax.f32 %v983, 0.0
  %v1240 = vmax.f32 %v984, 0.0
  %v1241 = vmax.f32 %v985, 0.0
  %v1242 = vmax.f32 %v986, 0.0
  %v1243 = vmax.f32 %v987, 0.0
  %v1244 = vmax.f32 %v988, 0.0
  %v1245 = vmax.f32 %v989, 0.0
  %v1246 = vmax.f32 %v990, 0.0
  %v1247 = vmax.f32 %v991, 0.0
  %v1248 = vmax.f32 %v992, 0.0
  %v1249 = vmax.f32 %v993, 0.0
  %v1250 = vmax.f32 %v994, 0.0
  %v1251 = vmax.f32 %v995, 0.0
  %v1252 = vmax.f32 %v996, 0.0
  %v1253 = vmax.f32 %v997, 0.0
  %v1254 = vmax.f32 %v998, 0.0
  %v1255 = vmax.f32 %v999, 0.0
  %v1256 = vmax.f32 %v1000, 0.0
  %v1257 = vmax.f32 %v1001, 0.0
  %v1258 = vmax.f32 %v1002, 0.0
  %v1259 = vmax.f32 %v1003, 0.0
  %v1260 = vmax.f32 %v1004, 0.0
  %v1261 = vmax.f32 %v1005, 0.0
  %v1262 = vmax.f32 %v1006, 0.0
  %v1263 = vmax.f32 %v1007, 0.0
  %v1264 = vmax.f32 %v1008, 0.0
  %v1265 = vmax.f32 %v1009, 0.0
  %v1266 = vmax.f32 %v1010, 0.0
  %v1267 = vmax.f32 %v1011, 0.0
  %v1268 = vmax.f32 %v1012, 0.0
  %v1269 = vmax.f32 %v1013, 0.0
  %v1270 = vmax.f32 %v1014, 0.0
  %v1271 = vmax.f32 %v1015, 0.0
  %v1272 = vmax.f32 %v1016, 0.0
  %v1273 = vmax.f32 %v1017, 0.0
  %v1274 = vmax.f32 %v1018, 0.0
  %v1275 = vmax.f32 %v1019, 0.0
  %v1276 = vmax.f32 %v1020, 0.0
  %v1277 = vmax.f32 %v1021, 0.0
  %v1278 = vmax.f32 %v1022, 0.0
  %v1279 = vmax.f32 %v1023, 0.0
  %v1280 = vmax.f32 %v1024, 0.0
  %v1281 = vmax.f32 %v1025, 0.0
  %v1282 = vmax.f32 %v1026, 0.0
  %v1283 = vmax.f32 %v1027, 0.0
  %v1284 = vmax.f32 %v1028, 0.0
  %v1285 = vmax.f32 %v1029, 0.0
  %v1286 = vmax.f32 %v1030, 0.0
  %v1287 = vmax.f32 %v1031, 0.0
  %v1288 = vmax.f32 %v1032, 0.0
  %v1289 = vmax.f32 %v1033, 0.0
  %v1290 = vmax.f32 %v1034, 0.0
  %v1291 = vmax.f32 %v1035, 0.0
  %v1292 = vmax.f32 %v1036, 0.0
  %v1293 = vmax.f32 %v1037, 0.0
  %v1294 = vmax.f32 %v1038, 0.0
  %v1295 = vmax.f32 %v1039, 0.0
  %v1296 = vmax.f32 %v1040, 0.0
  %v1297 = vmax.f32 %v1041, 0.0
  %v1298 = vmax.f32 %v1042, 0.0
  %v1299 = vmax.f32 %v1043, 0.0
  %v1300 = vmax.f32 %v1044, 0.0
  %v1301 = vmax.f32 %v1045, 0.0
  %v1302 = vmax.f32 %v1046, 0.0
  %v1303 = vmax.f32 %v1047, 0.0
  %v1304 = vmax.f32 %v1048, 0.0
  %v1305 = vmax.f32 %v1049, 0.0
  %v1306 = vmax.f32 %v1050, 0.0
  %v1307 = vmax.f32 %v1051, 0.0
  %1308 = vst [vmem:[%s3] sm:$0xff] %v1052
  %1309 = vst [vmem:[%s3 + $0x8] sm:$0xff] %v1053
  %1310 = vst [vmem:[%s3 + $0x10] sm:$0xff] %v1054
  %1311 = vst [vmem:[%s3 + $0x18] sm:$0xff] %v1055
  %1312 = vst [vmem:[%s3 + $0x20] sm:$0xff] %v1056
  %1313 = vst [vmem:[%s3 + $0x28] sm:$0xff] %v1057
  %1314 = vst [vmem:[%s3 + $0x30] sm:$0xff] %v1058
  %1315 = vst [vmem:[%s3 + $0x38] sm:$0xff] %v1059
  %1316 = vst [vmem:[%s3 + $0x40] sm:$0xff] %v1060
  %1317 = vst [vmem:[%s3 + $0x48] sm:$0xff] %v1061
  %1318 = vst [vmem:[%s3 + $0x50] sm:$0xff] %v1062
  %1319 = vst [vmem:[%s3 + $0x58] sm:$0xff] %v1063
  %1320 = vst [vmem:[%s3 + $0x60] sm:$0xff] %v1064
  %1321 = vst [vmem:[%s3 + $0x68] sm:$0xff] %v1065
  %1322 = vst [vmem:[%s3 + $0x70] sm:$0xff] %v1066
  %1323 = vst [vmem:[%s3 + $0x78] sm:$0xff] %v1067
  %1324 = vst [vmem:[%s3 + $0x80] sm:$0xff] %v1068
  %1325 = vst [vmem:[%s3 + $0x88] sm:$0xff] %v1069
  %1326 = vst [vmem:[%s3 + $0x90] sm:$0xff] %v1070
  %1327 = vst [vmem:[%s3 + $0x98] sm:$0xff] %v1071
  %1328 = vst [vmem:[%s3 + $0xa0] sm:$0xff] %v1072
  %1329 = vst [vmem:[%s3 + $0xa8] sm:$0xff] %v1073
  %1330 = vst [vmem:[%s3 + $0xb0] sm:$0xff] %v1074
  %1331 = vst [vmem:[%s3 + $0xb8] sm:$0xff] %v1075
  %1332 = vst [vmem:[%s3 + $0xc0] sm:$0xff] %v1076
  %1333 = vst [vmem:[%s3 + $0xc8] sm:$0xff] %v1077
  %1334 = vst [vmem:[%s3 + $0xd0] sm:$0xff] %v1078
  %1335 = vst [vmem:[%s3 + $0xd8] sm:$0xff] %v1079
  %1336 = vst [vmem:[%s3 + $0xe0] sm:$0xff] %v1080
  %1337 = vst [vmem:[%s3 + $0xe8] sm:$0xff] %v1081
  %1338 = vst [vmem:[%s3 + $0xf0] sm:$0xff] %v1082
  %1339 = vst [vmem:[%s3 + $0xf8] sm:$0xff] %v1083
  %1340 = vst [vmem:[%s3 + $0x100] sm:$0xff] %v1084
  %1341 = vst [vmem:[%s3 + $0x108] sm:$0xff] %v1085
  %1342 = vst [vmem:[%s3 + $0x110] sm:$0xff] %v1086
  %1343 = vst [vmem:[%s3 + $0x118] sm:$0xff] %v1087
  %1344 = vst [vmem:[%s3 + $0x120] sm:$0xff] %v1088
  %1345 = vst [vmem:[%s3 + $0x128] sm:$0xff] %v1089
  %1346 = vst [vmem:[%s3 + $0x130] sm:$0xff] %v1090
  %1347 = vst [vmem:[%s3 + $0x138] sm:$0xff] %v1091
  %1348 = vst [vmem:[%s3 + $0x140] sm:$0xff] %v1092
  %1349 = vst [vmem:[%s3 + $0x148] sm:$0xff] %v1093
  %1350 = vst [vmem:[%s3 + $0x150] sm:$0xff] %v1094
  %1351 = vst [vmem:[%s3 + $0x158] sm:$0xff] %v1095
  %1352 = vst [vmem:[%s3 + $0x160] sm:$0xff] %v1096
  %1353 = vst [vmem:[%s3 + $0x168] sm:$0xff] %v1097
  %1354 = vst [vmem:[%s3 + $0x170] sm:$0xff] %v1098
  %1355 = vst [vmem:[%s3 + $0x178] sm:$0xff] %v1099
  %1356 = vst [vmem:[%s3 + $0x180] sm:$0xff] %v1100
  %1357 = vst [vmem:[%s3 + $0x188] sm:$0xff] %v1101
  %1358 = vst [vmem:[%s3 + $0x190] sm:$0xff] %v1102
  %1359 = vst [vmem:[%s3 + $0x198] sm:$0xff] %v1103
  %1360 = vst [vmem:[%s3 + $0x1a0] sm:$0xff] %v1104
  %1361 = vst [vmem:[%s3 + $0x1a8] sm:$0xff] %v1105
  %1362 = vst [vmem:[%s3 + $0x1b0] sm:$0xff] %v1106
  %1363 = vst [vmem:[%s3 + $0x1b8] sm:$0xff] %v1107
  %1364 = vst [vmem:[%s3 + $0x1c0] sm:$0xff] %v1108
  %1365 = vst [vmem:[%s3 + $0x1c8] sm:$0xff] %v1109
  %1366 = vst [vmem:[%s3 + $0x1d0] sm:$0xff] %v1110
  %1367 = vst [vmem:[%s3 + $0x1d8] sm:$0xff] %v1111
  %1368 = vst [vmem:[%s3 + $0x1e0] sm:$0xff] %v1112
  %1369 = vst [vmem:[%s3 + $0x1e8] sm:$0xff] %v1113
  %1370 = vst [vmem:[%s3 + $0x1f0] sm:$0xff] %v1114
  %1371 = vst [vmem:[%s3 + $0x1f8] sm:$0xff] %v1115
  %1372 = vst [vmem:[%s3 + $0x200] sm:$0xff] %v1116
  %1373 = vst [vmem:[%s3 + $0x208] sm:$0xff] %v1117
  %1374 = vst [vmem:[%s3 + $0x210] sm:$0xff] %v1118
  %1375 = vst [vmem:[%s3 + $0x218] sm:$0xff] %v1119
  %1376 = vst [vmem:[%s3 + $0x220] sm:$0xff] %v1120
  %1377 = vst [vmem:[%s3 + $0x228] sm:$0xff] %v1121
  %1378 = vst [vmem:[%s3 + $0x230] sm:$0xff] %v1122
  %1379 = vst [vmem:[%s3 + $0x238] sm:$0xff] %v1123
  %1380 = vst [vmem:[%s3 + $0x240] sm:$0xff] %v1124
  %1381 = vst [vmem:[%s3 + $0x248] sm:$0xff] %v1125
  %1382 = vst [vmem:[%s3 + $0x250] sm:$0xff] %v1126
  %1383 = vst [vmem:[%s3 + $0x258] sm:$0xff] %v1127
  %1384 = vst [vmem:[%s3 + $0x260] sm:$0xff] %v1128
  %1385 = vst [vmem:[%s3 + $0x268] sm:$0xff] %v1129
  %1386 = vst [vmem:[%s3 + $0x270] sm:$0xff] %v1130
  %1387 = vst [vmem:[%s3 + $0x278] sm:$0xff] %v1131
  %1388 = vst [vmem:[%s3 + $0x280] sm:$0xff] %v1132
  %1389 = vst [vmem:[%s3 + $0x288] sm:$0xff] %v1133
  %1390 = vst [vmem:[%s3 + $0x290] sm:$0xff] %v1134
  %1391 = vst [vmem:[%s3 + $0x298] sm:$0xff] %v1135
  %1392 = vst [vmem:[%s3 + $0x2a0] sm:$0xff] %v1136
  %1393 = vst [vmem:[%s3 + $0x2a8] sm:$0xff] %v1137
  %1394 = vst [vmem:[%s3 + $0x2b0] sm:$0xff] %v1138
  %1395 = vst [vmem:[%s3 + $0x2b8] sm:$0xff] %v1139
  %1396 = vst [vmem:[%s3 + $0x2c0] sm:$0xff] %v1140
  %1397 = vst [vmem:[%s3 + $0x2c8] sm:$0xff] %v1141
  %1398 = vst [vmem:[%s3 + $0x2d0] sm:$0xff] %v1142
  %1399 = vst [vmem:[%s3 + $0x2d8] sm:$0xff] %v1143
  %1400 = vst [vmem:[%s3 + $0x2e0] sm:$0xff] %v1144
  %1401 = vst [vmem:[%s3 + $0x2e8] sm:$0xff] %v1145
  %1402 = vst [vmem:[%s3 + $0x2f0] sm:$0xff] %v1146
  %1403 = vst [vmem:[%s3 + $0x2f8] sm:$0xff] %v1147
  %1404 = vst [vmem:[%s3 + $0x300] sm:$0xff] %v1148
  %1405 = vst [vmem:[%s3 + $0x308] sm:$0xff] %v1149
  %1406 = vst [vmem:[%s3 + $0x310] sm:$0xff] %v1150
  %1407 = vst [vmem:[%s3 + $0x318] sm:$0xff] %v1151
  %1408 = vst [vmem:[%s3 + $0x320] sm:$0xff] %v1152
  %1409 = vst [vmem:[%s3 + $0x328] sm:$0xff] %v1153
  %1410 = vst [vmem:[%s3 + $0x330] sm:$0xff] %v1154
  %1411 = vst [vmem:[%s3 + $0x338] sm:$0xff] %v1155
  %1412 = vst [vmem:[%s3 + $0x340] sm:$0xff] %v1156
  %1413 = vst [vmem:[%s3 + $0x348] sm:$0xff] %v1157
  %1414 = vst [vmem:[%s3 + $0x350] sm:$0xff] %v1158
  %1415 = vst [vmem:[%s3 + $0x358] sm:$0xff] %v1159
  %1416 = vst [vmem:[%s3 + $0x360] sm:$0xff] %v1160
  %1417 = vst [vmem:[%s3 + $0x368] sm:$0xff] %v1161
  %1418 = vst [vmem:[%s3 + $0x370] sm:$0xff] %v1162
  %1419 = vst [vmem:[%s3 + $0x378] sm:$0xff] %v1163
  %1420 = vst [vmem:[%s3 + $0x380] sm:$0xff] %v1164
  %1421 = vst [vmem:[%s3 + $0x388] sm:$0xff] %v1165
  %1422 = vst [vmem:[%s3 + $0x390] sm:$0xff] %v1166
  %1423 = vst [vmem:[%s3 + $0x398] sm:$0xff] %v1167
  %1424 = vst [vmem:[%s3 + $0x3a0] sm:$0xff] %v1168
  %1425 = vst [vmem:[%s3 + $0x3a8] sm:$0xff] %v1169
  %1426 = vst [vmem:[%s3 + $0x3b0] sm:$0xff] %v1170
  %1427 = vst [vmem:[%s3 + $0x3b8] sm:$0xff] %v1171
  %1428 = vst [vmem:[%s3 + $0x3c0] sm:$0xff] %v1172
  %1429 = vst [vmem:[%s3 + $0x3c8] sm:$0xff] %v1173
  %1430 = vst [vmem:[%s3 + $0x3d0] sm:$0xff] %v1174
  %1431 = vst [vmem:[%s3 + $0x3d8] sm:$0xff] %v1175
  %1432 = vst [vmem:[%s3 + $0x3e0] sm:$0xff] %v1176
  %1433 = vst [vmem:[%s3 + $0x3e8] sm:$0xff] %v1177
  %1434 = vst [vmem:[%s3 + $0x3f0] sm:$0xff] %v1178
  %1435 = vst [vmem:[%s3 + $0x3f8] sm:$0xff] %v1179
  %1436 = vst [vmem:[%s3 + $0x400] sm:$0xff] %v1180
  %1437 = vst [vmem:[%s3 + $0x408] sm:$0xff] %v1181
  %1438 = vst [vmem:[%s3 + $0x410] sm:$0xff] %v1182
  %1439 = vst [vmem:[%s3 + $0x418] sm:$0xff] %v1183
  %1440 = vst [vmem:[%s3 + $0x420] sm:$0xff] %v1184
  %1441 = vst [vmem:[%s3 + $0x428] sm:$0xff] %v1185
  %1442 = vst [vmem:[%s3 + $0x430] sm:$0xff] %v1186
  %1443 = vst [vmem:[%s3 + $0x438] sm:$0xff] %v1187
  %1444 = vst [vmem:[%s3 + $0x440] sm:$0xff] %v1188
  %1445 = vst [vmem:[%s3 + $0x448] sm:$0xff] %v1189
  %1446 = vst [vmem:[%s3 + $0x450] sm:$0xff] %v1190
  %1447 = vst [vmem:[%s3 + $0x458] sm:$0xff] %v1191
  %1448 = vst [vmem:[%s3 + $0x460] sm:$0xff] %v1192
  %1449 = vst [vmem:[%s3 + $0x468] sm:$0xff] %v1193
  %1450 = vst [vmem:[%s3 + $0x470] sm:$0xff] %v1194
  %1451 = vst [vmem:[%s3 + $0x478] sm:$0xff] %v1195
  %1452 = vst [vmem:[%s3 + $0x480] sm:$0xff] %v1196
  %1453 = vst [vmem:[%s3 + $0x488] sm:$0xff] %v1197
  %1454 = vst [vmem:[%s3 + $0x490] sm:$0xff] %v1198
  %1455 = vst [vmem:[%s3 + $0x498] sm:$0xff] %v1199
  %1456 = vst [vmem:[%s3 + $0x4a0] sm:$0xff] %v1200
  %1457 = vst [vmem:[%s3 + $0x4a8] sm:$0xff] %v1201
  %1458 = vst [vmem:[%s3 + $0x4b0] sm:$0xff] %v1202
  %1459 = vst [vmem:[%s3 + $0x4b8] sm:$0xff] %v1203
  %1460 = vst [vmem:[%s3 + $0x4c0] sm:$0xff] %v1204
  %1461 = vst [vmem:[%s3 + $0x4c8] sm:$0xff] %v1205
  %1462 = vst [vmem:[%s3 + $0x4d0] sm:$0xff] %v1206
  %1463 = vst [vmem:[%s3 + $0x4d8] sm:$0xff] %v1207
  %1464 = vst [vmem:[%s3 + $0x4e0] sm:$0xff] %v1208
  %1465 = vst [vmem:[%s3 + $0x4e8] sm:$0xff] %v1209
  %1466 = vst [vmem:[%s3 + $0x4f0] sm:$0xff] %v1210
  %1467 = vst [vmem:[%s3 + $0x4f8] sm:$0xff] %v1211
  %1468 = vst [vmem:[%s3 + $0x500] sm:$0xff] %v1212
  %1469 = vst [vmem:[%s3 + $0x508] sm:$0xff] %v1213
  %1470 = vst [vmem:[%s3 + $0x510] sm:$0xff] %v1214
  %1471 = vst [vmem:[%s3 + $0x518] sm:$0xff] %v1215
  %1472 = vst [vmem:[%s3 + $0x520] sm:$0xff] %v1216
  %1473 = vst [vmem:[%s3 + $0x528] sm:$0xff] %v1217
  %1474 = vst [vmem:[%s3 + $0x530] sm:$0xff] %v1218
  %1475 = vst [vmem:[%s3 + $0x538] sm:$0xff] %v1219
  %1476 = vst [vmem:[%s3 + $0x540] sm:$0xff] %v1220
  %1477 = vst [vmem:[%s3 + $0x548] sm:$0xff] %v1221
  %1478 = vst [vmem:[%s3 + $0x550] sm:$0xff] %v1222
  %1479 = vst [vmem:[%s3 + $0x558] sm:$0xff] %v1223
  %1480 = vst [vmem:[%s3 + $0x560] sm:$0xff] %v1224
  %1481 = vst [vmem:[%s3 + $0x568] sm:$0xff] %v1225
  %1482 = vst [vmem:[%s3 + $0x570] sm:$0xff] %v1226
  %1483 = vst [vmem:[%s3 + $0x578] sm:$0xff] %v1227
  %1484 = vst [vmem:[%s3 + $0x580] sm:$0xff] %v1228
  %1485 = vst [vmem:[%s3 + $0x588] sm:$0xff] %v1229
  %1486 = vst [vmem:[%s3 + $0x590] sm:$0xff] %v1230
  %1487 = vst [vmem:[%s3 + $0x598] sm:$0xff] %v1231
  %1488 = vst [vmem:[%s3 + $0x5a0] sm:$0xff] %v1232
  %1489 = vst [vmem:[%s3 + $0x5a8] sm:$0xff] %v1233
  %1490 = vst [vmem:[%s3 + $0x5b0] sm:$0xff] %v1234
  %1491 = vst [vmem:[%s3 + $0x5b8] sm:$0xff] %v1235
  %1492 = vst [vmem:[%s3 + $0x5c0] sm:$0xff] %v1236
  %1493 = vst [vmem:[%s3 + $0x5c8] sm:$0xff] %v1237
  %1494 = vst [vmem:[%s3 + $0x5d0] sm:$0xff] %v1238
  %1495 = vst [vmem:[%s3 + $0x5d8] sm:$0xff] %v1239
  %1496 = vst [vmem:[%s3 + $0x5e0] sm:$0xff] %v1240
  %1497 = vst [vmem:[%s3 + $0x5e8] sm:$0xff] %v1241
  %1498 = vst [vmem:[%s3 + $0x5f0] sm:$0xff] %v1242
  %1499 = vst [vmem:[%s3 + $0x5f8] sm:$0xff] %v1243
  %1500 = vst [vmem:[%s3 + $0x600] sm:$0xff] %v1244
  %1501 = vst [vmem:[%s3 + $0x608] sm:$0xff] %v1245
  %1502 = vst [vmem:[%s3 + $0x610] sm:$0xff] %v1246
  %1503 = vst [vmem:[%s3 + $0x618] sm:$0xff] %v1247
  %1504 = vst [vmem:[%s3 + $0x620] sm:$0xff] %v1248
  %1505 = vst [vmem:[%s3 + $0x628] sm:$0xff] %v1249
  %1506 = vst [vmem:[%s3 + $0x630] sm:$0xff] %v1250
  %1507 = vst [vmem:[%s3 + $0x638] sm:$0xff] %v1251
  %1508 = vst [vmem:[%s3 + $0x640] sm:$0xff] %v1252
  %1509 = vst [vmem:[%s3 + $0x648] sm:$0xff] %v1253
  %1510 = vst [vmem:[%s3 + $0x650] sm:$0xff] %v1254
  %1511 = vst [vmem:[%s3 + $0x658] sm:$0xff] %v1255
  %1512 = vst [vmem:[%s3 + $0x660] sm:$0xff] %v1256
  %1513 = vst [vmem:[%s3 + $0x668] sm:$0xff] %v1257
  %1514 = vst [vmem:[%s3 + $0x670] sm:$0xff] %v1258
  %1515 = vst [vmem:[%s3 + $0x678] sm:$0xff] %v1259
  %1516 = vst [vmem:[%s3 + $0x680] sm:$0xff] %v1260
  %1517 = vst [vmem:[%s3 + $0x688] sm:$0xff] %v1261
  %1518 = vst [vmem:[%s3 + $0x690] sm:$0xff] %v1262
  %1519 = vst [vmem:[%s3 + $0x698] sm:$0xff] %v1263
  %1520 = vst [vmem:[%s3 + $0x6a0] sm:$0xff] %v1264
  %1521 = vst [vmem:[%s3 + $0x6a8] sm:$0xff] %v1265
  %1522 = vst [vmem:[%s3 + $0x6b0] sm:$0xff] %v1266
  %1523 = vst [vmem:[%s3 + $0x6b8] sm:$0xff] %v1267
  %1524 = vst [vmem:[%s3 + $0x6c0] sm:$0xff] %v1268
  %1525 = vst [vmem:[%s3 + $0x6c8] sm:$0xff] %v1269
  %1526 = vst [vmem:[%s3 + $0x6d0] sm:$0xff] %v1270
  %1527 = vst [vmem:[%s3 + $0x6d8] sm:$0xff] %v1271
  %1528 = vst [vmem:[%s3 + $0x6e0] sm:$0xff] %v1272
  %1529 = vst [vmem:[%s3 + $0x6e8] sm:$0xff] %v1273
  %1530 = vst [vmem:[%s3 + $0x6f0] sm:$0xff] %v1274
  %1531 = vst [vmem:[%s3 + $0x6f8] sm:$0xff] %v1275
  %1532 = vst [vmem:[%s3 + $0x700] sm:$0xff] %v1276
  %1533 = vst [vmem:[%s3 + $0x708] sm:$0xff] %v1277
  %1534 = vst [vmem:[%s3 + $0x710] sm:$0xff] %v1278
  %1535 = vst [vmem:[%s3 + $0x718] sm:$0xff] %v1279
  %1536 = vst [vmem:[%s3 + $0x720] sm:$0xff] %v1280
  %1537 = vst [vmem:[%s3 + $0x728] sm:$0xff] %v1281
  %1538 = vst [vmem:[%s3 + $0x730] sm:$0xff] %v1282
  %1539 = vst [vmem:[%s3 + $0x738] sm:$0xff] %v1283
  %1540 = vst [vmem:[%s3 + $0x740] sm:$0xff] %v1284
  %1541 = vst [vmem:[%s3 + $0x748] sm:$0xff] %v1285
  %1542 = vst [vmem:[%s3 + $0x750] sm:$0xff] %v1286
  %1543 = vst [vmem:[%s3 + $0x758] sm:$0xff] %v1287
  %1544 = vst [vmem:[%s3 + $0x760] sm:$0xff] %v1288
  %1545 = vst [vmem:[%s3 + $0x768] sm:$0xff] %v1289
  %1546 = vst [vmem:[%s3 + $0x770] sm:$0xff] %v1290
  %1547 = vst [vmem:[%s3 + $0x778] sm:$0xff] %v1291
  %1548 = vst [vmem:[%s3 + $0x780] sm:$0xff] %v1292
  %1549 = vst [vmem:[%s3 + $0x788] sm:$0xff] %v1293
  %1550 = vst [vmem:[%s3 + $0x790] sm:$0xff] %v1294
  %1551 = vst [vmem:[%s3 + $0x798] sm:$0xff] %v1295
  %1552 = vst [vmem:[%s3 + $0x7a0] sm:$0xff] %v1296
  %1553 = vst [vmem:[%s3 + $0x7a8] sm:$0xff] %v1297
  %1554 = vst [vmem:[%s3 + $0x7b0] sm:$0xff] %v1298
  %1555 = vst [vmem:[%s3 + $0x7b8] sm:$0xff] %v1299
  %1556 = vst [vmem:[%s3 + $0x7c0] sm:$0xff] %v1300
  %1557 = vst [vmem:[%s3 + $0x7c8] sm:$0xff] %v1301
  %1558 = vst [vmem:[%s3 + $0x7d0] sm:$0xff] %v1302
  %1559 = vst [vmem:[%s3 + $0x7d8] sm:$0xff] %v1303
  %1560 = vst [vmem:[%s3 + $0x7e0] sm:$0xff] %v1304
  %1561 = vst [vmem:[%s3 + $0x7e8] sm:$0xff] %v1305
  %1562 = vst [vmem:[%s3 + $0x7f0] sm:$0xff] %v1306
  %1563 = vst [vmem:[%s3 + $0x7f8] sm:$0xff] %v1307
  // Predicated region
  $region14: #{upconv_forward.5} parent=0 // pred_check
    _
  $region15: #{upconv_forward.5} parent=0 // pred_check_branch
    %1565 = sbr.rel (0) target = $region17
  $region16: #{upconv_forward.5} parent=0 // pred_region
    _
  $region17: #{upconv_forward.5} parent=0 // pred_fallthru
    _
  // Predicated region
  $region18: #{upconv_forward.5} parent=0 // pred_check
    _
  $region19: #{upconv_forward.5} parent=0 // pred_check_branch
    %1567 = sbr.rel (0) target = $region21
  $region20: #{upconv_forward.5} parent=0 // pred_region
    _
  $region21: #{upconv_forward.5} parent=0 // pred_fallthru
    _

</llo_original>
